<compile_context>
chip_gen: v7x
topology: tpu7x:2x2x1
jax: 0.10.0
libtpu: 0.0.40
codegen_flags: <defaults>
</compile_context>

<pallas_src>
import jax
import jax.numpy as jnp
import numpy as np
from jax.experimental import pallas as pl
from jax.experimental.pallas import tpu as pltpu


# -----------------------------------------------------------------------------
# Fused Branch kernel: one grid step = one batch element.
# Only x (bf16) is read from HBM and only the final combine (f32) is written.
# -----------------------------------------------------------------------------
def _branch_kernel(x_ref, w1_ref, w234_ref, b_ref, a_ref, o_ref,
                   xpad_ref, apad_ref, bpad_ref, p_ref):
    H = x_ref.shape[1]
    W = x_ref.shape[2]
    Cin = x_ref.shape[3]
    Cmid = o_ref.shape[3]

    # Zero-fill the padded scratch buffers (only the 1-pixel halo must be zero;
    # interiors are overwritten below). A few cheap VMEM stores.
    xpad_ref[...] = jnp.zeros_like(xpad_ref)
    apad_ref[...] = jnp.zeros_like(apad_ref)
    bpad_ref[...] = jnp.zeros_like(bpad_ref)

    xpad_ref[1:H + 1, 1:W + 1, :] = x_ref[0].astype(jnp.float32)

    b = b_ref[...]                                       # (4, Cmid) f32

    def prelu(acc, slope):
        return jnp.where(acc > 0, acc, slope * acc)

    # ---- layer 1: inputF (Cin -> Cmid), 9 shallow taps (Cin is tiny) --------
    xp = xpad_ref[...]                                   # (H+2, W+2, Cin) f32
    acc = jnp.broadcast_to(b[0:1, :], (H * W, Cmid))     # bias-initialized acc
    for kh in range(3):
        for kw in range(3):
            patch = (xp[kh:kh + H, kw:kw + W, :]
                     .reshape(H * W, Cin).astype(jnp.bfloat16))
            acc = acc + jnp.dot(patch, w1_ref[kh * 3 + kw],
                                preferred_element_type=jnp.float32)
    out = prelu(acc, a_ref[0])                           # (H*W, Cmid) f32
    apad_ref[1:H + 1, 1:W + 1, :] = out.reshape(H, W, Cmid)

    # ---- fused 64->64 conv3x3 + PReLU via kw-im2col (MXU sees K = 3*Cmid) ---
    def conv64_prelu(src_pad_ref, li, slope):
        ap = src_pad_ref[...]                            # (H+2, W+2, Cmid) f32
        for kw in range(3):                              # kw-im2col into VMEM
            p_ref[:, :, kw * Cmid:(kw + 1) * Cmid] = ap[:, kw:kw + W, :]
        acc = jnp.broadcast_to(b[li + 1:li + 2, :], (H * W, Cmid))
        for kh in range(3):
            patch = (p_ref[kh:kh + H]
                     .reshape(H * W, 3 * Cmid).astype(jnp.bfloat16))
            acc = acc + jnp.dot(patch, w234_ref[li, kh],
                                preferred_element_type=jnp.float32)
        return prelu(acc, slope)                         # (H*W, Cmid) f32

    # deepF: two conv+PReLU layers
    d = conv64_prelu(apad_ref, 0, a_ref[1])
    bpad_ref[1:H + 1, 1:W + 1, :] = d.reshape(H, W, Cmid)
    deep = conv64_prelu(bpad_ref, 1, a_ref[2])

    # combineF(out + deep): residual add fused in VMEM (halos stay zero)
    bpad_ref[1:H + 1, 1:W + 1, :] = (apad_ref[1:H + 1, 1:W + 1, :]
                                     + deep.reshape(H, W, Cmid))
    combine = conv64_prelu(bpad_ref, 2, a_ref[3])

    o_ref[...] = combine.reshape(1, H, W, Cmid)


# -----------------------------------------------------------------------------
# Wrapper: NCHW <-> NHWC at the boundary, weight repacking, one pallas_call.
# -----------------------------------------------------------------------------
def branch_forward(x_nchw, params):
    x = jnp.transpose(x_nchw, (0, 2, 3, 1))              # NCHW -> NHWC
    N, H, W, Cin = x.shape
    Cmid = params["conv_input"][0].shape[0]

    def taps9(w):    # (Cout,Cin,3,3) -> (9, Cin, Cout); row = kh*3 + kw
        cout, cin = w.shape[0], w.shape[1]
        return (jnp.transpose(w, (2, 3, 1, 0))
                .reshape(9, cin, cout).astype(jnp.bfloat16))

    def taps3(w):    # (Cout,Cin,3,3) -> (3, 3*Cin, Cout); row = kw*Cin + c
        cout, cin = w.shape[0], w.shape[1]
        return (jnp.transpose(w, (2, 3, 1, 0))
                .reshape(3, 3 * cin, cout).astype(jnp.bfloat16))

    w1 = taps9(params["conv_input"][0])
    w234 = jnp.stack([taps3(params["deep_conv1"][0]),
                      taps3(params["deep_conv2"][0]),
                      taps3(params["combine_conv"][0])], axis=0)
    b = jnp.stack([params["conv_input"][1], params["deep_conv1"][1],
                   params["deep_conv2"][1], params["combine_conv"][1]],
                  axis=0).astype(jnp.float32)             # (4, Cmid)
    a = jnp.asarray([params["prelu_input"], params["deep_prelu1"],
                     params["deep_prelu2"], params["combine_prelu"]],
                    dtype=jnp.float32)                    # (4,)

    combine = pl.pallas_call(
        _branch_kernel,
        out_shape=jax.ShapeDtypeStruct((N, H, W, Cmid), jnp.float32),
        grid=(N,),
        in_specs=[
            pl.BlockSpec((1, H, W, Cin), lambda n: (n, 0, 0, 0)),
            pl.BlockSpec((9, Cin, Cmid), lambda n: (0, 0, 0)),
            pl.BlockSpec((3, 3, 3 * Cmid, Cmid), lambda n: (0, 0, 0, 0)),
            pl.BlockSpec((4, Cmid), lambda n: (0, 0)),
            pl.BlockSpec(memory_space=pltpu.MemorySpace.SMEM),
        ],
        out_specs=pl.BlockSpec((1, H, W, Cmid), lambda n: (n, 0, 0, 0)),
        scratch_shapes=[
            pltpu.VMEM((H + 2, W + 2, Cin), jnp.float32),    # padded x
            pltpu.VMEM((H + 2, W + 2, Cmid), jnp.float32),   # padded out
            pltpu.VMEM((H + 2, W + 2, Cmid), jnp.float32),   # padded d / out+deep
            pltpu.VMEM((H + 2, W, 3 * Cmid), jnp.float32),   # kw-im2col buffer
        ],
        compiler_params=pltpu.CompilerParams(
            dimension_semantics=("parallel",)),
    )(x.astype(jnp.bfloat16), w1, w234, b, a)

    combine_nchw = jnp.transpose(combine, (0, 3, 1, 2))   # back to NCHW
    return combine_nchw, combine_nchw                      # (u2(combine), combine)


# -----------------------------------------------------------------------------
# Parameter construction (deterministic; stands in for initConvParameters)
# -----------------------------------------------------------------------------
def make_conv_params(key, cin, cout):
    kw_, _ = jax.random.split(key)
    fan_in = cin * 9
    std = float(np.sqrt(2.0 / fan_in))          # Kaiming-normal style
    w = jax.random.normal(kw_, (cout, cin, 3, 3), jnp.float32) * std
    bias = jnp.zeros((cout,), jnp.float32)
    return w, bias


def make_branch_params(in_channels=4, mid=64, seed=0):
    key = jax.random.PRNGKey(seed)
    k0, k1, k2, k3 = jax.random.split(key, 4)
    return {
        "conv_input": make_conv_params(k0, in_channels, mid),
        "deep_conv1": make_conv_params(k1, mid, mid),
        "deep_conv2": make_conv_params(k2, mid, mid),
        "combine_conv": make_conv_params(k3, mid, mid),
        # nn.PReLU() default: single parameter initialized to 0.25
        "prelu_input": 0.25,
        "deep_prelu1": 0.25,
        "deep_prelu2": 0.25,
        "combine_prelu": 0.25,
    }


# -----------------------------------------------------------------------------
# Pure-JAX reference (same bf16-input / f32-accum rounding as the kernel)
# -----------------------------------------------------------------------------
def _ref_conv_prelu(x, w_torch, bias, a, residual=None):
    if residual is not None:
        x = x + residual
    w = jnp.transpose(w_torch, (2, 3, 1, 0)).astype(jnp.bfloat16)   # HWIO
    y = jax.lax.conv_general_dilated(
        x.astype(jnp.bfloat16), w, window_strides=(1, 1), padding="SAME",
        dimension_numbers=("NHWC", "HWIO", "NHWC"),
        preferred_element_type=jnp.float32)
    y = y + bias.reshape(1, 1, 1, -1)
    return jnp.where(y > 0, y, a * y)


def _ref_branch(x_nchw, params):
    x = jnp.transpose(x_nchw, (0, 2, 3, 1))
    w, bias = params["conv_input"]
    out = _ref_conv_prelu(x, w, bias, params["prelu_input"])
    w, bias = params["deep_conv1"]
    d = _ref_conv_prelu(out, w, bias, params["deep_prelu1"])
    w, bias = params["deep_conv2"]
    deep = _ref_conv_prelu(d, w, bias, params["deep_prelu2"])
    w, bias = params["combine_conv"]
    combine = _ref_conv_prelu(out, w, bias, params["combine_prelu"], residual=deep)
    c = jnp.transpose(combine, (0, 3, 1, 2))
    return c, c


if __name__ == "__main__":
    N, C, H, W = 2, 4, 16, 16
    key = jax.random.PRNGKey(0)
    x = jax.random.normal(key, (N, C, H, W), jnp.float32)

    params = make_branch_params(in_channels=C, mid=64, seed=0)

    u2_out, combine_out = branch_forward(x, params)
    u2_out = jax.block_until_ready(u2_out)
    combine_out = jax.block_until_ready(combine_out)

    ref_u2, ref_combine = _ref_branch(x, params)
    np.testing.assert_allclose(np.asarray(combine_out), np.asarray(ref_combine),
                               rtol=2e-2, atol=2e-2)
    np.testing.assert_allclose(np.asarray(u2_out), np.asarray(ref_u2),
                               rtol=2e-2, atol=2e-2)

    assert combine_out.shape == (N, 64, H, W)
    print("KERNEL_OK")
</pallas_src>

<mosaic_0001>
module attributes {stable_mosaic.version = 11 : i64} {
  func.func @_branch_kernel(%arg0: i32, %arg1: memref<1x16x16x4xbf16, #tpu.memory_space<vmem>>, %arg2: memref<9x4x64xbf16, #tpu.memory_space<vmem>>, %arg3: memref<3x3x192x64xbf16, #tpu.memory_space<vmem>>, %arg4: memref<4x64xf32, #tpu.memory_space<vmem>>, %arg5: memref<4xf32, #tpu.memory_space<smem>>, %arg6: memref<1x16x16x64xf32, #tpu.memory_space<vmem>>, %arg7: memref<18x18x4xf32, #tpu.memory_space<vmem>>, %arg8: memref<18x18x64xf32, #tpu.memory_space<vmem>>, %arg9: memref<18x18x64xf32, #tpu.memory_space<vmem>>, %arg10: memref<18x16x192xf32, #tpu.memory_space<vmem>>) attributes {dimension_semantics = [#tpu.dimension_semantics<parallel>], iteration_bounds = array<i64: 2>, scalar_prefetch = 0 : i64, scratch_operands = 4 : i64, tpu.core_type = #tpu.core_type<tc>, window_params = [{transform_indices = @transform_0, window_bounds = array<i64: 1, 16, 16, 4>}, {pipeline_mode = #tpu.pipeline_mode<synchronous>, transform_indices = @transform_1, window_bounds = array<i64: 9, 4, 64>}, {pipeline_mode = #tpu.pipeline_mode<synchronous>, transform_indices = @transform_2, window_bounds = array<i64: 3, 3, 192, 64>}, {pipeline_mode = #tpu.pipeline_mode<synchronous>, transform_indices = @transform_3, window_bounds = array<i64: 4, 64>}, {transform_indices = @transform_4, window_bounds = array<i64: 4>}, {transform_indices = @transform_5, window_bounds = array<i64: 1, 16, 16, 64>}]} {
    %cst = arith.constant 0.000000e+00 : f32
    %0 = vector.broadcast %cst : f32 to vector<18x18x4xf32>
    %c0 = arith.constant 0 : index
    %c0_0 = arith.constant 0 : index
    %c0_1 = arith.constant 0 : index
    %1 = vector.load %arg7[%c0, %c0_0, %c0_1] : memref<18x18x4xf32, #tpu.memory_space<vmem>>, vector<18x18x4xf32>
    tpu.vector_store %arg7[%c0, %c0_0, %c0_1], %0 {strides = array<i32>} : memref<18x18x4xf32, #tpu.memory_space<vmem>>, vector<18x18x4xf32>,
    %cst_2 = arith.constant 0.000000e+00 : f32
    %2 = vector.broadcast %cst_2 : f32 to vector<18x18x64xf32>
    %c0_3 = arith.constant 0 : index
    %c0_4 = arith.constant 0 : index
    %c0_5 = arith.constant 0 : index
    %3 = vector.load %arg8[%c0_3, %c0_4, %c0_5] : memref<18x18x64xf32, #tpu.memory_space<vmem>>, vector<18x18x64xf32>
    tpu.vector_store %arg8[%c0_3, %c0_4, %c0_5], %2 {strides = array<i32>} : memref<18x18x64xf32, #tpu.memory_space<vmem>>, vector<18x18x64xf32>,
    %cst_6 = arith.constant 0.000000e+00 : f32
    %4 = vector.broadcast %cst_6 : f32 to vector<18x18x64xf32>
    %c0_7 = arith.constant 0 : index
    %c0_8 = arith.constant 0 : index
    %c0_9 = arith.constant 0 : index
    %5 = vector.load %arg9[%c0_7, %c0_8, %c0_9] : memref<18x18x64xf32, #tpu.memory_space<vmem>>, vector<18x18x64xf32>
    tpu.vector_store %arg9[%c0_7, %c0_8, %c0_9], %4 {strides = array<i32>} : memref<18x18x64xf32, #tpu.memory_space<vmem>>, vector<18x18x64xf32>,
    %c0_10 = arith.constant 0 : index
    %c0_11 = arith.constant 0 : index
    %c0_12 = arith.constant 0 : index
    %c0_13 = arith.constant 0 : index
    %6 = vector.load %arg1[%c0_10, %c0_11, %c0_12, %c0_13] : memref<1x16x16x4xbf16, #tpu.memory_space<vmem>>, vector<1x16x16x4xbf16>
    %7 = vector.shape_cast %6 : vector<1x16x16x4xbf16> to vector<16x16x4xbf16>
    %8 = arith.extf %7 : vector<16x16x4xbf16> to vector<16x16x4xf32>
    %c1 = arith.constant 1 : index
    %c1_14 = arith.constant 1 : index
    %c0_15 = arith.constant 0 : index
    %9 = vector.load %arg7[%c1, %c1_14, %c0_15] : memref<18x18x4xf32, #tpu.memory_space<vmem>>, vector<16x16x4xf32>
    tpu.vector_store %arg7[%c1, %c1_14, %c0_15], %8 {strides = array<i32>} : memref<18x18x4xf32, #tpu.memory_space<vmem>>, vector<16x16x4xf32>,
    %c0_16 = arith.constant 0 : index
    %c0_17 = arith.constant 0 : index
    %10 = vector.load %arg4[%c0_16, %c0_17] : memref<4x64xf32, #tpu.memory_space<vmem>>, vector<4x64xf32>
    %c0_18 = arith.constant 0 : index
    %c0_19 = arith.constant 0 : index
    %c0_20 = arith.constant 0 : index
    %11 = vector.load %arg7[%c0_18, %c0_19, %c0_20] : memref<18x18x4xf32, #tpu.memory_space<vmem>>, vector<18x18x4xf32>
    %12 = vector.extract_strided_slice %10 {offsets = [0, 0], sizes = [1, 64], strides = [1, 1]} : vector<4x64xf32> to vector<1x64xf32>
    %13 = vector.shape_cast %12 : vector<1x64xf32> to vector<1x64xf32>
    %14 = vector.broadcast %13 : vector<1x64xf32> to vector<256x64xf32>
    %15 = vector.extract_strided_slice %11 {offsets = [0, 0, 0], sizes = [16, 16, 4], strides = [1, 1, 1]} : vector<18x18x4xf32> to vector<16x16x4xf32>
    %16 = vector.shape_cast %15 : vector<16x16x4xf32> to vector<256x4xf32>
    %17 = arith.truncf %16 : vector<256x4xf32> to vector<256x4xbf16>
    %c0_21 = arith.constant 0 : index
    %c0_22 = arith.constant 0 : index
    %c0_23 = arith.constant 0 : index
    %18 = vector.load %arg2[%c0_21, %c0_22, %c0_23] : memref<9x4x64xbf16, #tpu.memory_space<vmem>>, vector<1x4x64xbf16>
    %19 = vector.shape_cast %18 : vector<1x4x64xbf16> to vector<4x64xbf16>
    %cst_24 = arith.constant dense<0.000000e+00> : vector<256x64xf32>
    %20 = tpu.matmul %17, %19, %cst_24 {dimension_numbers = #tpu.dot_dimension_numbers<[1], [0], [0], [1], [0, 0, 1, 1], [], []>} : vector<256x4xbf16>, vector<4x64xbf16>, vector<256x64xf32> -> vector<256x64xf32>
    %21 = arith.addf %14, %20 : vector<256x64xf32>
    %22 = vector.extract_strided_slice %11 {offsets = [0, 1, 0], sizes = [16, 16, 4], strides = [1, 1, 1]} : vector<18x18x4xf32> to vector<16x16x4xf32>
    %23 = vector.shape_cast %22 : vector<16x16x4xf32> to vector<256x4xf32>
    %24 = arith.truncf %23 : vector<256x4xf32> to vector<256x4xbf16>
    %c1_25 = arith.constant 1 : index
    %c0_26 = arith.constant 0 : index
    %c0_27 = arith.constant 0 : index
    %25 = vector.load %arg2[%c1_25, %c0_26, %c0_27] : memref<9x4x64xbf16, #tpu.memory_space<vmem>>, vector<1x4x64xbf16>
    %26 = vector.shape_cast %25 : vector<1x4x64xbf16> to vector<4x64xbf16>
    %cst_28 = arith.constant dense<0.000000e+00> : vector<256x64xf32>
    %27 = tpu.matmul %24, %26, %cst_28 {dimension_numbers = #tpu.dot_dimension_numbers<[1], [0], [0], [1], [0, 0, 1, 1], [], []>} : vector<256x4xbf16>, vector<4x64xbf16>, vector<256x64xf32> -> vector<256x64xf32>
    %28 = arith.addf %21, %27 : vector<256x64xf32>
    %29 = vector.extract_strided_slice %11 {offsets = [0, 2, 0], sizes = [16, 16, 4], strides = [1, 1, 1]} : vector<18x18x4xf32> to vector<16x16x4xf32>
    %30 = vector.shape_cast %29 : vector<16x16x4xf32> to vector<256x4xf32>
    %31 = arith.truncf %30 : vector<256x4xf32> to vector<256x4xbf16>
    %c2 = arith.constant 2 : index
    %c0_29 = arith.constant 0 : index
    %c0_30 = arith.constant 0 : index
    %32 = vector.load %arg2[%c2, %c0_29, %c0_30] : memref<9x4x64xbf16, #tpu.memory_space<vmem>>, vector<1x4x64xbf16>
    %33 = vector.shape_cast %32 : vector<1x4x64xbf16> to vector<4x64xbf16>
    %cst_31 = arith.constant dense<0.000000e+00> : vector<256x64xf32>
    %34 = tpu.matmul %31, %33, %cst_31 {dimension_numbers = #tpu.dot_dimension_numbers<[1], [0], [0], [1], [0, 0, 1, 1], [], []>} : vector<256x4xbf16>, vector<4x64xbf16>, vector<256x64xf32> -> vector<256x64xf32>
    %35 = arith.addf %28, %34 : vector<256x64xf32>
    %36 = vector.extract_strided_slice %11 {offsets = [1, 0, 0], sizes = [16, 16, 4], strides = [1, 1, 1]} : vector<18x18x4xf32> to vector<16x16x4xf32>
    %37 = vector.shape_cast %36 : vector<16x16x4xf32> to vector<256x4xf32>
    %38 = arith.truncf %37 : vector<256x4xf32> to vector<256x4xbf16>
    %c3 = arith.constant 3 : index
    %c0_32 = arith.constant 0 : index
    %c0_33 = arith.constant 0 : index
    %39 = vector.load %arg2[%c3, %c0_32, %c0_33] : memref<9x4x64xbf16, #tpu.memory_space<vmem>>, vector<1x4x64xbf16>
    %40 = vector.shape_cast %39 : vector<1x4x64xbf16> to vector<4x64xbf16>
    %cst_34 = arith.constant dense<0.000000e+00> : vector<256x64xf32>
    %41 = tpu.matmul %38, %40, %cst_34 {dimension_numbers = #tpu.dot_dimension_numbers<[1], [0], [0], [1], [0, 0, 1, 1], [], []>} : vector<256x4xbf16>, vector<4x64xbf16>, vector<256x64xf32> -> vector<256x64xf32>
    %42 = arith.addf %35, %41 : vector<256x64xf32>
    %43 = vector.extract_strided_slice %11 {offsets = [1, 1, 0], sizes = [16, 16, 4], strides = [1, 1, 1]} : vector<18x18x4xf32> to vector<16x16x4xf32>
    %44 = vector.shape_cast %43 : vector<16x16x4xf32> to vector<256x4xf32>
    %45 = arith.truncf %44 : vector<256x4xf32> to vector<256x4xbf16>
    %c4 = arith.constant 4 : index
    %c0_35 = arith.constant 0 : index
    %c0_36 = arith.constant 0 : index
    %46 = vector.load %arg2[%c4, %c0_35, %c0_36] : memref<9x4x64xbf16, #tpu.memory_space<vmem>>, vector<1x4x64xbf16>
    %47 = vector.shape_cast %46 : vector<1x4x64xbf16> to vector<4x64xbf16>
    %cst_37 = arith.constant dense<0.000000e+00> : vector<256x64xf32>
    %48 = tpu.matmul %45, %47, %cst_37 {dimension_numbers = #tpu.dot_dimension_numbers<[1], [0], [0], [1], [0, 0, 1, 1], [], []>} : vector<256x4xbf16>, vector<4x64xbf16>, vector<256x64xf32> -> vector<256x64xf32>
    %49 = arith.addf %42, %48 : vector<256x64xf32>
    %50 = vector.extract_strided_slice %11 {offsets = [1, 2, 0], sizes = [16, 16, 4], strides = [1, 1, 1]} : vector<18x18x4xf32> to vector<16x16x4xf32>
    %51 = vector.shape_cast %50 : vector<16x16x4xf32> to vector<256x4xf32>
    %52 = arith.truncf %51 : vector<256x4xf32> to vector<256x4xbf16>
    %c5 = arith.constant 5 : index
    %c0_38 = arith.constant 0 : index
    %c0_39 = arith.constant 0 : index
    %53 = vector.load %arg2[%c5, %c0_38, %c0_39] : memref<9x4x64xbf16, #tpu.memory_space<vmem>>, vector<1x4x64xbf16>
    %54 = vector.shape_cast %53 : vector<1x4x64xbf16> to vector<4x64xbf16>
    %cst_40 = arith.constant dense<0.000000e+00> : vector<256x64xf32>
    %55 = tpu.matmul %52, %54, %cst_40 {dimension_numbers = #tpu.dot_dimension_numbers<[1], [0], [0], [1], [0, 0, 1, 1], [], []>} : vector<256x4xbf16>, vector<4x64xbf16>, vector<256x64xf32> -> vector<256x64xf32>
    %56 = arith.addf %49, %55 : vector<256x64xf32>
    %57 = vector.extract_strided_slice %11 {offsets = [2, 0, 0], sizes = [16, 16, 4], strides = [1, 1, 1]} : vector<18x18x4xf32> to vector<16x16x4xf32>
    %58 = vector.shape_cast %57 : vector<16x16x4xf32> to vector<256x4xf32>
    %59 = arith.truncf %58 : vector<256x4xf32> to vector<256x4xbf16>
    %c6 = arith.constant 6 : index
    %c0_41 = arith.constant 0 : index
    %c0_42 = arith.constant 0 : index
    %60 = vector.load %arg2[%c6, %c0_41, %c0_42] : memref<9x4x64xbf16, #tpu.memory_space<vmem>>, vector<1x4x64xbf16>
    %61 = vector.shape_cast %60 : vector<1x4x64xbf16> to vector<4x64xbf16>
    %cst_43 = arith.constant dense<0.000000e+00> : vector<256x64xf32>
    %62 = tpu.matmul %59, %61, %cst_43 {dimension_numbers = #tpu.dot_dimension_numbers<[1], [0], [0], [1], [0, 0, 1, 1], [], []>} : vector<256x4xbf16>, vector<4x64xbf16>, vector<256x64xf32> -> vector<256x64xf32>
    %63 = arith.addf %56, %62 : vector<256x64xf32>
    %64 = vector.extract_strided_slice %11 {offsets = [2, 1, 0], sizes = [16, 16, 4], strides = [1, 1, 1]} : vector<18x18x4xf32> to vector<16x16x4xf32>
    %65 = vector.shape_cast %64 : vector<16x16x4xf32> to vector<256x4xf32>
    %66 = arith.truncf %65 : vector<256x4xf32> to vector<256x4xbf16>
    %c7 = arith.constant 7 : index
    %c0_44 = arith.constant 0 : index
    %c0_45 = arith.constant 0 : index
    %67 = vector.load %arg2[%c7, %c0_44, %c0_45] : memref<9x4x64xbf16, #tpu.memory_space<vmem>>, vector<1x4x64xbf16>
    %68 = vector.shape_cast %67 : vector<1x4x64xbf16> to vector<4x64xbf16>
    %cst_46 = arith.constant dense<0.000000e+00> : vector<256x64xf32>
    %69 = tpu.matmul %66, %68, %cst_46 {dimension_numbers = #tpu.dot_dimension_numbers<[1], [0], [0], [1], [0, 0, 1, 1], [], []>} : vector<256x4xbf16>, vector<4x64xbf16>, vector<256x64xf32> -> vector<256x64xf32>
    %70 = arith.addf %63, %69 : vector<256x64xf32>
    %71 = vector.extract_strided_slice %11 {offsets = [2, 2, 0], sizes = [16, 16, 4], strides = [1, 1, 1]} : vector<18x18x4xf32> to vector<16x16x4xf32>
    %72 = vector.shape_cast %71 : vector<16x16x4xf32> to vector<256x4xf32>
    %73 = arith.truncf %72 : vector<256x4xf32> to vector<256x4xbf16>
    %c8 = arith.constant 8 : index
    %c0_47 = arith.constant 0 : index
    %c0_48 = arith.constant 0 : index
    %74 = vector.load %arg2[%c8, %c0_47, %c0_48] : memref<9x4x64xbf16, #tpu.memory_space<vmem>>, vector<1x4x64xbf16>
    %75 = vector.shape_cast %74 : vector<1x4x64xbf16> to vector<4x64xbf16>
    %cst_49 = arith.constant dense<0.000000e+00> : vector<256x64xf32>
    %76 = tpu.matmul %73, %75, %cst_49 {dimension_numbers = #tpu.dot_dimension_numbers<[1], [0], [0], [1], [0, 0, 1, 1], [], []>} : vector<256x4xbf16>, vector<4x64xbf16>, vector<256x64xf32> -> vector<256x64xf32>
    %77 = arith.addf %70, %76 : vector<256x64xf32>
    %c0_50 = arith.constant 0 : index
    %78 = memref.load %arg5[%c0_50] : memref<4xf32, #tpu.memory_space<smem>>
    %cst_51 = arith.constant 0.000000e+00 : f32
    %79 = vector.broadcast %cst_51 : f32 to vector<256x64xf32>
    %80 = arith.cmpf ogt, %77, %79 : vector<256x64xf32>
    %81 = vector.broadcast %78 : f32 to vector<256x64xf32>
    %82 = arith.mulf %81, %77 : vector<256x64xf32>
    %83 = arith.select %80, %77, %82 : vector<256x64xi1>, vector<256x64xf32>
    %84 = vector.shape_cast %83 : vector<256x64xf32> to vector<16x16x64xf32>
    %c1_52 = arith.constant 1 : index
    %c1_53 = arith.constant 1 : index
    %c0_54 = arith.constant 0 : index
    %85 = vector.load %arg8[%c1_52, %c1_53, %c0_54] : memref<18x18x64xf32, #tpu.memory_space<vmem>>, vector<16x16x64xf32>
    tpu.vector_store %arg8[%c1_52, %c1_53, %c0_54], %84 {strides = array<i32>} : memref<18x18x64xf32, #tpu.memory_space<vmem>>, vector<16x16x64xf32>,
    %c1_55 = arith.constant 1 : index
    %86 = memref.load %arg5[%c1_55] : memref<4xf32, #tpu.memory_space<smem>>
    %c0_56 = arith.constant 0 : index
    %c0_57 = arith.constant 0 : index
    %c0_58 = arith.constant 0 : index
    %87 = vector.load %arg8[%c0_56, %c0_57, %c0_58] : memref<18x18x64xf32, #tpu.memory_space<vmem>>, vector<18x18x64xf32>
    %88 = vector.extract_strided_slice %87 {offsets = [0, 0, 0], sizes = [18, 16, 64], strides = [1, 1, 1]} : vector<18x18x64xf32> to vector<18x16x64xf32>
    %c0_59 = arith.constant 0 : index
    %c0_60 = arith.constant 0 : index
    %c0_61 = arith.constant 0 : index
    %89 = vector.load %arg10[%c0_59, %c0_60, %c0_61] : memref<18x16x192xf32, #tpu.memory_space<vmem>>, vector<18x16x64xf32>
    tpu.vector_store %arg10[%c0_59, %c0_60, %c0_61], %88 {strides = array<i32>} : memref<18x16x192xf32, #tpu.memory_space<vmem>>, vector<18x16x64xf32>,
    %90 = vector.extract_strided_slice %87 {offsets = [0, 1, 0], sizes = [18, 16, 64], strides = [1, 1, 1]} : vector<18x18x64xf32> to vector<18x16x64xf32>
    %c0_62 = arith.constant 0 : index
    %c0_63 = arith.constant 0 : index
    %c64 = arith.constant 64 : index
    %91 = vector.load %arg10[%c0_62, %c0_63, %c64] : memref<18x16x192xf32, #tpu.memory_space<vmem>>, vector<18x16x64xf32>
    tpu.vector_store %arg10[%c0_62, %c0_63, %c64], %90 {strides = array<i32>} : memref<18x16x192xf32, #tpu.memory_space<vmem>>, vector<18x16x64xf32>,
    %92 = vector.extract_strided_slice %87 {offsets = [0, 2, 0], sizes = [18, 16, 64], strides = [1, 1, 1]} : vector<18x18x64xf32> to vector<18x16x64xf32>
    %c0_64 = arith.constant 0 : index
    %c0_65 = arith.constant 0 : index
    %c128 = arith.constant 128 : index
    %93 = vector.load %arg10[%c0_64, %c0_65, %c128] : memref<18x16x192xf32, #tpu.memory_space<vmem>>, vector<18x16x64xf32>
    tpu.vector_store %arg10[%c0_64, %c0_65, %c128], %92 {strides = array<i32>} : memref<18x16x192xf32, #tpu.memory_space<vmem>>, vector<18x16x64xf32>,
    %94 = vector.extract_strided_slice %10 {offsets = [1, 0], sizes = [1, 64], strides = [1, 1]} : vector<4x64xf32> to vector<1x64xf32>
    %95 = vector.shape_cast %94 : vector<1x64xf32> to vector<1x64xf32>
    %96 = vector.broadcast %95 : vector<1x64xf32> to vector<256x64xf32>
    %c0_66 = arith.constant 0 : index
    %c0_67 = arith.constant 0 : index
    %c0_68 = arith.constant 0 : index
    %97 = vector.load %arg10[%c0_66, %c0_67, %c0_68] : memref<18x16x192xf32, #tpu.memory_space<vmem>>, vector<16x16x192xf32>
    %98 = vector.shape_cast %97 : vector<16x16x192xf32> to vector<256x192xf32>
    %99 = arith.truncf %98 : vector<256x192xf32> to vector<256x192xbf16>
    %c0_69 = arith.constant 0 : index
    %c0_70 = arith.constant 0 : index
    %c0_71 = arith.constant 0 : index
    %c0_72 = arith.constant 0 : index
    %100 = vector.load %arg3[%c0_69, %c0_70, %c0_71, %c0_72] : memref<3x3x192x64xbf16, #tpu.memory_space<vmem>>, vector<1x1x192x64xbf16>
    %101 = vector.shape_cast %100 : vector<1x1x192x64xbf16> to vector<192x64xbf16>
    %cst_73 = arith.constant dense<0.000000e+00> : vector<256x64xf32>
    %102 = tpu.matmul %99, %101, %cst_73 {dimension_numbers = #tpu.dot_dimension_numbers<[1], [0], [0], [1], [0, 0, 1, 1], [], []>} : vector<256x192xbf16>, vector<192x64xbf16>, vector<256x64xf32> -> vector<256x64xf32>
    %103 = arith.addf %96, %102 : vector<256x64xf32>
    %c1_74 = arith.constant 1 : index
    %c0_75 = arith.constant 0 : index
    %c0_76 = arith.constant 0 : index
    %104 = vector.load %arg10[%c1_74, %c0_75, %c0_76] : memref<18x16x192xf32, #tpu.memory_space<vmem>>, vector<16x16x192xf32>
    %105 = vector.shape_cast %104 : vector<16x16x192xf32> to vector<256x192xf32>
    %106 = arith.truncf %105 : vector<256x192xf32> to vector<256x192xbf16>
    %c0_77 = arith.constant 0 : index
    %c1_78 = arith.constant 1 : index
    %c0_79 = arith.constant 0 : index
    %c0_80 = arith.constant 0 : index
    %107 = vector.load %arg3[%c0_77, %c1_78, %c0_79, %c0_80] : memref<3x3x192x64xbf16, #tpu.memory_space<vmem>>, vector<1x1x192x64xbf16>
    %108 = vector.shape_cast %107 : vector<1x1x192x64xbf16> to vector<192x64xbf16>
    %cst_81 = arith.constant dense<0.000000e+00> : vector<256x64xf32>
    %109 = tpu.matmul %106, %108, %cst_81 {dimension_numbers = #tpu.dot_dimension_numbers<[1], [0], [0], [1], [0, 0, 1, 1], [], []>} : vector<256x192xbf16>, vector<192x64xbf16>, vector<256x64xf32> -> vector<256x64xf32>
    %110 = arith.addf %103, %109 : vector<256x64xf32>
    %c2_82 = arith.constant 2 : index
    %c0_83 = arith.constant 0 : index
    %c0_84 = arith.constant 0 : index
    %111 = vector.load %arg10[%c2_82, %c0_83, %c0_84] : memref<18x16x192xf32, #tpu.memory_space<vmem>>, vector<16x16x192xf32>
    %112 = vector.shape_cast %111 : vector<16x16x192xf32> to vector<256x192xf32>
    %113 = arith.truncf %112 : vector<256x192xf32> to vector<256x192xbf16>
    %c0_85 = arith.constant 0 : index
    %c2_86 = arith.constant 2 : index
    %c0_87 = arith.constant 0 : index
    %c0_88 = arith.constant 0 : index
    %114 = vector.load %arg3[%c0_85, %c2_86, %c0_87, %c0_88] : memref<3x3x192x64xbf16, #tpu.memory_space<vmem>>, vector<1x1x192x64xbf16>
    %115 = vector.shape_cast %114 : vector<1x1x192x64xbf16> to vector<192x64xbf16>
    %cst_89 = arith.constant dense<0.000000e+00> : vector<256x64xf32>
    %116 = tpu.matmul %113, %115, %cst_89 {dimension_numbers = #tpu.dot_dimension_numbers<[1], [0], [0], [1], [0, 0, 1, 1], [], []>} : vector<256x192xbf16>, vector<192x64xbf16>, vector<256x64xf32> -> vector<256x64xf32>
    %117 = arith.addf %110, %116 : vector<256x64xf32>
    %cst_90 = arith.constant 0.000000e+00 : f32
    %118 = vector.broadcast %cst_90 : f32 to vector<256x64xf32>
    %119 = arith.cmpf ogt, %117, %118 : vector<256x64xf32>
    %120 = vector.broadcast %86 : f32 to vector<256x64xf32>
    %121 = arith.mulf %120, %117 : vector<256x64xf32>
    %122 = arith.select %119, %117, %121 : vector<256x64xi1>, vector<256x64xf32>
    %123 = vector.shape_cast %122 : vector<256x64xf32> to vector<16x16x64xf32>
    %c1_91 = arith.constant 1 : index
    %c1_92 = arith.constant 1 : index
    %c0_93 = arith.constant 0 : index
    %124 = vector.load %arg9[%c1_91, %c1_92, %c0_93] : memref<18x18x64xf32, #tpu.memory_space<vmem>>, vector<16x16x64xf32>
    tpu.vector_store %arg9[%c1_91, %c1_92, %c0_93], %123 {strides = array<i32>} : memref<18x18x64xf32, #tpu.memory_space<vmem>>, vector<16x16x64xf32>,
    %c2_94 = arith.constant 2 : index
    %125 = memref.load %arg5[%c2_94] : memref<4xf32, #tpu.memory_space<smem>>
    %c0_95 = arith.constant 0 : index
    %c0_96 = arith.constant 0 : index
    %c0_97 = arith.constant 0 : index
    %126 = vector.load %arg9[%c0_95, %c0_96, %c0_97] : memref<18x18x64xf32, #tpu.memory_space<vmem>>, vector<18x18x64xf32>
    %127 = vector.extract_strided_slice %126 {offsets = [0, 0, 0], sizes = [18, 16, 64], strides = [1, 1, 1]} : vector<18x18x64xf32> to vector<18x16x64xf32>
    %c0_98 = arith.constant 0 : index
    %c0_99 = arith.constant 0 : index
    %c0_100 = arith.constant 0 : index
    %128 = vector.load %arg10[%c0_98, %c0_99, %c0_100] : memref<18x16x192xf32, #tpu.memory_space<vmem>>, vector<18x16x64xf32>
    tpu.vector_store %arg10[%c0_98, %c0_99, %c0_100], %127 {strides = array<i32>} : memref<18x16x192xf32, #tpu.memory_space<vmem>>, vector<18x16x64xf32>,
    %129 = vector.extract_strided_slice %126 {offsets = [0, 1, 0], sizes = [18, 16, 64], strides = [1, 1, 1]} : vector<18x18x64xf32> to vector<18x16x64xf32>
    %c0_101 = arith.constant 0 : index
    %c0_102 = arith.constant 0 : index
    %c64_103 = arith.constant 64 : index
    %130 = vector.load %arg10[%c0_101, %c0_102, %c64_103] : memref<18x16x192xf32, #tpu.memory_space<vmem>>, vector<18x16x64xf32>
    tpu.vector_store %arg10[%c0_101, %c0_102, %c64_103], %129 {strides = array<i32>} : memref<18x16x192xf32, #tpu.memory_space<vmem>>, vector<18x16x64xf32>,
    %131 = vector.extract_strided_slice %126 {offsets = [0, 2, 0], sizes = [18, 16, 64], strides = [1, 1, 1]} : vector<18x18x64xf32> to vector<18x16x64xf32>
    %c0_104 = arith.constant 0 : index
    %c0_105 = arith.constant 0 : index
    %c128_106 = arith.constant 128 : index
    %132 = vector.load %arg10[%c0_104, %c0_105, %c128_106] : memref<18x16x192xf32, #tpu.memory_space<vmem>>, vector<18x16x64xf32>
    tpu.vector_store %arg10[%c0_104, %c0_105, %c128_106], %131 {strides = array<i32>} : memref<18x16x192xf32, #tpu.memory_space<vmem>>, vector<18x16x64xf32>,
    %133 = vector.extract_strided_slice %10 {offsets = [2, 0], sizes = [1, 64], strides = [1, 1]} : vector<4x64xf32> to vector<1x64xf32>
    %134 = vector.shape_cast %133 : vector<1x64xf32> to vector<1x64xf32>
    %135 = vector.broadcast %134 : vector<1x64xf32> to vector<256x64xf32>
    %c0_107 = arith.constant 0 : index
    %c0_108 = arith.constant 0 : index
    %c0_109 = arith.constant 0 : index
    %136 = vector.load %arg10[%c0_107, %c0_108, %c0_109] : memref<18x16x192xf32, #tpu.memory_space<vmem>>, vector<16x16x192xf32>
    %137 = vector.shape_cast %136 : vector<16x16x192xf32> to vector<256x192xf32>
    %138 = arith.truncf %137 : vector<256x192xf32> to vector<256x192xbf16>
    %c1_110 = arith.constant 1 : index
    %c0_111 = arith.constant 0 : index
    %c0_112 = arith.constant 0 : index
    %c0_113 = arith.constant 0 : index
    %139 = vector.load %arg3[%c1_110, %c0_111, %c0_112, %c0_113] : memref<3x3x192x64xbf16, #tpu.memory_space<vmem>>, vector<1x1x192x64xbf16>
    %140 = vector.shape_cast %139 : vector<1x1x192x64xbf16> to vector<192x64xbf16>
    %cst_114 = arith.constant dense<0.000000e+00> : vector<256x64xf32>
    %141 = tpu.matmul %138, %140, %cst_114 {dimension_numbers = #tpu.dot_dimension_numbers<[1], [0], [0], [1], [0, 0, 1, 1], [], []>} : vector<256x192xbf16>, vector<192x64xbf16>, vector<256x64xf32> -> vector<256x64xf32>
    %142 = arith.addf %135, %141 : vector<256x64xf32>
    %c1_115 = arith.constant 1 : index
    %c0_116 = arith.constant 0 : index
    %c0_117 = arith.constant 0 : index
    %143 = vector.load %arg10[%c1_115, %c0_116, %c0_117] : memref<18x16x192xf32, #tpu.memory_space<vmem>>, vector<16x16x192xf32>
    %144 = vector.shape_cast %143 : vector<16x16x192xf32> to vector<256x192xf32>
    %145 = arith.truncf %144 : vector<256x192xf32> to vector<256x192xbf16>
    %c1_118 = arith.constant 1 : index
    %c1_119 = arith.constant 1 : index
    %c0_120 = arith.constant 0 : index
    %c0_121 = arith.constant 0 : index
    %146 = vector.load %arg3[%c1_118, %c1_119, %c0_120, %c0_121] : memref<3x3x192x64xbf16, #tpu.memory_space<vmem>>, vector<1x1x192x64xbf16>
    %147 = vector.shape_cast %146 : vector<1x1x192x64xbf16> to vector<192x64xbf16>
    %cst_122 = arith.constant dense<0.000000e+00> : vector<256x64xf32>
    %148 = tpu.matmul %145, %147, %cst_122 {dimension_numbers = #tpu.dot_dimension_numbers<[1], [0], [0], [1], [0, 0, 1, 1], [], []>} : vector<256x192xbf16>, vector<192x64xbf16>, vector<256x64xf32> -> vector<256x64xf32>
    %149 = arith.addf %142, %148 : vector<256x64xf32>
    %c2_123 = arith.constant 2 : index
    %c0_124 = arith.constant 0 : index
    %c0_125 = arith.constant 0 : index
    %150 = vector.load %arg10[%c2_123, %c0_124, %c0_125] : memref<18x16x192xf32, #tpu.memory_space<vmem>>, vector<16x16x192xf32>
    %151 = vector.shape_cast %150 : vector<16x16x192xf32> to vector<256x192xf32>
    %152 = arith.truncf %151 : vector<256x192xf32> to vector<256x192xbf16>
    %c1_126 = arith.constant 1 : index
    %c2_127 = arith.constant 2 : index
    %c0_128 = arith.constant 0 : index
    %c0_129 = arith.constant 0 : index
    %153 = vector.load %arg3[%c1_126, %c2_127, %c0_128, %c0_129] : memref<3x3x192x64xbf16, #tpu.memory_space<vmem>>, vector<1x1x192x64xbf16>
    %154 = vector.shape_cast %153 : vector<1x1x192x64xbf16> to vector<192x64xbf16>
    %cst_130 = arith.constant dense<0.000000e+00> : vector<256x64xf32>
    %155 = tpu.matmul %152, %154, %cst_130 {dimension_numbers = #tpu.dot_dimension_numbers<[1], [0], [0], [1], [0, 0, 1, 1], [], []>} : vector<256x192xbf16>, vector<192x64xbf16>, vector<256x64xf32> -> vector<256x64xf32>
    %156 = arith.addf %149, %155 : vector<256x64xf32>
    %cst_131 = arith.constant 0.000000e+00 : f32
    %157 = vector.broadcast %cst_131 : f32 to vector<256x64xf32>
    %158 = arith.cmpf ogt, %156, %157 : vector<256x64xf32>
    %159 = vector.broadcast %125 : f32 to vector<256x64xf32>
    %160 = arith.mulf %159, %156 : vector<256x64xf32>
    %161 = arith.select %158, %156, %160 : vector<256x64xi1>, vector<256x64xf32>
    %c1_132 = arith.constant 1 : index
    %c1_133 = arith.constant 1 : index
    %c0_134 = arith.constant 0 : index
    %162 = vector.load %arg8[%c1_132, %c1_133, %c0_134] : memref<18x18x64xf32, #tpu.memory_space<vmem>>, vector<16x16x64xf32>
    %163 = vector.shape_cast %161 : vector<256x64xf32> to vector<16x16x64xf32>
    %164 = arith.addf %162, %163 : vector<16x16x64xf32>
    %c1_135 = arith.constant 1 : index
    %c1_136 = arith.constant 1 : index
    %c0_137 = arith.constant 0 : index
    %165 = vector.load %arg9[%c1_135, %c1_136, %c0_137] : memref<18x18x64xf32, #tpu.memory_space<vmem>>, vector<16x16x64xf32>
    tpu.vector_store %arg9[%c1_135, %c1_136, %c0_137], %164 {strides = array<i32>} : memref<18x18x64xf32, #tpu.memory_space<vmem>>, vector<16x16x64xf32>,
    %c3_138 = arith.constant 3 : index
    %166 = memref.load %arg5[%c3_138] : memref<4xf32, #tpu.memory_space<smem>>
    %c0_139 = arith.constant 0 : index
    %c0_140 = arith.constant 0 : index
    %c0_141 = arith.constant 0 : index
    %167 = vector.load %arg9[%c0_139, %c0_140, %c0_141] : memref<18x18x64xf32, #tpu.memory_space<vmem>>, vector<18x18x64xf32>
    %168 = vector.extract_strided_slice %167 {offsets = [0, 0, 0], sizes = [18, 16, 64], strides = [1, 1, 1]} : vector<18x18x64xf32> to vector<18x16x64xf32>
    %c0_142 = arith.constant 0 : index
    %c0_143 = arith.constant 0 : index
    %c0_144 = arith.constant 0 : index
    %169 = vector.load %arg10[%c0_142, %c0_143, %c0_144] : memref<18x16x192xf32, #tpu.memory_space<vmem>>, vector<18x16x64xf32>
    tpu.vector_store %arg10[%c0_142, %c0_143, %c0_144], %168 {strides = array<i32>} : memref<18x16x192xf32, #tpu.memory_space<vmem>>, vector<18x16x64xf32>,
    %170 = vector.extract_strided_slice %167 {offsets = [0, 1, 0], sizes = [18, 16, 64], strides = [1, 1, 1]} : vector<18x18x64xf32> to vector<18x16x64xf32>
    %c0_145 = arith.constant 0 : index
    %c0_146 = arith.constant 0 : index
    %c64_147 = arith.constant 64 : index
    %171 = vector.load %arg10[%c0_145, %c0_146, %c64_147] : memref<18x16x192xf32, #tpu.memory_space<vmem>>, vector<18x16x64xf32>
    tpu.vector_store %arg10[%c0_145, %c0_146, %c64_147], %170 {strides = array<i32>} : memref<18x16x192xf32, #tpu.memory_space<vmem>>, vector<18x16x64xf32>,
    %172 = vector.extract_strided_slice %167 {offsets = [0, 2, 0], sizes = [18, 16, 64], strides = [1, 1, 1]} : vector<18x18x64xf32> to vector<18x16x64xf32>
    %c0_148 = arith.constant 0 : index
    %c0_149 = arith.constant 0 : index
    %c128_150 = arith.constant 128 : index
    %173 = vector.load %arg10[%c0_148, %c0_149, %c128_150] : memref<18x16x192xf32, #tpu.memory_space<vmem>>, vector<18x16x64xf32>
    tpu.vector_store %arg10[%c0_148, %c0_149, %c128_150], %172 {strides = array<i32>} : memref<18x16x192xf32, #tpu.memory_space<vmem>>, vector<18x16x64xf32>,
    %174 = vector.extract_strided_slice %10 {offsets = [3, 0], sizes = [1, 64], strides = [1, 1]} : vector<4x64xf32> to vector<1x64xf32>
    %175 = vector.shape_cast %174 : vector<1x64xf32> to vector<1x64xf32>
    %176 = vector.broadcast %175 : vector<1x64xf32> to vector<256x64xf32>
    %c0_151 = arith.constant 0 : index
    %c0_152 = arith.constant 0 : index
    %c0_153 = arith.constant 0 : index
    %177 = vector.load %arg10[%c0_151, %c0_152, %c0_153] : memref<18x16x192xf32, #tpu.memory_space<vmem>>, vector<16x16x192xf32>
    %178 = vector.shape_cast %177 : vector<16x16x192xf32> to vector<256x192xf32>
    %179 = arith.truncf %178 : vector<256x192xf32> to vector<256x192xbf16>
    %c2_154 = arith.constant 2 : index
    %c0_155 = arith.constant 0 : index
    %c0_156 = arith.constant 0 : index
    %c0_157 = arith.constant 0 : index
    %180 = vector.load %arg3[%c2_154, %c0_155, %c0_156, %c0_157] : memref<3x3x192x64xbf16, #tpu.memory_space<vmem>>, vector<1x1x192x64xbf16>
    %181 = vector.shape_cast %180 : vector<1x1x192x64xbf16> to vector<192x64xbf16>
    %cst_158 = arith.constant dense<0.000000e+00> : vector<256x64xf32>
    %182 = tpu.matmul %179, %181, %cst_158 {dimension_numbers = #tpu.dot_dimension_numbers<[1], [0], [0], [1], [0, 0, 1, 1], [], []>} : vector<256x192xbf16>, vector<192x64xbf16>, vector<256x64xf32> -> vector<256x64xf32>
    %183 = arith.addf %176, %182 : vector<256x64xf32>
    %c1_159 = arith.constant 1 : index
    %c0_160 = arith.constant 0 : index
    %c0_161 = arith.constant 0 : index
    %184 = vector.load %arg10[%c1_159, %c0_160, %c0_161] : memref<18x16x192xf32, #tpu.memory_space<vmem>>, vector<16x16x192xf32>
    %185 = vector.shape_cast %184 : vector<16x16x192xf32> to vector<256x192xf32>
    %186 = arith.truncf %185 : vector<256x192xf32> to vector<256x192xbf16>
    %c2_162 = arith.constant 2 : index
    %c1_163 = arith.constant 1 : index
    %c0_164 = arith.constant 0 : index
    %c0_165 = arith.constant 0 : index
    %187 = vector.load %arg3[%c2_162, %c1_163, %c0_164, %c0_165] : memref<3x3x192x64xbf16, #tpu.memory_space<vmem>>, vector<1x1x192x64xbf16>
    %188 = vector.shape_cast %187 : vector<1x1x192x64xbf16> to vector<192x64xbf16>
    %cst_166 = arith.constant dense<0.000000e+00> : vector<256x64xf32>
    %189 = tpu.matmul %186, %188, %cst_166 {dimension_numbers = #tpu.dot_dimension_numbers<[1], [0], [0], [1], [0, 0, 1, 1], [], []>} : vector<256x192xbf16>, vector<192x64xbf16>, vector<256x64xf32> -> vector<256x64xf32>
    %190 = arith.addf %183, %189 : vector<256x64xf32>
    %c2_167 = arith.constant 2 : index
    %c0_168 = arith.constant 0 : index
    %c0_169 = arith.constant 0 : index
    %191 = vector.load %arg10[%c2_167, %c0_168, %c0_169] : memref<18x16x192xf32, #tpu.memory_space<vmem>>, vector<16x16x192xf32>
    %192 = vector.shape_cast %191 : vector<16x16x192xf32> to vector<256x192xf32>
    %193 = arith.truncf %192 : vector<256x192xf32> to vector<256x192xbf16>
    %c2_170 = arith.constant 2 : index
    %c2_171 = arith.constant 2 : index
    %c0_172 = arith.constant 0 : index
    %c0_173 = arith.constant 0 : index
    %194 = vector.load %arg3[%c2_170, %c2_171, %c0_172, %c0_173] : memref<3x3x192x64xbf16, #tpu.memory_space<vmem>>, vector<1x1x192x64xbf16>
    %195 = vector.shape_cast %194 : vector<1x1x192x64xbf16> to vector<192x64xbf16>
    %cst_174 = arith.constant dense<0.000000e+00> : vector<256x64xf32>
    %196 = tpu.matmul %193, %195, %cst_174 {dimension_numbers = #tpu.dot_dimension_numbers<[1], [0], [0], [1], [0, 0, 1, 1], [], []>} : vector<256x192xbf16>, vector<192x64xbf16>, vector<256x64xf32> -> vector<256x64xf32>
    %197 = arith.addf %190, %196 : vector<256x64xf32>
    %cst_175 = arith.constant 0.000000e+00 : f32
    %198 = vector.broadcast %cst_175 : f32 to vector<256x64xf32>
    %199 = arith.cmpf ogt, %197, %198 : vector<256x64xf32>
    %200 = vector.broadcast %166 : f32 to vector<256x64xf32>
    %201 = arith.mulf %200, %197 : vector<256x64xf32>
    %202 = arith.select %199, %197, %201 : vector<256x64xi1>, vector<256x64xf32>
    %203 = vector.shape_cast %202 : vector<256x64xf32> to vector<1x16x16x64xf32>
    %c0_176 = arith.constant 0 : index
    %c0_177 = arith.constant 0 : index
    %c0_178 = arith.constant 0 : index
    %c0_179 = arith.constant 0 : index
    %204 = vector.load %arg6[%c0_176, %c0_177, %c0_178, %c0_179] : memref<1x16x16x64xf32, #tpu.memory_space<vmem>>, vector<1x16x16x64xf32>
    tpu.vector_store %arg6[%c0_176, %c0_177, %c0_178, %c0_179], %203 {strides = array<i32>} : memref<1x16x16x64xf32, #tpu.memory_space<vmem>>, vector<1x16x16x64xf32>,
    return
  }
  func.func @transform_0(%arg0: i32) -> (i32, i32, i32, i32) {
    %c0_i32 = arith.constant 0 : i32
    %c0_i32_0 = arith.constant 0 : i32
    %c0_i32_1 = arith.constant 0 : i32
    %c0_i32_2 = arith.constant 0 : i32
    return %arg0, %c0_i32, %c0_i32_0, %c0_i32_1 : i32, i32, i32, i32
  }
  func.func @transform_1(%arg0: i32) -> (i32, i32, i32) {
    %c0_i32 = arith.constant 0 : i32
    %c0_i32_0 = arith.constant 0 : i32
    %c0_i32_1 = arith.constant 0 : i32
    %c0_i32_2 = arith.constant 0 : i32
    return %c0_i32, %c0_i32_0, %c0_i32_1 : i32, i32, i32
  }
  func.func @transform_2(%arg0: i32) -> (i32, i32, i32, i32) {
    %c0_i32 = arith.constant 0 : i32
    %c0_i32_0 = arith.constant 0 : i32
    %c0_i32_1 = arith.constant 0 : i32
    %c0_i32_2 = arith.constant 0 : i32
    %c0_i32_3 = arith.constant 0 : i32
    return %c0_i32, %c0_i32_0, %c0_i32_1, %c0_i32_2 : i32, i32, i32, i32
  }
  func.func @transform_3(%arg0: i32) -> (i32, i32) {
    %c0_i32 = arith.constant 0 : i32
    %c0_i32_0 = arith.constant 0 : i32
    %c0_i32_1 = arith.constant 0 : i32
    return %c0_i32, %c0_i32_0 : i32, i32
  }
  func.func @transform_4(%arg0: i32) -> i32 {
    %c0_i32 = arith.constant 0 : i32
    %c0_i32_0 = arith.constant 0 : i32
    return %c0_i32 : i32
  }
  func.func @transform_5(%arg0: i32) -> (i32, i32, i32, i32) {
    %c0_i32 = arith.constant 0 : i32
    %c0_i32_0 = arith.constant 0 : i32
    %c0_i32_1 = arith.constant 0 : i32
    %c0_i32_2 = arith.constant 0 : i32
    return %arg0, %c0_i32, %c0_i32_0, %c0_i32_1 : i32, i32, i32, i32
  }
}

</mosaic_0001>

<llo_original>
// kernel: tpu_custom_call.1
$region0: #{tpu_custom_call.1}
  #allocation0 [shape = 'u32[]', space=smem, size = 0x4, offset = 0x4, fixed_abs, tag = 'smem constant byte address 0x4 - core index']
  #allocation1 [shape = 'u32[144,128]{1,0:T(1,128)}', space=vmem, size = 0x12000, scoped, tag = 'internal scratch']
  #allocation2 [shape = 'f32[18,18,4]{2,1,0:T(8,128)}', space=vmem, size = 0x36000, scoped, tag = 'scratch operand']
  #allocation3 [shape = 'f32[18,18,64]{2,1,0:T(8,128)}', space=vmem, size = 0x36000, scoped, tag = 'scratch operand']
  #allocation4 [shape = 'f32[18,18,64]{2,1,0:T(8,128)}', space=vmem, size = 0x36000, scoped, tag = 'scratch operand']
  #allocation5 [shape = 'f32[18,16,192]{2,1,0:T(8,128)}', space=vmem, size = 0x48000, scoped, tag = 'scratch operand']
  %s0 = inlined_call_operand.vmem [shape: bf16[2,16,16,4], index: 0, kind: input, shape index: {}]
  %s1 = inlined_call_operand.vmem [shape: bf16[9,4,64], index: 1, kind: input, shape index: {}]
  %s2 = inlined_call_operand.vmem [shape: bf16[3,3,192,64], index: 2, kind: input, shape index: {}]
  %s3 = inlined_call_operand.vmem [shape: f32[4,64], index: 3, kind: input, shape index: {}]
  %s4 = inlined_call_operand.vmem [shape: f32[4], index: 4, kind: input, shape index: {}]
  %s5 = inlined_call_operand.hbm [shape: f32[2,16,16,64], index: 5, kind: output, shape index: {}]
  %s6 = sld [smem:[#allocation0]]
  $region57: #{tpu_custom_call.1} parent=0
    _
  %s8 = ssub.s32 1, %s6
  %s9 = scalar_select 0, %s8, %s6
  $region1: #{tpu_custom_call.1} parent=0
    #allocation6 [shape = 'u8[512]{0}', space=smem, size = 0x200, scoped, tag = 'input window, operand 4, single buffered']
    #allocation7 [shape = 's32[2]{0}', space=sflag, size = 0x8, scoped, tag = 'scoped memory for tpu_custom_call.1']
    #allocation8 [shape = 's32[2]{0}', space=sflag, size = 0x8, scoped, tag = 'scoped memory for tpu_custom_call.1']
    #allocation9 [shape = 'u8[262144]{0}', space=vmem, size = 0x40000, scoped, tag = 'output window, operand 0']
    %10 = vsyncpa [#allocation8], 0
    %11 = vsyncpa [#allocation7], 0
    %s12 = scalar_lea.sflag [#allocation7], 1
    %13 = vsyncpa %s12, 0
    loop: start=0, step=1, limit=4
    $region2: #{tpu_custom_call.1} parent=1 // loop_pre_header
      _
    $region3: #{tpu_custom_call.1} parent=1 // loop_header
      %s15 = sphi 0, %s19
      %p16 = scmp.ge.s32.totalorder %s15, 4
      %s25 = sphi 0, %s27
      %s28 = sphi 0, %s25
      %s29 = sphi 0, %s28
      %s45 = sphi 0, %s29
      %s49 = sphi 0, %s49
      %s51 = sphi 0, %s49
      %s52 = sphi 0, %s51
      %s66 = sphi 0, %s52
      %s70 = sphi 0, %s70
      %s72 = sphi 0, %s70
      %s73 = sphi 0, %s72
      %s87 = sphi 0, %s73
      %s91 = sphi 0, %s91
      %s93 = sphi 0, %s91
      %s94 = sphi 0, %s93
      %s108 = sphi 0, %s94
      %s112 = sphi 0, %s112
      %s114 = sphi 0, %s112
      %s115 = sphi 0, %s114
      %s129 = sphi 0, %s115
      %s135 = sphi 0, %s137
      %s138 = sphi 0, %s135
      %s139 = sphi 0, %s138
      %s155 = sphi 0, %s139
    $region4: #{tpu_custom_call.1} parent=1 // loop_header_branch
      %18 = sbr.rel (%p16) target = $region8
    $region5: #{tpu_custom_call.1} parent=1 // loop_body
      %s20 = ssub.s32 %s15, 1
      %s21 = ssub.s32 %s15, 2
      %s22 = sadd.s32 %s15, 1
      %s23 = ssub.s32 %s15, %s22
      %p24 = scmp.eq.s32.totalorder %s23, 0
      %s26 = sadd.s32 %s25, 1
      %s27 = scalar_select %p24, %s25, %s26
      %p30 = pneg %p24
      %p31 = scmp.eq.s32.totalorder %s15, 1
      %p32 = por %p30, %p31
      %p33 = scmp.ne.s32.totalorder %s25, %s28
      %p34 = scmp.eq.s32.totalorder %s15, 0
      %p35 = por %p33, %p34
      %p36 = scmp.ne.s32.totalorder %s25, %s28
      %p37 = scmp.eq.s32.totalorder %s20, 1
      %p38 = por %p36, %p37
      %p39 = scmp.ne.s32.totalorder %s28, %s29
      %p40 = scmp.eq.s32.totalorder %s20, 0
      %p41 = por %p39, %p40
      %p42 = scmp.ne.s32.totalorder %s28, %s29
      %p43 = scmp.eq.s32.totalorder %s21, 1
      %p44 = por %p42, %p43
      %p46 = scmp.ne.s32.totalorder %s29, %s45
      %p47 = scmp.eq.s32.totalorder %s21, 0
      %p48 = por %p46, %p47
      %s50 = sadd.s32 %s49, 1
      %p53 = scmp.eq.s32.totalorder %s15, 1
      %p54 = scmp.ne.s32.totalorder %s49, %s51
      %p55 = scmp.eq.s32.totalorder %s15, 0
      %p56 = por %p54, %p55
      %p57 = scmp.ne.s32.totalorder %s49, %s51
      %p58 = scmp.eq.s32.totalorder %s20, 1
      %p59 = por %p57, %p58
      %p60 = scmp.ne.s32.totalorder %s51, %s52
      %p61 = scmp.eq.s32.totalorder %s20, 0
      %p62 = por %p60, %p61
      %p63 = scmp.ne.s32.totalorder %s51, %s52
      %p64 = scmp.eq.s32.totalorder %s21, 1
      %p65 = por %p63, %p64
      %p67 = scmp.ne.s32.totalorder %s52, %s66
      %p68 = scmp.eq.s32.totalorder %s21, 0
      %p69 = por %p67, %p68
      %s71 = sadd.s32 %s70, 1
      %p74 = scmp.eq.s32.totalorder %s15, 1
      %p75 = scmp.ne.s32.totalorder %s70, %s72
      %p76 = scmp.eq.s32.totalorder %s15, 0
      %p77 = por %p75, %p76
      %p78 = scmp.ne.s32.totalorder %s70, %s72
      %p79 = scmp.eq.s32.totalorder %s20, 1
      %p80 = por %p78, %p79
      %p81 = scmp.ne.s32.totalorder %s72, %s73
      %p82 = scmp.eq.s32.totalorder %s20, 0
      %p83 = por %p81, %p82
      %p84 = scmp.ne.s32.totalorder %s72, %s73
      %p85 = scmp.eq.s32.totalorder %s21, 1
      %p86 = por %p84, %p85
      %p88 = scmp.ne.s32.totalorder %s73, %s87
      %p89 = scmp.eq.s32.totalorder %s21, 0
      %p90 = por %p88, %p89
      %s92 = sadd.s32 %s91, 1
      %p95 = scmp.eq.s32.totalorder %s15, 1
      %p96 = scmp.ne.s32.totalorder %s91, %s93
      %p97 = scmp.eq.s32.totalorder %s15, 0
      %p98 = por %p96, %p97
      %p99 = scmp.ne.s32.totalorder %s91, %s93
      %p100 = scmp.eq.s32.totalorder %s20, 1
      %p101 = por %p99, %p100
      %p102 = scmp.ne.s32.totalorder %s93, %s94
      %p103 = scmp.eq.s32.totalorder %s20, 0
      %p104 = por %p102, %p103
      %p105 = scmp.ne.s32.totalorder %s93, %s94
      %p106 = scmp.eq.s32.totalorder %s21, 1
      %p107 = por %p105, %p106
      %p109 = scmp.ne.s32.totalorder %s94, %s108
      %p110 = scmp.eq.s32.totalorder %s21, 0
      %p111 = por %p109, %p110
      %s113 = sadd.s32 %s112, 1
      %p116 = scmp.eq.s32.totalorder %s15, 1
      %p117 = scmp.ne.s32.totalorder %s112, %s114
      %p118 = scmp.eq.s32.totalorder %s15, 0
      %p119 = por %p117, %p118
      %p120 = scmp.ne.s32.totalorder %s112, %s114
      %p121 = scmp.eq.s32.totalorder %s20, 1
      %p122 = por %p120, %p121
      %p123 = scmp.ne.s32.totalorder %s114, %s115
      %p124 = scmp.eq.s32.totalorder %s20, 0
      %p125 = por %p123, %p124
      %p126 = scmp.ne.s32.totalorder %s114, %s115
      %p127 = scmp.eq.s32.totalorder %s21, 1
      %p128 = por %p126, %p127
      %p130 = scmp.ne.s32.totalorder %s115, %s129
      %p131 = scmp.eq.s32.totalorder %s21, 0
      %p132 = por %p130, %p131
      %s133 = ssub.s32 %s15, %s22
      %p134 = scmp.eq.s32.totalorder %s133, 0
      %s136 = sadd.s32 %s135, 1
      %s137 = scalar_select %p134, %s135, %s136
      %p140 = pneg %p134
      %p141 = scmp.eq.s32.totalorder %s15, 1
      %p142 = por %p140, %p141
      %p143 = scmp.ne.s32.totalorder %s135, %s138
      %p144 = scmp.eq.s32.totalorder %s15, 0
      %p145 = por %p143, %p144
      %p146 = scmp.ne.s32.totalorder %s135, %s138
      %p147 = scmp.eq.s32.totalorder %s20, 1
      %p148 = por %p146, %p147
      %p149 = scmp.ne.s32.totalorder %s138, %s139
      %p150 = scmp.eq.s32.totalorder %s20, 0
      %p151 = por %p149, %p150
      %p152 = scmp.ne.s32.totalorder %s138, %s139
      %p153 = scmp.eq.s32.totalorder %s21, 1
      %p154 = por %p152, %p153
      %p156 = scmp.ne.s32.totalorder %s139, %s155
      %p157 = scmp.eq.s32.totalorder %s21, 0
      %p158 = por %p156, %p157
      %p159 = scmp.le.s32.totalorder 1, %s15
      %p160 = scmp.lt.s32.totalorder %s15, 3
      %p161 = pnand %p159, %p160
      %p162 = pneg %p161
      // Predicated region
      $region9: #{tpu_custom_call.1} parent=5 // pred_check
        _
      $region10: #{tpu_custom_call.1} parent=5 // pred_check_branch
        %164 = sbr.rel (%p161) target = $region12
      $region11: #{tpu_custom_call.1} parent=5 // pred_region
        %s165 = ssub.s32 %s15, 1
        // Predicated region
        $region13: #{tpu_custom_call.1} parent=11 // pred_check
          %p166 = pneg %p62
        $region14: #{tpu_custom_call.1} parent=11 // pred_check_branch
          %168 = sbr.rel (%p166) target = $region16
        $region15: #{tpu_custom_call.1} parent=11 // pred_region
          _
        $region16: #{tpu_custom_call.1} parent=11 // pred_fallthru
          _
        // Predicated region
        $region17: #{tpu_custom_call.1} parent=11 // pred_check
          %p169 = pneg %p83
        $region18: #{tpu_custom_call.1} parent=11 // pred_check_branch
          %171 = sbr.rel (%p169) target = $region20
        $region19: #{tpu_custom_call.1} parent=11 // pred_region
          _
        $region20: #{tpu_custom_call.1} parent=11 // pred_fallthru
          _
        // Predicated region
        $region21: #{tpu_custom_call.1} parent=11 // pred_check
          %p172 = pneg %p104
        $region22: #{tpu_custom_call.1} parent=11 // pred_check_branch
          %174 = sbr.rel (%p172) target = $region24
        $region23: #{tpu_custom_call.1} parent=11 // pred_region
          _
        $region24: #{tpu_custom_call.1} parent=11 // pred_fallthru
          _
        // Predicated region
        $region25: #{tpu_custom_call.1} parent=11 // pred_check
          %p175 = pneg %p125
        $region26: #{tpu_custom_call.1} parent=11 // pred_check_branch
          %177 = sbr.rel (%p175) target = $region28
        $region27: #{tpu_custom_call.1} parent=11 // pred_region
          %s179 = ssub.s32 16, 16
          %180 = vsyncadd [#allocation8], %s179
          %s182 = sshll.u32 %s4, 4
          %s183 = int_to_ptr.vmem [resolvable:$true] %s182
          %185 = dma.vmem_to_smem %s183, 16, [#allocation6], [#allocation8]
        $region28: #{tpu_custom_call.1} parent=11 // pred_fallthru
          _
      $region12: #{tpu_custom_call.1} parent=5 // pred_fallthru
        _
      %p186 = scmp.lt.s32.totalorder %s15, 2
      // Predicated region
      $region29: #{tpu_custom_call.1} parent=5 // pred_check
        %p187 = pneg %p186
      $region30: #{tpu_custom_call.1} parent=5 // pred_check_branch
        %189 = sbr.rel (%p187) target = $region32
      $region31: #{tpu_custom_call.1} parent=5 // pred_region
        // Predicated region
        $region33: #{tpu_custom_call.1} parent=31 // pred_check
          %p190 = pneg %p35
        $region34: #{tpu_custom_call.1} parent=31 // pred_check_branch
          %192 = sbr.rel (%p190) target = $region36
        $region35: #{tpu_custom_call.1} parent=31 // pred_region
          %p193 = scmp.lt.s32.totalorder %s15, 1
          %s194 = scalar_select %p193, %s15, 1
          %s195 = smul.addr %s194, 32
          %s196 = smul.addr %s195, 4
          %s197 = scalar_lea.vmem %s0, %s196
        $region36: #{tpu_custom_call.1} parent=31 // pred_fallthru
          _
      $region32: #{tpu_custom_call.1} parent=5 // pred_fallthru
        _
      %p198 = scmp.le.s32.totalorder 1, %s15
      %p199 = scmp.lt.s32.totalorder %s15, 3
      %p200 = pnand %p198, %p199
      %p201 = pneg %p200
      // Predicated region
      $region37: #{tpu_custom_call.1} parent=5 // pred_check
        _
      $region38: #{tpu_custom_call.1} parent=5 // pred_check_branch
        %203 = sbr.rel (%p200) target = $region40
      $region39: #{tpu_custom_call.1} parent=5 // pred_region
        %s204 = ssub.s32 %s15, 1
        // Predicated region
        $region41: #{tpu_custom_call.1} parent=39 // pred_check
          %p205 = pneg %p125
        $region42: #{tpu_custom_call.1} parent=39 // pred_check_branch
          %207 = sbr.rel (%p205) target = $region44
        $region43: #{tpu_custom_call.1} parent=39 // pred_region
          %208 = dma.done [#allocation8], 16
        $region44: #{tpu_custom_call.1} parent=39 // pred_fallthru
          _
        %209 = sfence
        %p210 = scmp.lt.s32.totalorder %s20, 1
        %s211 = scalar_select %p210, %s20, 1
        %s212 = smul.addr %s211, 32
        %s213 = smul.addr %s212, 4
        %s214 = scalar_lea.vmem %s0, %s213
        %p215 = pneg %p41
        %p216 = pneg %p38
        %p217 = pneg %p62
        %p218 = pneg %p59
        %p219 = pneg %p83
        %p220 = pneg %p80
        %p221 = pneg %p104
        %p222 = pneg %p101
        %p223 = pneg %p125
        %p224 = pneg %p122
        %p225 = pneg %p151
        %p226 = pneg %p148
        %s227 = sand.u32 %s138, 1
        %s228 = scalar_lea.sflag [#allocation7], %s227
        %s229 = sand.u32 %s138, 1
        %s230 = smul.addr %s229, 256
        %s231 = scalar_lea.vmem [#allocation9], %s230
        %p232 = scmp.lt.s32.totalorder %s20, 1
        %s233 = scalar_select %p232, %s20, 1
        %s234 = smul.addr %s233, 32
        %s235 = smul.addr %s234, 4
        %s236 = scalar_lea.vmem %s0, %s235
        %vm238 = vcmask 31744
        %239 = vst.msk [vmem:[#allocation2] sm:$0xff] %vm238, 0.0
        %240 = vst.msk [vmem:[#allocation2 + $0x8] sm:$0xff] %vm238, 0.0
        %vm241 = vcmask 25600
        %242 = vst.msk [vmem:[#allocation2 + $0x10] sm:$0x3] %vm241, 0.0
        %243 = vst.msk [vmem:[#allocation2 + $0x18] sm:$0xff] %vm238, 0.0
        %244 = vst.msk [vmem:[#allocation2 + $0x20] sm:$0xff] %vm238, 0.0
        %245 = vst.msk [vmem:[#allocation2 + $0x28] sm:$0x3] %vm241, 0.0
        %246 = vst.msk [vmem:[#allocation2 + $0x30] sm:$0xff] %vm238, 0.0
        %247 = vst.msk [vmem:[#allocation2 + $0x38] sm:$0xff] %vm238, 0.0
        %248 = vst.msk [vmem:[#allocation2 + $0x40] sm:$0x3] %vm241, 0.0
        %249 = vst.msk [vmem:[#allocation2 + $0x48] sm:$0xff] %vm238, 0.0
        %250 = vst.msk [vmem:[#allocation2 + $0x50] sm:$0xff] %vm238, 0.0
        %251 = vst.msk [vmem:[#allocation2 + $0x58] sm:$0x3] %vm241, 0.0
        %252 = vst.msk [vmem:[#allocation2 + $0x60] sm:$0xff] %vm238, 0.0
        %253 = vst.msk [vmem:[#allocation2 + $0x68] sm:$0xff] %vm238, 0.0
        %254 = vst.msk [vmem:[#allocation2 + $0x70] sm:$0x3] %vm241, 0.0
        %255 = vst.msk [vmem:[#allocation2 + $0x78] sm:$0xff] %vm238, 0.0
        %256 = vst.msk [vmem:[#allocation2 + $0x80] sm:$0xff] %vm238, 0.0
        %257 = vst.msk [vmem:[#allocation2 + $0x88] sm:$0x3] %vm241, 0.0
        %258 = vst.msk [vmem:[#allocation2 + $0x90] sm:$0xff] %vm238, 0.0
        %259 = vst.msk [vmem:[#allocation2 + $0x98] sm:$0xff] %vm238, 0.0
        %260 = vst.msk [vmem:[#allocation2 + $0xa0] sm:$0x3] %vm241, 0.0
        %261 = vst.msk [vmem:[#allocation2 + $0xa8] sm:$0xff] %vm238, 0.0
        %262 = vst.msk [vmem:[#allocation2 + $0xb0] sm:$0xff] %vm238, 0.0
        %263 = vst.msk [vmem:[#allocation2 + $0xb8] sm:$0x3] %vm241, 0.0
        %264 = vst.msk [vmem:[#allocation2 + $0xc0] sm:$0xff] %vm238, 0.0
        %265 = vst.msk [vmem:[#allocation2 + $0xc8] sm:$0xff] %vm238, 0.0
        %266 = vst.msk [vmem:[#allocation2 + $0xd0] sm:$0x3] %vm241, 0.0
        %267 = vst.msk [vmem:[#allocation2 + $0xd8] sm:$0xff] %vm238, 0.0
        %268 = vst.msk [vmem:[#allocation2 + $0xe0] sm:$0xff] %vm238, 0.0
        %269 = vst.msk [vmem:[#allocation2 + $0xe8] sm:$0x3] %vm241, 0.0
        %270 = vst.msk [vmem:[#allocation2 + $0xf0] sm:$0xff] %vm238, 0.0
        %271 = vst.msk [vmem:[#allocation2 + $0xf8] sm:$0xff] %vm238, 0.0
        %272 = vst.msk [vmem:[#allocation2 + $0x100] sm:$0x3] %vm241, 0.0
        %273 = vst.msk [vmem:[#allocation2 + $0x108] sm:$0xff] %vm238, 0.0
        %274 = vst.msk [vmem:[#allocation2 + $0x110] sm:$0xff] %vm238, 0.0
        %275 = vst.msk [vmem:[#allocation2 + $0x118] sm:$0x3] %vm241, 0.0
        %276 = vst.msk [vmem:[#allocation2 + $0x120] sm:$0xff] %vm238, 0.0
        %277 = vst.msk [vmem:[#allocation2 + $0x128] sm:$0xff] %vm238, 0.0
        %278 = vst.msk [vmem:[#allocation2 + $0x130] sm:$0x3] %vm241, 0.0
        %279 = vst.msk [vmem:[#allocation2 + $0x138] sm:$0xff] %vm238, 0.0
        %280 = vst.msk [vmem:[#allocation2 + $0x140] sm:$0xff] %vm238, 0.0
        %281 = vst.msk [vmem:[#allocation2 + $0x148] sm:$0x3] %vm241, 0.0
        %282 = vst.msk [vmem:[#allocation2 + $0x150] sm:$0xff] %vm238, 0.0
        %283 = vst.msk [vmem:[#allocation2 + $0x158] sm:$0xff] %vm238, 0.0
        %284 = vst.msk [vmem:[#allocation2 + $0x160] sm:$0x3] %vm241, 0.0
        %285 = vst.msk [vmem:[#allocation2 + $0x168] sm:$0xff] %vm238, 0.0
        %286 = vst.msk [vmem:[#allocation2 + $0x170] sm:$0xff] %vm238, 0.0
        %287 = vst.msk [vmem:[#allocation2 + $0x178] sm:$0x3] %vm241, 0.0
        %288 = vst.msk [vmem:[#allocation2 + $0x180] sm:$0xff] %vm238, 0.0
        %289 = vst.msk [vmem:[#allocation2 + $0x188] sm:$0xff] %vm238, 0.0
        %290 = vst.msk [vmem:[#allocation2 + $0x190] sm:$0x3] %vm241, 0.0
        %291 = vst.msk [vmem:[#allocation2 + $0x198] sm:$0xff] %vm238, 0.0
        %292 = vst.msk [vmem:[#allocation2 + $0x1a0] sm:$0xff] %vm238, 0.0
        %293 = vst.msk [vmem:[#allocation2 + $0x1a8] sm:$0x3] %vm241, 0.0
        %vm294 = vcmask 523264
        %295 = vst.msk [vmem:[#allocation3] sm:$0xff] %vm294, 0.0
        %296 = vst.msk [vmem:[#allocation3 + $0x8] sm:$0xff] %vm294, 0.0
        %vm297 = vcmask 517120
        %298 = vst.msk [vmem:[#allocation3 + $0x10] sm:$0x3] %vm297, 0.0
        %299 = vst.msk [vmem:[#allocation3 + $0x18] sm:$0xff] %vm294, 0.0
        %300 = vst.msk [vmem:[#allocation3 + $0x20] sm:$0xff] %vm294, 0.0
        %301 = vst.msk [vmem:[#allocation3 + $0x28] sm:$0x3] %vm297, 0.0
        %302 = vst.msk [vmem:[#allocation3 + $0x30] sm:$0xff] %vm294, 0.0
        %303 = vst.msk [vmem:[#allocation3 + $0x38] sm:$0xff] %vm294, 0.0
        %304 = vst.msk [vmem:[#allocation3 + $0x40] sm:$0x3] %vm297, 0.0
        %305 = vst.msk [vmem:[#allocation3 + $0x48] sm:$0xff] %vm294, 0.0
        %306 = vst.msk [vmem:[#allocation3 + $0x50] sm:$0xff] %vm294, 0.0
        %307 = vst.msk [vmem:[#allocation3 + $0x58] sm:$0x3] %vm297, 0.0
        %308 = vst.msk [vmem:[#allocation3 + $0x60] sm:$0xff] %vm294, 0.0
        %309 = vst.msk [vmem:[#allocation3 + $0x68] sm:$0xff] %vm294, 0.0
        %310 = vst.msk [vmem:[#allocation3 + $0x70] sm:$0x3] %vm297, 0.0
        %311 = vst.msk [vmem:[#allocation3 + $0x78] sm:$0xff] %vm294, 0.0
        %312 = vst.msk [vmem:[#allocation3 + $0x80] sm:$0xff] %vm294, 0.0
        %313 = vst.msk [vmem:[#allocation3 + $0x88] sm:$0x3] %vm297, 0.0
        %314 = vst.msk [vmem:[#allocation3 + $0x90] sm:$0xff] %vm294, 0.0
        %315 = vst.msk [vmem:[#allocation3 + $0x98] sm:$0xff] %vm294, 0.0
        %316 = vst.msk [vmem:[#allocation3 + $0xa0] sm:$0x3] %vm297, 0.0
        %317 = vst.msk [vmem:[#allocation3 + $0xa8] sm:$0xff] %vm294, 0.0
        %318 = vst.msk [vmem:[#allocation3 + $0xb0] sm:$0xff] %vm294, 0.0
        %319 = vst.msk [vmem:[#allocation3 + $0xb8] sm:$0x3] %vm297, 0.0
        %320 = vst.msk [vmem:[#allocation3 + $0xc0] sm:$0xff] %vm294, 0.0
        %321 = vst.msk [vmem:[#allocation3 + $0xc8] sm:$0xff] %vm294, 0.0
        %322 = vst.msk [vmem:[#allocation3 + $0xd0] sm:$0x3] %vm297, 0.0
        %323 = vst.msk [vmem:[#allocation3 + $0xd8] sm:$0xff] %vm294, 0.0
        %324 = vst.msk [vmem:[#allocation3 + $0xe0] sm:$0xff] %vm294, 0.0
        %325 = vst.msk [vmem:[#allocation3 + $0xe8] sm:$0x3] %vm297, 0.0
        %326 = vst.msk [vmem:[#allocation3 + $0xf0] sm:$0xff] %vm294, 0.0
        %327 = vst.msk [vmem:[#allocation3 + $0xf8] sm:$0xff] %vm294, 0.0
        %328 = vst.msk [vmem:[#allocation3 + $0x100] sm:$0x3] %vm297, 0.0
        %329 = vst.msk [vmem:[#allocation3 + $0x108] sm:$0xff] %vm294, 0.0
        %330 = vst.msk [vmem:[#allocation3 + $0x110] sm:$0xff] %vm294, 0.0
        %331 = vst.msk [vmem:[#allocation3 + $0x118] sm:$0x3] %vm297, 0.0
        %332 = vst.msk [vmem:[#allocation3 + $0x120] sm:$0xff] %vm294, 0.0
        %333 = vst.msk [vmem:[#allocation3 + $0x128] sm:$0xff] %vm294, 0.0
        %334 = vst.msk [vmem:[#allocation3 + $0x130] sm:$0x3] %vm297, 0.0
        %335 = vst.msk [vmem:[#allocation3 + $0x138] sm:$0xff] %vm294, 0.0
        %336 = vst.msk [vmem:[#allocation3 + $0x140] sm:$0xff] %vm294, 0.0
        %337 = vst.msk [vmem:[#allocation3 + $0x148] sm:$0x3] %vm297, 0.0
        %338 = vst.msk [vmem:[#allocation3 + $0x150] sm:$0xff] %vm294, 0.0
        %339 = vst.msk [vmem:[#allocation3 + $0x158] sm:$0xff] %vm294, 0.0
        %340 = vst.msk [vmem:[#allocation3 + $0x160] sm:$0x3] %vm297, 0.0
        %341 = vst.msk [vmem:[#allocation3 + $0x168] sm:$0xff] %vm294, 0.0
        %342 = vst.msk [vmem:[#allocation3 + $0x170] sm:$0xff] %vm294, 0.0
        %343 = vst.msk [vmem:[#allocation3 + $0x178] sm:$0x3] %vm297, 0.0
        %344 = vst.msk [vmem:[#allocation3 + $0x180] sm:$0xff] %vm294, 0.0
        %345 = vst.msk [vmem:[#allocation3 + $0x188] sm:$0xff] %vm294, 0.0
        %346 = vst.msk [vmem:[#allocation3 + $0x190] sm:$0x3] %vm297, 0.0
        %347 = vst.msk [vmem:[#allocation3 + $0x198] sm:$0xff] %vm294, 0.0
        %348 = vst.msk [vmem:[#allocation3 + $0x1a0] sm:$0xff] %vm294, 0.0
        %349 = vst.msk [vmem:[#allocation3 + $0x1a8] sm:$0x3] %vm297, 0.0
        %350 = vst.msk [vmem:[#allocation4] sm:$0xff] %vm294, 0.0
        %351 = vst.msk [vmem:[#allocation4 + $0x8] sm:$0xff] %vm294, 0.0
        %352 = vst.msk [vmem:[#allocation4 + $0x10] sm:$0x3] %vm297, 0.0
        %353 = vst.msk [vmem:[#allocation4 + $0x18] sm:$0xff] %vm294, 0.0
        %354 = vst.msk [vmem:[#allocation4 + $0x20] sm:$0xff] %vm294, 0.0
        %355 = vst.msk [vmem:[#allocation4 + $0x28] sm:$0x3] %vm297, 0.0
        %356 = vst.msk [vmem:[#allocation4 + $0x30] sm:$0xff] %vm294, 0.0
        %357 = vst.msk [vmem:[#allocation4 + $0x38] sm:$0xff] %vm294, 0.0
        %358 = vst.msk [vmem:[#allocation4 + $0x40] sm:$0x3] %vm297, 0.0
        %359 = vst.msk [vmem:[#allocation4 + $0x48] sm:$0xff] %vm294, 0.0
        %360 = vst.msk [vmem:[#allocation4 + $0x50] sm:$0xff] %vm294, 0.0
        %361 = vst.msk [vmem:[#allocation4 + $0x58] sm:$0x3] %vm297, 0.0
        %362 = vst.msk [vmem:[#allocation4 + $0x60] sm:$0xff] %vm294, 0.0
        %363 = vst.msk [vmem:[#allocation4 + $0x68] sm:$0xff] %vm294, 0.0
        %364 = vst.msk [vmem:[#allocation4 + $0x70] sm:$0x3] %vm297, 0.0
        %365 = vst.msk [vmem:[#allocation4 + $0x78] sm:$0xff] %vm294, 0.0
        %366 = vst.msk [vmem:[#allocation4 + $0x80] sm:$0xff] %vm294, 0.0
        %367 = vst.msk [vmem:[#allocation4 + $0x88] sm:$0x3] %vm297, 0.0
        %368 = vst.msk [vmem:[#allocation4 + $0x90] sm:$0xff] %vm294, 0.0
        %369 = vst.msk [vmem:[#allocation4 + $0x98] sm:$0xff] %vm294, 0.0
        %370 = vst.msk [vmem:[#allocation4 + $0xa0] sm:$0x3] %vm297, 0.0
        %371 = vst.msk [vmem:[#allocation4 + $0xa8] sm:$0xff] %vm294, 0.0
        %372 = vst.msk [vmem:[#allocation4 + $0xb0] sm:$0xff] %vm294, 0.0
        %373 = vst.msk [vmem:[#allocation4 + $0xb8] sm:$0x3] %vm297, 0.0
        %374 = vst.msk [vmem:[#allocation4 + $0xc0] sm:$0xff] %vm294, 0.0
        %375 = vst.msk [vmem:[#allocation4 + $0xc8] sm:$0xff] %vm294, 0.0
        %376 = vst.msk [vmem:[#allocation4 + $0xd0] sm:$0x3] %vm297, 0.0
        %377 = vst.msk [vmem:[#allocation4 + $0xd8] sm:$0xff] %vm294, 0.0
        %378 = vst.msk [vmem:[#allocation4 + $0xe0] sm:$0xff] %vm294, 0.0
        %379 = vst.msk [vmem:[#allocation4 + $0xe8] sm:$0x3] %vm297, 0.0
        %380 = vst.msk [vmem:[#allocation4 + $0xf0] sm:$0xff] %vm294, 0.0
        %381 = vst.msk [vmem:[#allocation4 + $0xf8] sm:$0xff] %vm294, 0.0
        %382 = vst.msk [vmem:[#allocation4 + $0x100] sm:$0x3] %vm297, 0.0
        %383 = vst.msk [vmem:[#allocation4 + $0x108] sm:$0xff] %vm294, 0.0
        %384 = vst.msk [vmem:[#allocation4 + $0x110] sm:$0xff] %vm294, 0.0
        %385 = vst.msk [vmem:[#allocation4 + $0x118] sm:$0x3] %vm297, 0.0
        %386 = vst.msk [vmem:[#allocation4 + $0x120] sm:$0xff] %vm294, 0.0
        %387 = vst.msk [vmem:[#allocation4 + $0x128] sm:$0xff] %vm294, 0.0
        %388 = vst.msk [vmem:[#allocation4 + $0x130] sm:$0x3] %vm297, 0.0
        %389 = vst.msk [vmem:[#allocation4 + $0x138] sm:$0xff] %vm294, 0.0
        %390 = vst.msk [vmem:[#allocation4 + $0x140] sm:$0xff] %vm294, 0.0
        %391 = vst.msk [vmem:[#allocation4 + $0x148] sm:$0x3] %vm297, 0.0
        %392 = vst.msk [vmem:[#allocation4 + $0x150] sm:$0xff] %vm294, 0.0
        %393 = vst.msk [vmem:[#allocation4 + $0x158] sm:$0xff] %vm294, 0.0
        %394 = vst.msk [vmem:[#allocation4 + $0x160] sm:$0x3] %vm297, 0.0
        %395 = vst.msk [vmem:[#allocation4 + $0x168] sm:$0xff] %vm294, 0.0
        %396 = vst.msk [vmem:[#allocation4 + $0x170] sm:$0xff] %vm294, 0.0
        %397 = vst.msk [vmem:[#allocation4 + $0x178] sm:$0x3] %vm297, 0.0
        %398 = vst.msk [vmem:[#allocation4 + $0x180] sm:$0xff] %vm294, 0.0
        %399 = vst.msk [vmem:[#allocation4 + $0x188] sm:$0xff] %vm294, 0.0
        %400 = vst.msk [vmem:[#allocation4 + $0x190] sm:$0x3] %vm297, 0.0
        %401 = vst.msk [vmem:[#allocation4 + $0x198] sm:$0xff] %vm294, 0.0
        %402 = vst.msk [vmem:[#allocation4 + $0x1a0] sm:$0xff] %vm294, 0.0
        %403 = vst.msk [vmem:[#allocation4 + $0x1a8] sm:$0x3] %vm297, 0.0
        %v404 = vld [vmem:[%s236] sm:$0xf]
        %v405 = vld [vmem:[%s236 + $0x4] sm:$0xf]
        %v406 = vld [vmem:[%s236 + $0x8] sm:$0xf]
        %v407 = vld [vmem:[%s236 + $0xc] sm:$0xf]
        %v408 = vld [vmem:[%s236 + $0x10] sm:$0xf]
        %v409 = vld [vmem:[%s236 + $0x14] sm:$0xf]
        %v410 = vld [vmem:[%s236 + $0x18] sm:$0xf]
        %v411 = vld [vmem:[%s236 + $0x1c] sm:$0xf]
        %v412 = vld [vmem:[%s236 + $0x20] sm:$0xf]
        %v413 = vld [vmem:[%s236 + $0x24] sm:$0xf]
        %v414 = vld [vmem:[%s236 + $0x28] sm:$0xf]
        %v415 = vld [vmem:[%s236 + $0x2c] sm:$0xf]
        %v416 = vld [vmem:[%s236 + $0x30] sm:$0xf]
        %v417 = vld [vmem:[%s236 + $0x34] sm:$0xf]
        %v418 = vld [vmem:[%s236 + $0x38] sm:$0xf]
        %v419 = vld [vmem:[%s236 + $0x3c] sm:$0xf]
        %v420 = vld [vmem:[%s236 + $0x40] sm:$0xf]
        %v421 = vld [vmem:[%s236 + $0x44] sm:$0xf]
        %v422 = vld [vmem:[%s236 + $0x48] sm:$0xf]
        %v423 = vld [vmem:[%s236 + $0x4c] sm:$0xf]
        %v424 = vld [vmem:[%s236 + $0x50] sm:$0xf]
        %v425 = vld [vmem:[%s236 + $0x54] sm:$0xf]
        %v426 = vld [vmem:[%s236 + $0x58] sm:$0xf]
        %v427 = vld [vmem:[%s236 + $0x5c] sm:$0xf]
        %v428 = vld [vmem:[%s236 + $0x60] sm:$0xf]
        %v429 = vld [vmem:[%s236 + $0x64] sm:$0xf]
        %v430 = vld [vmem:[%s236 + $0x68] sm:$0xf]
        %v431 = vld [vmem:[%s236 + $0x6c] sm:$0xf]
        %v432 = vld [vmem:[%s236 + $0x70] sm:$0xf]
        %v433 = vld [vmem:[%s236 + $0x74] sm:$0xf]
        %v434 = vld [vmem:[%s236 + $0x78] sm:$0xf]
        %v435 = vld [vmem:[%s236 + $0x7c] sm:$0xf]
        %v436 = vunpack.c.l.bf16 %v404
        %v437 = vunpack.c.l.bf16 %v405
        %v438 = vunpack.c.l.bf16 %v406
        %v439 = vunpack.c.l.bf16 %v407
        %v440 = vunpack.c.l.bf16 %v408
        %v441 = vunpack.c.l.bf16 %v409
        %v442 = vunpack.c.l.bf16 %v410
        %v443 = vunpack.c.l.bf16 %v411
        %v444 = vunpack.c.l.bf16 %v412
        %v445 = vunpack.c.l.bf16 %v413
        %v446 = vunpack.c.l.bf16 %v414
        %v447 = vunpack.c.l.bf16 %v415
        %v448 = vunpack.c.l.bf16 %v416
        %v449 = vunpack.c.l.bf16 %v417
        %v450 = vunpack.c.l.bf16 %v418
        %v451 = vunpack.c.l.bf16 %v419
        %v452 = vunpack.c.l.bf16 %v420
        %v453 = vunpack.c.l.bf16 %v421
        %v454 = vunpack.c.l.bf16 %v422
        %v455 = vunpack.c.l.bf16 %v423
        %v456 = vunpack.c.l.bf16 %v424
        %v457 = vunpack.c.l.bf16 %v425
        %v458 = vunpack.c.l.bf16 %v426
        %v459 = vunpack.c.l.bf16 %v427
        %v460 = vunpack.c.l.bf16 %v428
        %v461 = vunpack.c.l.bf16 %v429
        %v462 = vunpack.c.l.bf16 %v430
        %v463 = vunpack.c.l.bf16 %v431
        %v464 = vunpack.c.l.bf16 %v432
        %v465 = vunpack.c.l.bf16 %v433
        %v466 = vunpack.c.l.bf16 %v434
        %v467 = vunpack.c.l.bf16 %v435
        %s468 = scalar_lea.vmem [#allocation2], 24
        %469 = vst.msk [vmem:[%s468 + $0x1] sm:$0xff] %vm238, %v436
        %470 = vst.msk [vmem:[%s468 + $0x9] sm:$0xff] %vm238, %v437
        %471 = vst.msk [vmem:[%s468 + $0x19] sm:$0xff] %vm238, %v438
        %472 = vst.msk [vmem:[%s468 + $0x21] sm:$0xff] %vm238, %v439
        %473 = vst.msk [vmem:[%s468 + $0x31] sm:$0xff] %vm238, %v440
        %474 = vst.msk [vmem:[%s468 + $0x39] sm:$0xff] %vm238, %v441
        %475 = vst.msk [vmem:[%s468 + $0x49] sm:$0xff] %vm238, %v442
        %476 = vst.msk [vmem:[%s468 + $0x51] sm:$0xff] %vm238, %v443
        %477 = vst.msk [vmem:[%s468 + $0x61] sm:$0xff] %vm238, %v444
        %478 = vst.msk [vmem:[%s468 + $0x69] sm:$0xff] %vm238, %v445
        %479 = vst.msk [vmem:[%s468 + $0x79] sm:$0xff] %vm238, %v446
        %480 = vst.msk [vmem:[%s468 + $0x81] sm:$0xff] %vm238, %v447
        %481 = vst.msk [vmem:[%s468 + $0x91] sm:$0xff] %vm238, %v448
        %482 = vst.msk [vmem:[%s468 + $0x99] sm:$0xff] %vm238, %v449
        %483 = vst.msk [vmem:[%s468 + $0xa9] sm:$0xff] %vm238, %v450
        %484 = vst.msk [vmem:[%s468 + $0xb1] sm:$0xff] %vm238, %v451
        %485 = vst.msk [vmem:[%s468 + $0xc1] sm:$0xff] %vm238, %v452
        %486 = vst.msk [vmem:[%s468 + $0xc9] sm:$0xff] %vm238, %v453
        %487 = vst.msk [vmem:[%s468 + $0xd9] sm:$0xff] %vm238, %v454
        %488 = vst.msk [vmem:[%s468 + $0xe1] sm:$0xff] %vm238, %v455
        %489 = vst.msk [vmem:[%s468 + $0xf1] sm:$0xff] %vm238, %v456
        %490 = vst.msk [vmem:[%s468 + $0xf9] sm:$0xff] %vm238, %v457
        %491 = vst.msk [vmem:[%s468 + $0x109] sm:$0xff] %vm238, %v458
        %492 = vst.msk [vmem:[%s468 + $0x111] sm:$0xff] %vm238, %v459
        %493 = vst.msk [vmem:[%s468 + $0x121] sm:$0xff] %vm238, %v460
        %494 = vst.msk [vmem:[%s468 + $0x129] sm:$0xff] %vm238, %v461
        %495 = vst.msk [vmem:[%s468 + $0x139] sm:$0xff] %vm238, %v462
        %496 = vst.msk [vmem:[%s468 + $0x141] sm:$0xff] %vm238, %v463
        %497 = vst.msk [vmem:[%s468 + $0x151] sm:$0xff] %vm238, %v464
        %498 = vst.msk [vmem:[%s468 + $0x159] sm:$0xff] %vm238, %v465
        %499 = vst.msk [vmem:[%s468 + $0x169] sm:$0xff] %vm238, %v466
        %500 = vst.msk [vmem:[%s468 + $0x171] sm:$0xff] %vm238, %v467
        %v501 = vld [vmem:[%s3] sm:$0xf]
        %v502 = vld [vmem:[#allocation2] sm:$0xff]
        %v503 = vld [vmem:[#allocation2 + $0x8] sm:$0xff]
        %v504 = vld [vmem:[#allocation2 + $0x10] sm:$0x3]
        %v505 = vld [vmem:[#allocation2 + $0x18] sm:$0xff]
        %v506 = vld [vmem:[#allocation2 + $0x20] sm:$0xff]
        %v507 = vld [vmem:[#allocation2 + $0x28] sm:$0x3]
        %v508 = vld [vmem:[#allocation2 + $0x30] sm:$0xff]
        %v509 = vld [vmem:[#allocation2 + $0x38] sm:$0xff]
        %v510 = vld [vmem:[#allocation2 + $0x40] sm:$0x3]
        %v511 = vld [vmem:[#allocation2 + $0x48] sm:$0xff]
        %v512 = vld [vmem:[#allocation2 + $0x50] sm:$0xff]
        %v513 = vld [vmem:[#allocation2 + $0x58] sm:$0x3]
        %v514 = vld [vmem:[#allocation2 + $0x60] sm:$0xff]
        %v515 = vld [vmem:[#allocation2 + $0x68] sm:$0xff]
        %v516 = vld [vmem:[#allocation2 + $0x70] sm:$0x3]
        %v517 = vld [vmem:[#allocation2 + $0x78] sm:$0xff]
        %v518 = vld [vmem:[#allocation2 + $0x80] sm:$0xff]
        %v519 = vld [vmem:[#allocation2 + $0x88] sm:$0x3]
        %v520 = vld [vmem:[#allocation2 + $0x90] sm:$0xff]
        %v521 = vld [vmem:[#allocation2 + $0x98] sm:$0xff]
        %v522 = vld [vmem:[#allocation2 + $0xa0] sm:$0x3]
        %v523 = vld [vmem:[#allocation2 + $0xa8] sm:$0xff]
        %v524 = vld [vmem:[#allocation2 + $0xb0] sm:$0xff]
        %v525 = vld [vmem:[#allocation2 + $0xb8] sm:$0x3]
        %v526 = vld [vmem:[#allocation2 + $0xc0] sm:$0xff]
        %v527 = vld [vmem:[#allocation2 + $0xc8] sm:$0xff]
        %v528 = vld [vmem:[#allocation2 + $0xd0] sm:$0x3]
        %v529 = vld [vmem:[#allocation2 + $0xd8] sm:$0xff]
        %v530 = vld [vmem:[#allocation2 + $0xe0] sm:$0xff]
        %v531 = vld [vmem:[#allocation2 + $0xe8] sm:$0x3]
        %v532 = vld [vmem:[#allocation2 + $0xf0] sm:$0xff]
        %v533 = vld [vmem:[#allocation2 + $0xf8] sm:$0xff]
        %v534 = vld [vmem:[#allocation2 + $0x100] sm:$0x3]
        %v535 = vld [vmem:[#allocation2 + $0x108] sm:$0xff]
        %v536 = vld [vmem:[#allocation2 + $0x110] sm:$0xff]
        %v537 = vld [vmem:[#allocation2 + $0x118] sm:$0x3]
        %v538 = vld [vmem:[#allocation2 + $0x120] sm:$0xff]
        %v539 = vld [vmem:[#allocation2 + $0x128] sm:$0xff]
        %v540 = vld [vmem:[#allocation2 + $0x130] sm:$0x3]
        %v541 = vld [vmem:[#allocation2 + $0x138] sm:$0xff]
        %v542 = vld [vmem:[#allocation2 + $0x140] sm:$0xff]
        %v543 = vld [vmem:[#allocation2 + $0x148] sm:$0x3]
        %v544 = vld [vmem:[#allocation2 + $0x150] sm:$0xff]
        %v545 = vld [vmem:[#allocation2 + $0x158] sm:$0xff]
        %v546 = vld [vmem:[#allocation2 + $0x160] sm:$0x3]
        %v547 = vld [vmem:[#allocation2 + $0x168] sm:$0xff]
        %v548 = vld [vmem:[#allocation2 + $0x170] sm:$0xff]
        %v549 = vld [vmem:[#allocation2 + $0x178] sm:$0x3]
        %v550 = vld [vmem:[#allocation2 + $0x180] sm:$0xff]
        %v551 = vld [vmem:[#allocation2 + $0x188] sm:$0xff]
        %v552 = vld [vmem:[#allocation2 + $0x190] sm:$0x3]
        %v553 = vld [vmem:[#allocation2 + $0x198] sm:$0xff]
        %v554 = vld [vmem:[#allocation2 + $0x1a0] sm:$0xff]
        %v555 = vld [vmem:[#allocation2 + $0x1a8] sm:$0x3]
        %v556 = vlaneseq
        %v557 = vshrl.u32 %v556, 7
        %v558 = vsub.s32 0, %v557
        %v559 = vrot.slane %v501, %v558
        %v560 = vpack.c.bf16 %v503, %v502
        %v561 = vpack.c.bf16 %v506, %v505
        %v562 = vpack.c.bf16 %v509, %v508
        %v563 = vpack.c.bf16 %v512, %v511
        %v564 = vpack.c.bf16 %v515, %v514
        %v565 = vpack.c.bf16 %v518, %v517
        %v566 = vpack.c.bf16 %v521, %v520
        %v567 = vpack.c.bf16 %v524, %v523
        %v568 = vpack.c.bf16 %v527, %v526
        %v569 = vpack.c.bf16 %v530, %v529
        %v570 = vpack.c.bf16 %v533, %v532
        %v571 = vpack.c.bf16 %v536, %v535
        %v572 = vpack.c.bf16 %v539, %v538
        %v573 = vpack.c.bf16 %v542, %v541
        %v574 = vpack.c.bf16 %v545, %v544
        %v575 = vpack.c.bf16 %v548, %v547
        %v576 = vld [vmem:[%s1] sm:$0x3]
        %v578 = vsel %vm238, %v560, 0
        %v581 = vsel %vm238, %v561, 0
        %v584 = vsel %vm238, %v562, 0
        %v587 = vsel %vm238, %v563, 0
        %v590 = vsel %vm238, %v564, 0
        %v593 = vsel %vm238, %v565, 0
        %v596 = vsel %vm238, %v566, 0
        %v599 = vsel %vm238, %v567, 0
        %v602 = vsel %vm238, %v568, 0
        %v605 = vsel %vm238, %v569, 0
        %v608 = vsel %vm238, %v570, 0
        %v611 = vsel %vm238, %v571, 0
        %v614 = vsel %vm238, %v572, 0
        %v617 = vsel %vm238, %v573, 0
        %v620 = vsel %vm238, %v574, 0
        %v623 = vsel %vm238, %v575, 0
        %vm625 = vcmask 1041408
        %v627 = vsel %vm625, %v576, 0
        %629 = vmatprep.subr.bf16.mxu0 0
        %630 = vmatpush1.bf16.msra.mxu0 %v627
        %631 = vmatprep.subr.bf16.mxu0 0
        %632 = vmatpush1.bf16.msra.mxu0 0
        %633 = vmatprep.subr.bf16.mxu0 0
        %634 = vmatpush1.bf16.msra.mxu0 0
        %635 = vmatprep.subr.bf16.mxu0 0
        %636 = vmatpush1.bf16.msra.mxu0 0
        %637 = vmatprep.subr.bf16.mxu0 0
        %638 = vmatpush1.bf16.msra.mxu0 0
        %639 = vmatprep.subr.bf16.mxu0 0
        %640 = vmatpush1.bf16.msra.mxu0 0
        %641 = vmatprep.subr.bf16.mxu0 0
        %642 = vmatpush1.bf16.msra.mxu0 0
        %643 = vmatprep.subr.bf16.mxu0 0
        %644 = vmatpush1.bf16.msra.mxu0 0
        %645 = vmatprep.subr.bf16.mxu0 0
        %646 = vmatpush1.bf16.msra.mxu0 0
        %647 = vmatprep.subr.bf16.mxu0 0
        %648 = vmatpush1.bf16.msra.mxu0 0
        %649 = vmatprep.subr.bf16.mxu0 0
        %650 = vmatpush1.bf16.msra.mxu0 0
        %651 = vmatprep.subr.bf16.mxu0 0
        %652 = vmatpush1.bf16.msra.mxu0 0
        %653 = vmatprep.subr.bf16.mxu0 0
        %654 = vmatpush1.bf16.msra.mxu0 0
        %655 = vmatprep.subr.bf16.mxu0 0
        %656 = vmatpush1.bf16.msra.mxu0 0
        %657 = vmatprep.subr.bf16.mxu0 0
        %658 = vmatpush1.bf16.msra.mxu0 0
        %659 = vmatprep.subr.bf16.mxu0 0
        %660 = vmatpush1.bf16.msra.mxu0 0
        %661 = vmatprep.mubr.bf16.mxu0 0
        %662 = vmatmul.mubr.bf16.gmra.mrb[0].mxu0 %v578
        %v663 = vpop.f32.mrb[0].mxu0
        %v664 = vadd.f32 0.0, %v663
        %v665 = vpop.f32.mrb[0].mxu0
        %v666 = vpop.f32.mrb[0].mxu0
        %v667 = vadd.f32 0.0, %v666
        %v668 = vpop.f32.mrb[0].mxu0
        %669 = vmatprep.mubr.bf16.mxu0 0
        %670 = vmatmul.mubr.bf16.gmra.mrb[0].mxu0 %v581
        %v671 = vpop.f32.mrb[0].mxu0
        %v672 = vadd.f32 0.0, %v671
        %v673 = vpop.f32.mrb[0].mxu0
        %v674 = vpop.f32.mrb[0].mxu0
        %v675 = vadd.f32 0.0, %v674
        %v676 = vpop.f32.mrb[0].mxu0
        %677 = vmatprep.mubr.bf16.mxu0 0
        %678 = vmatmul.mubr.bf16.gmra.mrb[0].mxu0 %v584
        %v679 = vpop.f32.mrb[0].mxu0
        %v680 = vadd.f32 0.0, %v679
        %v681 = vpop.f32.mrb[0].mxu0
        %v682 = vpop.f32.mrb[0].mxu0
        %v683 = vadd.f32 0.0, %v682
        %v684 = vpop.f32.mrb[0].mxu0
        %685 = vmatprep.mubr.bf16.mxu0 0
        %686 = vmatmul.mubr.bf16.gmra.mrb[0].mxu0 %v587
        %v687 = vpop.f32.mrb[0].mxu0
        %v688 = vadd.f32 0.0, %v687
        %v689 = vpop.f32.mrb[0].mxu0
        %v690 = vpop.f32.mrb[0].mxu0
        %v691 = vadd.f32 0.0, %v690
        %v692 = vpop.f32.mrb[0].mxu0
        %693 = vmatprep.mubr.bf16.mxu0 0
        %694 = vmatmul.mubr.bf16.gmra.mrb[0].mxu0 %v590
        %v695 = vpop.f32.mrb[0].mxu0
        %v696 = vadd.f32 0.0, %v695
        %v697 = vpop.f32.mrb[0].mxu0
        %v698 = vpop.f32.mrb[0].mxu0
        %v699 = vadd.f32 0.0, %v698
        %v700 = vpop.f32.mrb[0].mxu0
        %701 = vmatprep.mubr.bf16.mxu0 0
        %702 = vmatmul.mubr.bf16.gmra.mrb[0].mxu0 %v593
        %v703 = vpop.f32.mrb[0].mxu0
        %v704 = vadd.f32 0.0, %v703
        %v705 = vpop.f32.mrb[0].mxu0
        %v706 = vpop.f32.mrb[0].mxu0
        %v707 = vadd.f32 0.0, %v706
        %v708 = vpop.f32.mrb[0].mxu0
        %709 = vmatprep.mubr.bf16.mxu0 0
        %710 = vmatmul.mubr.bf16.gmra.mrb[0].mxu0 %v596
        %v711 = vpop.f32.mrb[0].mxu0
        %v712 = vadd.f32 0.0, %v711
        %v713 = vpop.f32.mrb[0].mxu0
        %v714 = vpop.f32.mrb[0].mxu0
        %v715 = vadd.f32 0.0, %v714
        %v716 = vpop.f32.mrb[0].mxu0
        %717 = vmatprep.mubr.bf16.mxu0 0
        %718 = vmatmul.mubr.bf16.gmra.mrb[0].mxu0 %v599
        %v719 = vpop.f32.mrb[0].mxu0
        %v720 = vadd.f32 0.0, %v719
        %v721 = vpop.f32.mrb[0].mxu0
        %v722 = vpop.f32.mrb[0].mxu0
        %v723 = vadd.f32 0.0, %v722
        %v724 = vpop.f32.mrb[0].mxu0
        %725 = vmatprep.mubr.bf16.mxu0 0
        %726 = vmatmul.mubr.bf16.gmra.mrb[0].mxu0 %v602
        %v727 = vpop.f32.mrb[0].mxu0
        %v728 = vadd.f32 0.0, %v727
        %v729 = vpop.f32.mrb[0].mxu0
        %v730 = vpop.f32.mrb[0].mxu0
        %v731 = vadd.f32 0.0, %v730
        %v732 = vpop.f32.mrb[0].mxu0
        %733 = vmatprep.mubr.bf16.mxu0 0
        %734 = vmatmul.mubr.bf16.gmra.mrb[0].mxu0 %v605
        %v735 = vpop.f32.mrb[0].mxu0
        %v736 = vadd.f32 0.0, %v735
        %v737 = vpop.f32.mrb[0].mxu0
        %v738 = vpop.f32.mrb[0].mxu0
        %v739 = vadd.f32 0.0, %v738
        %v740 = vpop.f32.mrb[0].mxu0
        %741 = vmatprep.mubr.bf16.mxu0 0
        %742 = vmatmul.mubr.bf16.gmra.mrb[0].mxu0 %v608
        %v743 = vpop.f32.mrb[0].mxu0
        %v744 = vadd.f32 0.0, %v743
        %v745 = vpop.f32.mrb[0].mxu0
        %v746 = vpop.f32.mrb[0].mxu0
        %v747 = vadd.f32 0.0, %v746
        %v748 = vpop.f32.mrb[0].mxu0
        %749 = vmatprep.mubr.bf16.mxu0 0
        %750 = vmatmul.mubr.bf16.gmra.mrb[0].mxu0 %v611
        %v751 = vpop.f32.mrb[0].mxu0
        %v752 = vadd.f32 0.0, %v751
        %v753 = vpop.f32.mrb[0].mxu0
        %v754 = vpop.f32.mrb[0].mxu0
        %v755 = vadd.f32 0.0, %v754
        %v756 = vpop.f32.mrb[0].mxu0
        %757 = vmatprep.mubr.bf16.mxu0 0
        %758 = vmatmul.mubr.bf16.gmra.mrb[0].mxu0 %v614
        %v759 = vpop.f32.mrb[0].mxu0
        %v760 = vadd.f32 0.0, %v759
        %v761 = vpop.f32.mrb[0].mxu0
        %v762 = vpop.f32.mrb[0].mxu0
        %v763 = vadd.f32 0.0, %v762
        %v764 = vpop.f32.mrb[0].mxu0
        %765 = vmatprep.mubr.bf16.mxu0 0
        %766 = vmatmul.mubr.bf16.gmra.mrb[0].mxu0 %v617
        %v767 = vpop.f32.mrb[0].mxu0
        %v768 = vadd.f32 0.0, %v767
        %v769 = vpop.f32.mrb[0].mxu0
        %v770 = vpop.f32.mrb[0].mxu0
        %v771 = vadd.f32 0.0, %v770
        %v772 = vpop.f32.mrb[0].mxu0
        %773 = vmatprep.mubr.bf16.mxu0 0
        %774 = vmatmul.mubr.bf16.gmra.mrb[0].mxu0 %v620
        %v775 = vpop.f32.mrb[0].mxu0
        %v776 = vadd.f32 0.0, %v775
        %v777 = vpop.f32.mrb[0].mxu0
        %v778 = vpop.f32.mrb[0].mxu0
        %v779 = vadd.f32 0.0, %v778
        %v780 = vpop.f32.mrb[0].mxu0
        %781 = vmatprep.mubr.bf16.mxu0 0
        %782 = vmatmul.mubr.bf16.gmra.mrb[0].mxu0 %v623
        %v783 = vpop.f32.mrb[0].mxu0
        %v784 = vadd.f32 0.0, %v783
        %v785 = vpop.f32.mrb[0].mxu0
        %v786 = vpop.f32.mrb[0].mxu0
        %v787 = vadd.f32 0.0, %v786
        %v788 = vpop.f32.mrb[0].mxu0
        %789 = vdwg.mxu0
        %v790 = vadd.f32 %v559, %v664
        %v791 = vadd.f32 %v559, %v667
        %v792 = vadd.f32 %v559, %v672
        %v793 = vadd.f32 %v559, %v675
        %v794 = vadd.f32 %v559, %v680
        %v795 = vadd.f32 %v559, %v683
        %v796 = vadd.f32 %v559, %v688
        %v797 = vadd.f32 %v559, %v691
        %v798 = vadd.f32 %v559, %v696
        %v799 = vadd.f32 %v559, %v699
        %v800 = vadd.f32 %v559, %v704
        %v801 = vadd.f32 %v559, %v707
        %v802 = vadd.f32 %v559, %v712
        %v803 = vadd.f32 %v559, %v715
        %v804 = vadd.f32 %v559, %v720
        %v805 = vadd.f32 %v559, %v723
        %v806 = vadd.f32 %v559, %v728
        %v807 = vadd.f32 %v559, %v731
        %v808 = vadd.f32 %v559, %v736
        %v809 = vadd.f32 %v559, %v739
        %v810 = vadd.f32 %v559, %v744
        %v811 = vadd.f32 %v559, %v747
        %v812 = vadd.f32 %v559, %v752
        %v813 = vadd.f32 %v559, %v755
        %v814 = vadd.f32 %v559, %v760
        %v815 = vadd.f32 %v559, %v763
        %v816 = vadd.f32 %v559, %v768
        %v817 = vadd.f32 %v559, %v771
        %v818 = vadd.f32 %v559, %v776
        %v819 = vadd.f32 %v559, %v779
        %v820 = vadd.f32 %v559, %v784
        %v821 = vadd.f32 %v559, %v787
        %vm870 = vcmask 1046528
        %v871 = vrot.slane %v502, 1
        %v872 = vrot.slane %v503, 1
        %v873 = vsel %vm870, %v871, %v872
        %v874 = vrot.slane %v504, 1
        %v875 = vsel %vm870, %v872, %v874
        %v876 = vrot.slane %v505, 1
        %v877 = vrot.slane %v506, 1
        %v878 = vsel %vm870, %v876, %v877
        %v879 = vrot.slane %v507, 1
        %v880 = vsel %vm870, %v877, %v879
        %v881 = vrot.slane %v508, 1
        %v882 = vrot.slane %v509, 1
        %v883 = vsel %vm870, %v881, %v882
        %v884 = vrot.slane %v510, 1
        %v885 = vsel %vm870, %v882, %v884
        %v886 = vrot.slane %v511, 1
        %v887 = vrot.slane %v512, 1
        %v888 = vsel %vm870, %v886, %v887
        %v889 = vrot.slane %v513, 1
        %v890 = vsel %vm870, %v887, %v889
        %v891 = vrot.slane %v514, 1
        %v892 = vrot.slane %v515, 1
        %v893 = vsel %vm870, %v891, %v892
        %v894 = vrot.slane %v516, 1
        %v895 = vsel %vm870, %v892, %v894
        %v896 = vrot.slane %v517, 1
        %v897 = vrot.slane %v518, 1
        %v898 = vsel %vm870, %v896, %v897
        %v899 = vrot.slane %v519, 1
        %v900 = vsel %vm870, %v897, %v899
        %v901 = vrot.slane %v520, 1
        %v902 = vrot.slane %v521, 1
        %v903 = vsel %vm870, %v901, %v902
        %v904 = vrot.slane %v522, 1
        %v905 = vsel %vm870, %v902, %v904
        %v906 = vrot.slane %v523, 1
        %v907 = vrot.slane %v524, 1
        %v908 = vsel %vm870, %v906, %v907
        %v909 = vrot.slane %v525, 1
        %v910 = vsel %vm870, %v907, %v909
        %v911 = vrot.slane %v526, 1
        %v912 = vrot.slane %v527, 1
        %v913 = vsel %vm870, %v911, %v912
        %v914 = vrot.slane %v528, 1
        %v915 = vsel %vm870, %v912, %v914
        %v916 = vrot.slane %v529, 1
        %v917 = vrot.slane %v530, 1
        %v918 = vsel %vm870, %v916, %v917
        %v919 = vrot.slane %v531, 1
        %v920 = vsel %vm870, %v917, %v919
        %v921 = vrot.slane %v532, 1
        %v922 = vrot.slane %v533, 1
        %v923 = vsel %vm870, %v921, %v922
        %v924 = vrot.slane %v534, 1
        %v925 = vsel %vm870, %v922, %v924
        %v926 = vrot.slane %v535, 1
        %v927 = vrot.slane %v536, 1
        %v928 = vsel %vm870, %v926, %v927
        %v929 = vrot.slane %v537, 1
        %v930 = vsel %vm870, %v927, %v929
        %v931 = vrot.slane %v538, 1
        %v932 = vrot.slane %v539, 1
        %v933 = vsel %vm870, %v931, %v932
        %v934 = vrot.slane %v540, 1
        %v935 = vsel %vm870, %v932, %v934
        %v936 = vrot.slane %v541, 1
        %v937 = vrot.slane %v542, 1
        %v938 = vsel %vm870, %v936, %v937
        %v939 = vrot.slane %v543, 1
        %v940 = vsel %vm870, %v937, %v939
        %v941 = vrot.slane %v544, 1
        %v942 = vrot.slane %v545, 1
        %v943 = vsel %vm870, %v941, %v942
        %v944 = vrot.slane %v546, 1
        %v945 = vsel %vm870, %v942, %v944
        %v946 = vrot.slane %v547, 1
        %v947 = vrot.slane %v548, 1
        %v948 = vsel %vm870, %v946, %v947
        %v949 = vrot.slane %v549, 1
        %v950 = vsel %vm870, %v947, %v949
        %v983 = vpack.c.bf16 %v875, %v873
        %v984 = vpack.c.bf16 %v880, %v878
        %v985 = vpack.c.bf16 %v885, %v883
        %v986 = vpack.c.bf16 %v890, %v888
        %v987 = vpack.c.bf16 %v895, %v893
        %v988 = vpack.c.bf16 %v900, %v898
        %v989 = vpack.c.bf16 %v905, %v903
        %v990 = vpack.c.bf16 %v910, %v908
        %v991 = vpack.c.bf16 %v915, %v913
        %v992 = vpack.c.bf16 %v920, %v918
        %v993 = vpack.c.bf16 %v925, %v923
        %v994 = vpack.c.bf16 %v930, %v928
        %v995 = vpack.c.bf16 %v935, %v933
        %v996 = vpack.c.bf16 %v940, %v938
        %v997 = vpack.c.bf16 %v945, %v943
        %v998 = vpack.c.bf16 %v950, %v948
        %s999 = scalar_lea.vmem %s1, 2
        %v1000 = vld [vmem:[%s999] sm:$0x3]
        %v1002 = vsel %vm238, %v983, 0
        %v1005 = vsel %vm238, %v984, 0
        %v1008 = vsel %vm238, %v985, 0
        %v1011 = vsel %vm238, %v986, 0
        %v1014 = vsel %vm238, %v987, 0
        %v1017 = vsel %vm238, %v988, 0
        %v1020 = vsel %vm238, %v989, 0
        %v1023 = vsel %vm238, %v990, 0
        %v1026 = vsel %vm238, %v991, 0
        %v1029 = vsel %vm238, %v992, 0
        %v1032 = vsel %vm238, %v993, 0
        %v1035 = vsel %vm238, %v994, 0
        %v1038 = vsel %vm238, %v995, 0
        %v1041 = vsel %vm238, %v996, 0
        %v1044 = vsel %vm238, %v997, 0
        %v1047 = vsel %vm238, %v998, 0
        %v1050 = vsel %vm625, %v1000, 0
        %1052 = vmatprep.subr.bf16.mxu0 0
        %1053 = vmatpush1.bf16.msra.mxu0 %v1050
        %1054 = vmatprep.subr.bf16.mxu0 0
        %1055 = vmatpush1.bf16.msra.mxu0 0
        %1056 = vmatprep.subr.bf16.mxu0 0
        %1057 = vmatpush1.bf16.msra.mxu0 0
        %1058 = vmatprep.subr.bf16.mxu0 0
        %1059 = vmatpush1.bf16.msra.mxu0 0
        %1060 = vmatprep.subr.bf16.mxu0 0
        %1061 = vmatpush1.bf16.msra.mxu0 0
        %1062 = vmatprep.subr.bf16.mxu0 0
        %1063 = vmatpush1.bf16.msra.mxu0 0
        %1064 = vmatprep.subr.bf16.mxu0 0
        %1065 = vmatpush1.bf16.msra.mxu0 0
        %1066 = vmatprep.subr.bf16.mxu0 0
        %1067 = vmatpush1.bf16.msra.mxu0 0
        %1068 = vmatprep.subr.bf16.mxu0 0
        %1069 = vmatpush1.bf16.msra.mxu0 0
        %1070 = vmatprep.subr.bf16.mxu0 0
        %1071 = vmatpush1.bf16.msra.mxu0 0
        %1072 = vmatprep.subr.bf16.mxu0 0
        %1073 = vmatpush1.bf16.msra.mxu0 0
        %1074 = vmatprep.subr.bf16.mxu0 0
        %1075 = vmatpush1.bf16.msra.mxu0 0
        %1076 = vmatprep.subr.bf16.mxu0 0
        %1077 = vmatpush1.bf16.msra.mxu0 0
        %1078 = vmatprep.subr.bf16.mxu0 0
        %1079 = vmatpush1.bf16.msra.mxu0 0
        %1080 = vmatprep.subr.bf16.mxu0 0
        %1081 = vmatpush1.bf16.msra.mxu0 0
        %1082 = vmatprep.subr.bf16.mxu0 0
        %1083 = vmatpush1.bf16.msra.mxu0 0
        %1084 = vmatprep.mubr.bf16.mxu0 0
        %1085 = vmatmul.mubr.bf16.gmra.mrb[0].mxu0 %v1002
        %v1086 = vpop.f32.mrb[0].mxu0
        %v1087 = vadd.f32 0.0, %v1086
        %v1088 = vpop.f32.mrb[0].mxu0
        %v1089 = vpop.f32.mrb[0].mxu0
        %v1090 = vadd.f32 0.0, %v1089
        %v1091 = vpop.f32.mrb[0].mxu0
        %1092 = vmatprep.mubr.bf16.mxu0 0
        %1093 = vmatmul.mubr.bf16.gmra.mrb[0].mxu0 %v1005
        %v1094 = vpop.f32.mrb[0].mxu0
        %v1095 = vadd.f32 0.0, %v1094
        %v1096 = vpop.f32.mrb[0].mxu0
        %v1097 = vpop.f32.mrb[0].mxu0
        %v1098 = vadd.f32 0.0, %v1097
        %v1099 = vpop.f32.mrb[0].mxu0
        %1100 = vmatprep.mubr.bf16.mxu0 0
        %1101 = vmatmul.mubr.bf16.gmra.mrb[0].mxu0 %v1008
        %v1102 = vpop.f32.mrb[0].mxu0
        %v1103 = vadd.f32 0.0, %v1102
        %v1104 = vpop.f32.mrb[0].mxu0
        %v1105 = vpop.f32.mrb[0].mxu0
        %v1106 = vadd.f32 0.0, %v1105
        %v1107 = vpop.f32.mrb[0].mxu0
        %1108 = vmatprep.mubr.bf16.mxu0 0
        %1109 = vmatmul.mubr.bf16.gmra.mrb[0].mxu0 %v1011
        %v1110 = vpop.f32.mrb[0].mxu0
        %v1111 = vadd.f32 0.0, %v1110
        %v1112 = vpop.f32.mrb[0].mxu0
        %v1113 = vpop.f32.mrb[0].mxu0
        %v1114 = vadd.f32 0.0, %v1113
        %v1115 = vpop.f32.mrb[0].mxu0
        %1116 = vmatprep.mubr.bf16.mxu0 0
        %1117 = vmatmul.mubr.bf16.gmra.mrb[0].mxu0 %v1014
        %v1118 = vpop.f32.mrb[0].mxu0
        %v1119 = vadd.f32 0.0, %v1118
        %v1120 = vpop.f32.mrb[0].mxu0
        %v1121 = vpop.f32.mrb[0].mxu0
        %v1122 = vadd.f32 0.0, %v1121
        %v1123 = vpop.f32.mrb[0].mxu0
        %1124 = vmatprep.mubr.bf16.mxu0 0
        %1125 = vmatmul.mubr.bf16.gmra.mrb[0].mxu0 %v1017
        %v1126 = vpop.f32.mrb[0].mxu0
        %v1127 = vadd.f32 0.0, %v1126
        %v1128 = vpop.f32.mrb[0].mxu0
        %v1129 = vpop.f32.mrb[0].mxu0
        %v1130 = vadd.f32 0.0, %v1129
        %v1131 = vpop.f32.mrb[0].mxu0
        %1132 = vmatprep.mubr.bf16.mxu0 0
        %1133 = vmatmul.mubr.bf16.gmra.mrb[0].mxu0 %v1020
        %v1134 = vpop.f32.mrb[0].mxu0
        %v1135 = vadd.f32 0.0, %v1134
        %v1136 = vpop.f32.mrb[0].mxu0
        %v1137 = vpop.f32.mrb[0].mxu0
        %v1138 = vadd.f32 0.0, %v1137
        %v1139 = vpop.f32.mrb[0].mxu0
        %1140 = vmatprep.mubr.bf16.mxu0 0
        %1141 = vmatmul.mubr.bf16.gmra.mrb[0].mxu0 %v1023
        %v1142 = vpop.f32.mrb[0].mxu0
        %v1143 = vadd.f32 0.0, %v1142
        %v1144 = vpop.f32.mrb[0].mxu0
        %v1145 = vpop.f32.mrb[0].mxu0
        %v1146 = vadd.f32 0.0, %v1145
        %v1147 = vpop.f32.mrb[0].mxu0
        %1148 = vmatprep.mubr.bf16.mxu0 0
        %1149 = vmatmul.mubr.bf16.gmra.mrb[0].mxu0 %v1026
        %v1150 = vpop.f32.mrb[0].mxu0
        %v1151 = vadd.f32 0.0, %v1150
        %v1152 = vpop.f32.mrb[0].mxu0
        %v1153 = vpop.f32.mrb[0].mxu0
        %v1154 = vadd.f32 0.0, %v1153
        %v1155 = vpop.f32.mrb[0].mxu0
        %1156 = vmatprep.mubr.bf16.mxu0 0
        %1157 = vmatmul.mubr.bf16.gmra.mrb[0].mxu0 %v1029
        %v1158 = vpop.f32.mrb[0].mxu0
        %v1159 = vadd.f32 0.0, %v1158
        %v1160 = vpop.f32.mrb[0].mxu0
        %v1161 = vpop.f32.mrb[0].mxu0
        %v1162 = vadd.f32 0.0, %v1161
        %v1163 = vpop.f32.mrb[0].mxu0
        %1164 = vmatprep.mubr.bf16.mxu0 0
        %1165 = vmatmul.mubr.bf16.gmra.mrb[0].mxu0 %v1032
        %v1166 = vpop.f32.mrb[0].mxu0
        %v1167 = vadd.f32 0.0, %v1166
        %v1168 = vpop.f32.mrb[0].mxu0
        %v1169 = vpop.f32.mrb[0].mxu0
        %v1170 = vadd.f32 0.0, %v1169
        %v1171 = vpop.f32.mrb[0].mxu0
        %1172 = vmatprep.mubr.bf16.mxu0 0
        %1173 = vmatmul.mubr.bf16.gmra.mrb[0].mxu0 %v1035
        %v1174 = vpop.f32.mrb[0].mxu0
        %v1175 = vadd.f32 0.0, %v1174
        %v1176 = vpop.f32.mrb[0].mxu0
        %v1177 = vpop.f32.mrb[0].mxu0
        %v1178 = vadd.f32 0.0, %v1177
        %v1179 = vpop.f32.mrb[0].mxu0
        %1180 = vmatprep.mubr.bf16.mxu0 0
        %1181 = vmatmul.mubr.bf16.gmra.mrb[0].mxu0 %v1038
        %v1182 = vpop.f32.mrb[0].mxu0
        %v1183 = vadd.f32 0.0, %v1182
        %v1184 = vpop.f32.mrb[0].mxu0
        %v1185 = vpop.f32.mrb[0].mxu0
        %v1186 = vadd.f32 0.0, %v1185
        %v1187 = vpop.f32.mrb[0].mxu0
        %1188 = vmatprep.mubr.bf16.mxu0 0
        %1189 = vmatmul.mubr.bf16.gmra.mrb[0].mxu0 %v1041
        %v1190 = vpop.f32.mrb[0].mxu0
        %v1191 = vadd.f32 0.0, %v1190
        %v1192 = vpop.f32.mrb[0].mxu0
        %v1193 = vpop.f32.mrb[0].mxu0
        %v1194 = vadd.f32 0.0, %v1193
        %v1195 = vpop.f32.mrb[0].mxu0
        %1196 = vmatprep.mubr.bf16.mxu0 0
        %1197 = vmatmul.mubr.bf16.gmra.mrb[0].mxu0 %v1044
        %v1198 = vpop.f32.mrb[0].mxu0
        %v1199 = vadd.f32 0.0, %v1198
        %v1200 = vpop.f32.mrb[0].mxu0
        %v1201 = vpop.f32.mrb[0].mxu0
        %v1202 = vadd.f32 0.0, %v1201
        %v1203 = vpop.f32.mrb[0].mxu0
        %1204 = vmatprep.mubr.bf16.mxu0 0
        %1205 = vmatmul.mubr.bf16.gmra.mrb[0].mxu0 %v1047
        %v1206 = vpop.f32.mrb[0].mxu0
        %v1207 = vadd.f32 0.0, %v1206
        %v1208 = vpop.f32.mrb[0].mxu0
        %v1209 = vpop.f32.mrb[0].mxu0
        %v1210 = vadd.f32 0.0, %v1209
        %v1211 = vpop.f32.mrb[0].mxu0
        %1212 = vdwg.mxu0
        %v1213 = vadd.f32 %v790, %v1087
        %v1214 = vadd.f32 %v791, %v1090
        %v1215 = vadd.f32 %v792, %v1095
        %v1216 = vadd.f32 %v793, %v1098
        %v1217 = vadd.f32 %v794, %v1103
        %v1218 = vadd.f32 %v795, %v1106
        %v1219 = vadd.f32 %v796, %v1111
        %v1220 = vadd.f32 %v797, %v1114
        %v1221 = vadd.f32 %v798, %v1119
        %v1222 = vadd.f32 %v799, %v1122
        %v1223 = vadd.f32 %v800, %v1127
        %v1224 = vadd.f32 %v801, %v1130
        %v1225 = vadd.f32 %v802, %v1135
        %v1226 = vadd.f32 %v803, %v1138
        %v1227 = vadd.f32 %v804, %v1143
        %v1228 = vadd.f32 %v805, %v1146
        %v1229 = vadd.f32 %v806, %v1151
        %v1230 = vadd.f32 %v807, %v1154
        %v1231 = vadd.f32 %v808, %v1159
        %v1232 = vadd.f32 %v809, %v1162
        %v1233 = vadd.f32 %v810, %v1167
        %v1234 = vadd.f32 %v811, %v1170
        %v1235 = vadd.f32 %v812, %v1175
        %v1236 = vadd.f32 %v813, %v1178
        %v1237 = vadd.f32 %v814, %v1183
        %v1238 = vadd.f32 %v815, %v1186
        %v1239 = vadd.f32 %v816, %v1191
        %v1240 = vadd.f32 %v817, %v1194
        %v1241 = vadd.f32 %v818, %v1199
        %v1242 = vadd.f32 %v819, %v1202
        %v1243 = vadd.f32 %v820, %v1207
        %v1244 = vadd.f32 %v821, %v1210
        %vm1245 = vcmask 1045504
        %v1246 = vrot.slane %v502, 2
        %v1247 = vrot.slane %v503, 2
        %v1248 = vsel %vm1245, %v1246, %v1247
        %v1249 = vrot.slane %v504, 2
        %v1250 = vsel %vm1245, %v1247, %v1249
        %v1251 = vrot.slane %v505, 2
        %v1252 = vrot.slane %v506, 2
        %v1253 = vsel %vm1245, %v1251, %v1252
        %v1254 = vrot.slane %v507, 2
        %v1255 = vsel %vm1245, %v1252, %v1254
        %v1256 = vrot.slane %v508, 2
        %v1257 = vrot.slane %v509, 2
        %v1258 = vsel %vm1245, %v1256, %v1257
        %v1259 = vrot.slane %v510, 2
        %v1260 = vsel %vm1245, %v1257, %v1259
        %v1261 = vrot.slane %v511, 2
        %v1262 = vrot.slane %v512, 2
        %v1263 = vsel %vm1245, %v1261, %v1262
        %v1264 = vrot.slane %v513, 2
        %v1265 = vsel %vm1245, %v1262, %v1264
        %v1266 = vrot.slane %v514, 2
        %v1267 = vrot.slane %v515, 2
        %v1268 = vsel %vm1245, %v1266, %v1267
        %v1269 = vrot.slane %v516, 2
        %v1270 = vsel %vm1245, %v1267, %v1269
        %v1271 = vrot.slane %v517, 2
        %v1272 = vrot.slane %v518, 2
        %v1273 = vsel %vm1245, %v1271, %v1272
        %v1274 = vrot.slane %v519, 2
        %v1275 = vsel %vm1245, %v1272, %v1274
        %v1276 = vrot.slane %v520, 2
        %v1277 = vrot.slane %v521, 2
        %v1278 = vsel %vm1245, %v1276, %v1277
        %v1279 = vrot.slane %v522, 2
        %v1280 = vsel %vm1245, %v1277, %v1279
        %v1281 = vrot.slane %v523, 2
        %v1282 = vrot.slane %v524, 2
        %v1283 = vsel %vm1245, %v1281, %v1282
        %v1284 = vrot.slane %v525, 2
        %v1285 = vsel %vm1245, %v1282, %v1284
        %v1286 = vrot.slane %v526, 2
        %v1287 = vrot.slane %v527, 2
        %v1288 = vsel %vm1245, %v1286, %v1287
        %v1289 = vrot.slane %v528, 2
        %v1290 = vsel %vm1245, %v1287, %v1289
        %v1291 = vrot.slane %v529, 2
        %v1292 = vrot.slane %v530, 2
        %v1293 = vsel %vm1245, %v1291, %v1292
        %v1294 = vrot.slane %v531, 2
        %v1295 = vsel %vm1245, %v1292, %v1294
        %v1296 = vrot.slane %v532, 2
        %v1297 = vrot.slane %v533, 2
        %v1298 = vsel %vm1245, %v1296, %v1297
        %v1299 = vrot.slane %v534, 2
        %v1300 = vsel %vm1245, %v1297, %v1299
        %v1301 = vrot.slane %v535, 2
        %v1302 = vrot.slane %v536, 2
        %v1303 = vsel %vm1245, %v1301, %v1302
        %v1304 = vrot.slane %v537, 2
        %v1305 = vsel %vm1245, %v1302, %v1304
        %v1306 = vrot.slane %v538, 2
        %v1307 = vrot.slane %v539, 2
        %v1308 = vsel %vm1245, %v1306, %v1307
        %v1309 = vrot.slane %v540, 2
        %v1310 = vsel %vm1245, %v1307, %v1309
        %v1311 = vrot.slane %v541, 2
        %v1312 = vrot.slane %v542, 2
        %v1313 = vsel %vm1245, %v1311, %v1312
        %v1314 = vrot.slane %v543, 2
        %v1315 = vsel %vm1245, %v1312, %v1314
        %v1316 = vrot.slane %v544, 2
        %v1317 = vrot.slane %v545, 2
        %v1318 = vsel %vm1245, %v1316, %v1317
        %v1319 = vrot.slane %v546, 2
        %v1320 = vsel %vm1245, %v1317, %v1319
        %v1321 = vrot.slane %v547, 2
        %v1322 = vrot.slane %v548, 2
        %v1323 = vsel %vm1245, %v1321, %v1322
        %v1324 = vrot.slane %v549, 2
        %v1325 = vsel %vm1245, %v1322, %v1324
        %v1358 = vpack.c.bf16 %v1250, %v1248
        %v1359 = vpack.c.bf16 %v1255, %v1253
        %v1360 = vpack.c.bf16 %v1260, %v1258
        %v1361 = vpack.c.bf16 %v1265, %v1263
        %v1362 = vpack.c.bf16 %v1270, %v1268
        %v1363 = vpack.c.bf16 %v1275, %v1273
        %v1364 = vpack.c.bf16 %v1280, %v1278
        %v1365 = vpack.c.bf16 %v1285, %v1283
        %v1366 = vpack.c.bf16 %v1290, %v1288
        %v1367 = vpack.c.bf16 %v1295, %v1293
        %v1368 = vpack.c.bf16 %v1300, %v1298
        %v1369 = vpack.c.bf16 %v1305, %v1303
        %v1370 = vpack.c.bf16 %v1310, %v1308
        %v1371 = vpack.c.bf16 %v1315, %v1313
        %v1372 = vpack.c.bf16 %v1320, %v1318
        %v1373 = vpack.c.bf16 %v1325, %v1323
        %s1374 = scalar_lea.vmem %s1, 4
        %v1375 = vld [vmem:[%s1374] sm:$0x3]
        %v1377 = vsel %vm238, %v1358, 0
        %v1380 = vsel %vm238, %v1359, 0
        %v1383 = vsel %vm238, %v1360, 0
        %v1386 = vsel %vm238, %v1361, 0
        %v1389 = vsel %vm238, %v1362, 0
        %v1392 = vsel %vm238, %v1363, 0
        %v1395 = vsel %vm238, %v1364, 0
        %v1398 = vsel %vm238, %v1365, 0
        %v1401 = vsel %vm238, %v1366, 0
        %v1404 = vsel %vm238, %v1367, 0
        %v1407 = vsel %vm238, %v1368, 0
        %v1410 = vsel %vm238, %v1369, 0
        %v1413 = vsel %vm238, %v1370, 0
        %v1416 = vsel %vm238, %v1371, 0
        %v1419 = vsel %vm238, %v1372, 0
        %v1422 = vsel %vm238, %v1373, 0
        %v1425 = vsel %vm625, %v1375, 0
        %1427 = vmatprep.subr.bf16.mxu0 0
        %1428 = vmatpush1.bf16.msra.mxu0 %v1425
        %1429 = vmatprep.subr.bf16.mxu0 0
        %1430 = vmatpush1.bf16.msra.mxu0 0
        %1431 = vmatprep.subr.bf16.mxu0 0
        %1432 = vmatpush1.bf16.msra.mxu0 0
        %1433 = vmatprep.subr.bf16.mxu0 0
        %1434 = vmatpush1.bf16.msra.mxu0 0
        %1435 = vmatprep.subr.bf16.mxu0 0
        %1436 = vmatpush1.bf16.msra.mxu0 0
        %1437 = vmatprep.subr.bf16.mxu0 0
        %1438 = vmatpush1.bf16.msra.mxu0 0
        %1439 = vmatprep.subr.bf16.mxu0 0
        %1440 = vmatpush1.bf16.msra.mxu0 0
        %1441 = vmatprep.subr.bf16.mxu0 0
        %1442 = vmatpush1.bf16.msra.mxu0 0
        %1443 = vmatprep.subr.bf16.mxu0 0
        %1444 = vmatpush1.bf16.msra.mxu0 0
        %1445 = vmatprep.subr.bf16.mxu0 0
        %1446 = vmatpush1.bf16.msra.mxu0 0
        %1447 = vmatprep.subr.bf16.mxu0 0
        %1448 = vmatpush1.bf16.msra.mxu0 0
        %1449 = vmatprep.subr.bf16.mxu0 0
        %1450 = vmatpush1.bf16.msra.mxu0 0
        %1451 = vmatprep.subr.bf16.mxu0 0
        %1452 = vmatpush1.bf16.msra.mxu0 0
        %1453 = vmatprep.subr.bf16.mxu0 0
        %1454 = vmatpush1.bf16.msra.mxu0 0
        %1455 = vmatprep.subr.bf16.mxu0 0
        %1456 = vmatpush1.bf16.msra.mxu0 0
        %1457 = vmatprep.subr.bf16.mxu0 0
        %1458 = vmatpush1.bf16.msra.mxu0 0
        %1459 = vmatprep.mubr.bf16.mxu0 0
        %1460 = vmatmul.mubr.bf16.gmra.mrb[0].mxu0 %v1377
        %v1461 = vpop.f32.mrb[0].mxu0
        %v1462 = vadd.f32 0.0, %v1461
        %v1463 = vpop.f32.mrb[0].mxu0
        %v1464 = vpop.f32.mrb[0].mxu0
        %v1465 = vadd.f32 0.0, %v1464
        %v1466 = vpop.f32.mrb[0].mxu0
        %1467 = vmatprep.mubr.bf16.mxu0 0
        %1468 = vmatmul.mubr.bf16.gmra.mrb[0].mxu0 %v1380
        %v1469 = vpop.f32.mrb[0].mxu0
        %v1470 = vadd.f32 0.0, %v1469
        %v1471 = vpop.f32.mrb[0].mxu0
        %v1472 = vpop.f32.mrb[0].mxu0
        %v1473 = vadd.f32 0.0, %v1472
        %v1474 = vpop.f32.mrb[0].mxu0
        %1475 = vmatprep.mubr.bf16.mxu0 0
        %1476 = vmatmul.mubr.bf16.gmra.mrb[0].mxu0 %v1383
        %v1477 = vpop.f32.mrb[0].mxu0
        %v1478 = vadd.f32 0.0, %v1477
        %v1479 = vpop.f32.mrb[0].mxu0
        %v1480 = vpop.f32.mrb[0].mxu0
        %v1481 = vadd.f32 0.0, %v1480
        %v1482 = vpop.f32.mrb[0].mxu0
        %1483 = vmatprep.mubr.bf16.mxu0 0
        %1484 = vmatmul.mubr.bf16.gmra.mrb[0].mxu0 %v1386
        %v1485 = vpop.f32.mrb[0].mxu0
        %v1486 = vadd.f32 0.0, %v1485
        %v1487 = vpop.f32.mrb[0].mxu0
        %v1488 = vpop.f32.mrb[0].mxu0
        %v1489 = vadd.f32 0.0, %v1488
        %v1490 = vpop.f32.mrb[0].mxu0
        %1491 = vmatprep.mubr.bf16.mxu0 0
        %1492 = vmatmul.mubr.bf16.gmra.mrb[0].mxu0 %v1389
        %v1493 = vpop.f32.mrb[0].mxu0
        %v1494 = vadd.f32 0.0, %v1493
        %v1495 = vpop.f32.mrb[0].mxu0
        %v1496 = vpop.f32.mrb[0].mxu0
        %v1497 = vadd.f32 0.0, %v1496
        %v1498 = vpop.f32.mrb[0].mxu0
        %1499 = vmatprep.mubr.bf16.mxu0 0
        %1500 = vmatmul.mubr.bf16.gmra.mrb[0].mxu0 %v1392
        %v1501 = vpop.f32.mrb[0].mxu0
        %v1502 = vadd.f32 0.0, %v1501
        %v1503 = vpop.f32.mrb[0].mxu0
        %v1504 = vpop.f32.mrb[0].mxu0
        %v1505 = vadd.f32 0.0, %v1504
        %v1506 = vpop.f32.mrb[0].mxu0
        %1507 = vmatprep.mubr.bf16.mxu0 0
        %1508 = vmatmul.mubr.bf16.gmra.mrb[0].mxu0 %v1395
        %v1509 = vpop.f32.mrb[0].mxu0
        %v1510 = vadd.f32 0.0, %v1509
        %v1511 = vpop.f32.mrb[0].mxu0
        %v1512 = vpop.f32.mrb[0].mxu0
        %v1513 = vadd.f32 0.0, %v1512
        %v1514 = vpop.f32.mrb[0].mxu0
        %1515 = vmatprep.mubr.bf16.mxu0 0
        %1516 = vmatmul.mubr.bf16.gmra.mrb[0].mxu0 %v1398
        %v1517 = vpop.f32.mrb[0].mxu0
        %v1518 = vadd.f32 0.0, %v1517
        %v1519 = vpop.f32.mrb[0].mxu0
        %v1520 = vpop.f32.mrb[0].mxu0
        %v1521 = vadd.f32 0.0, %v1520
        %v1522 = vpop.f32.mrb[0].mxu0
        %1523 = vmatprep.mubr.bf16.mxu0 0
        %1524 = vmatmul.mubr.bf16.gmra.mrb[0].mxu0 %v1401
        %v1525 = vpop.f32.mrb[0].mxu0
        %v1526 = vadd.f32 0.0, %v1525
        %v1527 = vpop.f32.mrb[0].mxu0
        %v1528 = vpop.f32.mrb[0].mxu0
        %v1529 = vadd.f32 0.0, %v1528
        %v1530 = vpop.f32.mrb[0].mxu0
        %1531 = vmatprep.mubr.bf16.mxu0 0
        %1532 = vmatmul.mubr.bf16.gmra.mrb[0].mxu0 %v1404
        %v1533 = vpop.f32.mrb[0].mxu0
        %v1534 = vadd.f32 0.0, %v1533
        %v1535 = vpop.f32.mrb[0].mxu0
        %v1536 = vpop.f32.mrb[0].mxu0
        %v1537 = vadd.f32 0.0, %v1536
        %v1538 = vpop.f32.mrb[0].mxu0
        %1539 = vmatprep.mubr.bf16.mxu0 0
        %1540 = vmatmul.mubr.bf16.gmra.mrb[0].mxu0 %v1407
        %v1541 = vpop.f32.mrb[0].mxu0
        %v1542 = vadd.f32 0.0, %v1541
        %v1543 = vpop.f32.mrb[0].mxu0
        %v1544 = vpop.f32.mrb[0].mxu0
        %v1545 = vadd.f32 0.0, %v1544
        %v1546 = vpop.f32.mrb[0].mxu0
        %1547 = vmatprep.mubr.bf16.mxu0 0
        %1548 = vmatmul.mubr.bf16.gmra.mrb[0].mxu0 %v1410
        %v1549 = vpop.f32.mrb[0].mxu0
        %v1550 = vadd.f32 0.0, %v1549
        %v1551 = vpop.f32.mrb[0].mxu0
        %v1552 = vpop.f32.mrb[0].mxu0
        %v1553 = vadd.f32 0.0, %v1552
        %v1554 = vpop.f32.mrb[0].mxu0
        %1555 = vmatprep.mubr.bf16.mxu0 0
        %1556 = vmatmul.mubr.bf16.gmra.mrb[0].mxu0 %v1413
        %v1557 = vpop.f32.mrb[0].mxu0
        %v1558 = vadd.f32 0.0, %v1557
        %v1559 = vpop.f32.mrb[0].mxu0
        %v1560 = vpop.f32.mrb[0].mxu0
        %v1561 = vadd.f32 0.0, %v1560
        %v1562 = vpop.f32.mrb[0].mxu0
        %1563 = vmatprep.mubr.bf16.mxu0 0
        %1564 = vmatmul.mubr.bf16.gmra.mrb[0].mxu0 %v1416
        %v1565 = vpop.f32.mrb[0].mxu0
        %v1566 = vadd.f32 0.0, %v1565
        %v1567 = vpop.f32.mrb[0].mxu0
        %v1568 = vpop.f32.mrb[0].mxu0
        %v1569 = vadd.f32 0.0, %v1568
        %v1570 = vpop.f32.mrb[0].mxu0
        %1571 = vmatprep.mubr.bf16.mxu0 0
        %1572 = vmatmul.mubr.bf16.gmra.mrb[0].mxu0 %v1419
        %v1573 = vpop.f32.mrb[0].mxu0
        %v1574 = vadd.f32 0.0, %v1573
        %v1575 = vpop.f32.mrb[0].mxu0
        %v1576 = vpop.f32.mrb[0].mxu0
        %v1577 = vadd.f32 0.0, %v1576
        %v1578 = vpop.f32.mrb[0].mxu0
        %1579 = vmatprep.mubr.bf16.mxu0 0
        %1580 = vmatmul.mubr.bf16.gmra.mrb[0].mxu0 %v1422
        %v1581 = vpop.f32.mrb[0].mxu0
        %v1582 = vadd.f32 0.0, %v1581
        %v1583 = vpop.f32.mrb[0].mxu0
        %v1584 = vpop.f32.mrb[0].mxu0
        %v1585 = vadd.f32 0.0, %v1584
        %v1586 = vpop.f32.mrb[0].mxu0
        %1587 = vdwg.mxu0
        %v1588 = vadd.f32 %v1213, %v1462
        %v1589 = vadd.f32 %v1214, %v1465
        %v1590 = vadd.f32 %v1215, %v1470
        %v1591 = vadd.f32 %v1216, %v1473
        %v1592 = vadd.f32 %v1217, %v1478
        %v1593 = vadd.f32 %v1218, %v1481
        %v1594 = vadd.f32 %v1219, %v1486
        %v1595 = vadd.f32 %v1220, %v1489
        %v1596 = vadd.f32 %v1221, %v1494
        %v1597 = vadd.f32 %v1222, %v1497
        %v1598 = vadd.f32 %v1223, %v1502
        %v1599 = vadd.f32 %v1224, %v1505
        %v1600 = vadd.f32 %v1225, %v1510
        %v1601 = vadd.f32 %v1226, %v1513
        %v1602 = vadd.f32 %v1227, %v1518
        %v1603 = vadd.f32 %v1228, %v1521
        %v1604 = vadd.f32 %v1229, %v1526
        %v1605 = vadd.f32 %v1230, %v1529
        %v1606 = vadd.f32 %v1231, %v1534
        %v1607 = vadd.f32 %v1232, %v1537
        %v1608 = vadd.f32 %v1233, %v1542
        %v1609 = vadd.f32 %v1234, %v1545
        %v1610 = vadd.f32 %v1235, %v1550
        %v1611 = vadd.f32 %v1236, %v1553
        %v1612 = vadd.f32 %v1237, %v1558
        %v1613 = vadd.f32 %v1238, %v1561
        %v1614 = vadd.f32 %v1239, %v1566
        %v1615 = vadd.f32 %v1240, %v1569
        %v1616 = vadd.f32 %v1241, %v1574
        %v1617 = vadd.f32 %v1242, %v1577
        %v1618 = vadd.f32 %v1243, %v1582
        %v1619 = vadd.f32 %v1244, %v1585
        %v1620 = vpack.c.bf16 %v551, %v550
        %s1621 = scalar_lea.vmem %s1, 6
        %v1622 = vld [vmem:[%s1621] sm:$0x3]
        %v1624 = vsel %vm238, %v1620, 0
        %v1627 = vsel %vm625, %v1622, 0
        %1629 = vmatprep.subr.bf16.mxu0 0
        %1630 = vmatpush1.bf16.msra.mxu0 %v1627
        %1631 = vmatprep.subr.bf16.mxu0 0
        %1632 = vmatpush1.bf16.msra.mxu0 0
        %1633 = vmatprep.subr.bf16.mxu0 0
        %1634 = vmatpush1.bf16.msra.mxu0 0
        %1635 = vmatprep.subr.bf16.mxu0 0
        %1636 = vmatpush1.bf16.msra.mxu0 0
        %1637 = vmatprep.subr.bf16.mxu0 0
        %1638 = vmatpush1.bf16.msra.mxu0 0
        %1639 = vmatprep.subr.bf16.mxu0 0
        %1640 = vmatpush1.bf16.msra.mxu0 0
        %1641 = vmatprep.subr.bf16.mxu0 0
        %1642 = vmatpush1.bf16.msra.mxu0 0
        %1643 = vmatprep.subr.bf16.mxu0 0
        %1644 = vmatpush1.bf16.msra.mxu0 0
        %1645 = vmatprep.subr.bf16.mxu0 0
        %1646 = vmatpush1.bf16.msra.mxu0 0
        %1647 = vmatprep.subr.bf16.mxu0 0
        %1648 = vmatpush1.bf16.msra.mxu0 0
        %1649 = vmatprep.subr.bf16.mxu0 0
        %1650 = vmatpush1.bf16.msra.mxu0 0
        %1651 = vmatprep.subr.bf16.mxu0 0
        %1652 = vmatpush1.bf16.msra.mxu0 0
        %1653 = vmatprep.subr.bf16.mxu0 0
        %1654 = vmatpush1.bf16.msra.mxu0 0
        %1655 = vmatprep.subr.bf16.mxu0 0
        %1656 = vmatpush1.bf16.msra.mxu0 0
        %1657 = vmatprep.subr.bf16.mxu0 0
        %1658 = vmatpush1.bf16.msra.mxu0 0
        %1659 = vmatprep.subr.bf16.mxu0 0
        %1660 = vmatpush1.bf16.msra.mxu0 0
        %1661 = vmatprep.mubr.bf16.mxu0 0
        %1662 = vmatmul.mubr.bf16.gmra.mrb[0].mxu0 %v581
        %v1663 = vpop.f32.mrb[0].mxu0
        %v1664 = vadd.f32 0.0, %v1663
        %v1665 = vpop.f32.mrb[0].mxu0
        %v1666 = vpop.f32.mrb[0].mxu0
        %v1667 = vadd.f32 0.0, %v1666
        %v1668 = vpop.f32.mrb[0].mxu0
        %1669 = vmatprep.mubr.bf16.mxu0 0
        %1670 = vmatmul.mubr.bf16.gmra.mrb[0].mxu0 %v584
        %v1671 = vpop.f32.mrb[0].mxu0
        %v1672 = vadd.f32 0.0, %v1671
        %v1673 = vpop.f32.mrb[0].mxu0
        %v1674 = vpop.f32.mrb[0].mxu0
        %v1675 = vadd.f32 0.0, %v1674
        %v1676 = vpop.f32.mrb[0].mxu0
        %1677 = vmatprep.mubr.bf16.mxu0 0
        %1678 = vmatmul.mubr.bf16.gmra.mrb[0].mxu0 %v587
        %v1679 = vpop.f32.mrb[0].mxu0
        %v1680 = vadd.f32 0.0, %v1679
        %v1681 = vpop.f32.mrb[0].mxu0
        %v1682 = vpop.f32.mrb[0].mxu0
        %v1683 = vadd.f32 0.0, %v1682
        %v1684 = vpop.f32.mrb[0].mxu0
        %1685 = vmatprep.mubr.bf16.mxu0 0
        %1686 = vmatmul.mubr.bf16.gmra.mrb[0].mxu0 %v590
        %v1687 = vpop.f32.mrb[0].mxu0
        %v1688 = vadd.f32 0.0, %v1687
        %v1689 = vpop.f32.mrb[0].mxu0
        %v1690 = vpop.f32.mrb[0].mxu0
        %v1691 = vadd.f32 0.0, %v1690
        %v1692 = vpop.f32.mrb[0].mxu0
        %1693 = vmatprep.mubr.bf16.mxu0 0
        %1694 = vmatmul.mubr.bf16.gmra.mrb[0].mxu0 %v593
        %v1695 = vpop.f32.mrb[0].mxu0
        %v1696 = vadd.f32 0.0, %v1695
        %v1697 = vpop.f32.mrb[0].mxu0
        %v1698 = vpop.f32.mrb[0].mxu0
        %v1699 = vadd.f32 0.0, %v1698
        %v1700 = vpop.f32.mrb[0].mxu0
        %1701 = vmatprep.mubr.bf16.mxu0 0
        %1702 = vmatmul.mubr.bf16.gmra.mrb[0].mxu0 %v596
        %v1703 = vpop.f32.mrb[0].mxu0
        %v1704 = vadd.f32 0.0, %v1703
        %v1705 = vpop.f32.mrb[0].mxu0
        %v1706 = vpop.f32.mrb[0].mxu0
        %v1707 = vadd.f32 0.0, %v1706
        %v1708 = vpop.f32.mrb[0].mxu0
        %1709 = vmatprep.mubr.bf16.mxu0 0
        %1710 = vmatmul.mubr.bf16.gmra.mrb[0].mxu0 %v599
        %v1711 = vpop.f32.mrb[0].mxu0
        %v1712 = vadd.f32 0.0, %v1711
        %v1713 = vpop.f32.mrb[0].mxu0
        %v1714 = vpop.f32.mrb[0].mxu0
        %v1715 = vadd.f32 0.0, %v1714
        %v1716 = vpop.f32.mrb[0].mxu0
        %1717 = vmatprep.mubr.bf16.mxu0 0
        %1718 = vmatmul.mubr.bf16.gmra.mrb[0].mxu0 %v602
        %v1719 = vpop.f32.mrb[0].mxu0
        %v1720 = vadd.f32 0.0, %v1719
        %v1721 = vpop.f32.mrb[0].mxu0
        %v1722 = vpop.f32.mrb[0].mxu0
        %v1723 = vadd.f32 0.0, %v1722
        %v1724 = vpop.f32.mrb[0].mxu0
        %1725 = vmatprep.mubr.bf16.mxu0 0
        %1726 = vmatmul.mubr.bf16.gmra.mrb[0].mxu0 %v605
        %v1727 = vpop.f32.mrb[0].mxu0
        %v1728 = vadd.f32 0.0, %v1727
        %v1729 = vpop.f32.mrb[0].mxu0
        %v1730 = vpop.f32.mrb[0].mxu0
        %v1731 = vadd.f32 0.0, %v1730
        %v1732 = vpop.f32.mrb[0].mxu0
        %1733 = vmatprep.mubr.bf16.mxu0 0
        %1734 = vmatmul.mubr.bf16.gmra.mrb[0].mxu0 %v608
        %v1735 = vpop.f32.mrb[0].mxu0
        %v1736 = vadd.f32 0.0, %v1735
        %v1737 = vpop.f32.mrb[0].mxu0
        %v1738 = vpop.f32.mrb[0].mxu0
        %v1739 = vadd.f32 0.0, %v1738
        %v1740 = vpop.f32.mrb[0].mxu0
        %1741 = vmatprep.mubr.bf16.mxu0 0
        %1742 = vmatmul.mubr.bf16.gmra.mrb[0].mxu0 %v611
        %v1743 = vpop.f32.mrb[0].mxu0
        %v1744 = vadd.f32 0.0, %v1743
        %v1745 = vpop.f32.mrb[0].mxu0
        %v1746 = vpop.f32.mrb[0].mxu0
        %v1747 = vadd.f32 0.0, %v1746
        %v1748 = vpop.f32.mrb[0].mxu0
        %1749 = vmatprep.mubr.bf16.mxu0 0
        %1750 = vmatmul.mubr.bf16.gmra.mrb[0].mxu0 %v614
        %v1751 = vpop.f32.mrb[0].mxu0
        %v1752 = vadd.f32 0.0, %v1751
        %v1753 = vpop.f32.mrb[0].mxu0
        %v1754 = vpop.f32.mrb[0].mxu0
        %v1755 = vadd.f32 0.0, %v1754
        %v1756 = vpop.f32.mrb[0].mxu0
        %1757 = vmatprep.mubr.bf16.mxu0 0
        %1758 = vmatmul.mubr.bf16.gmra.mrb[0].mxu0 %v617
        %v1759 = vpop.f32.mrb[0].mxu0
        %v1760 = vadd.f32 0.0, %v1759
        %v1761 = vpop.f32.mrb[0].mxu0
        %v1762 = vpop.f32.mrb[0].mxu0
        %v1763 = vadd.f32 0.0, %v1762
        %v1764 = vpop.f32.mrb[0].mxu0
        %1765 = vmatprep.mubr.bf16.mxu0 0
        %1766 = vmatmul.mubr.bf16.gmra.mrb[0].mxu0 %v620
        %v1767 = vpop.f32.mrb[0].mxu0
        %v1768 = vadd.f32 0.0, %v1767
        %v1769 = vpop.f32.mrb[0].mxu0
        %v1770 = vpop.f32.mrb[0].mxu0
        %v1771 = vadd.f32 0.0, %v1770
        %v1772 = vpop.f32.mrb[0].mxu0
        %1773 = vmatprep.mubr.bf16.mxu0 0
        %1774 = vmatmul.mubr.bf16.gmra.mrb[0].mxu0 %v623
        %v1775 = vpop.f32.mrb[0].mxu0
        %v1776 = vadd.f32 0.0, %v1775
        %v1777 = vpop.f32.mrb[0].mxu0
        %v1778 = vpop.f32.mrb[0].mxu0
        %v1779 = vadd.f32 0.0, %v1778
        %v1780 = vpop.f32.mrb[0].mxu0
        %1781 = vmatprep.mubr.bf16.mxu0 0
        %1782 = vmatmul.mubr.bf16.gmra.mrb[0].mxu0 %v1624
        %v1783 = vpop.f32.mrb[0].mxu0
        %v1784 = vadd.f32 0.0, %v1783
        %v1785 = vpop.f32.mrb[0].mxu0
        %v1786 = vpop.f32.mrb[0].mxu0
        %v1787 = vadd.f32 0.0, %v1786
        %v1788 = vpop.f32.mrb[0].mxu0
        %1789 = vdwg.mxu0
        %v1790 = vadd.f32 %v1588, %v1664
        %v1791 = vadd.f32 %v1589, %v1667
        %v1792 = vadd.f32 %v1590, %v1672
        %v1793 = vadd.f32 %v1591, %v1675
        %v1794 = vadd.f32 %v1592, %v1680
        %v1795 = vadd.f32 %v1593, %v1683
        %v1796 = vadd.f32 %v1594, %v1688
        %v1797 = vadd.f32 %v1595, %v1691
        %v1798 = vadd.f32 %v1596, %v1696
        %v1799 = vadd.f32 %v1597, %v1699
        %v1800 = vadd.f32 %v1598, %v1704
        %v1801 = vadd.f32 %v1599, %v1707
        %v1802 = vadd.f32 %v1600, %v1712
        %v1803 = vadd.f32 %v1601, %v1715
        %v1804 = vadd.f32 %v1602, %v1720
        %v1805 = vadd.f32 %v1603, %v1723
        %v1806 = vadd.f32 %v1604, %v1728
        %v1807 = vadd.f32 %v1605, %v1731
        %v1808 = vadd.f32 %v1606, %v1736
        %v1809 = vadd.f32 %v1607, %v1739
        %v1810 = vadd.f32 %v1608, %v1744
        %v1811 = vadd.f32 %v1609, %v1747
        %v1812 = vadd.f32 %v1610, %v1752
        %v1813 = vadd.f32 %v1611, %v1755
        %v1814 = vadd.f32 %v1612, %v1760
        %v1815 = vadd.f32 %v1613, %v1763
        %v1816 = vadd.f32 %v1614, %v1768
        %v1817 = vadd.f32 %v1615, %v1771
        %v1818 = vadd.f32 %v1616, %v1776
        %v1819 = vadd.f32 %v1617, %v1779
        %v1820 = vadd.f32 %v1618, %v1784
        %v1821 = vadd.f32 %v1619, %v1787
        %v1825 = vrot.slane %v550, 1
        %v1826 = vrot.slane %v551, 1
        %v1827 = vsel %vm870, %v1825, %v1826
        %v1828 = vrot.slane %v552, 1
        %v1829 = vsel %vm870, %v1826, %v1828
        %v1832 = vpack.c.bf16 %v1829, %v1827
        %s1833 = scalar_lea.vmem %s1, 8
        %v1834 = vld [vmem:[%s1833] sm:$0x3]
        %v1836 = vsel %vm238, %v1832, 0
        %v1839 = vsel %vm625, %v1834, 0
        %1841 = vmatprep.subr.bf16.mxu0 0
        %1842 = vmatpush1.bf16.msra.mxu0 %v1839
        %1843 = vmatprep.subr.bf16.mxu0 0
        %1844 = vmatpush1.bf16.msra.mxu0 0
        %1845 = vmatprep.subr.bf16.mxu0 0
        %1846 = vmatpush1.bf16.msra.mxu0 0
        %1847 = vmatprep.subr.bf16.mxu0 0
        %1848 = vmatpush1.bf16.msra.mxu0 0
        %1849 = vmatprep.subr.bf16.mxu0 0
        %1850 = vmatpush1.bf16.msra.mxu0 0
        %1851 = vmatprep.subr.bf16.mxu0 0
        %1852 = vmatpush1.bf16.msra.mxu0 0
        %1853 = vmatprep.subr.bf16.mxu0 0
        %1854 = vmatpush1.bf16.msra.mxu0 0
        %1855 = vmatprep.subr.bf16.mxu0 0
        %1856 = vmatpush1.bf16.msra.mxu0 0
        %1857 = vmatprep.subr.bf16.mxu0 0
        %1858 = vmatpush1.bf16.msra.mxu0 0
        %1859 = vmatprep.subr.bf16.mxu0 0
        %1860 = vmatpush1.bf16.msra.mxu0 0
        %1861 = vmatprep.subr.bf16.mxu0 0
        %1862 = vmatpush1.bf16.msra.mxu0 0
        %1863 = vmatprep.subr.bf16.mxu0 0
        %1864 = vmatpush1.bf16.msra.mxu0 0
        %1865 = vmatprep.subr.bf16.mxu0 0
        %1866 = vmatpush1.bf16.msra.mxu0 0
        %1867 = vmatprep.subr.bf16.mxu0 0
        %1868 = vmatpush1.bf16.msra.mxu0 0
        %1869 = vmatprep.subr.bf16.mxu0 0
        %1870 = vmatpush1.bf16.msra.mxu0 0
        %1871 = vmatprep.subr.bf16.mxu0 0
        %1872 = vmatpush1.bf16.msra.mxu0 0
        %1873 = vmatprep.mubr.bf16.mxu0 0
        %1874 = vmatmul.mubr.bf16.gmra.mrb[0].mxu0 %v1005
        %v1875 = vpop.f32.mrb[0].mxu0
        %v1876 = vadd.f32 0.0, %v1875
        %v1877 = vpop.f32.mrb[0].mxu0
        %v1878 = vpop.f32.mrb[0].mxu0
        %v1879 = vadd.f32 0.0, %v1878
        %v1880 = vpop.f32.mrb[0].mxu0
        %1881 = vmatprep.mubr.bf16.mxu0 0
        %1882 = vmatmul.mubr.bf16.gmra.mrb[0].mxu0 %v1008
        %v1883 = vpop.f32.mrb[0].mxu0
        %v1884 = vadd.f32 0.0, %v1883
        %v1885 = vpop.f32.mrb[0].mxu0
        %v1886 = vpop.f32.mrb[0].mxu0
        %v1887 = vadd.f32 0.0, %v1886
        %v1888 = vpop.f32.mrb[0].mxu0
        %1889 = vmatprep.mubr.bf16.mxu0 0
        %1890 = vmatmul.mubr.bf16.gmra.mrb[0].mxu0 %v1011
        %v1891 = vpop.f32.mrb[0].mxu0
        %v1892 = vadd.f32 0.0, %v1891
        %v1893 = vpop.f32.mrb[0].mxu0
        %v1894 = vpop.f32.mrb[0].mxu0
        %v1895 = vadd.f32 0.0, %v1894
        %v1896 = vpop.f32.mrb[0].mxu0
        %1897 = vmatprep.mubr.bf16.mxu0 0
        %1898 = vmatmul.mubr.bf16.gmra.mrb[0].mxu0 %v1014
        %v1899 = vpop.f32.mrb[0].mxu0
        %v1900 = vadd.f32 0.0, %v1899
        %v1901 = vpop.f32.mrb[0].mxu0
        %v1902 = vpop.f32.mrb[0].mxu0
        %v1903 = vadd.f32 0.0, %v1902
        %v1904 = vpop.f32.mrb[0].mxu0
        %1905 = vmatprep.mubr.bf16.mxu0 0
        %1906 = vmatmul.mubr.bf16.gmra.mrb[0].mxu0 %v1017
        %v1907 = vpop.f32.mrb[0].mxu0
        %v1908 = vadd.f32 0.0, %v1907
        %v1909 = vpop.f32.mrb[0].mxu0
        %v1910 = vpop.f32.mrb[0].mxu0
        %v1911 = vadd.f32 0.0, %v1910
        %v1912 = vpop.f32.mrb[0].mxu0
        %1913 = vmatprep.mubr.bf16.mxu0 0
        %1914 = vmatmul.mubr.bf16.gmra.mrb[0].mxu0 %v1020
        %v1915 = vpop.f32.mrb[0].mxu0
        %v1916 = vadd.f32 0.0, %v1915
        %v1917 = vpop.f32.mrb[0].mxu0
        %v1918 = vpop.f32.mrb[0].mxu0
        %v1919 = vadd.f32 0.0, %v1918
        %v1920 = vpop.f32.mrb[0].mxu0
        %1921 = vmatprep.mubr.bf16.mxu0 0
        %1922 = vmatmul.mubr.bf16.gmra.mrb[0].mxu0 %v1023
        %v1923 = vpop.f32.mrb[0].mxu0
        %v1924 = vadd.f32 0.0, %v1923
        %v1925 = vpop.f32.mrb[0].mxu0
        %v1926 = vpop.f32.mrb[0].mxu0
        %v1927 = vadd.f32 0.0, %v1926
        %v1928 = vpop.f32.mrb[0].mxu0
        %1929 = vmatprep.mubr.bf16.mxu0 0
        %1930 = vmatmul.mubr.bf16.gmra.mrb[0].mxu0 %v1026
        %v1931 = vpop.f32.mrb[0].mxu0
        %v1932 = vadd.f32 0.0, %v1931
        %v1933 = vpop.f32.mrb[0].mxu0
        %v1934 = vpop.f32.mrb[0].mxu0
        %v1935 = vadd.f32 0.0, %v1934
        %v1936 = vpop.f32.mrb[0].mxu0
        %1937 = vmatprep.mubr.bf16.mxu0 0
        %1938 = vmatmul.mubr.bf16.gmra.mrb[0].mxu0 %v1029
        %v1939 = vpop.f32.mrb[0].mxu0
        %v1940 = vadd.f32 0.0, %v1939
        %v1941 = vpop.f32.mrb[0].mxu0
        %v1942 = vpop.f32.mrb[0].mxu0
        %v1943 = vadd.f32 0.0, %v1942
        %v1944 = vpop.f32.mrb[0].mxu0
        %1945 = vmatprep.mubr.bf16.mxu0 0
        %1946 = vmatmul.mubr.bf16.gmra.mrb[0].mxu0 %v1032
        %v1947 = vpop.f32.mrb[0].mxu0
        %v1948 = vadd.f32 0.0, %v1947
        %v1949 = vpop.f32.mrb[0].mxu0
        %v1950 = vpop.f32.mrb[0].mxu0
        %v1951 = vadd.f32 0.0, %v1950
        %v1952 = vpop.f32.mrb[0].mxu0
        %1953 = vmatprep.mubr.bf16.mxu0 0
        %1954 = vmatmul.mubr.bf16.gmra.mrb[0].mxu0 %v1035
        %v1955 = vpop.f32.mrb[0].mxu0
        %v1956 = vadd.f32 0.0, %v1955
        %v1957 = vpop.f32.mrb[0].mxu0
        %v1958 = vpop.f32.mrb[0].mxu0
        %v1959 = vadd.f32 0.0, %v1958
        %v1960 = vpop.f32.mrb[0].mxu0
        %1961 = vmatprep.mubr.bf16.mxu0 0
        %1962 = vmatmul.mubr.bf16.gmra.mrb[0].mxu0 %v1038
        %v1963 = vpop.f32.mrb[0].mxu0
        %v1964 = vadd.f32 0.0, %v1963
        %v1965 = vpop.f32.mrb[0].mxu0
        %v1966 = vpop.f32.mrb[0].mxu0
        %v1967 = vadd.f32 0.0, %v1966
        %v1968 = vpop.f32.mrb[0].mxu0
        %1969 = vmatprep.mubr.bf16.mxu0 0
        %1970 = vmatmul.mubr.bf16.gmra.mrb[0].mxu0 %v1041
        %v1971 = vpop.f32.mrb[0].mxu0
        %v1972 = vadd.f32 0.0, %v1971
        %v1973 = vpop.f32.mrb[0].mxu0
        %v1974 = vpop.f32.mrb[0].mxu0
        %v1975 = vadd.f32 0.0, %v1974
        %v1976 = vpop.f32.mrb[0].mxu0
        %1977 = vmatprep.mubr.bf16.mxu0 0
        %1978 = vmatmul.mubr.bf16.gmra.mrb[0].mxu0 %v1044
        %v1979 = vpop.f32.mrb[0].mxu0
        %v1980 = vadd.f32 0.0, %v1979
        %v1981 = vpop.f32.mrb[0].mxu0
        %v1982 = vpop.f32.mrb[0].mxu0
        %v1983 = vadd.f32 0.0, %v1982
        %v1984 = vpop.f32.mrb[0].mxu0
        %1985 = vmatprep.mubr.bf16.mxu0 0
        %1986 = vmatmul.mubr.bf16.gmra.mrb[0].mxu0 %v1047
        %v1987 = vpop.f32.mrb[0].mxu0
        %v1988 = vadd.f32 0.0, %v1987
        %v1989 = vpop.f32.mrb[0].mxu0
        %v1990 = vpop.f32.mrb[0].mxu0
        %v1991 = vadd.f32 0.0, %v1990
        %v1992 = vpop.f32.mrb[0].mxu0
        %1993 = vmatprep.mubr.bf16.mxu0 0
        %1994 = vmatmul.mubr.bf16.gmra.mrb[0].mxu0 %v1836
        %v1995 = vpop.f32.mrb[0].mxu0
        %v1996 = vadd.f32 0.0, %v1995
        %v1997 = vpop.f32.mrb[0].mxu0
        %v1998 = vpop.f32.mrb[0].mxu0
        %v1999 = vadd.f32 0.0, %v1998
        %v2000 = vpop.f32.mrb[0].mxu0
        %2001 = vdwg.mxu0
        %v2002 = vadd.f32 %v1790, %v1876
        %v2003 = vadd.f32 %v1791, %v1879
        %v2004 = vadd.f32 %v1792, %v1884
        %v2005 = vadd.f32 %v1793, %v1887
        %v2006 = vadd.f32 %v1794, %v1892
        %v2007 = vadd.f32 %v1795, %v1895
        %v2008 = vadd.f32 %v1796, %v1900
        %v2009 = vadd.f32 %v1797, %v1903
        %v2010 = vadd.f32 %v1798, %v1908
        %v2011 = vadd.f32 %v1799, %v1911
        %v2012 = vadd.f32 %v1800, %v1916
        %v2013 = vadd.f32 %v1801, %v1919
        %v2014 = vadd.f32 %v1802, %v1924
        %v2015 = vadd.f32 %v1803, %v1927
        %v2016 = vadd.f32 %v1804, %v1932
        %v2017 = vadd.f32 %v1805, %v1935
        %v2018 = vadd.f32 %v1806, %v1940
        %v2019 = vadd.f32 %v1807, %v1943
        %v2020 = vadd.f32 %v1808, %v1948
        %v2021 = vadd.f32 %v1809, %v1951
        %v2022 = vadd.f32 %v1810, %v1956
        %v2023 = vadd.f32 %v1811, %v1959
        %v2024 = vadd.f32 %v1812, %v1964
        %v2025 = vadd.f32 %v1813, %v1967
        %v2026 = vadd.f32 %v1814, %v1972
        %v2027 = vadd.f32 %v1815, %v1975
        %v2028 = vadd.f32 %v1816, %v1980
        %v2029 = vadd.f32 %v1817, %v1983
        %v2030 = vadd.f32 %v1818, %v1988
        %v2031 = vadd.f32 %v1819, %v1991
        %v2032 = vadd.f32 %v1820, %v1996
        %v2033 = vadd.f32 %v1821, %v1999
        %v2034 = vrot.slane %v550, 2
        %v2035 = vrot.slane %v551, 2
        %v2036 = vsel %vm1245, %v2034, %v2035
        %v2037 = vrot.slane %v552, 2
        %v2038 = vsel %vm1245, %v2035, %v2037
        %v2041 = vpack.c.bf16 %v2038, %v2036
        %s2042 = scalar_lea.vmem %s1, 10
        %v2043 = vld [vmem:[%s2042] sm:$0x3]
        %v2045 = vsel %vm238, %v2041, 0
        %v2048 = vsel %vm625, %v2043, 0
        %2050 = vmatprep.subr.bf16.mxu0 0
        %2051 = vmatpush1.bf16.msra.mxu0 %v2048
        %2052 = vmatprep.subr.bf16.mxu0 0
        %2053 = vmatpush1.bf16.msra.mxu0 0
        %2054 = vmatprep.subr.bf16.mxu0 0
        %2055 = vmatpush1.bf16.msra.mxu0 0
        %2056 = vmatprep.subr.bf16.mxu0 0
        %2057 = vmatpush1.bf16.msra.mxu0 0
        %2058 = vmatprep.subr.bf16.mxu0 0
        %2059 = vmatpush1.bf16.msra.mxu0 0
        %2060 = vmatprep.subr.bf16.mxu0 0
        %2061 = vmatpush1.bf16.msra.mxu0 0
        %2062 = vmatprep.subr.bf16.mxu0 0
        %2063 = vmatpush1.bf16.msra.mxu0 0
        %2064 = vmatprep.subr.bf16.mxu0 0
        %2065 = vmatpush1.bf16.msra.mxu0 0
        %2066 = vmatprep.subr.bf16.mxu0 0
        %2067 = vmatpush1.bf16.msra.mxu0 0
        %2068 = vmatprep.subr.bf16.mxu0 0
        %2069 = vmatpush1.bf16.msra.mxu0 0
        %2070 = vmatprep.subr.bf16.mxu0 0
        %2071 = vmatpush1.bf16.msra.mxu0 0
        %2072 = vmatprep.subr.bf16.mxu0 0
        %2073 = vmatpush1.bf16.msra.mxu0 0
        %2074 = vmatprep.subr.bf16.mxu0 0
        %2075 = vmatpush1.bf16.msra.mxu0 0
        %2076 = vmatprep.subr.bf16.mxu0 0
        %2077 = vmatpush1.bf16.msra.mxu0 0
        %2078 = vmatprep.subr.bf16.mxu0 0
        %2079 = vmatpush1.bf16.msra.mxu0 0
        %2080 = vmatprep.subr.bf16.mxu0 0
        %2081 = vmatpush1.bf16.msra.mxu0 0
        %2082 = vmatprep.mubr.bf16.mxu0 0
        %2083 = vmatmul.mubr.bf16.gmra.mrb[0].mxu0 %v1380
        %v2084 = vpop.f32.mrb[0].mxu0
        %v2085 = vadd.f32 0.0, %v2084
        %v2086 = vpop.f32.mrb[0].mxu0
        %v2087 = vpop.f32.mrb[0].mxu0
        %v2088 = vadd.f32 0.0, %v2087
        %v2089 = vpop.f32.mrb[0].mxu0
        %2090 = vmatprep.mubr.bf16.mxu0 0
        %2091 = vmatmul.mubr.bf16.gmra.mrb[0].mxu0 %v1383
        %v2092 = vpop.f32.mrb[0].mxu0
        %v2093 = vadd.f32 0.0, %v2092
        %v2094 = vpop.f32.mrb[0].mxu0
        %v2095 = vpop.f32.mrb[0].mxu0
        %v2096 = vadd.f32 0.0, %v2095
        %v2097 = vpop.f32.mrb[0].mxu0
        %2098 = vmatprep.mubr.bf16.mxu0 0
        %2099 = vmatmul.mubr.bf16.gmra.mrb[0].mxu0 %v1386
        %v2100 = vpop.f32.mrb[0].mxu0
        %v2101 = vadd.f32 0.0, %v2100
        %v2102 = vpop.f32.mrb[0].mxu0
        %v2103 = vpop.f32.mrb[0].mxu0
        %v2104 = vadd.f32 0.0, %v2103
        %v2105 = vpop.f32.mrb[0].mxu0
        %2106 = vmatprep.mubr.bf16.mxu0 0
        %2107 = vmatmul.mubr.bf16.gmra.mrb[0].mxu0 %v1389
        %v2108 = vpop.f32.mrb[0].mxu0
        %v2109 = vadd.f32 0.0, %v2108
        %v2110 = vpop.f32.mrb[0].mxu0
        %v2111 = vpop.f32.mrb[0].mxu0
        %v2112 = vadd.f32 0.0, %v2111
        %v2113 = vpop.f32.mrb[0].mxu0
        %2114 = vmatprep.mubr.bf16.mxu0 0
        %2115 = vmatmul.mubr.bf16.gmra.mrb[0].mxu0 %v1392
        %v2116 = vpop.f32.mrb[0].mxu0
        %v2117 = vadd.f32 0.0, %v2116
        %v2118 = vpop.f32.mrb[0].mxu0
        %v2119 = vpop.f32.mrb[0].mxu0
        %v2120 = vadd.f32 0.0, %v2119
        %v2121 = vpop.f32.mrb[0].mxu0
        %2122 = vmatprep.mubr.bf16.mxu0 0
        %2123 = vmatmul.mubr.bf16.gmra.mrb[0].mxu0 %v1395
        %v2124 = vpop.f32.mrb[0].mxu0
        %v2125 = vadd.f32 0.0, %v2124
        %v2126 = vpop.f32.mrb[0].mxu0
        %v2127 = vpop.f32.mrb[0].mxu0
        %v2128 = vadd.f32 0.0, %v2127
        %v2129 = vpop.f32.mrb[0].mxu0
        %2130 = vmatprep.mubr.bf16.mxu0 0
        %2131 = vmatmul.mubr.bf16.gmra.mrb[0].mxu0 %v1398
        %v2132 = vpop.f32.mrb[0].mxu0
        %v2133 = vadd.f32 0.0, %v2132
        %v2134 = vpop.f32.mrb[0].mxu0
        %v2135 = vpop.f32.mrb[0].mxu0
        %v2136 = vadd.f32 0.0, %v2135
        %v2137 = vpop.f32.mrb[0].mxu0
        %2138 = vmatprep.mubr.bf16.mxu0 0
        %2139 = vmatmul.mubr.bf16.gmra.mrb[0].mxu0 %v1401
        %v2140 = vpop.f32.mrb[0].mxu0
        %v2141 = vadd.f32 0.0, %v2140
        %v2142 = vpop.f32.mrb[0].mxu0
        %v2143 = vpop.f32.mrb[0].mxu0
        %v2144 = vadd.f32 0.0, %v2143
        %v2145 = vpop.f32.mrb[0].mxu0
        %2146 = vmatprep.mubr.bf16.mxu0 0
        %2147 = vmatmul.mubr.bf16.gmra.mrb[0].mxu0 %v1404
        %v2148 = vpop.f32.mrb[0].mxu0
        %v2149 = vadd.f32 0.0, %v2148
        %v2150 = vpop.f32.mrb[0].mxu0
        %v2151 = vpop.f32.mrb[0].mxu0
        %v2152 = vadd.f32 0.0, %v2151
        %v2153 = vpop.f32.mrb[0].mxu0
        %2154 = vmatprep.mubr.bf16.mxu0 0
        %2155 = vmatmul.mubr.bf16.gmra.mrb[0].mxu0 %v1407
        %v2156 = vpop.f32.mrb[0].mxu0
        %v2157 = vadd.f32 0.0, %v2156
        %v2158 = vpop.f32.mrb[0].mxu0
        %v2159 = vpop.f32.mrb[0].mxu0
        %v2160 = vadd.f32 0.0, %v2159
        %v2161 = vpop.f32.mrb[0].mxu0
        %2162 = vmatprep.mubr.bf16.mxu0 0
        %2163 = vmatmul.mubr.bf16.gmra.mrb[0].mxu0 %v1410
        %v2164 = vpop.f32.mrb[0].mxu0
        %v2165 = vadd.f32 0.0, %v2164
        %v2166 = vpop.f32.mrb[0].mxu0
        %v2167 = vpop.f32.mrb[0].mxu0
        %v2168 = vadd.f32 0.0, %v2167
        %v2169 = vpop.f32.mrb[0].mxu0
        %2170 = vmatprep.mubr.bf16.mxu0 0
        %2171 = vmatmul.mubr.bf16.gmra.mrb[0].mxu0 %v1413
        %v2172 = vpop.f32.mrb[0].mxu0
        %v2173 = vadd.f32 0.0, %v2172
        %v2174 = vpop.f32.mrb[0].mxu0
        %v2175 = vpop.f32.mrb[0].mxu0
        %v2176 = vadd.f32 0.0, %v2175
        %v2177 = vpop.f32.mrb[0].mxu0
        %2178 = vmatprep.mubr.bf16.mxu0 0
        %2179 = vmatmul.mubr.bf16.gmra.mrb[0].mxu0 %v1416
        %v2180 = vpop.f32.mrb[0].mxu0
        %v2181 = vadd.f32 0.0, %v2180
        %v2182 = vpop.f32.mrb[0].mxu0
        %v2183 = vpop.f32.mrb[0].mxu0
        %v2184 = vadd.f32 0.0, %v2183
        %v2185 = vpop.f32.mrb[0].mxu0
        %2186 = vmatprep.mubr.bf16.mxu0 0
        %2187 = vmatmul.mubr.bf16.gmra.mrb[0].mxu0 %v1419
        %v2188 = vpop.f32.mrb[0].mxu0
        %v2189 = vadd.f32 0.0, %v2188
        %v2190 = vpop.f32.mrb[0].mxu0
        %v2191 = vpop.f32.mrb[0].mxu0
        %v2192 = vadd.f32 0.0, %v2191
        %v2193 = vpop.f32.mrb[0].mxu0
        %2194 = vmatprep.mubr.bf16.mxu0 0
        %2195 = vmatmul.mubr.bf16.gmra.mrb[0].mxu0 %v1422
        %v2196 = vpop.f32.mrb[0].mxu0
        %v2197 = vadd.f32 0.0, %v2196
        %v2198 = vpop.f32.mrb[0].mxu0
        %v2199 = vpop.f32.mrb[0].mxu0
        %v2200 = vadd.f32 0.0, %v2199
        %v2201 = vpop.f32.mrb[0].mxu0
        %2202 = vmatprep.mubr.bf16.mxu0 0
        %2203 = vmatmul.mubr.bf16.gmra.mrb[0].mxu0 %v2045
        %v2204 = vpop.f32.mrb[0].mxu0
        %v2205 = vadd.f32 0.0, %v2204
        %v2206 = vpop.f32.mrb[0].mxu0
        %v2207 = vpop.f32.mrb[0].mxu0
        %v2208 = vadd.f32 0.0, %v2207
        %v2209 = vpop.f32.mrb[0].mxu0
        %2210 = vdwg.mxu0
        %v2211 = vadd.f32 %v2002, %v2085
        %v2212 = vadd.f32 %v2003, %v2088
        %v2213 = vadd.f32 %v2004, %v2093
        %v2214 = vadd.f32 %v2005, %v2096
        %v2215 = vadd.f32 %v2006, %v2101
        %v2216 = vadd.f32 %v2007, %v2104
        %v2217 = vadd.f32 %v2008, %v2109
        %v2218 = vadd.f32 %v2009, %v2112
        %v2219 = vadd.f32 %v2010, %v2117
        %v2220 = vadd.f32 %v2011, %v2120
        %v2221 = vadd.f32 %v2012, %v2125
        %v2222 = vadd.f32 %v2013, %v2128
        %v2223 = vadd.f32 %v2014, %v2133
        %v2224 = vadd.f32 %v2015, %v2136
        %v2225 = vadd.f32 %v2016, %v2141
        %v2226 = vadd.f32 %v2017, %v2144
        %v2227 = vadd.f32 %v2018, %v2149
        %v2228 = vadd.f32 %v2019, %v2152
        %v2229 = vadd.f32 %v2020, %v2157
        %v2230 = vadd.f32 %v2021, %v2160
        %v2231 = vadd.f32 %v2022, %v2165
        %v2232 = vadd.f32 %v2023, %v2168
        %v2233 = vadd.f32 %v2024, %v2173
        %v2234 = vadd.f32 %v2025, %v2176
        %v2235 = vadd.f32 %v2026, %v2181
        %v2236 = vadd.f32 %v2027, %v2184
        %v2237 = vadd.f32 %v2028, %v2189
        %v2238 = vadd.f32 %v2029, %v2192
        %v2239 = vadd.f32 %v2030, %v2197
        %v2240 = vadd.f32 %v2031, %v2200
        %v2241 = vadd.f32 %v2032, %v2205
        %v2242 = vadd.f32 %v2033, %v2208
        %v2243 = vpack.c.bf16 %v554, %v553
        %s2244 = scalar_lea.vmem %s1, 12
        %v2245 = vld [vmem:[%s2244] sm:$0x3]
        %v2247 = vsel %vm238, %v2243, 0
        %v2250 = vsel %vm625, %v2245, 0
        %2252 = vmatprep.subr.bf16.mxu0 0
        %2253 = vmatpush1.bf16.msra.mxu0 %v2250
        %2254 = vmatprep.subr.bf16.mxu0 0
        %2255 = vmatpush1.bf16.msra.mxu0 0
        %2256 = vmatprep.subr.bf16.mxu0 0
        %2257 = vmatpush1.bf16.msra.mxu0 0
        %2258 = vmatprep.subr.bf16.mxu0 0
        %2259 = vmatpush1.bf16.msra.mxu0 0
        %2260 = vmatprep.subr.bf16.mxu0 0
        %2261 = vmatpush1.bf16.msra.mxu0 0
        %2262 = vmatprep.subr.bf16.mxu0 0
        %2263 = vmatpush1.bf16.msra.mxu0 0
        %2264 = vmatprep.subr.bf16.mxu0 0
        %2265 = vmatpush1.bf16.msra.mxu0 0
        %2266 = vmatprep.subr.bf16.mxu0 0
        %2267 = vmatpush1.bf16.msra.mxu0 0
        %2268 = vmatprep.subr.bf16.mxu0 0
        %2269 = vmatpush1.bf16.msra.mxu0 0
        %2270 = vmatprep.subr.bf16.mxu0 0
        %2271 = vmatpush1.bf16.msra.mxu0 0
        %2272 = vmatprep.subr.bf16.mxu0 0
        %2273 = vmatpush1.bf16.msra.mxu0 0
        %2274 = vmatprep.subr.bf16.mxu0 0
        %2275 = vmatpush1.bf16.msra.mxu0 0
        %2276 = vmatprep.subr.bf16.mxu0 0
        %2277 = vmatpush1.bf16.msra.mxu0 0
        %2278 = vmatprep.subr.bf16.mxu0 0
        %2279 = vmatpush1.bf16.msra.mxu0 0
        %2280 = vmatprep.subr.bf16.mxu0 0
        %2281 = vmatpush1.bf16.msra.mxu0 0
        %2282 = vmatprep.subr.bf16.mxu0 0
        %2283 = vmatpush1.bf16.msra.mxu0 0
        %2284 = vmatprep.mubr.bf16.mxu0 0
        %2285 = vmatmul.mubr.bf16.gmra.mrb[0].mxu0 %v584
        %v2286 = vpop.f32.mrb[0].mxu0
        %v2287 = vadd.f32 0.0, %v2286
        %v2288 = vpop.f32.mrb[0].mxu0
        %v2289 = vpop.f32.mrb[0].mxu0
        %v2290 = vadd.f32 0.0, %v2289
        %v2291 = vpop.f32.mrb[0].mxu0
        %2292 = vmatprep.mubr.bf16.mxu0 0
        %2293 = vmatmul.mubr.bf16.gmra.mrb[0].mxu0 %v587
        %v2294 = vpop.f32.mrb[0].mxu0
        %v2295 = vadd.f32 0.0, %v2294
        %v2296 = vpop.f32.mrb[0].mxu0
        %v2297 = vpop.f32.mrb[0].mxu0
        %v2298 = vadd.f32 0.0, %v2297
        %v2299 = vpop.f32.mrb[0].mxu0
        %2300 = vmatprep.mubr.bf16.mxu0 0
        %2301 = vmatmul.mubr.bf16.gmra.mrb[0].mxu0 %v590
        %v2302 = vpop.f32.mrb[0].mxu0
        %v2303 = vadd.f32 0.0, %v2302
        %v2304 = vpop.f32.mrb[0].mxu0
        %v2305 = vpop.f32.mrb[0].mxu0
        %v2306 = vadd.f32 0.0, %v2305
        %v2307 = vpop.f32.mrb[0].mxu0
        %2308 = vmatprep.mubr.bf16.mxu0 0
        %2309 = vmatmul.mubr.bf16.gmra.mrb[0].mxu0 %v593
        %v2310 = vpop.f32.mrb[0].mxu0
        %v2311 = vadd.f32 0.0, %v2310
        %v2312 = vpop.f32.mrb[0].mxu0
        %v2313 = vpop.f32.mrb[0].mxu0
        %v2314 = vadd.f32 0.0, %v2313
        %v2315 = vpop.f32.mrb[0].mxu0
        %2316 = vmatprep.mubr.bf16.mxu0 0
        %2317 = vmatmul.mubr.bf16.gmra.mrb[0].mxu0 %v596
        %v2318 = vpop.f32.mrb[0].mxu0
        %v2319 = vadd.f32 0.0, %v2318
        %v2320 = vpop.f32.mrb[0].mxu0
        %v2321 = vpop.f32.mrb[0].mxu0
        %v2322 = vadd.f32 0.0, %v2321
        %v2323 = vpop.f32.mrb[0].mxu0
        %2324 = vmatprep.mubr.bf16.mxu0 0
        %2325 = vmatmul.mubr.bf16.gmra.mrb[0].mxu0 %v599
        %v2326 = vpop.f32.mrb[0].mxu0
        %v2327 = vadd.f32 0.0, %v2326
        %v2328 = vpop.f32.mrb[0].mxu0
        %v2329 = vpop.f32.mrb[0].mxu0
        %v2330 = vadd.f32 0.0, %v2329
        %v2331 = vpop.f32.mrb[0].mxu0
        %2332 = vmatprep.mubr.bf16.mxu0 0
        %2333 = vmatmul.mubr.bf16.gmra.mrb[0].mxu0 %v602
        %v2334 = vpop.f32.mrb[0].mxu0
        %v2335 = vadd.f32 0.0, %v2334
        %v2336 = vpop.f32.mrb[0].mxu0
        %v2337 = vpop.f32.mrb[0].mxu0
        %v2338 = vadd.f32 0.0, %v2337
        %v2339 = vpop.f32.mrb[0].mxu0
        %2340 = vmatprep.mubr.bf16.mxu0 0
        %2341 = vmatmul.mubr.bf16.gmra.mrb[0].mxu0 %v605
        %v2342 = vpop.f32.mrb[0].mxu0
        %v2343 = vadd.f32 0.0, %v2342
        %v2344 = vpop.f32.mrb[0].mxu0
        %v2345 = vpop.f32.mrb[0].mxu0
        %v2346 = vadd.f32 0.0, %v2345
        %v2347 = vpop.f32.mrb[0].mxu0
        %2348 = vmatprep.mubr.bf16.mxu0 0
        %2349 = vmatmul.mubr.bf16.gmra.mrb[0].mxu0 %v608
        %v2350 = vpop.f32.mrb[0].mxu0
        %v2351 = vadd.f32 0.0, %v2350
        %v2352 = vpop.f32.mrb[0].mxu0
        %v2353 = vpop.f32.mrb[0].mxu0
        %v2354 = vadd.f32 0.0, %v2353
        %v2355 = vpop.f32.mrb[0].mxu0
        %2356 = vmatprep.mubr.bf16.mxu0 0
        %2357 = vmatmul.mubr.bf16.gmra.mrb[0].mxu0 %v611
        %v2358 = vpop.f32.mrb[0].mxu0
        %v2359 = vadd.f32 0.0, %v2358
        %v2360 = vpop.f32.mrb[0].mxu0
        %v2361 = vpop.f32.mrb[0].mxu0
        %v2362 = vadd.f32 0.0, %v2361
        %v2363 = vpop.f32.mrb[0].mxu0
        %2364 = vmatprep.mubr.bf16.mxu0 0
        %2365 = vmatmul.mubr.bf16.gmra.mrb[0].mxu0 %v614
        %v2366 = vpop.f32.mrb[0].mxu0
        %v2367 = vadd.f32 0.0, %v2366
        %v2368 = vpop.f32.mrb[0].mxu0
        %v2369 = vpop.f32.mrb[0].mxu0
        %v2370 = vadd.f32 0.0, %v2369
        %v2371 = vpop.f32.mrb[0].mxu0
        %2372 = vmatprep.mubr.bf16.mxu0 0
        %2373 = vmatmul.mubr.bf16.gmra.mrb[0].mxu0 %v617
        %v2374 = vpop.f32.mrb[0].mxu0
        %v2375 = vadd.f32 0.0, %v2374
        %v2376 = vpop.f32.mrb[0].mxu0
        %v2377 = vpop.f32.mrb[0].mxu0
        %v2378 = vadd.f32 0.0, %v2377
        %v2379 = vpop.f32.mrb[0].mxu0
        %2380 = vmatprep.mubr.bf16.mxu0 0
        %2381 = vmatmul.mubr.bf16.gmra.mrb[0].mxu0 %v620
        %v2382 = vpop.f32.mrb[0].mxu0
        %v2383 = vadd.f32 0.0, %v2382
        %v2384 = vpop.f32.mrb[0].mxu0
        %v2385 = vpop.f32.mrb[0].mxu0
        %v2386 = vadd.f32 0.0, %v2385
        %v2387 = vpop.f32.mrb[0].mxu0
        %2388 = vmatprep.mubr.bf16.mxu0 0
        %2389 = vmatmul.mubr.bf16.gmra.mrb[0].mxu0 %v623
        %v2390 = vpop.f32.mrb[0].mxu0
        %v2391 = vadd.f32 0.0, %v2390
        %v2392 = vpop.f32.mrb[0].mxu0
        %v2393 = vpop.f32.mrb[0].mxu0
        %v2394 = vadd.f32 0.0, %v2393
        %v2395 = vpop.f32.mrb[0].mxu0
        %2396 = vmatprep.mubr.bf16.mxu0 0
        %2397 = vmatmul.mubr.bf16.gmra.mrb[0].mxu0 %v1624
        %v2398 = vpop.f32.mrb[0].mxu0
        %v2399 = vadd.f32 0.0, %v2398
        %v2400 = vpop.f32.mrb[0].mxu0
        %v2401 = vpop.f32.mrb[0].mxu0
        %v2402 = vadd.f32 0.0, %v2401
        %v2403 = vpop.f32.mrb[0].mxu0
        %2404 = vmatprep.mubr.bf16.mxu0 0
        %2405 = vmatmul.mubr.bf16.gmra.mrb[0].mxu0 %v2247
        %v2406 = vpop.f32.mrb[0].mxu0
        %v2407 = vadd.f32 0.0, %v2406
        %v2408 = vpop.f32.mrb[0].mxu0
        %v2409 = vpop.f32.mrb[0].mxu0
        %v2410 = vadd.f32 0.0, %v2409
        %v2411 = vpop.f32.mrb[0].mxu0
        %2412 = vdwg.mxu0
        %v2413 = vadd.f32 %v2211, %v2287
        %v2414 = vadd.f32 %v2212, %v2290
        %v2415 = vadd.f32 %v2213, %v2295
        %v2416 = vadd.f32 %v2214, %v2298
        %v2417 = vadd.f32 %v2215, %v2303
        %v2418 = vadd.f32 %v2216, %v2306
        %v2419 = vadd.f32 %v2217, %v2311
        %v2420 = vadd.f32 %v2218, %v2314
        %v2421 = vadd.f32 %v2219, %v2319
        %v2422 = vadd.f32 %v2220, %v2322
        %v2423 = vadd.f32 %v2221, %v2327
        %v2424 = vadd.f32 %v2222, %v2330
        %v2425 = vadd.f32 %v2223, %v2335
        %v2426 = vadd.f32 %v2224, %v2338
        %v2427 = vadd.f32 %v2225, %v2343
        %v2428 = vadd.f32 %v2226, %v2346
        %v2429 = vadd.f32 %v2227, %v2351
        %v2430 = vadd.f32 %v2228, %v2354
        %v2431 = vadd.f32 %v2229, %v2359
        %v2432 = vadd.f32 %v2230, %v2362
        %v2433 = vadd.f32 %v2231, %v2367
        %v2434 = vadd.f32 %v2232, %v2370
        %v2435 = vadd.f32 %v2233, %v2375
        %v2436 = vadd.f32 %v2234, %v2378
        %v2437 = vadd.f32 %v2235, %v2383
        %v2438 = vadd.f32 %v2236, %v2386
        %v2439 = vadd.f32 %v2237, %v2391
        %v2440 = vadd.f32 %v2238, %v2394
        %v2441 = vadd.f32 %v2239, %v2399
        %v2442 = vadd.f32 %v2240, %v2402
        %v2443 = vadd.f32 %v2241, %v2407
        %v2444 = vadd.f32 %v2242, %v2410
        %v2448 = vrot.slane %v553, 1
        %v2449 = vrot.slane %v554, 1
        %v2450 = vsel %vm870, %v2448, %v2449
        %v2451 = vrot.slane %v555, 1
        %v2452 = vsel %vm870, %v2449, %v2451
        %v2455 = vpack.c.bf16 %v2452, %v2450
        %s2456 = scalar_lea.vmem %s1, 14
        %v2457 = vld [vmem:[%s2456] sm:$0x3]
        %v2459 = vsel %vm238, %v2455, 0
        %v2462 = vsel %vm625, %v2457, 0
        %2464 = vmatprep.subr.bf16.mxu0 0
        %2465 = vmatpush1.bf16.msra.mxu0 %v2462
        %2466 = vmatprep.subr.bf16.mxu0 0
        %2467 = vmatpush1.bf16.msra.mxu0 0
        %2468 = vmatprep.subr.bf16.mxu0 0
        %2469 = vmatpush1.bf16.msra.mxu0 0
        %2470 = vmatprep.subr.bf16.mxu0 0
        %2471 = vmatpush1.bf16.msra.mxu0 0
        %2472 = vmatprep.subr.bf16.mxu0 0
        %2473 = vmatpush1.bf16.msra.mxu0 0
        %2474 = vmatprep.subr.bf16.mxu0 0
        %2475 = vmatpush1.bf16.msra.mxu0 0
        %2476 = vmatprep.subr.bf16.mxu0 0
        %2477 = vmatpush1.bf16.msra.mxu0 0
        %2478 = vmatprep.subr.bf16.mxu0 0
        %2479 = vmatpush1.bf16.msra.mxu0 0
        %2480 = vmatprep.subr.bf16.mxu0 0
        %2481 = vmatpush1.bf16.msra.mxu0 0
        %2482 = vmatprep.subr.bf16.mxu0 0
        %2483 = vmatpush1.bf16.msra.mxu0 0
        %2484 = vmatprep.subr.bf16.mxu0 0
        %2485 = vmatpush1.bf16.msra.mxu0 0
        %2486 = vmatprep.subr.bf16.mxu0 0
        %2487 = vmatpush1.bf16.msra.mxu0 0
        %2488 = vmatprep.subr.bf16.mxu0 0
        %2489 = vmatpush1.bf16.msra.mxu0 0
        %2490 = vmatprep.subr.bf16.mxu0 0
        %2491 = vmatpush1.bf16.msra.mxu0 0
        %2492 = vmatprep.subr.bf16.mxu0 0
        %2493 = vmatpush1.bf16.msra.mxu0 0
        %2494 = vmatprep.subr.bf16.mxu0 0
        %2495 = vmatpush1.bf16.msra.mxu0 0
        %2496 = vmatprep.mubr.bf16.mxu0 0
        %2497 = vmatmul.mubr.bf16.gmra.mrb[0].mxu0 %v1008
        %v2498 = vpop.f32.mrb[0].mxu0
        %v2499 = vadd.f32 0.0, %v2498
        %v2500 = vpop.f32.mrb[0].mxu0
        %v2501 = vpop.f32.mrb[0].mxu0
        %v2502 = vadd.f32 0.0, %v2501
        %v2503 = vpop.f32.mrb[0].mxu0
        %2504 = vmatprep.mubr.bf16.mxu0 0
        %2505 = vmatmul.mubr.bf16.gmra.mrb[0].mxu0 %v1011
        %v2506 = vpop.f32.mrb[0].mxu0
        %v2507 = vadd.f32 0.0, %v2506
        %v2508 = vpop.f32.mrb[0].mxu0
        %v2509 = vpop.f32.mrb[0].mxu0
        %v2510 = vadd.f32 0.0, %v2509
        %v2511 = vpop.f32.mrb[0].mxu0
        %2512 = vmatprep.mubr.bf16.mxu0 0
        %2513 = vmatmul.mubr.bf16.gmra.mrb[0].mxu0 %v1014
        %v2514 = vpop.f32.mrb[0].mxu0
        %v2515 = vadd.f32 0.0, %v2514
        %v2516 = vpop.f32.mrb[0].mxu0
        %v2517 = vpop.f32.mrb[0].mxu0
        %v2518 = vadd.f32 0.0, %v2517
        %v2519 = vpop.f32.mrb[0].mxu0
        %2520 = vmatprep.mubr.bf16.mxu0 0
        %2521 = vmatmul.mubr.bf16.gmra.mrb[0].mxu0 %v1017
        %v2522 = vpop.f32.mrb[0].mxu0
        %v2523 = vadd.f32 0.0, %v2522
        %v2524 = vpop.f32.mrb[0].mxu0
        %v2525 = vpop.f32.mrb[0].mxu0
        %v2526 = vadd.f32 0.0, %v2525
        %v2527 = vpop.f32.mrb[0].mxu0
        %2528 = vmatprep.mubr.bf16.mxu0 0
        %2529 = vmatmul.mubr.bf16.gmra.mrb[0].mxu0 %v1020
        %v2530 = vpop.f32.mrb[0].mxu0
        %v2531 = vadd.f32 0.0, %v2530
        %v2532 = vpop.f32.mrb[0].mxu0
        %v2533 = vpop.f32.mrb[0].mxu0
        %v2534 = vadd.f32 0.0, %v2533
        %v2535 = vpop.f32.mrb[0].mxu0
        %2536 = vmatprep.mubr.bf16.mxu0 0
        %2537 = vmatmul.mubr.bf16.gmra.mrb[0].mxu0 %v1023
        %v2538 = vpop.f32.mrb[0].mxu0
        %v2539 = vadd.f32 0.0, %v2538
        %v2540 = vpop.f32.mrb[0].mxu0
        %v2541 = vpop.f32.mrb[0].mxu0
        %v2542 = vadd.f32 0.0, %v2541
        %v2543 = vpop.f32.mrb[0].mxu0
        %2544 = vmatprep.mubr.bf16.mxu0 0
        %2545 = vmatmul.mubr.bf16.gmra.mrb[0].mxu0 %v1026
        %v2546 = vpop.f32.mrb[0].mxu0
        %v2547 = vadd.f32 0.0, %v2546
        %v2548 = vpop.f32.mrb[0].mxu0
        %v2549 = vpop.f32.mrb[0].mxu0
        %v2550 = vadd.f32 0.0, %v2549
        %v2551 = vpop.f32.mrb[0].mxu0
        %2552 = vmatprep.mubr.bf16.mxu0 0
        %2553 = vmatmul.mubr.bf16.gmra.mrb[0].mxu0 %v1029
        %v2554 = vpop.f32.mrb[0].mxu0
        %v2555 = vadd.f32 0.0, %v2554
        %v2556 = vpop.f32.mrb[0].mxu0
        %v2557 = vpop.f32.mrb[0].mxu0
        %v2558 = vadd.f32 0.0, %v2557
        %v2559 = vpop.f32.mrb[0].mxu0
        %2560 = vmatprep.mubr.bf16.mxu0 0
        %2561 = vmatmul.mubr.bf16.gmra.mrb[0].mxu0 %v1032
        %v2562 = vpop.f32.mrb[0].mxu0
        %v2563 = vadd.f32 0.0, %v2562
        %v2564 = vpop.f32.mrb[0].mxu0
        %v2565 = vpop.f32.mrb[0].mxu0
        %v2566 = vadd.f32 0.0, %v2565
        %v2567 = vpop.f32.mrb[0].mxu0
        %2568 = vmatprep.mubr.bf16.mxu0 0
        %2569 = vmatmul.mubr.bf16.gmra.mrb[0].mxu0 %v1035
        %v2570 = vpop.f32.mrb[0].mxu0
        %v2571 = vadd.f32 0.0, %v2570
        %v2572 = vpop.f32.mrb[0].mxu0
        %v2573 = vpop.f32.mrb[0].mxu0
        %v2574 = vadd.f32 0.0, %v2573
        %v2575 = vpop.f32.mrb[0].mxu0
        %2576 = vmatprep.mubr.bf16.mxu0 0
        %2577 = vmatmul.mubr.bf16.gmra.mrb[0].mxu0 %v1038
        %v2578 = vpop.f32.mrb[0].mxu0
        %v2579 = vadd.f32 0.0, %v2578
        %v2580 = vpop.f32.mrb[0].mxu0
        %v2581 = vpop.f32.mrb[0].mxu0
        %v2582 = vadd.f32 0.0, %v2581
        %v2583 = vpop.f32.mrb[0].mxu0
        %2584 = vmatprep.mubr.bf16.mxu0 0
        %2585 = vmatmul.mubr.bf16.gmra.mrb[0].mxu0 %v1041
        %v2586 = vpop.f32.mrb[0].mxu0
        %v2587 = vadd.f32 0.0, %v2586
        %v2588 = vpop.f32.mrb[0].mxu0
        %v2589 = vpop.f32.mrb[0].mxu0
        %v2590 = vadd.f32 0.0, %v2589
        %v2591 = vpop.f32.mrb[0].mxu0
        %2592 = vmatprep.mubr.bf16.mxu0 0
        %2593 = vmatmul.mubr.bf16.gmra.mrb[0].mxu0 %v1044
        %v2594 = vpop.f32.mrb[0].mxu0
        %v2595 = vadd.f32 0.0, %v2594
        %v2596 = vpop.f32.mrb[0].mxu0
        %v2597 = vpop.f32.mrb[0].mxu0
        %v2598 = vadd.f32 0.0, %v2597
        %v2599 = vpop.f32.mrb[0].mxu0
        %2600 = vmatprep.mubr.bf16.mxu0 0
        %2601 = vmatmul.mubr.bf16.gmra.mrb[0].mxu0 %v1047
        %v2602 = vpop.f32.mrb[0].mxu0
        %v2603 = vadd.f32 0.0, %v2602
        %v2604 = vpop.f32.mrb[0].mxu0
        %v2605 = vpop.f32.mrb[0].mxu0
        %v2606 = vadd.f32 0.0, %v2605
        %v2607 = vpop.f32.mrb[0].mxu0
        %2608 = vmatprep.mubr.bf16.mxu0 0
        %2609 = vmatmul.mubr.bf16.gmra.mrb[0].mxu0 %v1836
        %v2610 = vpop.f32.mrb[0].mxu0
        %v2611 = vadd.f32 0.0, %v2610
        %v2612 = vpop.f32.mrb[0].mxu0
        %v2613 = vpop.f32.mrb[0].mxu0
        %v2614 = vadd.f32 0.0, %v2613
        %v2615 = vpop.f32.mrb[0].mxu0
        %2616 = vmatprep.mubr.bf16.mxu0 0
        %2617 = vmatmul.mubr.bf16.gmra.mrb[0].mxu0 %v2459
        %v2618 = vpop.f32.mrb[0].mxu0
        %v2619 = vadd.f32 0.0, %v2618
        %v2620 = vpop.f32.mrb[0].mxu0
        %v2621 = vpop.f32.mrb[0].mxu0
        %v2622 = vadd.f32 0.0, %v2621
        %v2623 = vpop.f32.mrb[0].mxu0
        %2624 = vdwg.mxu0
        %v2625 = vadd.f32 %v2413, %v2499
        %v2626 = vadd.f32 %v2414, %v2502
        %v2627 = vadd.f32 %v2415, %v2507
        %v2628 = vadd.f32 %v2416, %v2510
        %v2629 = vadd.f32 %v2417, %v2515
        %v2630 = vadd.f32 %v2418, %v2518
        %v2631 = vadd.f32 %v2419, %v2523
        %v2632 = vadd.f32 %v2420, %v2526
        %v2633 = vadd.f32 %v2421, %v2531
        %v2634 = vadd.f32 %v2422, %v2534
        %v2635 = vadd.f32 %v2423, %v2539
        %v2636 = vadd.f32 %v2424, %v2542
        %v2637 = vadd.f32 %v2425, %v2547
        %v2638 = vadd.f32 %v2426, %v2550
        %v2639 = vadd.f32 %v2427, %v2555
        %v2640 = vadd.f32 %v2428, %v2558
        %v2641 = vadd.f32 %v2429, %v2563
        %v2642 = vadd.f32 %v2430, %v2566
        %v2643 = vadd.f32 %v2431, %v2571
        %v2644 = vadd.f32 %v2432, %v2574
        %v2645 = vadd.f32 %v2433, %v2579
        %v2646 = vadd.f32 %v2434, %v2582
        %v2647 = vadd.f32 %v2435, %v2587
        %v2648 = vadd.f32 %v2436, %v2590
        %v2649 = vadd.f32 %v2437, %v2595
        %v2650 = vadd.f32 %v2438, %v2598
        %v2651 = vadd.f32 %v2439, %v2603
        %v2652 = vadd.f32 %v2440, %v2606
        %v2653 = vadd.f32 %v2441, %v2611
        %v2654 = vadd.f32 %v2442, %v2614
        %v2655 = vadd.f32 %v2443, %v2619
        %v2656 = vadd.f32 %v2444, %v2622
        %v2657 = vrot.slane %v553, 2
        %v2658 = vrot.slane %v554, 2
        %v2659 = vsel %vm1245, %v2657, %v2658
        %v2660 = vrot.slane %v555, 2
        %v2661 = vsel %vm1245, %v2658, %v2660
        %v2664 = vpack.c.bf16 %v2661, %v2659
        %s2665 = scalar_lea.vmem %s1, 16
        %v2666 = vld [vmem:[%s2665] sm:$0x3]
        %v2668 = vsel %vm238, %v2664, 0
        %v2671 = vsel %vm625, %v2666, 0
        %2673 = vmatprep.subr.bf16.mxu0 0
        %2674 = vmatpush1.bf16.msra.mxu0 %v2671
        %2675 = vmatprep.subr.bf16.mxu0 0
        %2676 = vmatpush1.bf16.msra.mxu0 0
        %2677 = vmatprep.subr.bf16.mxu0 0
        %2678 = vmatpush1.bf16.msra.mxu0 0
        %2679 = vmatprep.subr.bf16.mxu0 0
        %2680 = vmatpush1.bf16.msra.mxu0 0
        %2681 = vmatprep.subr.bf16.mxu0 0
        %2682 = vmatpush1.bf16.msra.mxu0 0
        %2683 = vmatprep.subr.bf16.mxu0 0
        %2684 = vmatpush1.bf16.msra.mxu0 0
        %2685 = vmatprep.subr.bf16.mxu0 0
        %2686 = vmatpush1.bf16.msra.mxu0 0
        %2687 = vmatprep.subr.bf16.mxu0 0
        %2688 = vmatpush1.bf16.msra.mxu0 0
        %2689 = vmatprep.subr.bf16.mxu0 0
        %2690 = vmatpush1.bf16.msra.mxu0 0
        %2691 = vmatprep.subr.bf16.mxu0 0
        %2692 = vmatpush1.bf16.msra.mxu0 0
        %2693 = vmatprep.subr.bf16.mxu0 0
        %2694 = vmatpush1.bf16.msra.mxu0 0
        %2695 = vmatprep.subr.bf16.mxu0 0
        %2696 = vmatpush1.bf16.msra.mxu0 0
        %2697 = vmatprep.subr.bf16.mxu0 0
        %2698 = vmatpush1.bf16.msra.mxu0 0
        %2699 = vmatprep.subr.bf16.mxu0 0
        %2700 = vmatpush1.bf16.msra.mxu0 0
        %2701 = vmatprep.subr.bf16.mxu0 0
        %2702 = vmatpush1.bf16.msra.mxu0 0
        %2703 = vmatprep.subr.bf16.mxu0 0
        %2704 = vmatpush1.bf16.msra.mxu0 0
        %2705 = vmatprep.mubr.bf16.mxu0 0
        %2706 = vmatmul.mubr.bf16.gmra.mrb[0].mxu0 %v1383
        %v2707 = vpop.f32.mrb[0].mxu0
        %v2708 = vadd.f32 0.0, %v2707
        %v2709 = vpop.f32.mrb[0].mxu0
        %v2710 = vpop.f32.mrb[0].mxu0
        %v2711 = vadd.f32 0.0, %v2710
        %v2712 = vpop.f32.mrb[0].mxu0
        %2713 = vmatprep.mubr.bf16.mxu0 0
        %2714 = vmatmul.mubr.bf16.gmra.mrb[0].mxu0 %v1386
        %v2715 = vpop.f32.mrb[0].mxu0
        %v2716 = vadd.f32 0.0, %v2715
        %v2717 = vpop.f32.mrb[0].mxu0
        %v2718 = vpop.f32.mrb[0].mxu0
        %v2719 = vadd.f32 0.0, %v2718
        %v2720 = vpop.f32.mrb[0].mxu0
        %2721 = vmatprep.mubr.bf16.mxu0 0
        %2722 = vmatmul.mubr.bf16.gmra.mrb[0].mxu0 %v1389
        %v2723 = vpop.f32.mrb[0].mxu0
        %v2724 = vadd.f32 0.0, %v2723
        %v2725 = vpop.f32.mrb[0].mxu0
        %v2726 = vpop.f32.mrb[0].mxu0
        %v2727 = vadd.f32 0.0, %v2726
        %v2728 = vpop.f32.mrb[0].mxu0
        %2729 = vmatprep.mubr.bf16.mxu0 0
        %2730 = vmatmul.mubr.bf16.gmra.mrb[0].mxu0 %v1392
        %v2731 = vpop.f32.mrb[0].mxu0
        %v2732 = vadd.f32 0.0, %v2731
        %v2733 = vpop.f32.mrb[0].mxu0
        %v2734 = vpop.f32.mrb[0].mxu0
        %v2735 = vadd.f32 0.0, %v2734
        %v2736 = vpop.f32.mrb[0].mxu0
        %2737 = vmatprep.mubr.bf16.mxu0 0
        %2738 = vmatmul.mubr.bf16.gmra.mrb[0].mxu0 %v1395
        %v2739 = vpop.f32.mrb[0].mxu0
        %v2740 = vadd.f32 0.0, %v2739
        %v2741 = vpop.f32.mrb[0].mxu0
        %v2742 = vpop.f32.mrb[0].mxu0
        %v2743 = vadd.f32 0.0, %v2742
        %v2744 = vpop.f32.mrb[0].mxu0
        %2745 = vmatprep.mubr.bf16.mxu0 0
        %2746 = vmatmul.mubr.bf16.gmra.mrb[0].mxu0 %v1398
        %v2747 = vpop.f32.mrb[0].mxu0
        %v2748 = vadd.f32 0.0, %v2747
        %v2749 = vpop.f32.mrb[0].mxu0
        %v2750 = vpop.f32.mrb[0].mxu0
        %v2751 = vadd.f32 0.0, %v2750
        %v2752 = vpop.f32.mrb[0].mxu0
        %2753 = vmatprep.mubr.bf16.mxu0 0
        %2754 = vmatmul.mubr.bf16.gmra.mrb[0].mxu0 %v1401
        %v2755 = vpop.f32.mrb[0].mxu0
        %v2756 = vadd.f32 0.0, %v2755
        %v2757 = vpop.f32.mrb[0].mxu0
        %v2758 = vpop.f32.mrb[0].mxu0
        %v2759 = vadd.f32 0.0, %v2758
        %v2760 = vpop.f32.mrb[0].mxu0
        %2761 = vmatprep.mubr.bf16.mxu0 0
        %2762 = vmatmul.mubr.bf16.gmra.mrb[0].mxu0 %v1404
        %v2763 = vpop.f32.mrb[0].mxu0
        %v2764 = vadd.f32 0.0, %v2763
        %v2765 = vpop.f32.mrb[0].mxu0
        %v2766 = vpop.f32.mrb[0].mxu0
        %v2767 = vadd.f32 0.0, %v2766
        %v2768 = vpop.f32.mrb[0].mxu0
        %2769 = vmatprep.mubr.bf16.mxu0 0
        %2770 = vmatmul.mubr.bf16.gmra.mrb[0].mxu0 %v1407
        %v2771 = vpop.f32.mrb[0].mxu0
        %v2772 = vadd.f32 0.0, %v2771
        %v2773 = vpop.f32.mrb[0].mxu0
        %v2774 = vpop.f32.mrb[0].mxu0
        %v2775 = vadd.f32 0.0, %v2774
        %v2776 = vpop.f32.mrb[0].mxu0
        %2777 = vmatprep.mubr.bf16.mxu0 0
        %2778 = vmatmul.mubr.bf16.gmra.mrb[0].mxu0 %v1410
        %v2779 = vpop.f32.mrb[0].mxu0
        %v2780 = vadd.f32 0.0, %v2779
        %v2781 = vpop.f32.mrb[0].mxu0
        %v2782 = vpop.f32.mrb[0].mxu0
        %v2783 = vadd.f32 0.0, %v2782
        %v2784 = vpop.f32.mrb[0].mxu0
        %2785 = vmatprep.mubr.bf16.mxu0 0
        %2786 = vmatmul.mubr.bf16.gmra.mrb[0].mxu0 %v1413
        %v2787 = vpop.f32.mrb[0].mxu0
        %v2788 = vadd.f32 0.0, %v2787
        %v2789 = vpop.f32.mrb[0].mxu0
        %v2790 = vpop.f32.mrb[0].mxu0
        %v2791 = vadd.f32 0.0, %v2790
        %v2792 = vpop.f32.mrb[0].mxu0
        %2793 = vmatprep.mubr.bf16.mxu0 0
        %2794 = vmatmul.mubr.bf16.gmra.mrb[0].mxu0 %v1416
        %v2795 = vpop.f32.mrb[0].mxu0
        %v2796 = vadd.f32 0.0, %v2795
        %v2797 = vpop.f32.mrb[0].mxu0
        %v2798 = vpop.f32.mrb[0].mxu0
        %v2799 = vadd.f32 0.0, %v2798
        %v2800 = vpop.f32.mrb[0].mxu0
        %2801 = vmatprep.mubr.bf16.mxu0 0
        %2802 = vmatmul.mubr.bf16.gmra.mrb[0].mxu0 %v1419
        %v2803 = vpop.f32.mrb[0].mxu0
        %v2804 = vadd.f32 0.0, %v2803
        %v2805 = vpop.f32.mrb[0].mxu0
        %v2806 = vpop.f32.mrb[0].mxu0
        %v2807 = vadd.f32 0.0, %v2806
        %v2808 = vpop.f32.mrb[0].mxu0
        %2809 = vmatprep.mubr.bf16.mxu0 0
        %2810 = vmatmul.mubr.bf16.gmra.mrb[0].mxu0 %v1422
        %v2811 = vpop.f32.mrb[0].mxu0
        %v2812 = vadd.f32 0.0, %v2811
        %v2813 = vpop.f32.mrb[0].mxu0
        %v2814 = vpop.f32.mrb[0].mxu0
        %v2815 = vadd.f32 0.0, %v2814
        %v2816 = vpop.f32.mrb[0].mxu0
        %2817 = vmatprep.mubr.bf16.mxu0 0
        %2818 = vmatmul.mubr.bf16.gmra.mrb[0].mxu0 %v2045
        %v2819 = vpop.f32.mrb[0].mxu0
        %v2820 = vadd.f32 0.0, %v2819
        %v2821 = vpop.f32.mrb[0].mxu0
        %v2822 = vpop.f32.mrb[0].mxu0
        %v2823 = vadd.f32 0.0, %v2822
        %v2824 = vpop.f32.mrb[0].mxu0
        %2825 = vmatprep.mubr.bf16.mxu0 0
        %2826 = vmatmul.mubr.bf16.gmra.mrb[0].mxu0 %v2668
        %v2827 = vpop.f32.mrb[0].mxu0
        %v2828 = vadd.f32 0.0, %v2827
        %v2829 = vpop.f32.mrb[0].mxu0
        %v2830 = vpop.f32.mrb[0].mxu0
        %v2831 = vadd.f32 0.0, %v2830
        %v2832 = vpop.f32.mrb[0].mxu0
        %2833 = vdwg.mxu0
        %v2834 = vadd.f32 %v2625, %v2708
        %v2835 = vadd.f32 %v2626, %v2711
        %v2836 = vadd.f32 %v2627, %v2716
        %v2837 = vadd.f32 %v2628, %v2719
        %v2838 = vadd.f32 %v2629, %v2724
        %v2839 = vadd.f32 %v2630, %v2727
        %v2840 = vadd.f32 %v2631, %v2732
        %v2841 = vadd.f32 %v2632, %v2735
        %v2842 = vadd.f32 %v2633, %v2740
        %v2843 = vadd.f32 %v2634, %v2743
        %v2844 = vadd.f32 %v2635, %v2748
        %v2845 = vadd.f32 %v2636, %v2751
        %v2846 = vadd.f32 %v2637, %v2756
        %v2847 = vadd.f32 %v2638, %v2759
        %v2848 = vadd.f32 %v2639, %v2764
        %v2849 = vadd.f32 %v2640, %v2767
        %v2850 = vadd.f32 %v2641, %v2772
        %v2851 = vadd.f32 %v2642, %v2775
        %v2852 = vadd.f32 %v2643, %v2780
        %v2853 = vadd.f32 %v2644, %v2783
        %v2854 = vadd.f32 %v2645, %v2788
        %v2855 = vadd.f32 %v2646, %v2791
        %v2856 = vadd.f32 %v2647, %v2796
        %v2857 = vadd.f32 %v2648, %v2799
        %v2858 = vadd.f32 %v2649, %v2804
        %v2859 = vadd.f32 %v2650, %v2807
        %v2860 = vadd.f32 %v2651, %v2812
        %v2861 = vadd.f32 %v2652, %v2815
        %v2862 = vadd.f32 %v2653, %v2820
        %v2863 = vadd.f32 %v2654, %v2823
        %v2864 = vadd.f32 %v2655, %v2828
        %v2865 = vadd.f32 %v2656, %v2831
        %s2866 = sld [smem:[#allocation6]]
        %vm2867 = vcmp.gt.f32.partialorder %v2834, 0.0
        %vm2868 = vcmp.gt.f32.partialorder %v2835, 0.0
        %vm2869 = vcmp.gt.f32.partialorder %v2836, 0.0
        %vm2870 = vcmp.gt.f32.partialorder %v2837, 0.0
        %vm2871 = vcmp.gt.f32.partialorder %v2838, 0.0
        %vm2872 = vcmp.gt.f32.partialorder %v2839, 0.0
        %vm2873 = vcmp.gt.f32.partialorder %v2840, 0.0
        %vm2874 = vcmp.gt.f32.partialorder %v2841, 0.0
        %vm2875 = vcmp.gt.f32.partialorder %v2842, 0.0
        %vm2876 = vcmp.gt.f32.partialorder %v2843, 0.0
        %vm2877 = vcmp.gt.f32.partialorder %v2844, 0.0
        %vm2878 = vcmp.gt.f32.partialorder %v2845, 0.0
        %vm2879 = vcmp.gt.f32.partialorder %v2846, 0.0
        %vm2880 = vcmp.gt.f32.partialorder %v2847, 0.0
        %vm2881 = vcmp.gt.f32.partialorder %v2848, 0.0
        %vm2882 = vcmp.gt.f32.partialorder %v2849, 0.0
        %vm2883 = vcmp.gt.f32.partialorder %v2850, 0.0
        %vm2884 = vcmp.gt.f32.partialorder %v2851, 0.0
        %vm2885 = vcmp.gt.f32.partialorder %v2852, 0.0
        %vm2886 = vcmp.gt.f32.partialorder %v2853, 0.0
        %vm2887 = vcmp.gt.f32.partialorder %v2854, 0.0
        %vm2888 = vcmp.gt.f32.partialorder %v2855, 0.0
        %vm2889 = vcmp.gt.f32.partialorder %v2856, 0.0
        %vm2890 = vcmp.gt.f32.partialorder %v2857, 0.0
        %vm2891 = vcmp.gt.f32.partialorder %v2858, 0.0
        %vm2892 = vcmp.gt.f32.partialorder %v2859, 0.0
        %vm2893 = vcmp.gt.f32.partialorder %v2860, 0.0
        %vm2894 = vcmp.gt.f32.partialorder %v2861, 0.0
        %vm2895 = vcmp.gt.f32.partialorder %v2862, 0.0
        %vm2896 = vcmp.gt.f32.partialorder %v2863, 0.0
        %vm2897 = vcmp.gt.f32.partialorder %v2864, 0.0
        %vm2898 = vcmp.gt.f32.partialorder %v2865, 0.0
        %v2899 = vstv %s2866
        %v2900 = vmul.f32 %v2899, %v2834
        %v2901 = vmul.f32 %v2899, %v2835
        %v2902 = vmul.f32 %v2899, %v2836
        %v2903 = vmul.f32 %v2899, %v2837
        %v2904 = vmul.f32 %v2899, %v2838
        %v2905 = vmul.f32 %v2899, %v2839
        %v2906 = vmul.f32 %v2899, %v2840
        %v2907 = vmul.f32 %v2899, %v2841
        %v2908 = vmul.f32 %v2899, %v2842
        %v2909 = vmul.f32 %v2899, %v2843
        %v2910 = vmul.f32 %v2899, %v2844
        %v2911 = vmul.f32 %v2899, %v2845
        %v2912 = vmul.f32 %v2899, %v2846
        %v2913 = vmul.f32 %v2899, %v2847
        %v2914 = vmul.f32 %v2899, %v2848
        %v2915 = vmul.f32 %v2899, %v2849
        %v2916 = vmul.f32 %v2899, %v2850
        %v2917 = vmul.f32 %v2899, %v2851
        %v2918 = vmul.f32 %v2899, %v2852
        %v2919 = vmul.f32 %v2899, %v2853
        %v2920 = vmul.f32 %v2899, %v2854
        %v2921 = vmul.f32 %v2899, %v2855
        %v2922 = vmul.f32 %v2899, %v2856
        %v2923 = vmul.f32 %v2899, %v2857
        %v2924 = vmul.f32 %v2899, %v2858
        %v2925 = vmul.f32 %v2899, %v2859
        %v2926 = vmul.f32 %v2899, %v2860
        %v2927 = vmul.f32 %v2899, %v2861
        %v2928 = vmul.f32 %v2899, %v2862
        %v2929 = vmul.f32 %v2899, %v2863
        %v2930 = vmul.f32 %v2899, %v2864
        %v2931 = vmul.f32 %v2899, %v2865
        %v2932 = vsel %vm2867, %v2834, %v2900
        %v2933 = vsel %vm2868, %v2835, %v2901
        %v2934 = vsel %vm2869, %v2836, %v2902
        %v2935 = vsel %vm2870, %v2837, %v2903
        %v2936 = vsel %vm2871, %v2838, %v2904
        %v2937 = vsel %vm2872, %v2839, %v2905
        %v2938 = vsel %vm2873, %v2840, %v2906
        %v2939 = vsel %vm2874, %v2841, %v2907
        %v2940 = vsel %vm2875, %v2842, %v2908
        %v2941 = vsel %vm2876, %v2843, %v2909
        %v2942 = vsel %vm2877, %v2844, %v2910
        %v2943 = vsel %vm2878, %v2845, %v2911
        %v2944 = vsel %vm2879, %v2846, %v2912
        %v2945 = vsel %vm2880, %v2847, %v2913
        %v2946 = vsel %vm2881, %v2848, %v2914
        %v2947 = vsel %vm2882, %v2849, %v2915
        %v2948 = vsel %vm2883, %v2850, %v2916
        %v2949 = vsel %vm2884, %v2851, %v2917
        %v2950 = vsel %vm2885, %v2852, %v2918
        %v2951 = vsel %vm2886, %v2853, %v2919
        %v2952 = vsel %vm2887, %v2854, %v2920
        %v2953 = vsel %vm2888, %v2855, %v2921
        %v2954 = vsel %vm2889, %v2856, %v2922
        %v2955 = vsel %vm2890, %v2857, %v2923
        %v2956 = vsel %vm2891, %v2858, %v2924
        %v2957 = vsel %vm2892, %v2859, %v2925
        %v2958 = vsel %vm2893, %v2860, %v2926
        %v2959 = vsel %vm2894, %v2861, %v2927
        %v2960 = vsel %vm2895, %v2862, %v2928
        %v2961 = vsel %vm2896, %v2863, %v2929
        %v2962 = vsel %vm2897, %v2864, %v2930
        %v2963 = vsel %vm2898, %v2865, %v2931
        %s2964 = scalar_lea.vmem [#allocation3], 24
        %2965 = vst.msk [vmem:[%s2964 + $0x1] sm:$0xff] %vm294, %v2932
        %2966 = vst.msk [vmem:[%s2964 + $0x9] sm:$0xff] %vm294, %v2933
        %2967 = vst.msk [vmem:[%s2964 + $0x19] sm:$0xff] %vm294, %v2934
        %2968 = vst.msk [vmem:[%s2964 + $0x21] sm:$0xff] %vm294, %v2935
        %2969 = vst.msk [vmem:[%s2964 + $0x31] sm:$0xff] %vm294, %v2936
        %2970 = vst.msk [vmem:[%s2964 + $0x39] sm:$0xff] %vm294, %v2937
        %2971 = vst.msk [vmem:[%s2964 + $0x49] sm:$0xff] %vm294, %v2938
        %2972 = vst.msk [vmem:[%s2964 + $0x51] sm:$0xff] %vm294, %v2939
        %2973 = vst.msk [vmem:[%s2964 + $0x61] sm:$0xff] %vm294, %v2940
        %2974 = vst.msk [vmem:[%s2964 + $0x69] sm:$0xff] %vm294, %v2941
        %2975 = vst.msk [vmem:[%s2964 + $0x79] sm:$0xff] %vm294, %v2942
        %2976 = vst.msk [vmem:[%s2964 + $0x81] sm:$0xff] %vm294, %v2943
        %2977 = vst.msk [vmem:[%s2964 + $0x91] sm:$0xff] %vm294, %v2944
        %2978 = vst.msk [vmem:[%s2964 + $0x99] sm:$0xff] %vm294, %v2945
        %2979 = vst.msk [vmem:[%s2964 + $0xa9] sm:$0xff] %vm294, %v2946
        %2980 = vst.msk [vmem:[%s2964 + $0xb1] sm:$0xff] %vm294, %v2947
        %2981 = vst.msk [vmem:[%s2964 + $0xc1] sm:$0xff] %vm294, %v2948
        %2982 = vst.msk [vmem:[%s2964 + $0xc9] sm:$0xff] %vm294, %v2949
        %2983 = vst.msk [vmem:[%s2964 + $0xd9] sm:$0xff] %vm294, %v2950
        %2984 = vst.msk [vmem:[%s2964 + $0xe1] sm:$0xff] %vm294, %v2951
        %2985 = vst.msk [vmem:[%s2964 + $0xf1] sm:$0xff] %vm294, %v2952
        %2986 = vst.msk [vmem:[%s2964 + $0xf9] sm:$0xff] %vm294, %v2953
        %2987 = vst.msk [vmem:[%s2964 + $0x109] sm:$0xff] %vm294, %v2954
        %2988 = vst.msk [vmem:[%s2964 + $0x111] sm:$0xff] %vm294, %v2955
        %2989 = vst.msk [vmem:[%s2964 + $0x121] sm:$0xff] %vm294, %v2956
        %2990 = vst.msk [vmem:[%s2964 + $0x129] sm:$0xff] %vm294, %v2957
        %2991 = vst.msk [vmem:[%s2964 + $0x139] sm:$0xff] %vm294, %v2958
        %2992 = vst.msk [vmem:[%s2964 + $0x141] sm:$0xff] %vm294, %v2959
        %2993 = vst.msk [vmem:[%s2964 + $0x151] sm:$0xff] %vm294, %v2960
        %2994 = vst.msk [vmem:[%s2964 + $0x159] sm:$0xff] %vm294, %v2961
        %2995 = vst.msk [vmem:[%s2964 + $0x169] sm:$0xff] %vm294, %v2962
        %2996 = vst.msk [vmem:[%s2964 + $0x171] sm:$0xff] %vm294, %v2963
        %s2997 = sld [smem:[#allocation6 + $0x1]]
        %v2998 = vld [vmem:[#allocation3] sm:$0xff]
        %v2999 = vld [vmem:[#allocation3 + $0x8] sm:$0xff]
        %v3000 = vld [vmem:[#allocation3 + $0x10] sm:$0x3]
        %v3001 = vld [vmem:[#allocation3 + $0x18] sm:$0xff]
        %v3002 = vld [vmem:[#allocation3 + $0x20] sm:$0xff]
        %v3003 = vld [vmem:[#allocation3 + $0x28] sm:$0x3]
        %v3004 = vld [vmem:[#allocation3 + $0x30] sm:$0xff]
        %v3005 = vld [vmem:[#allocation3 + $0x38] sm:$0xff]
        %v3006 = vld [vmem:[#allocation3 + $0x40] sm:$0x3]
        %v3007 = vld [vmem:[#allocation3 + $0x48] sm:$0xff]
        %v3008 = vld [vmem:[#allocation3 + $0x50] sm:$0xff]
        %v3009 = vld [vmem:[#allocation3 + $0x58] sm:$0x3]
        %v3010 = vld [vmem:[#allocation3 + $0x60] sm:$0xff]
        %v3011 = vld [vmem:[#allocation3 + $0x68] sm:$0xff]
        %v3012 = vld [vmem:[#allocation3 + $0x70] sm:$0x3]
        %v3013 = vld [vmem:[#allocation3 + $0x78] sm:$0xff]
        %v3014 = vld [vmem:[#allocation3 + $0x80] sm:$0xff]
        %v3015 = vld [vmem:[#allocation3 + $0x88] sm:$0x3]
        %v3016 = vld [vmem:[#allocation3 + $0x90] sm:$0xff]
        %v3017 = vld [vmem:[#allocation3 + $0x98] sm:$0xff]
        %v3018 = vld [vmem:[#allocation3 + $0xa0] sm:$0x3]
        %v3019 = vld [vmem:[#allocation3 + $0xa8] sm:$0xff]
        %v3020 = vld [vmem:[#allocation3 + $0xb0] sm:$0xff]
        %v3021 = vld [vmem:[#allocation3 + $0xb8] sm:$0x3]
        %v3022 = vld [vmem:[#allocation3 + $0xc0] sm:$0xff]
        %v3023 = vld [vmem:[#allocation3 + $0xc8] sm:$0xff]
        %v3024 = vld [vmem:[#allocation3 + $0xd0] sm:$0x3]
        %v3025 = vld [vmem:[#allocation3 + $0xd8] sm:$0xff]
        %v3026 = vld [vmem:[#allocation3 + $0xe0] sm:$0xff]
        %v3027 = vld [vmem:[#allocation3 + $0xe8] sm:$0x3]
        %v3028 = vld [vmem:[#allocation3 + $0xf0] sm:$0xff]
        %v3029 = vld [vmem:[#allocation3 + $0xf8] sm:$0xff]
        %v3030 = vld [vmem:[#allocation3 + $0x100] sm:$0x3]
        %v3031 = vld [vmem:[#allocation3 + $0x108] sm:$0xff]
        %v3032 = vld [vmem:[#allocation3 + $0x110] sm:$0xff]
        %v3033 = vld [vmem:[#allocation3 + $0x118] sm:$0x3]
        %v3034 = vld [vmem:[#allocation3 + $0x120] sm:$0xff]
        %v3035 = vld [vmem:[#allocation3 + $0x128] sm:$0xff]
        %v3036 = vld [vmem:[#allocation3 + $0x130] sm:$0x3]
        %v3037 = vld [vmem:[#allocation3 + $0x138] sm:$0xff]
        %v3038 = vld [vmem:[#allocation3 + $0x140] sm:$0xff]
        %v3039 = vld [vmem:[#allocation3 + $0x148] sm:$0x3]
        %v3040 = vld [vmem:[#allocation3 + $0x150] sm:$0xff]
        %v3041 = vld [vmem:[#allocation3 + $0x158] sm:$0xff]
        %v3042 = vld [vmem:[#allocation3 + $0x160] sm:$0x3]
        %v3043 = vld [vmem:[#allocation3 + $0x168] sm:$0xff]
        %v3044 = vld [vmem:[#allocation3 + $0x170] sm:$0xff]
        %v3045 = vld [vmem:[#allocation3 + $0x178] sm:$0x3]
        %v3046 = vld [vmem:[#allocation3 + $0x180] sm:$0xff]
        %v3047 = vld [vmem:[#allocation3 + $0x188] sm:$0xff]
        %v3048 = vld [vmem:[#allocation3 + $0x190] sm:$0x3]
        %v3049 = vld [vmem:[#allocation3 + $0x198] sm:$0xff]
        %v3050 = vld [vmem:[#allocation3 + $0x1a0] sm:$0xff]
        %v3051 = vld [vmem:[#allocation3 + $0x1a8] sm:$0x3]
        %3052 = vst.msk [vmem:[#allocation5] sm:$0xff] %vm294, %v2998
        %3053 = vst.msk [vmem:[#allocation5 + $0x10] sm:$0xff] %vm294, %v2999
        %3054 = vst.msk [vmem:[#allocation5 + $0x20] sm:$0xff] %vm294, %v3001
        %3055 = vst.msk [vmem:[#allocation5 + $0x30] sm:$0xff] %vm294, %v3002
        %3056 = vst.msk [vmem:[#allocation5 + $0x40] sm:$0xff] %vm294, %v3004
        %3057 = vst.msk [vmem:[#allocation5 + $0x50] sm:$0xff] %vm294, %v3005
        %3058 = vst.msk [vmem:[#allocation5 + $0x60] sm:$0xff] %vm294, %v3007
        %3059 = vst.msk [vmem:[#allocation5 + $0x70] sm:$0xff] %vm294, %v3008
        %3060 = vst.msk [vmem:[#allocation5 + $0x80] sm:$0xff] %vm294, %v3010
        %3061 = vst.msk [vmem:[#allocation5 + $0x90] sm:$0xff] %vm294, %v3011
        %3062 = vst.msk [vmem:[#allocation5 + $0xa0] sm:$0xff] %vm294, %v3013
        %3063 = vst.msk [vmem:[#allocation5 + $0xb0] sm:$0xff] %vm294, %v3014
        %3064 = vst.msk [vmem:[#allocation5 + $0xc0] sm:$0xff] %vm294, %v3016
        %3065 = vst.msk [vmem:[#allocation5 + $0xd0] sm:$0xff] %vm294, %v3017
        %3066 = vst.msk [vmem:[#allocation5 + $0xe0] sm:$0xff] %vm294, %v3019
        %3067 = vst.msk [vmem:[#allocation5 + $0xf0] sm:$0xff] %vm294, %v3020
        %3068 = vst.msk [vmem:[#allocation5 + $0x100] sm:$0xff] %vm294, %v3022
        %3069 = vst.msk [vmem:[#allocation5 + $0x110] sm:$0xff] %vm294, %v3023
        %3070 = vst.msk [vmem:[#allocation5 + $0x120] sm:$0xff] %vm294, %v3025
        %3071 = vst.msk [vmem:[#allocation5 + $0x130] sm:$0xff] %vm294, %v3026
        %3072 = vst.msk [vmem:[#allocation5 + $0x140] sm:$0xff] %vm294, %v3028
        %3073 = vst.msk [vmem:[#allocation5 + $0x150] sm:$0xff] %vm294, %v3029
        %3074 = vst.msk [vmem:[#allocation5 + $0x160] sm:$0xff] %vm294, %v3031
        %3075 = vst.msk [vmem:[#allocation5 + $0x170] sm:$0xff] %vm294, %v3032
        %3076 = vst.msk [vmem:[#allocation5 + $0x180] sm:$0xff] %vm294, %v3034
        %3077 = vst.msk [vmem:[#allocation5 + $0x190] sm:$0xff] %vm294, %v3035
        %3078 = vst.msk [vmem:[#allocation5 + $0x1a0] sm:$0xff] %vm294, %v3037
        %3079 = vst.msk [vmem:[#allocation5 + $0x1b0] sm:$0xff] %vm294, %v3038
        %3080 = vst.msk [vmem:[#allocation5 + $0x1c0] sm:$0xff] %vm294, %v3040
        %3081 = vst.msk [vmem:[#allocation5 + $0x1d0] sm:$0xff] %vm294, %v3041
        %3082 = vst.msk [vmem:[#allocation5 + $0x1e0] sm:$0xff] %vm294, %v3043
        %3083 = vst.msk [vmem:[#allocation5 + $0x1f0] sm:$0xff] %vm294, %v3044
        %3084 = vst.msk [vmem:[#allocation5 + $0x200] sm:$0xff] %vm294, %v3046
        %3085 = vst.msk [vmem:[#allocation5 + $0x210] sm:$0xff] %vm294, %v3047
        %3086 = vst.msk [vmem:[#allocation5 + $0x220] sm:$0xff] %vm294, %v3049
        %3087 = vst.msk [vmem:[#allocation5 + $0x230] sm:$0xff] %vm294, %v3050
        %v3142 = vrot.slane %v2998, 1
        %v3143 = vrot.slane %v2999, 1
        %v3144 = vsel %vm870, %v3142, %v3143
        %v3145 = vrot.slane %v3000, 1
        %v3146 = vsel %vm870, %v3143, %v3145
        %v3147 = vrot.slane %v3001, 1
        %v3148 = vrot.slane %v3002, 1
        %v3149 = vsel %vm870, %v3147, %v3148
        %v3150 = vrot.slane %v3003, 1
        %v3151 = vsel %vm870, %v3148, %v3150
        %v3152 = vrot.slane %v3004, 1
        %v3153 = vrot.slane %v3005, 1
        %v3154 = vsel %vm870, %v3152, %v3153
        %v3155 = vrot.slane %v3006, 1
        %v3156 = vsel %vm870, %v3153, %v3155
        %v3157 = vrot.slane %v3007, 1
        %v3158 = vrot.slane %v3008, 1
        %v3159 = vsel %vm870, %v3157, %v3158
        %v3160 = vrot.slane %v3009, 1
        %v3161 = vsel %vm870, %v3158, %v3160
        %v3162 = vrot.slane %v3010, 1
        %v3163 = vrot.slane %v3011, 1
        %v3164 = vsel %vm870, %v3162, %v3163
        %v3165 = vrot.slane %v3012, 1
        %v3166 = vsel %vm870, %v3163, %v3165
        %v3167 = vrot.slane %v3013, 1
        %v3168 = vrot.slane %v3014, 1
        %v3169 = vsel %vm870, %v3167, %v3168
        %v3170 = vrot.slane %v3015, 1
        %v3171 = vsel %vm870, %v3168, %v3170
        %v3172 = vrot.slane %v3016, 1
        %v3173 = vrot.slane %v3017, 1
        %v3174 = vsel %vm870, %v3172, %v3173
        %v3175 = vrot.slane %v3018, 1
        %v3176 = vsel %vm870, %v3173, %v3175
        %v3177 = vrot.slane %v3019, 1
        %v3178 = vrot.slane %v3020, 1
        %v3179 = vsel %vm870, %v3177, %v3178
        %v3180 = vrot.slane %v3021, 1
        %v3181 = vsel %vm870, %v3178, %v3180
        %v3182 = vrot.slane %v3022, 1
        %v3183 = vrot.slane %v3023, 1
        %v3184 = vsel %vm870, %v3182, %v3183
        %v3185 = vrot.slane %v3024, 1
        %v3186 = vsel %vm870, %v3183, %v3185
        %v3187 = vrot.slane %v3025, 1
        %v3188 = vrot.slane %v3026, 1
        %v3189 = vsel %vm870, %v3187, %v3188
        %v3190 = vrot.slane %v3027, 1
        %v3191 = vsel %vm870, %v3188, %v3190
        %v3192 = vrot.slane %v3028, 1
        %v3193 = vrot.slane %v3029, 1
        %v3194 = vsel %vm870, %v3192, %v3193
        %v3195 = vrot.slane %v3030, 1
        %v3196 = vsel %vm870, %v3193, %v3195
        %v3197 = vrot.slane %v3031, 1
        %v3198 = vrot.slane %v3032, 1
        %v3199 = vsel %vm870, %v3197, %v3198
        %v3200 = vrot.slane %v3033, 1
        %v3201 = vsel %vm870, %v3198, %v3200
        %v3202 = vrot.slane %v3034, 1
        %v3203 = vrot.slane %v3035, 1
        %v3204 = vsel %vm870, %v3202, %v3203
        %v3205 = vrot.slane %v3036, 1
        %v3206 = vsel %vm870, %v3203, %v3205
        %v3207 = vrot.slane %v3037, 1
        %v3208 = vrot.slane %v3038, 1
        %v3209 = vsel %vm870, %v3207, %v3208
        %v3210 = vrot.slane %v3039, 1
        %v3211 = vsel %vm870, %v3208, %v3210
        %v3212 = vrot.slane %v3040, 1
        %v3213 = vrot.slane %v3041, 1
        %v3214 = vsel %vm870, %v3212, %v3213
        %v3215 = vrot.slane %v3042, 1
        %v3216 = vsel %vm870, %v3213, %v3215
        %v3217 = vrot.slane %v3043, 1
        %v3218 = vrot.slane %v3044, 1
        %v3219 = vsel %vm870, %v3217, %v3218
        %v3220 = vrot.slane %v3045, 1
        %v3221 = vsel %vm870, %v3218, %v3220
        %v3222 = vrot.slane %v3046, 1
        %v3223 = vrot.slane %v3047, 1
        %v3224 = vsel %vm870, %v3222, %v3223
        %v3225 = vrot.slane %v3048, 1
        %v3226 = vsel %vm870, %v3223, %v3225
        %v3227 = vrot.slane %v3049, 1
        %v3228 = vrot.slane %v3050, 1
        %v3229 = vsel %vm870, %v3227, %v3228
        %v3230 = vrot.slane %v3051, 1
        %v3231 = vsel %vm870, %v3228, %v3230
        %3232 = vrot.lane.b32.xlu0 %v3144, 64
        %v3233 = vpop.permute.xlu0 %3232
        %3234 = vrot.lane.b32.xlu0 %v3146, 64
        %v3235 = vpop.permute.xlu0 %3234
        %3236 = vrot.lane.b32.xlu0 %v3149, 64
        %v3237 = vpop.permute.xlu0 %3236
        %3238 = vrot.lane.b32.xlu0 %v3151, 64
        %v3239 = vpop.permute.xlu0 %3238
        %3240 = vrot.lane.b32.xlu0 %v3154, 64
        %v3241 = vpop.permute.xlu0 %3240
        %3242 = vrot.lane.b32.xlu0 %v3156, 64
        %v3243 = vpop.permute.xlu0 %3242
        %3244 = vrot.lane.b32.xlu0 %v3159, 64
        %v3245 = vpop.permute.xlu0 %3244
        %3246 = vrot.lane.b32.xlu0 %v3161, 64
        %v3247 = vpop.permute.xlu0 %3246
        %3248 = vrot.lane.b32.xlu0 %v3164, 64
        %v3249 = vpop.permute.xlu0 %3248
        %3250 = vrot.lane.b32.xlu0 %v3166, 64
        %v3251 = vpop.permute.xlu0 %3250
        %3252 = vrot.lane.b32.xlu0 %v3169, 64
        %v3253 = vpop.permute.xlu0 %3252
        %3254 = vrot.lane.b32.xlu0 %v3171, 64
        %v3255 = vpop.permute.xlu0 %3254
        %3256 = vrot.lane.b32.xlu0 %v3174, 64
        %v3257 = vpop.permute.xlu0 %3256
        %3258 = vrot.lane.b32.xlu0 %v3176, 64
        %v3259 = vpop.permute.xlu0 %3258
        %3260 = vrot.lane.b32.xlu0 %v3179, 64
        %v3261 = vpop.permute.xlu0 %3260
        %3262 = vrot.lane.b32.xlu0 %v3181, 64
        %v3263 = vpop.permute.xlu0 %3262
        %3264 = vrot.lane.b32.xlu0 %v3184, 64
        %v3265 = vpop.permute.xlu0 %3264
        %3266 = vrot.lane.b32.xlu0 %v3186, 64
        %v3267 = vpop.permute.xlu0 %3266
        %3268 = vrot.lane.b32.xlu0 %v3189, 64
        %v3269 = vpop.permute.xlu0 %3268
        %3270 = vrot.lane.b32.xlu0 %v3191, 64
        %v3271 = vpop.permute.xlu0 %3270
        %3272 = vrot.lane.b32.xlu0 %v3194, 64
        %v3273 = vpop.permute.xlu0 %3272
        %3274 = vrot.lane.b32.xlu0 %v3196, 64
        %v3275 = vpop.permute.xlu0 %3274
        %3276 = vrot.lane.b32.xlu0 %v3199, 64
        %v3277 = vpop.permute.xlu0 %3276
        %3278 = vrot.lane.b32.xlu0 %v3201, 64
        %v3279 = vpop.permute.xlu0 %3278
        %3280 = vrot.lane.b32.xlu0 %v3204, 64
        %v3281 = vpop.permute.xlu0 %3280
        %3282 = vrot.lane.b32.xlu0 %v3206, 64
        %v3283 = vpop.permute.xlu0 %3282
        %3284 = vrot.lane.b32.xlu0 %v3209, 64
        %v3285 = vpop.permute.xlu0 %3284
        %3286 = vrot.lane.b32.xlu0 %v3211, 64
        %v3287 = vpop.permute.xlu0 %3286
        %3288 = vrot.lane.b32.xlu0 %v3214, 64
        %v3289 = vpop.permute.xlu0 %3288
        %3290 = vrot.lane.b32.xlu0 %v3216, 64
        %v3291 = vpop.permute.xlu0 %3290
        %3292 = vrot.lane.b32.xlu0 %v3219, 64
        %v3293 = vpop.permute.xlu0 %3292
        %3294 = vrot.lane.b32.xlu0 %v3221, 64
        %v3295 = vpop.permute.xlu0 %3294
        %3296 = vrot.lane.b32.xlu0 %v3224, 64
        %v3297 = vpop.permute.xlu0 %3296
        %3298 = vrot.lane.b32.xlu0 %v3226, 64
        %v3299 = vpop.permute.xlu0 %3298
        %3300 = vrot.lane.b32.xlu0 %v3229, 64
        %v3301 = vpop.permute.xlu0 %3300
        %3302 = vrot.lane.b32.xlu0 %v3231, 64
        %v3303 = vpop.permute.xlu0 %3302
        %vm3340 = vcmask 1048064
        %3341 = vst.msk [vmem:[#allocation5] sm:$0xff] %vm3340, %v3233
        %3342 = vst.msk [vmem:[#allocation5 + $0x10] sm:$0xff] %vm3340, %v3235
        %3343 = vst.msk [vmem:[#allocation5 + $0x20] sm:$0xff] %vm3340, %v3237
        %3344 = vst.msk [vmem:[#allocation5 + $0x30] sm:$0xff] %vm3340, %v3239
        %3345 = vst.msk [vmem:[#allocation5 + $0x40] sm:$0xff] %vm3340, %v3241
        %3346 = vst.msk [vmem:[#allocation5 + $0x50] sm:$0xff] %vm3340, %v3243
        %3347 = vst.msk [vmem:[#allocation5 + $0x60] sm:$0xff] %vm3340, %v3245
        %3348 = vst.msk [vmem:[#allocation5 + $0x70] sm:$0xff] %vm3340, %v3247
        %3349 = vst.msk [vmem:[#allocation5 + $0x80] sm:$0xff] %vm3340, %v3249
        %3350 = vst.msk [vmem:[#allocation5 + $0x90] sm:$0xff] %vm3340, %v3251
        %3351 = vst.msk [vmem:[#allocation5 + $0xa0] sm:$0xff] %vm3340, %v3253
        %3352 = vst.msk [vmem:[#allocation5 + $0xb0] sm:$0xff] %vm3340, %v3255
        %3353 = vst.msk [vmem:[#allocation5 + $0xc0] sm:$0xff] %vm3340, %v3257
        %3354 = vst.msk [vmem:[#allocation5 + $0xd0] sm:$0xff] %vm3340, %v3259
        %3355 = vst.msk [vmem:[#allocation5 + $0xe0] sm:$0xff] %vm3340, %v3261
        %3356 = vst.msk [vmem:[#allocation5 + $0xf0] sm:$0xff] %vm3340, %v3263
        %3357 = vst.msk [vmem:[#allocation5 + $0x100] sm:$0xff] %vm3340, %v3265
        %3358 = vst.msk [vmem:[#allocation5 + $0x110] sm:$0xff] %vm3340, %v3267
        %3359 = vst.msk [vmem:[#allocation5 + $0x120] sm:$0xff] %vm3340, %v3269
        %3360 = vst.msk [vmem:[#allocation5 + $0x130] sm:$0xff] %vm3340, %v3271
        %3361 = vst.msk [vmem:[#allocation5 + $0x140] sm:$0xff] %vm3340, %v3273
        %3362 = vst.msk [vmem:[#allocation5 + $0x150] sm:$0xff] %vm3340, %v3275
        %3363 = vst.msk [vmem:[#allocation5 + $0x160] sm:$0xff] %vm3340, %v3277
        %3364 = vst.msk [vmem:[#allocation5 + $0x170] sm:$0xff] %vm3340, %v3279
        %3365 = vst.msk [vmem:[#allocation5 + $0x180] sm:$0xff] %vm3340, %v3281
        %3366 = vst.msk [vmem:[#allocation5 + $0x190] sm:$0xff] %vm3340, %v3283
        %3367 = vst.msk [vmem:[#allocation5 + $0x1a0] sm:$0xff] %vm3340, %v3285
        %3368 = vst.msk [vmem:[#allocation5 + $0x1b0] sm:$0xff] %vm3340, %v3287
        %3369 = vst.msk [vmem:[#allocation5 + $0x1c0] sm:$0xff] %vm3340, %v3289
        %3370 = vst.msk [vmem:[#allocation5 + $0x1d0] sm:$0xff] %vm3340, %v3291
        %3371 = vst.msk [vmem:[#allocation5 + $0x1e0] sm:$0xff] %vm3340, %v3293
        %3372 = vst.msk [vmem:[#allocation5 + $0x1f0] sm:$0xff] %vm3340, %v3295
        %3373 = vst.msk [vmem:[#allocation5 + $0x200] sm:$0xff] %vm3340, %v3297
        %3374 = vst.msk [vmem:[#allocation5 + $0x210] sm:$0xff] %vm3340, %v3299
        %3375 = vst.msk [vmem:[#allocation5 + $0x220] sm:$0xff] %vm3340, %v3301
        %3376 = vst.msk [vmem:[#allocation5 + $0x230] sm:$0xff] %vm3340, %v3303
        %v3377 = vrot.slane %v2998, 2
        %v3378 = vrot.slane %v2999, 2
        %v3379 = vsel %vm1245, %v3377, %v3378
        %v3380 = vrot.slane %v3000, 2
        %v3381 = vsel %vm1245, %v3378, %v3380
        %v3382 = vrot.slane %v3001, 2
        %v3383 = vrot.slane %v3002, 2
        %v3384 = vsel %vm1245, %v3382, %v3383
        %v3385 = vrot.slane %v3003, 2
        %v3386 = vsel %vm1245, %v3383, %v3385
        %v3387 = vrot.slane %v3004, 2
        %v3388 = vrot.slane %v3005, 2
        %v3389 = vsel %vm1245, %v3387, %v3388
        %v3390 = vrot.slane %v3006, 2
        %v3391 = vsel %vm1245, %v3388, %v3390
        %v3392 = vrot.slane %v3007, 2
        %v3393 = vrot.slane %v3008, 2
        %v3394 = vsel %vm1245, %v3392, %v3393
        %v3395 = vrot.slane %v3009, 2
        %v3396 = vsel %vm1245, %v3393, %v3395
        %v3397 = vrot.slane %v3010, 2
        %v3398 = vrot.slane %v3011, 2
        %v3399 = vsel %vm1245, %v3397, %v3398
        %v3400 = vrot.slane %v3012, 2
        %v3401 = vsel %vm1245, %v3398, %v3400
        %v3402 = vrot.slane %v3013, 2
        %v3403 = vrot.slane %v3014, 2
        %v3404 = vsel %vm1245, %v3402, %v3403
        %v3405 = vrot.slane %v3015, 2
        %v3406 = vsel %vm1245, %v3403, %v3405
        %v3407 = vrot.slane %v3016, 2
        %v3408 = vrot.slane %v3017, 2
        %v3409 = vsel %vm1245, %v3407, %v3408
        %v3410 = vrot.slane %v3018, 2
        %v3411 = vsel %vm1245, %v3408, %v3410
        %v3412 = vrot.slane %v3019, 2
        %v3413 = vrot.slane %v3020, 2
        %v3414 = vsel %vm1245, %v3412, %v3413
        %v3415 = vrot.slane %v3021, 2
        %v3416 = vsel %vm1245, %v3413, %v3415
        %v3417 = vrot.slane %v3022, 2
        %v3418 = vrot.slane %v3023, 2
        %v3419 = vsel %vm1245, %v3417, %v3418
        %v3420 = vrot.slane %v3024, 2
        %v3421 = vsel %vm1245, %v3418, %v3420
        %v3422 = vrot.slane %v3025, 2
        %v3423 = vrot.slane %v3026, 2
        %v3424 = vsel %vm1245, %v3422, %v3423
        %v3425 = vrot.slane %v3027, 2
        %v3426 = vsel %vm1245, %v3423, %v3425
        %v3427 = vrot.slane %v3028, 2
        %v3428 = vrot.slane %v3029, 2
        %v3429 = vsel %vm1245, %v3427, %v3428
        %v3430 = vrot.slane %v3030, 2
        %v3431 = vsel %vm1245, %v3428, %v3430
        %v3432 = vrot.slane %v3031, 2
        %v3433 = vrot.slane %v3032, 2
        %v3434 = vsel %vm1245, %v3432, %v3433
        %v3435 = vrot.slane %v3033, 2
        %v3436 = vsel %vm1245, %v3433, %v3435
        %v3437 = vrot.slane %v3034, 2
        %v3438 = vrot.slane %v3035, 2
        %v3439 = vsel %vm1245, %v3437, %v3438
        %v3440 = vrot.slane %v3036, 2
        %v3441 = vsel %vm1245, %v3438, %v3440
        %v3442 = vrot.slane %v3037, 2
        %v3443 = vrot.slane %v3038, 2
        %v3444 = vsel %vm1245, %v3442, %v3443
        %v3445 = vrot.slane %v3039, 2
        %v3446 = vsel %vm1245, %v3443, %v3445
        %v3447 = vrot.slane %v3040, 2
        %v3448 = vrot.slane %v3041, 2
        %v3449 = vsel %vm1245, %v3447, %v3448
        %v3450 = vrot.slane %v3042, 2
        %v3451 = vsel %vm1245, %v3448, %v3450
        %v3452 = vrot.slane %v3043, 2
        %v3453 = vrot.slane %v3044, 2
        %v3454 = vsel %vm1245, %v3452, %v3453
        %v3455 = vrot.slane %v3045, 2
        %v3456 = vsel %vm1245, %v3453, %v3455
        %v3457 = vrot.slane %v3046, 2
        %v3458 = vrot.slane %v3047, 2
        %v3459 = vsel %vm1245, %v3457, %v3458
        %v3460 = vrot.slane %v3048, 2
        %v3461 = vsel %vm1245, %v3458, %v3460
        %v3462 = vrot.slane %v3049, 2
        %v3463 = vrot.slane %v3050, 2
        %v3464 = vsel %vm1245, %v3462, %v3463
        %v3465 = vrot.slane %v3051, 2
        %v3466 = vsel %vm1245, %v3463, %v3465
        %3503 = vst.msk [vmem:[#allocation5 + $0x8] sm:$0xff] %vm294, %v3379
        %3504 = vst.msk [vmem:[#allocation5 + $0x18] sm:$0xff] %vm294, %v3381
        %3505 = vst.msk [vmem:[#allocation5 + $0x28] sm:$0xff] %vm294, %v3384
        %3506 = vst.msk [vmem:[#allocation5 + $0x38] sm:$0xff] %vm294, %v3386
        %3507 = vst.msk [vmem:[#allocation5 + $0x48] sm:$0xff] %vm294, %v3389
        %3508 = vst.msk [vmem:[#allocation5 + $0x58] sm:$0xff] %vm294, %v3391
        %3509 = vst.msk [vmem:[#allocation5 + $0x68] sm:$0xff] %vm294, %v3394
        %3510 = vst.msk [vmem:[#allocation5 + $0x78] sm:$0xff] %vm294, %v3396
        %3511 = vst.msk [vmem:[#allocation5 + $0x88] sm:$0xff] %vm294, %v3399
        %3512 = vst.msk [vmem:[#allocation5 + $0x98] sm:$0xff] %vm294, %v3401
        %3513 = vst.msk [vmem:[#allocation5 + $0xa8] sm:$0xff] %vm294, %v3404
        %3514 = vst.msk [vmem:[#allocation5 + $0xb8] sm:$0xff] %vm294, %v3406
        %3515 = vst.msk [vmem:[#allocation5 + $0xc8] sm:$0xff] %vm294, %v3409
        %3516 = vst.msk [vmem:[#allocation5 + $0xd8] sm:$0xff] %vm294, %v3411
        %3517 = vst.msk [vmem:[#allocation5 + $0xe8] sm:$0xff] %vm294, %v3414
        %3518 = vst.msk [vmem:[#allocation5 + $0xf8] sm:$0xff] %vm294, %v3416
        %3519 = vst.msk [vmem:[#allocation5 + $0x108] sm:$0xff] %vm294, %v3419
        %3520 = vst.msk [vmem:[#allocation5 + $0x118] sm:$0xff] %vm294, %v3421
        %3521 = vst.msk [vmem:[#allocation5 + $0x128] sm:$0xff] %vm294, %v3424
        %3522 = vst.msk [vmem:[#allocation5 + $0x138] sm:$0xff] %vm294, %v3426
        %3523 = vst.msk [vmem:[#allocation5 + $0x148] sm:$0xff] %vm294, %v3429
        %3524 = vst.msk [vmem:[#allocation5 + $0x158] sm:$0xff] %vm294, %v3431
        %3525 = vst.msk [vmem:[#allocation5 + $0x168] sm:$0xff] %vm294, %v3434
        %3526 = vst.msk [vmem:[#allocation5 + $0x178] sm:$0xff] %vm294, %v3436
        %3527 = vst.msk [vmem:[#allocation5 + $0x188] sm:$0xff] %vm294, %v3439
        %3528 = vst.msk [vmem:[#allocation5 + $0x198] sm:$0xff] %vm294, %v3441
        %3529 = vst.msk [vmem:[#allocation5 + $0x1a8] sm:$0xff] %vm294, %v3444
        %3530 = vst.msk [vmem:[#allocation5 + $0x1b8] sm:$0xff] %vm294, %v3446
        %3531 = vst.msk [vmem:[#allocation5 + $0x1c8] sm:$0xff] %vm294, %v3449
        %3532 = vst.msk [vmem:[#allocation5 + $0x1d8] sm:$0xff] %vm294, %v3451
        %3533 = vst.msk [vmem:[#allocation5 + $0x1e8] sm:$0xff] %vm294, %v3454
        %3534 = vst.msk [vmem:[#allocation5 + $0x1f8] sm:$0xff] %vm294, %v3456
        %3535 = vst.msk [vmem:[#allocation5 + $0x208] sm:$0xff] %vm294, %v3459
        %3536 = vst.msk [vmem:[#allocation5 + $0x218] sm:$0xff] %vm294, %v3461
        %3537 = vst.msk [vmem:[#allocation5 + $0x228] sm:$0xff] %vm294, %v3464
        %3538 = vst.msk [vmem:[#allocation5 + $0x238] sm:$0xff] %vm294, %v3466
        %v3539 = vlaneseq
        %v3540 = vshrl.u32 %v3539, 7
        %v3541 = vsub.s32 1, %v3540
        %v3542 = vrot.slane %v501, %v3541
        %v3543 = vld [vmem:[#allocation5] sm:$0xff]
        %v3544 = vld [vmem:[#allocation5 + $0x8] sm:$0xff]
        %v3545 = vld [vmem:[#allocation5 + $0x10] sm:$0xff]
        %v3546 = vld [vmem:[#allocation5 + $0x18] sm:$0xff]
        %v3547 = vld [vmem:[#allocation5 + $0x20] sm:$0xff]
        %v3548 = vld [vmem:[#allocation5 + $0x28] sm:$0xff]
        %v3549 = vld [vmem:[#allocation5 + $0x30] sm:$0xff]
        %v3550 = vld [vmem:[#allocation5 + $0x38] sm:$0xff]
        %v3551 = vld [vmem:[#allocation5 + $0x40] sm:$0xff]
        %v3552 = vld [vmem:[#allocation5 + $0x48] sm:$0xff]
        %v3553 = vld [vmem:[#allocation5 + $0x50] sm:$0xff]
        %v3554 = vld [vmem:[#allocation5 + $0x58] sm:$0xff]
        %v3555 = vld [vmem:[#allocation5 + $0x60] sm:$0xff]
        %v3556 = vld [vmem:[#allocation5 + $0x68] sm:$0xff]
        %v3557 = vld [vmem:[#allocation5 + $0x70] sm:$0xff]
        %v3558 = vld [vmem:[#allocation5 + $0x78] sm:$0xff]
        %v3559 = vld [vmem:[#allocation5 + $0x80] sm:$0xff]
        %v3560 = vld [vmem:[#allocation5 + $0x88] sm:$0xff]
        %v3561 = vld [vmem:[#allocation5 + $0x90] sm:$0xff]
        %v3562 = vld [vmem:[#allocation5 + $0x98] sm:$0xff]
        %v3563 = vld [vmem:[#allocation5 + $0xa0] sm:$0xff]
        %v3564 = vld [vmem:[#allocation5 + $0xa8] sm:$0xff]
        %v3565 = vld [vmem:[#allocation5 + $0xb0] sm:$0xff]
        %v3566 = vld [vmem:[#allocation5 + $0xb8] sm:$0xff]
        %v3567 = vld [vmem:[#allocation5 + $0xc0] sm:$0xff]
        %v3568 = vld [vmem:[#allocation5 + $0xc8] sm:$0xff]
        %v3569 = vld [vmem:[#allocation5 + $0xd0] sm:$0xff]
        %v3570 = vld [vmem:[#allocation5 + $0xd8] sm:$0xff]
        %v3571 = vld [vmem:[#allocation5 + $0xe0] sm:$0xff]
        %v3572 = vld [vmem:[#allocation5 + $0xe8] sm:$0xff]
        %v3573 = vld [vmem:[#allocation5 + $0xf0] sm:$0xff]
        %v3574 = vld [vmem:[#allocation5 + $0xf8] sm:$0xff]
        %v3575 = vld [vmem:[#allocation5 + $0x100] sm:$0xff]
        %v3576 = vld [vmem:[#allocation5 + $0x108] sm:$0xff]
        %v3577 = vld [vmem:[#allocation5 + $0x110] sm:$0xff]
        %v3578 = vld [vmem:[#allocation5 + $0x118] sm:$0xff]
        %v3579 = vld [vmem:[#allocation5 + $0x120] sm:$0xff]
        %v3580 = vld [vmem:[#allocation5 + $0x128] sm:$0xff]
        %v3581 = vld [vmem:[#allocation5 + $0x130] sm:$0xff]
        %v3582 = vld [vmem:[#allocation5 + $0x138] sm:$0xff]
        %v3583 = vld [vmem:[#allocation5 + $0x140] sm:$0xff]
        %v3584 = vld [vmem:[#allocation5 + $0x148] sm:$0xff]
        %v3585 = vld [vmem:[#allocation5 + $0x150] sm:$0xff]
        %v3586 = vld [vmem:[#allocation5 + $0x158] sm:$0xff]
        %v3587 = vld [vmem:[#allocation5 + $0x160] sm:$0xff]
        %v3588 = vld [vmem:[#allocation5 + $0x168] sm:$0xff]
        %v3589 = vld [vmem:[#allocation5 + $0x170] sm:$0xff]
        %v3590 = vld [vmem:[#allocation5 + $0x178] sm:$0xff]
        %v3591 = vld [vmem:[#allocation5 + $0x180] sm:$0xff]
        %v3592 = vld [vmem:[#allocation5 + $0x188] sm:$0xff]
        %v3593 = vld [vmem:[#allocation5 + $0x190] sm:$0xff]
        %v3594 = vld [vmem:[#allocation5 + $0x198] sm:$0xff]
        %v3595 = vld [vmem:[#allocation5 + $0x1a0] sm:$0xff]
        %v3596 = vld [vmem:[#allocation5 + $0x1a8] sm:$0xff]
        %v3597 = vld [vmem:[#allocation5 + $0x1b0] sm:$0xff]
        %v3598 = vld [vmem:[#allocation5 + $0x1b8] sm:$0xff]
        %v3599 = vld [vmem:[#allocation5 + $0x1c0] sm:$0xff]
        %v3600 = vld [vmem:[#allocation5 + $0x1c8] sm:$0xff]
        %v3601 = vld [vmem:[#allocation5 + $0x1d0] sm:$0xff]
        %v3602 = vld [vmem:[#allocation5 + $0x1d8] sm:$0xff]
        %v3603 = vld [vmem:[#allocation5 + $0x1e0] sm:$0xff]
        %v3604 = vld [vmem:[#allocation5 + $0x1e8] sm:$0xff]
        %v3605 = vld [vmem:[#allocation5 + $0x1f0] sm:$0xff]
        %v3606 = vld [vmem:[#allocation5 + $0x1f8] sm:$0xff]
        %v3607 = vpack.c.bf16 %v3545, %v3543
        %v3608 = vpack.c.bf16 %v3546, %v3544
        %v3609 = vpack.c.bf16 %v3549, %v3547
        %v3610 = vpack.c.bf16 %v3550, %v3548
        %v3611 = vpack.c.bf16 %v3553, %v3551
        %v3612 = vpack.c.bf16 %v3554, %v3552
        %v3613 = vpack.c.bf16 %v3557, %v3555
        %v3614 = vpack.c.bf16 %v3558, %v3556
        %v3615 = vpack.c.bf16 %v3561, %v3559
        %v3616 = vpack.c.bf16 %v3562, %v3560
        %v3617 = vpack.c.bf16 %v3565, %v3563
        %v3618 = vpack.c.bf16 %v3566, %v3564
        %v3619 = vpack.c.bf16 %v3569, %v3567
        %v3620 = vpack.c.bf16 %v3570, %v3568
        %v3621 = vpack.c.bf16 %v3573, %v3571
        %v3622 = vpack.c.bf16 %v3574, %v3572
        %v3623 = vpack.c.bf16 %v3577, %v3575
        %v3624 = vpack.c.bf16 %v3578, %v3576
        %v3625 = vpack.c.bf16 %v3581, %v3579
        %v3626 = vpack.c.bf16 %v3582, %v3580
        %v3627 = vpack.c.bf16 %v3585, %v3583
        %v3628 = vpack.c.bf16 %v3586, %v3584
        %v3629 = vpack.c.bf16 %v3589, %v3587
        %v3630 = vpack.c.bf16 %v3590, %v3588
        %v3631 = vpack.c.bf16 %v3593, %v3591
        %v3632 = vpack.c.bf16 %v3594, %v3592
        %v3633 = vpack.c.bf16 %v3597, %v3595
        %v3634 = vpack.c.bf16 %v3598, %v3596
        %v3635 = vpack.c.bf16 %v3601, %v3599
        %v3636 = vpack.c.bf16 %v3602, %v3600
        %v3637 = vpack.c.bf16 %v3605, %v3603
        %v3638 = vpack.c.bf16 %v3606, %v3604
        %v3639 = vld [vmem:[%s2] sm:$0xf]
        %v3640 = vld [vmem:[%s2 + $0x4] sm:$0xf]
        %v3641 = vld [vmem:[%s2 + $0x8] sm:$0xf]
        %v3642 = vld [vmem:[%s2 + $0xc] sm:$0xf]
        %v3643 = vld [vmem:[%s2 + $0x10] sm:$0xf]
        %v3644 = vld [vmem:[%s2 + $0x14] sm:$0xf]
        %v3645 = vld [vmem:[%s2 + $0x18] sm:$0xf]
        %v3646 = vld [vmem:[%s2 + $0x1c] sm:$0xf]
        %v3647 = vld [vmem:[%s2 + $0x20] sm:$0xf]
        %v3648 = vld [vmem:[%s2 + $0x24] sm:$0xf]
        %v3649 = vld [vmem:[%s2 + $0x28] sm:$0xf]
        %v3650 = vld [vmem:[%s2 + $0x2c] sm:$0xf]
        %v3651 = vld [vmem:[%s2 + $0x30] sm:$0xf]
        %v3652 = vld [vmem:[%s2 + $0x34] sm:$0xf]
        %v3653 = vld [vmem:[%s2 + $0x38] sm:$0xf]
        %v3654 = vld [vmem:[%s2 + $0x3c] sm:$0xf]
        %v3655 = vld [vmem:[%s2 + $0x40] sm:$0xf]
        %v3656 = vld [vmem:[%s2 + $0x44] sm:$0xf]
        %v3657 = vld [vmem:[%s2 + $0x48] sm:$0xf]
        %v3658 = vld [vmem:[%s2 + $0x4c] sm:$0xf]
        %v3659 = vld [vmem:[%s2 + $0x50] sm:$0xf]
        %v3660 = vld [vmem:[%s2 + $0x54] sm:$0xf]
        %v3661 = vld [vmem:[%s2 + $0x58] sm:$0xf]
        %v3662 = vld [vmem:[%s2 + $0x5c] sm:$0xf]
        %v3687 = vunpack.c.l.b16 %v3639
        %v3688 = vunpack.c.l.b16 %v3640
        %v3689 = vunpack.c.l.b16 %v3641
        %v3690 = vunpack.c.l.b16 %v3642
        %v3691 = vunpack.c.l.b16 %v3643
        %v3692 = vunpack.c.l.b16 %v3644
        %v3693 = vunpack.c.l.b16 %v3645
        %v3694 = vunpack.c.l.b16 %v3646
        %v3695 = vunpack.c.l.b16 %v3647
        %v3696 = vunpack.c.l.b16 %v3648
        %v3697 = vunpack.c.l.b16 %v3649
        %v3698 = vunpack.c.l.b16 %v3650
        %v3699 = vunpack.c.l.b16 %v3651
        %v3700 = vunpack.c.l.b16 %v3652
        %v3701 = vunpack.c.l.b16 %v3653
        %v3702 = vunpack.c.l.b16 %v3654
        %v3703 = vunpack.c.l.b16 %v3655
        %v3704 = vunpack.c.l.b16 %v3656
        %v3705 = vunpack.c.l.b16 %v3657
        %v3706 = vunpack.c.l.b16 %v3658
        %v3707 = vunpack.c.l.b16 %v3659
        %v3708 = vunpack.c.l.b16 %v3660
        %v3709 = vunpack.c.l.b16 %v3661
        %v3710 = vunpack.c.l.b16 %v3662
        %v3711 = vpack.c.b16 %v3688, %v3687
        %v3712 = vpack.c.b16 %v3690, %v3689
        %v3713 = vpack.c.b16 %v3692, %v3691
        %v3714 = vpack.c.b16 %v3694, %v3693
        %v3715 = vpack.c.b16 %v3696, %v3695
        %v3716 = vpack.c.b16 %v3698, %v3697
        %v3717 = vpack.c.b16 %v3700, %v3699
        %v3718 = vpack.c.b16 %v3702, %v3701
        %v3719 = vpack.c.b16 %v3704, %v3703
        %v3720 = vpack.c.b16 %v3706, %v3705
        %v3721 = vpack.c.b16 %v3708, %v3707
        %v3722 = vpack.c.b16 %v3710, %v3709
        %v3736 = vsel %vm294, %v3608, 0
        %v3739 = vsel %vm294, %v3610, 0
        %v3742 = vsel %vm294, %v3612, 0
        %v3745 = vsel %vm294, %v3614, 0
        %v3748 = vsel %vm294, %v3616, 0
        %v3751 = vsel %vm294, %v3618, 0
        %v3754 = vsel %vm294, %v3620, 0
        %v3757 = vsel %vm294, %v3622, 0
        %v3760 = vsel %vm294, %v3624, 0
        %v3763 = vsel %vm294, %v3626, 0
        %v3766 = vsel %vm294, %v3628, 0
        %v3769 = vsel %vm294, %v3630, 0
        %v3772 = vsel %vm294, %v3632, 0
        %v3775 = vsel %vm294, %v3634, 0
        %v3778 = vsel %vm294, %v3636, 0
        %v3781 = vsel %vm294, %v3638, 0
        %3783 = vmatprep.subr.bf16.mxu0 0
        %3784 = vmatpush1.bf16.msra.mxu0 %v3711
        %3785 = vmatprep.subr.bf16.mxu0 0
        %3786 = vmatpush1.bf16.msra.mxu0 %v3712
        %3787 = vmatprep.subr.bf16.mxu0 0
        %3788 = vmatpush1.bf16.msra.mxu0 %v3713
        %3789 = vmatprep.subr.bf16.mxu0 0
        %3790 = vmatpush1.bf16.msra.mxu0 %v3714
        %3791 = vmatprep.subr.bf16.mxu0 0
        %3792 = vmatpush1.bf16.msra.mxu0 %v3715
        %3793 = vmatprep.subr.bf16.mxu0 0
        %3794 = vmatpush1.bf16.msra.mxu0 %v3716
        %3795 = vmatprep.subr.bf16.mxu0 0
        %3796 = vmatpush1.bf16.msra.mxu0 %v3717
        %3797 = vmatprep.subr.bf16.mxu0 0
        %3798 = vmatpush1.bf16.msra.mxu0 %v3718
        %3799 = vmatprep.subr.bf16.mxu0 0
        %3800 = vmatpush1.bf16.msra.mxu0 %v3719
        %3801 = vmatprep.subr.bf16.mxu0 0
        %3802 = vmatpush1.bf16.msra.mxu0 %v3720
        %3803 = vmatprep.subr.bf16.mxu0 0
        %3804 = vmatpush1.bf16.msra.mxu0 %v3721
        %3805 = vmatprep.subr.bf16.mxu0 0
        %3806 = vmatpush1.bf16.msra.mxu0 %v3722
        %3807 = vmatprep.subr.bf16.mxu0 0
        %3808 = vmatpush1.bf16.msra.mxu0 0
        %3809 = vmatprep.subr.bf16.mxu0 0
        %3810 = vmatpush1.bf16.msra.mxu0 0
        %3811 = vmatprep.subr.bf16.mxu0 0
        %3812 = vmatpush1.bf16.msra.mxu0 0
        %3813 = vmatprep.subr.bf16.mxu0 0
        %3814 = vmatpush1.bf16.msra.mxu0 0
        %3815 = vmatprep.mubr.bf16.mxu0 %v3736
        %3816 = vmatmul.mubr.bf16.gmra.mrb[0].mxu0 %v3607
        %v3817 = vpop.f32.mrb[0].mxu0
        %v3818 = vadd.f32 0.0, %v3817
        %v3819 = vpop.f32.mrb[0].mxu0
        %v3820 = vpop.f32.mrb[0].mxu0
        %v3821 = vadd.f32 0.0, %v3820
        %v3822 = vpop.f32.mrb[0].mxu0
        %3823 = vmatprep.mubr.bf16.mxu0 %v3739
        %3824 = vmatmul.mubr.bf16.gmra.mrb[0].mxu0 %v3609
        %v3825 = vpop.f32.mrb[0].mxu0
        %v3826 = vadd.f32 0.0, %v3825
        %v3827 = vpop.f32.mrb[0].mxu0
        %v3828 = vpop.f32.mrb[0].mxu0
        %v3829 = vadd.f32 0.0, %v3828
        %v3830 = vpop.f32.mrb[0].mxu0
        %3831 = vmatprep.mubr.bf16.mxu0 %v3742
        %3832 = vmatmul.mubr.bf16.gmra.mrb[0].mxu0 %v3611
        %v3833 = vpop.f32.mrb[0].mxu0
        %v3834 = vadd.f32 0.0, %v3833
        %v3835 = vpop.f32.mrb[0].mxu0
        %v3836 = vpop.f32.mrb[0].mxu0
        %v3837 = vadd.f32 0.0, %v3836
        %v3838 = vpop.f32.mrb[0].mxu0
        %3839 = vmatprep.mubr.bf16.mxu0 %v3745
        %3840 = vmatmul.mubr.bf16.gmra.mrb[0].mxu0 %v3613
        %v3841 = vpop.f32.mrb[0].mxu0
        %v3842 = vadd.f32 0.0, %v3841
        %v3843 = vpop.f32.mrb[0].mxu0
        %v3844 = vpop.f32.mrb[0].mxu0
        %v3845 = vadd.f32 0.0, %v3844
        %v3846 = vpop.f32.mrb[0].mxu0
        %3847 = vmatprep.mubr.bf16.mxu0 %v3748
        %3848 = vmatmul.mubr.bf16.gmra.mrb[0].mxu0 %v3615
        %v3849 = vpop.f32.mrb[0].mxu0
        %v3850 = vadd.f32 0.0, %v3849
        %v3851 = vpop.f32.mrb[0].mxu0
        %v3852 = vpop.f32.mrb[0].mxu0
        %v3853 = vadd.f32 0.0, %v3852
        %v3854 = vpop.f32.mrb[0].mxu0
        %3855 = vmatprep.mubr.bf16.mxu0 %v3751
        %3856 = vmatmul.mubr.bf16.gmra.mrb[0].mxu0 %v3617
        %v3857 = vpop.f32.mrb[0].mxu0
        %v3858 = vadd.f32 0.0, %v3857
        %v3859 = vpop.f32.mrb[0].mxu0
        %v3860 = vpop.f32.mrb[0].mxu0
        %v3861 = vadd.f32 0.0, %v3860
        %v3862 = vpop.f32.mrb[0].mxu0
        %3863 = vmatprep.mubr.bf16.mxu0 %v3754
        %3864 = vmatmul.mubr.bf16.gmra.mrb[0].mxu0 %v3619
        %v3865 = vpop.f32.mrb[0].mxu0
        %v3866 = vadd.f32 0.0, %v3865
        %v3867 = vpop.f32.mrb[0].mxu0
        %v3868 = vpop.f32.mrb[0].mxu0
        %v3869 = vadd.f32 0.0, %v3868
        %v3870 = vpop.f32.mrb[0].mxu0
        %3871 = vmatprep.mubr.bf16.mxu0 %v3757
        %3872 = vmatmul.mubr.bf16.gmra.mrb[0].mxu0 %v3621
        %v3873 = vpop.f32.mrb[0].mxu0
        %v3874 = vadd.f32 0.0, %v3873
        %v3875 = vpop.f32.mrb[0].mxu0
        %v3876 = vpop.f32.mrb[0].mxu0
        %v3877 = vadd.f32 0.0, %v3876
        %v3878 = vpop.f32.mrb[0].mxu0
        %3879 = vmatprep.mubr.bf16.mxu0 %v3760
        %3880 = vmatmul.mubr.bf16.gmra.mrb[0].mxu0 %v3623
        %v3881 = vpop.f32.mrb[0].mxu0
        %v3882 = vadd.f32 0.0, %v3881
        %v3883 = vpop.f32.mrb[0].mxu0
        %v3884 = vpop.f32.mrb[0].mxu0
        %v3885 = vadd.f32 0.0, %v3884
        %v3886 = vpop.f32.mrb[0].mxu0
        %3887 = vmatprep.mubr.bf16.mxu0 %v3763
        %3888 = vmatmul.mubr.bf16.gmra.mrb[0].mxu0 %v3625
        %v3889 = vpop.f32.mrb[0].mxu0
        %v3890 = vadd.f32 0.0, %v3889
        %v3891 = vpop.f32.mrb[0].mxu0
        %v3892 = vpop.f32.mrb[0].mxu0
        %v3893 = vadd.f32 0.0, %v3892
        %v3894 = vpop.f32.mrb[0].mxu0
        %3895 = vmatprep.mubr.bf16.mxu0 %v3766
        %3896 = vmatmul.mubr.bf16.gmra.mrb[0].mxu0 %v3627
        %v3897 = vpop.f32.mrb[0].mxu0
        %v3898 = vadd.f32 0.0, %v3897
        %v3899 = vpop.f32.mrb[0].mxu0
        %v3900 = vpop.f32.mrb[0].mxu0
        %v3901 = vadd.f32 0.0, %v3900
        %v3902 = vpop.f32.mrb[0].mxu0
        %3903 = vmatprep.mubr.bf16.mxu0 %v3769
        %3904 = vmatmul.mubr.bf16.gmra.mrb[0].mxu0 %v3629
        %v3905 = vpop.f32.mrb[0].mxu0
        %v3906 = vadd.f32 0.0, %v3905
        %v3907 = vpop.f32.mrb[0].mxu0
        %v3908 = vpop.f32.mrb[0].mxu0
        %v3909 = vadd.f32 0.0, %v3908
        %v3910 = vpop.f32.mrb[0].mxu0
        %3911 = vmatprep.mubr.bf16.mxu0 %v3772
        %3912 = vmatmul.mubr.bf16.gmra.mrb[0].mxu0 %v3631
        %v3913 = vpop.f32.mrb[0].mxu0
        %v3914 = vadd.f32 0.0, %v3913
        %v3915 = vpop.f32.mrb[0].mxu0
        %v3916 = vpop.f32.mrb[0].mxu0
        %v3917 = vadd.f32 0.0, %v3916
        %v3918 = vpop.f32.mrb[0].mxu0
        %3919 = vmatprep.mubr.bf16.mxu0 %v3775
        %3920 = vmatmul.mubr.bf16.gmra.mrb[0].mxu0 %v3633
        %v3921 = vpop.f32.mrb[0].mxu0
        %v3922 = vadd.f32 0.0, %v3921
        %v3923 = vpop.f32.mrb[0].mxu0
        %v3924 = vpop.f32.mrb[0].mxu0
        %v3925 = vadd.f32 0.0, %v3924
        %v3926 = vpop.f32.mrb[0].mxu0
        %3927 = vmatprep.mubr.bf16.mxu0 %v3778
        %3928 = vmatmul.mubr.bf16.gmra.mrb[0].mxu0 %v3635
        %v3929 = vpop.f32.mrb[0].mxu0
        %v3930 = vadd.f32 0.0, %v3929
        %v3931 = vpop.f32.mrb[0].mxu0
        %v3932 = vpop.f32.mrb[0].mxu0
        %v3933 = vadd.f32 0.0, %v3932
        %v3934 = vpop.f32.mrb[0].mxu0
        %3935 = vmatprep.mubr.bf16.mxu0 %v3781
        %3936 = vmatmul.mubr.bf16.gmra.mrb[0].mxu0 %v3637
        %v3937 = vpop.f32.mrb[0].mxu0
        %v3938 = vadd.f32 0.0, %v3937
        %v3939 = vpop.f32.mrb[0].mxu0
        %v3940 = vpop.f32.mrb[0].mxu0
        %v3941 = vadd.f32 0.0, %v3940
        %v3942 = vpop.f32.mrb[0].mxu0
        %3943 = vdwg.mxu0
        %v3944 = vadd.f32 %v3542, %v3818
        %v3945 = vadd.f32 %v3542, %v3821
        %v3946 = vadd.f32 %v3542, %v3826
        %v3947 = vadd.f32 %v3542, %v3829
        %v3948 = vadd.f32 %v3542, %v3834
        %v3949 = vadd.f32 %v3542, %v3837
        %v3950 = vadd.f32 %v3542, %v3842
        %v3951 = vadd.f32 %v3542, %v3845
        %v3952 = vadd.f32 %v3542, %v3850
        %v3953 = vadd.f32 %v3542, %v3853
        %v3954 = vadd.f32 %v3542, %v3858
        %v3955 = vadd.f32 %v3542, %v3861
        %v3956 = vadd.f32 %v3542, %v3866
        %v3957 = vadd.f32 %v3542, %v3869
        %v3958 = vadd.f32 %v3542, %v3874
        %v3959 = vadd.f32 %v3542, %v3877
        %v3960 = vadd.f32 %v3542, %v3882
        %v3961 = vadd.f32 %v3542, %v3885
        %v3962 = vadd.f32 %v3542, %v3890
        %v3963 = vadd.f32 %v3542, %v3893
        %v3964 = vadd.f32 %v3542, %v3898
        %v3965 = vadd.f32 %v3542, %v3901
        %v3966 = vadd.f32 %v3542, %v3906
        %v3967 = vadd.f32 %v3542, %v3909
        %v3968 = vadd.f32 %v3542, %v3914
        %v3969 = vadd.f32 %v3542, %v3917
        %v3970 = vadd.f32 %v3542, %v3922
        %v3971 = vadd.f32 %v3542, %v3925
        %v3972 = vadd.f32 %v3542, %v3930
        %v3973 = vadd.f32 %v3542, %v3933
        %v3974 = vadd.f32 %v3542, %v3938
        %v3975 = vadd.f32 %v3542, %v3941
        %s3976 = scalar_lea.vmem [#allocation5], 32
        %v3977 = vld [vmem:[%s3976] sm:$0xff]
        %v3978 = vld [vmem:[%s3976 + $0x8] sm:$0xff]
        %v3979 = vld [vmem:[%s3976 + $0x10] sm:$0xff]
        %v3980 = vld [vmem:[%s3976 + $0x18] sm:$0xff]
        %v3981 = vld [vmem:[%s3976 + $0x20] sm:$0xff]
        %v3982 = vld [vmem:[%s3976 + $0x28] sm:$0xff]
        %v3983 = vld [vmem:[%s3976 + $0x30] sm:$0xff]
        %v3984 = vld [vmem:[%s3976 + $0x38] sm:$0xff]
        %v3985 = vld [vmem:[%s3976 + $0x40] sm:$0xff]
        %v3986 = vld [vmem:[%s3976 + $0x48] sm:$0xff]
        %v3987 = vld [vmem:[%s3976 + $0x50] sm:$0xff]
        %v3988 = vld [vmem:[%s3976 + $0x58] sm:$0xff]
        %v3989 = vld [vmem:[%s3976 + $0x60] sm:$0xff]
        %v3990 = vld [vmem:[%s3976 + $0x68] sm:$0xff]
        %v3991 = vld [vmem:[%s3976 + $0x70] sm:$0xff]
        %v3992 = vld [vmem:[%s3976 + $0x78] sm:$0xff]
        %v3993 = vld [vmem:[%s3976 + $0x80] sm:$0xff]
        %v3994 = vld [vmem:[%s3976 + $0x88] sm:$0xff]
        %v3995 = vld [vmem:[%s3976 + $0x90] sm:$0xff]
        %v3996 = vld [vmem:[%s3976 + $0x98] sm:$0xff]
        %v3997 = vld [vmem:[%s3976 + $0xa0] sm:$0xff]
        %v3998 = vld [vmem:[%s3976 + $0xa8] sm:$0xff]
        %v3999 = vld [vmem:[%s3976 + $0xb0] sm:$0xff]
        %v4000 = vld [vmem:[%s3976 + $0xb8] sm:$0xff]
        %v4001 = vld [vmem:[%s3976 + $0xc0] sm:$0xff]
        %v4002 = vld [vmem:[%s3976 + $0xc8] sm:$0xff]
        %v4003 = vld [vmem:[%s3976 + $0xd0] sm:$0xff]
        %v4004 = vld [vmem:[%s3976 + $0xd8] sm:$0xff]
        %v4005 = vld [vmem:[%s3976 + $0xe0] sm:$0xff]
        %v4006 = vld [vmem:[%s3976 + $0xe8] sm:$0xff]
        %v4007 = vld [vmem:[%s3976 + $0xf0] sm:$0xff]
        %v4008 = vld [vmem:[%s3976 + $0xf8] sm:$0xff]
        %v4009 = vld [vmem:[%s3976 + $0x100] sm:$0xff]
        %v4010 = vld [vmem:[%s3976 + $0x108] sm:$0xff]
        %v4011 = vld [vmem:[%s3976 + $0x110] sm:$0xff]
        %v4012 = vld [vmem:[%s3976 + $0x118] sm:$0xff]
        %v4013 = vld [vmem:[%s3976 + $0x120] sm:$0xff]
        %v4014 = vld [vmem:[%s3976 + $0x128] sm:$0xff]
        %v4015 = vld [vmem:[%s3976 + $0x130] sm:$0xff]
        %v4016 = vld [vmem:[%s3976 + $0x138] sm:$0xff]
        %v4017 = vld [vmem:[%s3976 + $0x140] sm:$0xff]
        %v4018 = vld [vmem:[%s3976 + $0x148] sm:$0xff]
        %v4019 = vld [vmem:[%s3976 + $0x150] sm:$0xff]
        %v4020 = vld [vmem:[%s3976 + $0x158] sm:$0xff]
        %v4021 = vld [vmem:[%s3976 + $0x160] sm:$0xff]
        %v4022 = vld [vmem:[%s3976 + $0x168] sm:$0xff]
        %v4023 = vld [vmem:[%s3976 + $0x170] sm:$0xff]
        %v4024 = vld [vmem:[%s3976 + $0x178] sm:$0xff]
        %v4025 = vld [vmem:[%s3976 + $0x180] sm:$0xff]
        %v4026 = vld [vmem:[%s3976 + $0x188] sm:$0xff]
        %v4027 = vld [vmem:[%s3976 + $0x190] sm:$0xff]
        %v4028 = vld [vmem:[%s3976 + $0x198] sm:$0xff]
        %v4029 = vld [vmem:[%s3976 + $0x1a0] sm:$0xff]
        %v4030 = vld [vmem:[%s3976 + $0x1a8] sm:$0xff]
        %v4031 = vld [vmem:[%s3976 + $0x1b0] sm:$0xff]
        %v4032 = vld [vmem:[%s3976 + $0x1b8] sm:$0xff]
        %v4033 = vld [vmem:[%s3976 + $0x1c0] sm:$0xff]
        %v4034 = vld [vmem:[%s3976 + $0x1c8] sm:$0xff]
        %v4035 = vld [vmem:[%s3976 + $0x1d0] sm:$0xff]
        %v4036 = vld [vmem:[%s3976 + $0x1d8] sm:$0xff]
        %v4037 = vld [vmem:[%s3976 + $0x1e0] sm:$0xff]
        %v4038 = vld [vmem:[%s3976 + $0x1e8] sm:$0xff]
        %v4039 = vld [vmem:[%s3976 + $0x1f0] sm:$0xff]
        %v4040 = vld [vmem:[%s3976 + $0x1f8] sm:$0xff]
        %v4041 = vpack.c.bf16 %v3979, %v3977
        %v4042 = vpack.c.bf16 %v3980, %v3978
        %v4043 = vpack.c.bf16 %v3983, %v3981
        %v4044 = vpack.c.bf16 %v3984, %v3982
        %v4045 = vpack.c.bf16 %v3987, %v3985
        %v4046 = vpack.c.bf16 %v3988, %v3986
        %v4047 = vpack.c.bf16 %v3991, %v3989
        %v4048 = vpack.c.bf16 %v3992, %v3990
        %v4049 = vpack.c.bf16 %v3995, %v3993
        %v4050 = vpack.c.bf16 %v3996, %v3994
        %v4051 = vpack.c.bf16 %v3999, %v3997
        %v4052 = vpack.c.bf16 %v4000, %v3998
        %v4053 = vpack.c.bf16 %v4003, %v4001
        %v4054 = vpack.c.bf16 %v4004, %v4002
        %v4055 = vpack.c.bf16 %v4007, %v4005
        %v4056 = vpack.c.bf16 %v4008, %v4006
        %v4057 = vpack.c.bf16 %v4011, %v4009
        %v4058 = vpack.c.bf16 %v4012, %v4010
        %v4059 = vpack.c.bf16 %v4015, %v4013
        %v4060 = vpack.c.bf16 %v4016, %v4014
        %v4061 = vpack.c.bf16 %v4019, %v4017
        %v4062 = vpack.c.bf16 %v4020, %v4018
        %v4063 = vpack.c.bf16 %v4023, %v4021
        %v4064 = vpack.c.bf16 %v4024, %v4022
        %v4065 = vpack.c.bf16 %v4027, %v4025
        %v4066 = vpack.c.bf16 %v4028, %v4026
        %v4067 = vpack.c.bf16 %v4031, %v4029
        %v4068 = vpack.c.bf16 %v4032, %v4030
        %v4069 = vpack.c.bf16 %v4035, %v4033
        %v4070 = vpack.c.bf16 %v4036, %v4034
        %v4071 = vpack.c.bf16 %v4039, %v4037
        %v4072 = vpack.c.bf16 %v4040, %v4038
        %s4073 = scalar_lea.vmem %s2, 96
        %v4074 = vld [vmem:[%s4073] sm:$0xf]
        %v4075 = vld [vmem:[%s4073 + $0x4] sm:$0xf]
        %v4076 = vld [vmem:[%s4073 + $0x8] sm:$0xf]
        %v4077 = vld [vmem:[%s4073 + $0xc] sm:$0xf]
        %v4078 = vld [vmem:[%s4073 + $0x10] sm:$0xf]
        %v4079 = vld [vmem:[%s4073 + $0x14] sm:$0xf]
        %v4080 = vld [vmem:[%s4073 + $0x18] sm:$0xf]
        %v4081 = vld [vmem:[%s4073 + $0x1c] sm:$0xf]
        %v4082 = vld [vmem:[%s4073 + $0x20] sm:$0xf]
        %v4083 = vld [vmem:[%s4073 + $0x24] sm:$0xf]
        %v4084 = vld [vmem:[%s4073 + $0x28] sm:$0xf]
        %v4085 = vld [vmem:[%s4073 + $0x2c] sm:$0xf]
        %v4086 = vld [vmem:[%s4073 + $0x30] sm:$0xf]
        %v4087 = vld [vmem:[%s4073 + $0x34] sm:$0xf]
        %v4088 = vld [vmem:[%s4073 + $0x38] sm:$0xf]
        %v4089 = vld [vmem:[%s4073 + $0x3c] sm:$0xf]
        %v4090 = vld [vmem:[%s4073 + $0x40] sm:$0xf]
        %v4091 = vld [vmem:[%s4073 + $0x44] sm:$0xf]
        %v4092 = vld [vmem:[%s4073 + $0x48] sm:$0xf]
        %v4093 = vld [vmem:[%s4073 + $0x4c] sm:$0xf]
        %v4094 = vld [vmem:[%s4073 + $0x50] sm:$0xf]
        %v4095 = vld [vmem:[%s4073 + $0x54] sm:$0xf]
        %v4096 = vld [vmem:[%s4073 + $0x58] sm:$0xf]
        %v4097 = vld [vmem:[%s4073 + $0x5c] sm:$0xf]
        %v4122 = vunpack.c.l.b16 %v4074
        %v4123 = vunpack.c.l.b16 %v4075
        %v4124 = vunpack.c.l.b16 %v4076
        %v4125 = vunpack.c.l.b16 %v4077
        %v4126 = vunpack.c.l.b16 %v4078
        %v4127 = vunpack.c.l.b16 %v4079
        %v4128 = vunpack.c.l.b16 %v4080
        %v4129 = vunpack.c.l.b16 %v4081
        %v4130 = vunpack.c.l.b16 %v4082
        %v4131 = vunpack.c.l.b16 %v4083
        %v4132 = vunpack.c.l.b16 %v4084
        %v4133 = vunpack.c.l.b16 %v4085
        %v4134 = vunpack.c.l.b16 %v4086
        %v4135 = vunpack.c.l.b16 %v4087
        %v4136 = vunpack.c.l.b16 %v4088
        %v4137 = vunpack.c.l.b16 %v4089
        %v4138 = vunpack.c.l.b16 %v4090
        %v4139 = vunpack.c.l.b16 %v4091
        %v4140 = vunpack.c.l.b16 %v4092
        %v4141 = vunpack.c.l.b16 %v4093
        %v4142 = vunpack.c.l.b16 %v4094
        %v4143 = vunpack.c.l.b16 %v4095
        %v4144 = vunpack.c.l.b16 %v4096
        %v4145 = vunpack.c.l.b16 %v4097
        %v4146 = vpack.c.b16 %v4123, %v4122
        %v4147 = vpack.c.b16 %v4125, %v4124
        %v4148 = vpack.c.b16 %v4127, %v4126
        %v4149 = vpack.c.b16 %v4129, %v4128
        %v4150 = vpack.c.b16 %v4131, %v4130
        %v4151 = vpack.c.b16 %v4133, %v4132
        %v4152 = vpack.c.b16 %v4135, %v4134
        %v4153 = vpack.c.b16 %v4137, %v4136
        %v4154 = vpack.c.b16 %v4139, %v4138
        %v4155 = vpack.c.b16 %v4141, %v4140
        %v4156 = vpack.c.b16 %v4143, %v4142
        %v4157 = vpack.c.b16 %v4145, %v4144
        %v4171 = vsel %vm294, %v4042, 0
        %v4174 = vsel %vm294, %v4044, 0
        %v4177 = vsel %vm294, %v4046, 0
        %v4180 = vsel %vm294, %v4048, 0
        %v4183 = vsel %vm294, %v4050, 0
        %v4186 = vsel %vm294, %v4052, 0
        %v4189 = vsel %vm294, %v4054, 0
        %v4192 = vsel %vm294, %v4056, 0
        %v4195 = vsel %vm294, %v4058, 0
        %v4198 = vsel %vm294, %v4060, 0
        %v4201 = vsel %vm294, %v4062, 0
        %v4204 = vsel %vm294, %v4064, 0
        %v4207 = vsel %vm294, %v4066, 0
        %v4210 = vsel %vm294, %v4068, 0
        %v4213 = vsel %vm294, %v4070, 0
        %v4216 = vsel %vm294, %v4072, 0
        %4218 = vmatprep.subr.bf16.mxu0 0
        %4219 = vmatpush1.bf16.msra.mxu0 %v4146
        %4220 = vmatprep.subr.bf16.mxu0 0
        %4221 = vmatpush1.bf16.msra.mxu0 %v4147
        %4222 = vmatprep.subr.bf16.mxu0 0
        %4223 = vmatpush1.bf16.msra.mxu0 %v4148
        %4224 = vmatprep.subr.bf16.mxu0 0
        %4225 = vmatpush1.bf16.msra.mxu0 %v4149
        %4226 = vmatprep.subr.bf16.mxu0 0
        %4227 = vmatpush1.bf16.msra.mxu0 %v4150
        %4228 = vmatprep.subr.bf16.mxu0 0
        %4229 = vmatpush1.bf16.msra.mxu0 %v4151
        %4230 = vmatprep.subr.bf16.mxu0 0
        %4231 = vmatpush1.bf16.msra.mxu0 %v4152
        %4232 = vmatprep.subr.bf16.mxu0 0
        %4233 = vmatpush1.bf16.msra.mxu0 %v4153
        %4234 = vmatprep.subr.bf16.mxu0 0
        %4235 = vmatpush1.bf16.msra.mxu0 %v4154
        %4236 = vmatprep.subr.bf16.mxu0 0
        %4237 = vmatpush1.bf16.msra.mxu0 %v4155
        %4238 = vmatprep.subr.bf16.mxu0 0
        %4239 = vmatpush1.bf16.msra.mxu0 %v4156
        %4240 = vmatprep.subr.bf16.mxu0 0
        %4241 = vmatpush1.bf16.msra.mxu0 %v4157
        %4242 = vmatprep.subr.bf16.mxu0 0
        %4243 = vmatpush1.bf16.msra.mxu0 0
        %4244 = vmatprep.subr.bf16.mxu0 0
        %4245 = vmatpush1.bf16.msra.mxu0 0
        %4246 = vmatprep.subr.bf16.mxu0 0
        %4247 = vmatpush1.bf16.msra.mxu0 0
        %4248 = vmatprep.subr.bf16.mxu0 0
        %4249 = vmatpush1.bf16.msra.mxu0 0
        %4250 = vmatprep.mubr.bf16.mxu0 %v4171
        %4251 = vmatmul.mubr.bf16.gmra.mrb[0].mxu0 %v4041
        %v4252 = vpop.f32.mrb[0].mxu0
        %v4253 = vadd.f32 0.0, %v4252
        %v4254 = vpop.f32.mrb[0].mxu0
        %v4255 = vpop.f32.mrb[0].mxu0
        %v4256 = vadd.f32 0.0, %v4255
        %v4257 = vpop.f32.mrb[0].mxu0
        %4258 = vmatprep.mubr.bf16.mxu0 %v4174
        %4259 = vmatmul.mubr.bf16.gmra.mrb[0].mxu0 %v4043
        %v4260 = vpop.f32.mrb[0].mxu0
        %v4261 = vadd.f32 0.0, %v4260
        %v4262 = vpop.f32.mrb[0].mxu0
        %v4263 = vpop.f32.mrb[0].mxu0
        %v4264 = vadd.f32 0.0, %v4263
        %v4265 = vpop.f32.mrb[0].mxu0
        %4266 = vmatprep.mubr.bf16.mxu0 %v4177
        %4267 = vmatmul.mubr.bf16.gmra.mrb[0].mxu0 %v4045
        %v4268 = vpop.f32.mrb[0].mxu0
        %v4269 = vadd.f32 0.0, %v4268
        %v4270 = vpop.f32.mrb[0].mxu0
        %v4271 = vpop.f32.mrb[0].mxu0
        %v4272 = vadd.f32 0.0, %v4271
        %v4273 = vpop.f32.mrb[0].mxu0
        %4274 = vmatprep.mubr.bf16.mxu0 %v4180
        %4275 = vmatmul.mubr.bf16.gmra.mrb[0].mxu0 %v4047
        %v4276 = vpop.f32.mrb[0].mxu0
        %v4277 = vadd.f32 0.0, %v4276
        %v4278 = vpop.f32.mrb[0].mxu0
        %v4279 = vpop.f32.mrb[0].mxu0
        %v4280 = vadd.f32 0.0, %v4279
        %v4281 = vpop.f32.mrb[0].mxu0
        %4282 = vmatprep.mubr.bf16.mxu0 %v4183
        %4283 = vmatmul.mubr.bf16.gmra.mrb[0].mxu0 %v4049
        %v4284 = vpop.f32.mrb[0].mxu0
        %v4285 = vadd.f32 0.0, %v4284
        %v4286 = vpop.f32.mrb[0].mxu0
        %v4287 = vpop.f32.mrb[0].mxu0
        %v4288 = vadd.f32 0.0, %v4287
        %v4289 = vpop.f32.mrb[0].mxu0
        %4290 = vmatprep.mubr.bf16.mxu0 %v4186
        %4291 = vmatmul.mubr.bf16.gmra.mrb[0].mxu0 %v4051
        %v4292 = vpop.f32.mrb[0].mxu0
        %v4293 = vadd.f32 0.0, %v4292
        %v4294 = vpop.f32.mrb[0].mxu0
        %v4295 = vpop.f32.mrb[0].mxu0
        %v4296 = vadd.f32 0.0, %v4295
        %v4297 = vpop.f32.mrb[0].mxu0
        %4298 = vmatprep.mubr.bf16.mxu0 %v4189
        %4299 = vmatmul.mubr.bf16.gmra.mrb[0].mxu0 %v4053
        %v4300 = vpop.f32.mrb[0].mxu0
        %v4301 = vadd.f32 0.0, %v4300
        %v4302 = vpop.f32.mrb[0].mxu0
        %v4303 = vpop.f32.mrb[0].mxu0
        %v4304 = vadd.f32 0.0, %v4303
        %v4305 = vpop.f32.mrb[0].mxu0
        %4306 = vmatprep.mubr.bf16.mxu0 %v4192
        %4307 = vmatmul.mubr.bf16.gmra.mrb[0].mxu0 %v4055
        %v4308 = vpop.f32.mrb[0].mxu0
        %v4309 = vadd.f32 0.0, %v4308
        %v4310 = vpop.f32.mrb[0].mxu0
        %v4311 = vpop.f32.mrb[0].mxu0
        %v4312 = vadd.f32 0.0, %v4311
        %v4313 = vpop.f32.mrb[0].mxu0
        %4314 = vmatprep.mubr.bf16.mxu0 %v4195
        %4315 = vmatmul.mubr.bf16.gmra.mrb[0].mxu0 %v4057
        %v4316 = vpop.f32.mrb[0].mxu0
        %v4317 = vadd.f32 0.0, %v4316
        %v4318 = vpop.f32.mrb[0].mxu0
        %v4319 = vpop.f32.mrb[0].mxu0
        %v4320 = vadd.f32 0.0, %v4319
        %v4321 = vpop.f32.mrb[0].mxu0
        %4322 = vmatprep.mubr.bf16.mxu0 %v4198
        %4323 = vmatmul.mubr.bf16.gmra.mrb[0].mxu0 %v4059
        %v4324 = vpop.f32.mrb[0].mxu0
        %v4325 = vadd.f32 0.0, %v4324
        %v4326 = vpop.f32.mrb[0].mxu0
        %v4327 = vpop.f32.mrb[0].mxu0
        %v4328 = vadd.f32 0.0, %v4327
        %v4329 = vpop.f32.mrb[0].mxu0
        %4330 = vmatprep.mubr.bf16.mxu0 %v4201
        %4331 = vmatmul.mubr.bf16.gmra.mrb[0].mxu0 %v4061
        %v4332 = vpop.f32.mrb[0].mxu0
        %v4333 = vadd.f32 0.0, %v4332
        %v4334 = vpop.f32.mrb[0].mxu0
        %v4335 = vpop.f32.mrb[0].mxu0
        %v4336 = vadd.f32 0.0, %v4335
        %v4337 = vpop.f32.mrb[0].mxu0
        %4338 = vmatprep.mubr.bf16.mxu0 %v4204
        %4339 = vmatmul.mubr.bf16.gmra.mrb[0].mxu0 %v4063
        %v4340 = vpop.f32.mrb[0].mxu0
        %v4341 = vadd.f32 0.0, %v4340
        %v4342 = vpop.f32.mrb[0].mxu0
        %v4343 = vpop.f32.mrb[0].mxu0
        %v4344 = vadd.f32 0.0, %v4343
        %v4345 = vpop.f32.mrb[0].mxu0
        %4346 = vmatprep.mubr.bf16.mxu0 %v4207
        %4347 = vmatmul.mubr.bf16.gmra.mrb[0].mxu0 %v4065
        %v4348 = vpop.f32.mrb[0].mxu0
        %v4349 = vadd.f32 0.0, %v4348
        %v4350 = vpop.f32.mrb[0].mxu0
        %v4351 = vpop.f32.mrb[0].mxu0
        %v4352 = vadd.f32 0.0, %v4351
        %v4353 = vpop.f32.mrb[0].mxu0
        %4354 = vmatprep.mubr.bf16.mxu0 %v4210
        %4355 = vmatmul.mubr.bf16.gmra.mrb[0].mxu0 %v4067
        %v4356 = vpop.f32.mrb[0].mxu0
        %v4357 = vadd.f32 0.0, %v4356
        %v4358 = vpop.f32.mrb[0].mxu0
        %v4359 = vpop.f32.mrb[0].mxu0
        %v4360 = vadd.f32 0.0, %v4359
        %v4361 = vpop.f32.mrb[0].mxu0
        %4362 = vmatprep.mubr.bf16.mxu0 %v4213
        %4363 = vmatmul.mubr.bf16.gmra.mrb[0].mxu0 %v4069
        %v4364 = vpop.f32.mrb[0].mxu0
        %v4365 = vadd.f32 0.0, %v4364
        %v4366 = vpop.f32.mrb[0].mxu0
        %v4367 = vpop.f32.mrb[0].mxu0
        %v4368 = vadd.f32 0.0, %v4367
        %v4369 = vpop.f32.mrb[0].mxu0
        %4370 = vmatprep.mubr.bf16.mxu0 %v4216
        %4371 = vmatmul.mubr.bf16.gmra.mrb[0].mxu0 %v4071
        %v4372 = vpop.f32.mrb[0].mxu0
        %v4373 = vadd.f32 0.0, %v4372
        %v4374 = vpop.f32.mrb[0].mxu0
        %v4375 = vpop.f32.mrb[0].mxu0
        %v4376 = vadd.f32 0.0, %v4375
        %v4377 = vpop.f32.mrb[0].mxu0
        %4378 = vdwg.mxu0
        %v4379 = vadd.f32 %v3944, %v4253
        %v4380 = vadd.f32 %v3945, %v4256
        %v4381 = vadd.f32 %v3946, %v4261
        %v4382 = vadd.f32 %v3947, %v4264
        %v4383 = vadd.f32 %v3948, %v4269
        %v4384 = vadd.f32 %v3949, %v4272
        %v4385 = vadd.f32 %v3950, %v4277
        %v4386 = vadd.f32 %v3951, %v4280
        %v4387 = vadd.f32 %v3952, %v4285
        %v4388 = vadd.f32 %v3953, %v4288
        %v4389 = vadd.f32 %v3954, %v4293
        %v4390 = vadd.f32 %v3955, %v4296
        %v4391 = vadd.f32 %v3956, %v4301
        %v4392 = vadd.f32 %v3957, %v4304
        %v4393 = vadd.f32 %v3958, %v4309
        %v4394 = vadd.f32 %v3959, %v4312
        %v4395 = vadd.f32 %v3960, %v4317
        %v4396 = vadd.f32 %v3961, %v4320
        %v4397 = vadd.f32 %v3962, %v4325
        %v4398 = vadd.f32 %v3963, %v4328
        %v4399 = vadd.f32 %v3964, %v4333
        %v4400 = vadd.f32 %v3965, %v4336
        %v4401 = vadd.f32 %v3966, %v4341
        %v4402 = vadd.f32 %v3967, %v4344
        %v4403 = vadd.f32 %v3968, %v4349
        %v4404 = vadd.f32 %v3969, %v4352
        %v4405 = vadd.f32 %v3970, %v4357
        %v4406 = vadd.f32 %v3971, %v4360
        %v4407 = vadd.f32 %v3972, %v4365
        %v4408 = vadd.f32 %v3973, %v4368
        %v4409 = vadd.f32 %v3974, %v4373
        %v4410 = vadd.f32 %v3975, %v4376
        %s4411 = scalar_lea.vmem [#allocation5], 64
        %v4412 = vld [vmem:[%s4411] sm:$0xff]
        %v4413 = vld [vmem:[%s4411 + $0x8] sm:$0xff]
        %v4414 = vld [vmem:[%s4411 + $0x10] sm:$0xff]
        %v4415 = vld [vmem:[%s4411 + $0x18] sm:$0xff]
        %v4416 = vld [vmem:[%s4411 + $0x20] sm:$0xff]
        %v4417 = vld [vmem:[%s4411 + $0x28] sm:$0xff]
        %v4418 = vld [vmem:[%s4411 + $0x30] sm:$0xff]
        %v4419 = vld [vmem:[%s4411 + $0x38] sm:$0xff]
        %v4420 = vld [vmem:[%s4411 + $0x40] sm:$0xff]
        %v4421 = vld [vmem:[%s4411 + $0x48] sm:$0xff]
        %v4422 = vld [vmem:[%s4411 + $0x50] sm:$0xff]
        %v4423 = vld [vmem:[%s4411 + $0x58] sm:$0xff]
        %v4424 = vld [vmem:[%s4411 + $0x60] sm:$0xff]
        %v4425 = vld [vmem:[%s4411 + $0x68] sm:$0xff]
        %v4426 = vld [vmem:[%s4411 + $0x70] sm:$0xff]
        %v4427 = vld [vmem:[%s4411 + $0x78] sm:$0xff]
        %v4428 = vld [vmem:[%s4411 + $0x80] sm:$0xff]
        %v4429 = vld [vmem:[%s4411 + $0x88] sm:$0xff]
        %v4430 = vld [vmem:[%s4411 + $0x90] sm:$0xff]
        %v4431 = vld [vmem:[%s4411 + $0x98] sm:$0xff]
        %v4432 = vld [vmem:[%s4411 + $0xa0] sm:$0xff]
        %v4433 = vld [vmem:[%s4411 + $0xa8] sm:$0xff]
        %v4434 = vld [vmem:[%s4411 + $0xb0] sm:$0xff]
        %v4435 = vld [vmem:[%s4411 + $0xb8] sm:$0xff]
        %v4436 = vld [vmem:[%s4411 + $0xc0] sm:$0xff]
        %v4437 = vld [vmem:[%s4411 + $0xc8] sm:$0xff]
        %v4438 = vld [vmem:[%s4411 + $0xd0] sm:$0xff]
        %v4439 = vld [vmem:[%s4411 + $0xd8] sm:$0xff]
        %v4440 = vld [vmem:[%s4411 + $0xe0] sm:$0xff]
        %v4441 = vld [vmem:[%s4411 + $0xe8] sm:$0xff]
        %v4442 = vld [vmem:[%s4411 + $0xf0] sm:$0xff]
        %v4443 = vld [vmem:[%s4411 + $0xf8] sm:$0xff]
        %v4444 = vld [vmem:[%s4411 + $0x100] sm:$0xff]
        %v4445 = vld [vmem:[%s4411 + $0x108] sm:$0xff]
        %v4446 = vld [vmem:[%s4411 + $0x110] sm:$0xff]
        %v4447 = vld [vmem:[%s4411 + $0x118] sm:$0xff]
        %v4448 = vld [vmem:[%s4411 + $0x120] sm:$0xff]
        %v4449 = vld [vmem:[%s4411 + $0x128] sm:$0xff]
        %v4450 = vld [vmem:[%s4411 + $0x130] sm:$0xff]
        %v4451 = vld [vmem:[%s4411 + $0x138] sm:$0xff]
        %v4452 = vld [vmem:[%s4411 + $0x140] sm:$0xff]
        %v4453 = vld [vmem:[%s4411 + $0x148] sm:$0xff]
        %v4454 = vld [vmem:[%s4411 + $0x150] sm:$0xff]
        %v4455 = vld [vmem:[%s4411 + $0x158] sm:$0xff]
        %v4456 = vld [vmem:[%s4411 + $0x160] sm:$0xff]
        %v4457 = vld [vmem:[%s4411 + $0x168] sm:$0xff]
        %v4458 = vld [vmem:[%s4411 + $0x170] sm:$0xff]
        %v4459 = vld [vmem:[%s4411 + $0x178] sm:$0xff]
        %v4460 = vld [vmem:[%s4411 + $0x180] sm:$0xff]
        %v4461 = vld [vmem:[%s4411 + $0x188] sm:$0xff]
        %v4462 = vld [vmem:[%s4411 + $0x190] sm:$0xff]
        %v4463 = vld [vmem:[%s4411 + $0x198] sm:$0xff]
        %v4464 = vld [vmem:[%s4411 + $0x1a0] sm:$0xff]
        %v4465 = vld [vmem:[%s4411 + $0x1a8] sm:$0xff]
        %v4466 = vld [vmem:[%s4411 + $0x1b0] sm:$0xff]
        %v4467 = vld [vmem:[%s4411 + $0x1b8] sm:$0xff]
        %v4468 = vld [vmem:[%s4411 + $0x1c0] sm:$0xff]
        %v4469 = vld [vmem:[%s4411 + $0x1c8] sm:$0xff]
        %v4470 = vld [vmem:[%s4411 + $0x1d0] sm:$0xff]
        %v4471 = vld [vmem:[%s4411 + $0x1d8] sm:$0xff]
        %v4472 = vld [vmem:[%s4411 + $0x1e0] sm:$0xff]
        %v4473 = vld [vmem:[%s4411 + $0x1e8] sm:$0xff]
        %v4474 = vld [vmem:[%s4411 + $0x1f0] sm:$0xff]
        %v4475 = vld [vmem:[%s4411 + $0x1f8] sm:$0xff]
        %v4476 = vpack.c.bf16 %v4414, %v4412
        %v4477 = vpack.c.bf16 %v4415, %v4413
        %v4478 = vpack.c.bf16 %v4418, %v4416
        %v4479 = vpack.c.bf16 %v4419, %v4417
        %v4480 = vpack.c.bf16 %v4422, %v4420
        %v4481 = vpack.c.bf16 %v4423, %v4421
        %v4482 = vpack.c.bf16 %v4426, %v4424
        %v4483 = vpack.c.bf16 %v4427, %v4425
        %v4484 = vpack.c.bf16 %v4430, %v4428
        %v4485 = vpack.c.bf16 %v4431, %v4429
        %v4486 = vpack.c.bf16 %v4434, %v4432
        %v4487 = vpack.c.bf16 %v4435, %v4433
        %v4488 = vpack.c.bf16 %v4438, %v4436
        %v4489 = vpack.c.bf16 %v4439, %v4437
        %v4490 = vpack.c.bf16 %v4442, %v4440
        %v4491 = vpack.c.bf16 %v4443, %v4441
        %v4492 = vpack.c.bf16 %v4446, %v4444
        %v4493 = vpack.c.bf16 %v4447, %v4445
        %v4494 = vpack.c.bf16 %v4450, %v4448
        %v4495 = vpack.c.bf16 %v4451, %v4449
        %v4496 = vpack.c.bf16 %v4454, %v4452
        %v4497 = vpack.c.bf16 %v4455, %v4453
        %v4498 = vpack.c.bf16 %v4458, %v4456
        %v4499 = vpack.c.bf16 %v4459, %v4457
        %v4500 = vpack.c.bf16 %v4462, %v4460
        %v4501 = vpack.c.bf16 %v4463, %v4461
        %v4502 = vpack.c.bf16 %v4466, %v4464
        %v4503 = vpack.c.bf16 %v4467, %v4465
        %v4504 = vpack.c.bf16 %v4470, %v4468
        %v4505 = vpack.c.bf16 %v4471, %v4469
        %v4506 = vpack.c.bf16 %v4474, %v4472
        %v4507 = vpack.c.bf16 %v4475, %v4473
        %s4508 = scalar_lea.vmem %s2, 192
        %v4509 = vld [vmem:[%s4508] sm:$0xf]
        %v4510 = vld [vmem:[%s4508 + $0x4] sm:$0xf]
        %v4511 = vld [vmem:[%s4508 + $0x8] sm:$0xf]
        %v4512 = vld [vmem:[%s4508 + $0xc] sm:$0xf]
        %v4513 = vld [vmem:[%s4508 + $0x10] sm:$0xf]
        %v4514 = vld [vmem:[%s4508 + $0x14] sm:$0xf]
        %v4515 = vld [vmem:[%s4508 + $0x18] sm:$0xf]
        %v4516 = vld [vmem:[%s4508 + $0x1c] sm:$0xf]
        %v4517 = vld [vmem:[%s4508 + $0x20] sm:$0xf]
        %v4518 = vld [vmem:[%s4508 + $0x24] sm:$0xf]
        %v4519 = vld [vmem:[%s4508 + $0x28] sm:$0xf]
        %v4520 = vld [vmem:[%s4508 + $0x2c] sm:$0xf]
        %v4521 = vld [vmem:[%s4508 + $0x30] sm:$0xf]
        %v4522 = vld [vmem:[%s4508 + $0x34] sm:$0xf]
        %v4523 = vld [vmem:[%s4508 + $0x38] sm:$0xf]
        %v4524 = vld [vmem:[%s4508 + $0x3c] sm:$0xf]
        %v4525 = vld [vmem:[%s4508 + $0x40] sm:$0xf]
        %v4526 = vld [vmem:[%s4508 + $0x44] sm:$0xf]
        %v4527 = vld [vmem:[%s4508 + $0x48] sm:$0xf]
        %v4528 = vld [vmem:[%s4508 + $0x4c] sm:$0xf]
        %v4529 = vld [vmem:[%s4508 + $0x50] sm:$0xf]
        %v4530 = vld [vmem:[%s4508 + $0x54] sm:$0xf]
        %v4531 = vld [vmem:[%s4508 + $0x58] sm:$0xf]
        %v4532 = vld [vmem:[%s4508 + $0x5c] sm:$0xf]
        %v4557 = vunpack.c.l.b16 %v4509
        %v4558 = vunpack.c.l.b16 %v4510
        %v4559 = vunpack.c.l.b16 %v4511
        %v4560 = vunpack.c.l.b16 %v4512
        %v4561 = vunpack.c.l.b16 %v4513
        %v4562 = vunpack.c.l.b16 %v4514
        %v4563 = vunpack.c.l.b16 %v4515
        %v4564 = vunpack.c.l.b16 %v4516
        %v4565 = vunpack.c.l.b16 %v4517
        %v4566 = vunpack.c.l.b16 %v4518
        %v4567 = vunpack.c.l.b16 %v4519
        %v4568 = vunpack.c.l.b16 %v4520
        %v4569 = vunpack.c.l.b16 %v4521
        %v4570 = vunpack.c.l.b16 %v4522
        %v4571 = vunpack.c.l.b16 %v4523
        %v4572 = vunpack.c.l.b16 %v4524
        %v4573 = vunpack.c.l.b16 %v4525
        %v4574 = vunpack.c.l.b16 %v4526
        %v4575 = vunpack.c.l.b16 %v4527
        %v4576 = vunpack.c.l.b16 %v4528
        %v4577 = vunpack.c.l.b16 %v4529
        %v4578 = vunpack.c.l.b16 %v4530
        %v4579 = vunpack.c.l.b16 %v4531
        %v4580 = vunpack.c.l.b16 %v4532
        %v4581 = vpack.c.b16 %v4558, %v4557
        %v4582 = vpack.c.b16 %v4560, %v4559
        %v4583 = vpack.c.b16 %v4562, %v4561
        %v4584 = vpack.c.b16 %v4564, %v4563
        %v4585 = vpack.c.b16 %v4566, %v4565
        %v4586 = vpack.c.b16 %v4568, %v4567
        %v4587 = vpack.c.b16 %v4570, %v4569
        %v4588 = vpack.c.b16 %v4572, %v4571
        %v4589 = vpack.c.b16 %v4574, %v4573
        %v4590 = vpack.c.b16 %v4576, %v4575
        %v4591 = vpack.c.b16 %v4578, %v4577
        %v4592 = vpack.c.b16 %v4580, %v4579
        %v4606 = vsel %vm294, %v4477, 0
        %v4609 = vsel %vm294, %v4479, 0
        %v4612 = vsel %vm294, %v4481, 0
        %v4615 = vsel %vm294, %v4483, 0
        %v4618 = vsel %vm294, %v4485, 0
        %v4621 = vsel %vm294, %v4487, 0
        %v4624 = vsel %vm294, %v4489, 0
        %v4627 = vsel %vm294, %v4491, 0
        %v4630 = vsel %vm294, %v4493, 0
        %v4633 = vsel %vm294, %v4495, 0
        %v4636 = vsel %vm294, %v4497, 0
        %v4639 = vsel %vm294, %v4499, 0
        %v4642 = vsel %vm294, %v4501, 0
        %v4645 = vsel %vm294, %v4503, 0
        %v4648 = vsel %vm294, %v4505, 0
        %v4651 = vsel %vm294, %v4507, 0
        %4653 = vmatprep.subr.bf16.mxu0 0
        %4654 = vmatpush1.bf16.msra.mxu0 %v4581
        %4655 = vmatprep.subr.bf16.mxu0 0
        %4656 = vmatpush1.bf16.msra.mxu0 %v4582
        %4657 = vmatprep.subr.bf16.mxu0 0
        %4658 = vmatpush1.bf16.msra.mxu0 %v4583
        %4659 = vmatprep.subr.bf16.mxu0 0
        %4660 = vmatpush1.bf16.msra.mxu0 %v4584
        %4661 = vmatprep.subr.bf16.mxu0 0
        %4662 = vmatpush1.bf16.msra.mxu0 %v4585
        %4663 = vmatprep.subr.bf16.mxu0 0
        %4664 = vmatpush1.bf16.msra.mxu0 %v4586
        %4665 = vmatprep.subr.bf16.mxu0 0
        %4666 = vmatpush1.bf16.msra.mxu0 %v4587
        %4667 = vmatprep.subr.bf16.mxu0 0
        %4668 = vmatpush1.bf16.msra.mxu0 %v4588
        %4669 = vmatprep.subr.bf16.mxu0 0
        %4670 = vmatpush1.bf16.msra.mxu0 %v4589
        %4671 = vmatprep.subr.bf16.mxu0 0
        %4672 = vmatpush1.bf16.msra.mxu0 %v4590
        %4673 = vmatprep.subr.bf16.mxu0 0
        %4674 = vmatpush1.bf16.msra.mxu0 %v4591
        %4675 = vmatprep.subr.bf16.mxu0 0
        %4676 = vmatpush1.bf16.msra.mxu0 %v4592
        %4677 = vmatprep.subr.bf16.mxu0 0
        %4678 = vmatpush1.bf16.msra.mxu0 0
        %4679 = vmatprep.subr.bf16.mxu0 0
        %4680 = vmatpush1.bf16.msra.mxu0 0
        %4681 = vmatprep.subr.bf16.mxu0 0
        %4682 = vmatpush1.bf16.msra.mxu0 0
        %4683 = vmatprep.subr.bf16.mxu0 0
        %4684 = vmatpush1.bf16.msra.mxu0 0
        %4685 = vmatprep.mubr.bf16.mxu0 %v4606
        %4686 = vmatmul.mubr.bf16.gmra.mrb[0].mxu0 %v4476
        %v4687 = vpop.f32.mrb[0].mxu0
        %v4688 = vadd.f32 0.0, %v4687
        %v4689 = vpop.f32.mrb[0].mxu0
        %v4690 = vpop.f32.mrb[0].mxu0
        %v4691 = vadd.f32 0.0, %v4690
        %v4692 = vpop.f32.mrb[0].mxu0
        %4693 = vmatprep.mubr.bf16.mxu0 %v4609
        %4694 = vmatmul.mubr.bf16.gmra.mrb[0].mxu0 %v4478
        %v4695 = vpop.f32.mrb[0].mxu0
        %v4696 = vadd.f32 0.0, %v4695
        %v4697 = vpop.f32.mrb[0].mxu0
        %v4698 = vpop.f32.mrb[0].mxu0
        %v4699 = vadd.f32 0.0, %v4698
        %v4700 = vpop.f32.mrb[0].mxu0
        %4701 = vmatprep.mubr.bf16.mxu0 %v4612
        %4702 = vmatmul.mubr.bf16.gmra.mrb[0].mxu0 %v4480
        %v4703 = vpop.f32.mrb[0].mxu0
        %v4704 = vadd.f32 0.0, %v4703
        %v4705 = vpop.f32.mrb[0].mxu0
        %v4706 = vpop.f32.mrb[0].mxu0
        %v4707 = vadd.f32 0.0, %v4706
        %v4708 = vpop.f32.mrb[0].mxu0
        %4709 = vmatprep.mubr.bf16.mxu0 %v4615
        %4710 = vmatmul.mubr.bf16.gmra.mrb[0].mxu0 %v4482
        %v4711 = vpop.f32.mrb[0].mxu0
        %v4712 = vadd.f32 0.0, %v4711
        %v4713 = vpop.f32.mrb[0].mxu0
        %v4714 = vpop.f32.mrb[0].mxu0
        %v4715 = vadd.f32 0.0, %v4714
        %v4716 = vpop.f32.mrb[0].mxu0
        %4717 = vmatprep.mubr.bf16.mxu0 %v4618
        %4718 = vmatmul.mubr.bf16.gmra.mrb[0].mxu0 %v4484
        %v4719 = vpop.f32.mrb[0].mxu0
        %v4720 = vadd.f32 0.0, %v4719
        %v4721 = vpop.f32.mrb[0].mxu0
        %v4722 = vpop.f32.mrb[0].mxu0
        %v4723 = vadd.f32 0.0, %v4722
        %v4724 = vpop.f32.mrb[0].mxu0
        %4725 = vmatprep.mubr.bf16.mxu0 %v4621
        %4726 = vmatmul.mubr.bf16.gmra.mrb[0].mxu0 %v4486
        %v4727 = vpop.f32.mrb[0].mxu0
        %v4728 = vadd.f32 0.0, %v4727
        %v4729 = vpop.f32.mrb[0].mxu0
        %v4730 = vpop.f32.mrb[0].mxu0
        %v4731 = vadd.f32 0.0, %v4730
        %v4732 = vpop.f32.mrb[0].mxu0
        %4733 = vmatprep.mubr.bf16.mxu0 %v4624
        %4734 = vmatmul.mubr.bf16.gmra.mrb[0].mxu0 %v4488
        %v4735 = vpop.f32.mrb[0].mxu0
        %v4736 = vadd.f32 0.0, %v4735
        %v4737 = vpop.f32.mrb[0].mxu0
        %v4738 = vpop.f32.mrb[0].mxu0
        %v4739 = vadd.f32 0.0, %v4738
        %v4740 = vpop.f32.mrb[0].mxu0
        %4741 = vmatprep.mubr.bf16.mxu0 %v4627
        %4742 = vmatmul.mubr.bf16.gmra.mrb[0].mxu0 %v4490
        %v4743 = vpop.f32.mrb[0].mxu0
        %v4744 = vadd.f32 0.0, %v4743
        %v4745 = vpop.f32.mrb[0].mxu0
        %v4746 = vpop.f32.mrb[0].mxu0
        %v4747 = vadd.f32 0.0, %v4746
        %v4748 = vpop.f32.mrb[0].mxu0
        %4749 = vmatprep.mubr.bf16.mxu0 %v4630
        %4750 = vmatmul.mubr.bf16.gmra.mrb[0].mxu0 %v4492
        %v4751 = vpop.f32.mrb[0].mxu0
        %v4752 = vadd.f32 0.0, %v4751
        %v4753 = vpop.f32.mrb[0].mxu0
        %v4754 = vpop.f32.mrb[0].mxu0
        %v4755 = vadd.f32 0.0, %v4754
        %v4756 = vpop.f32.mrb[0].mxu0
        %4757 = vmatprep.mubr.bf16.mxu0 %v4633
        %4758 = vmatmul.mubr.bf16.gmra.mrb[0].mxu0 %v4494
        %v4759 = vpop.f32.mrb[0].mxu0
        %v4760 = vadd.f32 0.0, %v4759
        %v4761 = vpop.f32.mrb[0].mxu0
        %v4762 = vpop.f32.mrb[0].mxu0
        %v4763 = vadd.f32 0.0, %v4762
        %v4764 = vpop.f32.mrb[0].mxu0
        %4765 = vmatprep.mubr.bf16.mxu0 %v4636
        %4766 = vmatmul.mubr.bf16.gmra.mrb[0].mxu0 %v4496
        %v4767 = vpop.f32.mrb[0].mxu0
        %v4768 = vadd.f32 0.0, %v4767
        %v4769 = vpop.f32.mrb[0].mxu0
        %v4770 = vpop.f32.mrb[0].mxu0
        %v4771 = vadd.f32 0.0, %v4770
        %v4772 = vpop.f32.mrb[0].mxu0
        %4773 = vmatprep.mubr.bf16.mxu0 %v4639
        %4774 = vmatmul.mubr.bf16.gmra.mrb[0].mxu0 %v4498
        %v4775 = vpop.f32.mrb[0].mxu0
        %v4776 = vadd.f32 0.0, %v4775
        %v4777 = vpop.f32.mrb[0].mxu0
        %v4778 = vpop.f32.mrb[0].mxu0
        %v4779 = vadd.f32 0.0, %v4778
        %v4780 = vpop.f32.mrb[0].mxu0
        %4781 = vmatprep.mubr.bf16.mxu0 %v4642
        %4782 = vmatmul.mubr.bf16.gmra.mrb[0].mxu0 %v4500
        %v4783 = vpop.f32.mrb[0].mxu0
        %v4784 = vadd.f32 0.0, %v4783
        %v4785 = vpop.f32.mrb[0].mxu0
        %v4786 = vpop.f32.mrb[0].mxu0
        %v4787 = vadd.f32 0.0, %v4786
        %v4788 = vpop.f32.mrb[0].mxu0
        %4789 = vmatprep.mubr.bf16.mxu0 %v4645
        %4790 = vmatmul.mubr.bf16.gmra.mrb[0].mxu0 %v4502
        %v4791 = vpop.f32.mrb[0].mxu0
        %v4792 = vadd.f32 0.0, %v4791
        %v4793 = vpop.f32.mrb[0].mxu0
        %v4794 = vpop.f32.mrb[0].mxu0
        %v4795 = vadd.f32 0.0, %v4794
        %v4796 = vpop.f32.mrb[0].mxu0
        %4797 = vmatprep.mubr.bf16.mxu0 %v4648
        %4798 = vmatmul.mubr.bf16.gmra.mrb[0].mxu0 %v4504
        %v4799 = vpop.f32.mrb[0].mxu0
        %v4800 = vadd.f32 0.0, %v4799
        %v4801 = vpop.f32.mrb[0].mxu0
        %v4802 = vpop.f32.mrb[0].mxu0
        %v4803 = vadd.f32 0.0, %v4802
        %v4804 = vpop.f32.mrb[0].mxu0
        %4805 = vmatprep.mubr.bf16.mxu0 %v4651
        %4806 = vmatmul.mubr.bf16.gmra.mrb[0].mxu0 %v4506
        %v4807 = vpop.f32.mrb[0].mxu0
        %v4808 = vadd.f32 0.0, %v4807
        %v4809 = vpop.f32.mrb[0].mxu0
        %v4810 = vpop.f32.mrb[0].mxu0
        %v4811 = vadd.f32 0.0, %v4810
        %v4812 = vpop.f32.mrb[0].mxu0
        %4813 = vdwg.mxu0
        %v4814 = vadd.f32 %v4379, %v4688
        %v4815 = vadd.f32 %v4380, %v4691
        %v4816 = vadd.f32 %v4381, %v4696
        %v4817 = vadd.f32 %v4382, %v4699
        %v4818 = vadd.f32 %v4383, %v4704
        %v4819 = vadd.f32 %v4384, %v4707
        %v4820 = vadd.f32 %v4385, %v4712
        %v4821 = vadd.f32 %v4386, %v4715
        %v4822 = vadd.f32 %v4387, %v4720
        %v4823 = vadd.f32 %v4388, %v4723
        %v4824 = vadd.f32 %v4389, %v4728
        %v4825 = vadd.f32 %v4390, %v4731
        %v4826 = vadd.f32 %v4391, %v4736
        %v4827 = vadd.f32 %v4392, %v4739
        %v4828 = vadd.f32 %v4393, %v4744
        %v4829 = vadd.f32 %v4394, %v4747
        %v4830 = vadd.f32 %v4395, %v4752
        %v4831 = vadd.f32 %v4396, %v4755
        %v4832 = vadd.f32 %v4397, %v4760
        %v4833 = vadd.f32 %v4398, %v4763
        %v4834 = vadd.f32 %v4399, %v4768
        %v4835 = vadd.f32 %v4400, %v4771
        %v4836 = vadd.f32 %v4401, %v4776
        %v4837 = vadd.f32 %v4402, %v4779
        %v4838 = vadd.f32 %v4403, %v4784
        %v4839 = vadd.f32 %v4404, %v4787
        %v4840 = vadd.f32 %v4405, %v4792
        %v4841 = vadd.f32 %v4406, %v4795
        %v4842 = vadd.f32 %v4407, %v4800
        %v4843 = vadd.f32 %v4408, %v4803
        %v4844 = vadd.f32 %v4409, %v4808
        %v4845 = vadd.f32 %v4410, %v4811
        %vm4846 = vcmp.gt.f32.partialorder %v4814, 0.0
        %vm4847 = vcmp.gt.f32.partialorder %v4815, 0.0
        %vm4848 = vcmp.gt.f32.partialorder %v4816, 0.0
        %vm4849 = vcmp.gt.f32.partialorder %v4817, 0.0
        %vm4850 = vcmp.gt.f32.partialorder %v4818, 0.0
        %vm4851 = vcmp.gt.f32.partialorder %v4819, 0.0
        %vm4852 = vcmp.gt.f32.partialorder %v4820, 0.0
        %vm4853 = vcmp.gt.f32.partialorder %v4821, 0.0
        %vm4854 = vcmp.gt.f32.partialorder %v4822, 0.0
        %vm4855 = vcmp.gt.f32.partialorder %v4823, 0.0
        %vm4856 = vcmp.gt.f32.partialorder %v4824, 0.0
        %vm4857 = vcmp.gt.f32.partialorder %v4825, 0.0
        %vm4858 = vcmp.gt.f32.partialorder %v4826, 0.0
        %vm4859 = vcmp.gt.f32.partialorder %v4827, 0.0
        %vm4860 = vcmp.gt.f32.partialorder %v4828, 0.0
        %vm4861 = vcmp.gt.f32.partialorder %v4829, 0.0
        %vm4862 = vcmp.gt.f32.partialorder %v4830, 0.0
        %vm4863 = vcmp.gt.f32.partialorder %v4831, 0.0
        %vm4864 = vcmp.gt.f32.partialorder %v4832, 0.0
        %vm4865 = vcmp.gt.f32.partialorder %v4833, 0.0
        %vm4866 = vcmp.gt.f32.partialorder %v4834, 0.0
        %vm4867 = vcmp.gt.f32.partialorder %v4835, 0.0
        %vm4868 = vcmp.gt.f32.partialorder %v4836, 0.0
        %vm4869 = vcmp.gt.f32.partialorder %v4837, 0.0
        %vm4870 = vcmp.gt.f32.partialorder %v4838, 0.0
        %vm4871 = vcmp.gt.f32.partialorder %v4839, 0.0
        %vm4872 = vcmp.gt.f32.partialorder %v4840, 0.0
        %vm4873 = vcmp.gt.f32.partialorder %v4841, 0.0
        %vm4874 = vcmp.gt.f32.partialorder %v4842, 0.0
        %vm4875 = vcmp.gt.f32.partialorder %v4843, 0.0
        %vm4876 = vcmp.gt.f32.partialorder %v4844, 0.0
        %vm4877 = vcmp.gt.f32.partialorder %v4845, 0.0
        %v4878 = vstv %s2997
        %v4879 = vmul.f32 %v4878, %v4814
        %v4880 = vmul.f32 %v4878, %v4815
        %v4881 = vmul.f32 %v4878, %v4816
        %v4882 = vmul.f32 %v4878, %v4817
        %v4883 = vmul.f32 %v4878, %v4818
        %v4884 = vmul.f32 %v4878, %v4819
        %v4885 = vmul.f32 %v4878, %v4820
        %v4886 = vmul.f32 %v4878, %v4821
        %v4887 = vmul.f32 %v4878, %v4822
        %v4888 = vmul.f32 %v4878, %v4823
        %v4889 = vmul.f32 %v4878, %v4824
        %v4890 = vmul.f32 %v4878, %v4825
        %v4891 = vmul.f32 %v4878, %v4826
        %v4892 = vmul.f32 %v4878, %v4827
        %v4893 = vmul.f32 %v4878, %v4828
        %v4894 = vmul.f32 %v4878, %v4829
        %v4895 = vmul.f32 %v4878, %v4830
        %v4896 = vmul.f32 %v4878, %v4831
        %v4897 = vmul.f32 %v4878, %v4832
        %v4898 = vmul.f32 %v4878, %v4833
        %v4899 = vmul.f32 %v4878, %v4834
        %v4900 = vmul.f32 %v4878, %v4835
        %v4901 = vmul.f32 %v4878, %v4836
        %v4902 = vmul.f32 %v4878, %v4837
        %v4903 = vmul.f32 %v4878, %v4838
        %v4904 = vmul.f32 %v4878, %v4839
        %v4905 = vmul.f32 %v4878, %v4840
        %v4906 = vmul.f32 %v4878, %v4841
        %v4907 = vmul.f32 %v4878, %v4842
        %v4908 = vmul.f32 %v4878, %v4843
        %v4909 = vmul.f32 %v4878, %v4844
        %v4910 = vmul.f32 %v4878, %v4845
        %v4911 = vsel %vm4846, %v4814, %v4879
        %v4912 = vsel %vm4847, %v4815, %v4880
        %v4913 = vsel %vm4848, %v4816, %v4881
        %v4914 = vsel %vm4849, %v4817, %v4882
        %v4915 = vsel %vm4850, %v4818, %v4883
        %v4916 = vsel %vm4851, %v4819, %v4884
        %v4917 = vsel %vm4852, %v4820, %v4885
        %v4918 = vsel %vm4853, %v4821, %v4886
        %v4919 = vsel %vm4854, %v4822, %v4887
        %v4920 = vsel %vm4855, %v4823, %v4888
        %v4921 = vsel %vm4856, %v4824, %v4889
        %v4922 = vsel %vm4857, %v4825, %v4890
        %v4923 = vsel %vm4858, %v4826, %v4891
        %v4924 = vsel %vm4859, %v4827, %v4892
        %v4925 = vsel %vm4860, %v4828, %v4893
        %v4926 = vsel %vm4861, %v4829, %v4894
        %v4927 = vsel %vm4862, %v4830, %v4895
        %v4928 = vsel %vm4863, %v4831, %v4896
        %v4929 = vsel %vm4864, %v4832, %v4897
        %v4930 = vsel %vm4865, %v4833, %v4898
        %v4931 = vsel %vm4866, %v4834, %v4899
        %v4932 = vsel %vm4867, %v4835, %v4900
        %v4933 = vsel %vm4868, %v4836, %v4901
        %v4934 = vsel %vm4869, %v4837, %v4902
        %v4935 = vsel %vm4870, %v4838, %v4903
        %v4936 = vsel %vm4871, %v4839, %v4904
        %v4937 = vsel %vm4872, %v4840, %v4905
        %v4938 = vsel %vm4873, %v4841, %v4906
        %v4939 = vsel %vm4874, %v4842, %v4907
        %v4940 = vsel %vm4875, %v4843, %v4908
        %v4941 = vsel %vm4876, %v4844, %v4909
        %v4942 = vsel %vm4877, %v4845, %v4910
        %s4943 = scalar_lea.vmem [#allocation4], 24
        %4944 = vst.msk [vmem:[%s4943 + $0x1] sm:$0xff] %vm294, %v4911
        %4945 = vst.msk [vmem:[%s4943 + $0x9] sm:$0xff] %vm294, %v4912
        %4946 = vst.msk [vmem:[%s4943 + $0x19] sm:$0xff] %vm294, %v4913
        %4947 = vst.msk [vmem:[%s4943 + $0x21] sm:$0xff] %vm294, %v4914
        %4948 = vst.msk [vmem:[%s4943 + $0x31] sm:$0xff] %vm294, %v4915
        %4949 = vst.msk [vmem:[%s4943 + $0x39] sm:$0xff] %vm294, %v4916
        %4950 = vst.msk [vmem:[%s4943 + $0x49] sm:$0xff] %vm294, %v4917
        %4951 = vst.msk [vmem:[%s4943 + $0x51] sm:$0xff] %vm294, %v4918
        %4952 = vst.msk [vmem:[%s4943 + $0x61] sm:$0xff] %vm294, %v4919
        %4953 = vst.msk [vmem:[%s4943 + $0x69] sm:$0xff] %vm294, %v4920
        %4954 = vst.msk [vmem:[%s4943 + $0x79] sm:$0xff] %vm294, %v4921
        %4955 = vst.msk [vmem:[%s4943 + $0x81] sm:$0xff] %vm294, %v4922
        %4956 = vst.msk [vmem:[%s4943 + $0x91] sm:$0xff] %vm294, %v4923
        %4957 = vst.msk [vmem:[%s4943 + $0x99] sm:$0xff] %vm294, %v4924
        %4958 = vst.msk [vmem:[%s4943 + $0xa9] sm:$0xff] %vm294, %v4925
        %4959 = vst.msk [vmem:[%s4943 + $0xb1] sm:$0xff] %vm294, %v4926
        %4960 = vst.msk [vmem:[%s4943 + $0xc1] sm:$0xff] %vm294, %v4927
        %4961 = vst.msk [vmem:[%s4943 + $0xc9] sm:$0xff] %vm294, %v4928
        %4962 = vst.msk [vmem:[%s4943 + $0xd9] sm:$0xff] %vm294, %v4929
        %4963 = vst.msk [vmem:[%s4943 + $0xe1] sm:$0xff] %vm294, %v4930
        %4964 = vst.msk [vmem:[%s4943 + $0xf1] sm:$0xff] %vm294, %v4931
        %4965 = vst.msk [vmem:[%s4943 + $0xf9] sm:$0xff] %vm294, %v4932
        %4966 = vst.msk [vmem:[%s4943 + $0x109] sm:$0xff] %vm294, %v4933
        %4967 = vst.msk [vmem:[%s4943 + $0x111] sm:$0xff] %vm294, %v4934
        %4968 = vst.msk [vmem:[%s4943 + $0x121] sm:$0xff] %vm294, %v4935
        %4969 = vst.msk [vmem:[%s4943 + $0x129] sm:$0xff] %vm294, %v4936
        %4970 = vst.msk [vmem:[%s4943 + $0x139] sm:$0xff] %vm294, %v4937
        %4971 = vst.msk [vmem:[%s4943 + $0x141] sm:$0xff] %vm294, %v4938
        %4972 = vst.msk [vmem:[%s4943 + $0x151] sm:$0xff] %vm294, %v4939
        %4973 = vst.msk [vmem:[%s4943 + $0x159] sm:$0xff] %vm294, %v4940
        %4974 = vst.msk [vmem:[%s4943 + $0x169] sm:$0xff] %vm294, %v4941
        %4975 = vst.msk [vmem:[%s4943 + $0x171] sm:$0xff] %vm294, %v4942
        %s4976 = sld [smem:[#allocation6 + $0x2]]
        %v4977 = vld [vmem:[#allocation4] sm:$0xff]
        %v4978 = vld [vmem:[#allocation4 + $0x8] sm:$0xff]
        %v4979 = vld [vmem:[#allocation4 + $0x10] sm:$0x3]
        %v4980 = vld [vmem:[#allocation4 + $0x18] sm:$0xff]
        %v4981 = vld [vmem:[#allocation4 + $0x20] sm:$0xff]
        %v4982 = vld [vmem:[#allocation4 + $0x28] sm:$0x3]
        %v4983 = vld [vmem:[#allocation4 + $0x30] sm:$0xff]
        %v4984 = vld [vmem:[#allocation4 + $0x38] sm:$0xff]
        %v4985 = vld [vmem:[#allocation4 + $0x40] sm:$0x3]
        %v4986 = vld [vmem:[#allocation4 + $0x48] sm:$0xff]
        %v4987 = vld [vmem:[#allocation4 + $0x50] sm:$0xff]
        %v4988 = vld [vmem:[#allocation4 + $0x58] sm:$0x3]
        %v4989 = vld [vmem:[#allocation4 + $0x60] sm:$0xff]
        %v4990 = vld [vmem:[#allocation4 + $0x68] sm:$0xff]
        %v4991 = vld [vmem:[#allocation4 + $0x70] sm:$0x3]
        %v4992 = vld [vmem:[#allocation4 + $0x78] sm:$0xff]
        %v4993 = vld [vmem:[#allocation4 + $0x80] sm:$0xff]
        %v4994 = vld [vmem:[#allocation4 + $0x88] sm:$0x3]
        %v4995 = vld [vmem:[#allocation4 + $0x90] sm:$0xff]
        %v4996 = vld [vmem:[#allocation4 + $0x98] sm:$0xff]
        %v4997 = vld [vmem:[#allocation4 + $0xa0] sm:$0x3]
        %v4998 = vld [vmem:[#allocation4 + $0xa8] sm:$0xff]
        %v4999 = vld [vmem:[#allocation4 + $0xb0] sm:$0xff]
        %v5000 = vld [vmem:[#allocation4 + $0xb8] sm:$0x3]
        %v5001 = vld [vmem:[#allocation4 + $0xc0] sm:$0xff]
        %v5002 = vld [vmem:[#allocation4 + $0xc8] sm:$0xff]
        %v5003 = vld [vmem:[#allocation4 + $0xd0] sm:$0x3]
        %v5004 = vld [vmem:[#allocation4 + $0xd8] sm:$0xff]
        %v5005 = vld [vmem:[#allocation4 + $0xe0] sm:$0xff]
        %v5006 = vld [vmem:[#allocation4 + $0xe8] sm:$0x3]
        %v5007 = vld [vmem:[#allocation4 + $0xf0] sm:$0xff]
        %v5008 = vld [vmem:[#allocation4 + $0xf8] sm:$0xff]
        %v5009 = vld [vmem:[#allocation4 + $0x100] sm:$0x3]
        %v5010 = vld [vmem:[#allocation4 + $0x108] sm:$0xff]
        %v5011 = vld [vmem:[#allocation4 + $0x110] sm:$0xff]
        %v5012 = vld [vmem:[#allocation4 + $0x118] sm:$0x3]
        %v5013 = vld [vmem:[#allocation4 + $0x120] sm:$0xff]
        %v5014 = vld [vmem:[#allocation4 + $0x128] sm:$0xff]
        %v5015 = vld [vmem:[#allocation4 + $0x130] sm:$0x3]
        %v5016 = vld [vmem:[#allocation4 + $0x138] sm:$0xff]
        %v5017 = vld [vmem:[#allocation4 + $0x140] sm:$0xff]
        %v5018 = vld [vmem:[#allocation4 + $0x148] sm:$0x3]
        %v5019 = vld [vmem:[#allocation4 + $0x150] sm:$0xff]
        %v5020 = vld [vmem:[#allocation4 + $0x158] sm:$0xff]
        %v5021 = vld [vmem:[#allocation4 + $0x160] sm:$0x3]
        %v5022 = vld [vmem:[#allocation4 + $0x168] sm:$0xff]
        %v5023 = vld [vmem:[#allocation4 + $0x170] sm:$0xff]
        %v5024 = vld [vmem:[#allocation4 + $0x178] sm:$0x3]
        %v5025 = vld [vmem:[#allocation4 + $0x180] sm:$0xff]
        %v5026 = vld [vmem:[#allocation4 + $0x188] sm:$0xff]
        %v5027 = vld [vmem:[#allocation4 + $0x190] sm:$0x3]
        %v5028 = vld [vmem:[#allocation4 + $0x198] sm:$0xff]
        %v5029 = vld [vmem:[#allocation4 + $0x1a0] sm:$0xff]
        %v5030 = vld [vmem:[#allocation4 + $0x1a8] sm:$0x3]
        %5031 = vst.msk [vmem:[#allocation5] sm:$0xff] %vm294, %v4977
        %5032 = vst.msk [vmem:[#allocation5 + $0x10] sm:$0xff] %vm294, %v4978
        %5033 = vst.msk [vmem:[#allocation5 + $0x20] sm:$0xff] %vm294, %v4980
        %5034 = vst.msk [vmem:[#allocation5 + $0x30] sm:$0xff] %vm294, %v4981
        %5035 = vst.msk [vmem:[#allocation5 + $0x40] sm:$0xff] %vm294, %v4983
        %5036 = vst.msk [vmem:[#allocation5 + $0x50] sm:$0xff] %vm294, %v4984
        %5037 = vst.msk [vmem:[#allocation5 + $0x60] sm:$0xff] %vm294, %v4986
        %5038 = vst.msk [vmem:[#allocation5 + $0x70] sm:$0xff] %vm294, %v4987
        %5039 = vst.msk [vmem:[#allocation5 + $0x80] sm:$0xff] %vm294, %v4989
        %5040 = vst.msk [vmem:[#allocation5 + $0x90] sm:$0xff] %vm294, %v4990
        %5041 = vst.msk [vmem:[#allocation5 + $0xa0] sm:$0xff] %vm294, %v4992
        %5042 = vst.msk [vmem:[#allocation5 + $0xb0] sm:$0xff] %vm294, %v4993
        %5043 = vst.msk [vmem:[#allocation5 + $0xc0] sm:$0xff] %vm294, %v4995
        %5044 = vst.msk [vmem:[#allocation5 + $0xd0] sm:$0xff] %vm294, %v4996
        %5045 = vst.msk [vmem:[#allocation5 + $0xe0] sm:$0xff] %vm294, %v4998
        %5046 = vst.msk [vmem:[#allocation5 + $0xf0] sm:$0xff] %vm294, %v4999
        %5047 = vst.msk [vmem:[#allocation5 + $0x100] sm:$0xff] %vm294, %v5001
        %5048 = vst.msk [vmem:[#allocation5 + $0x110] sm:$0xff] %vm294, %v5002
        %5049 = vst.msk [vmem:[#allocation5 + $0x120] sm:$0xff] %vm294, %v5004
        %5050 = vst.msk [vmem:[#allocation5 + $0x130] sm:$0xff] %vm294, %v5005
        %5051 = vst.msk [vmem:[#allocation5 + $0x140] sm:$0xff] %vm294, %v5007
        %5052 = vst.msk [vmem:[#allocation5 + $0x150] sm:$0xff] %vm294, %v5008
        %5053 = vst.msk [vmem:[#allocation5 + $0x160] sm:$0xff] %vm294, %v5010
        %5054 = vst.msk [vmem:[#allocation5 + $0x170] sm:$0xff] %vm294, %v5011
        %5055 = vst.msk [vmem:[#allocation5 + $0x180] sm:$0xff] %vm294, %v5013
        %5056 = vst.msk [vmem:[#allocation5 + $0x190] sm:$0xff] %vm294, %v5014
        %5057 = vst.msk [vmem:[#allocation5 + $0x1a0] sm:$0xff] %vm294, %v5016
        %5058 = vst.msk [vmem:[#allocation5 + $0x1b0] sm:$0xff] %vm294, %v5017
        %5059 = vst.msk [vmem:[#allocation5 + $0x1c0] sm:$0xff] %vm294, %v5019
        %5060 = vst.msk [vmem:[#allocation5 + $0x1d0] sm:$0xff] %vm294, %v5020
        %5061 = vst.msk [vmem:[#allocation5 + $0x1e0] sm:$0xff] %vm294, %v5022
        %5062 = vst.msk [vmem:[#allocation5 + $0x1f0] sm:$0xff] %vm294, %v5023
        %5063 = vst.msk [vmem:[#allocation5 + $0x200] sm:$0xff] %vm294, %v5025
        %5064 = vst.msk [vmem:[#allocation5 + $0x210] sm:$0xff] %vm294, %v5026
        %5065 = vst.msk [vmem:[#allocation5 + $0x220] sm:$0xff] %vm294, %v5028
        %5066 = vst.msk [vmem:[#allocation5 + $0x230] sm:$0xff] %vm294, %v5029
        %v5121 = vrot.slane %v4977, 1
        %v5122 = vrot.slane %v4978, 1
        %v5123 = vsel %vm870, %v5121, %v5122
        %v5124 = vrot.slane %v4979, 1
        %v5125 = vsel %vm870, %v5122, %v5124
        %v5126 = vrot.slane %v4980, 1
        %v5127 = vrot.slane %v4981, 1
        %v5128 = vsel %vm870, %v5126, %v5127
        %v5129 = vrot.slane %v4982, 1
        %v5130 = vsel %vm870, %v5127, %v5129
        %v5131 = vrot.slane %v4983, 1
        %v5132 = vrot.slane %v4984, 1
        %v5133 = vsel %vm870, %v5131, %v5132
        %v5134 = vrot.slane %v4985, 1
        %v5135 = vsel %vm870, %v5132, %v5134
        %v5136 = vrot.slane %v4986, 1
        %v5137 = vrot.slane %v4987, 1
        %v5138 = vsel %vm870, %v5136, %v5137
        %v5139 = vrot.slane %v4988, 1
        %v5140 = vsel %vm870, %v5137, %v5139
        %v5141 = vrot.slane %v4989, 1
        %v5142 = vrot.slane %v4990, 1
        %v5143 = vsel %vm870, %v5141, %v5142
        %v5144 = vrot.slane %v4991, 1
        %v5145 = vsel %vm870, %v5142, %v5144
        %v5146 = vrot.slane %v4992, 1
        %v5147 = vrot.slane %v4993, 1
        %v5148 = vsel %vm870, %v5146, %v5147
        %v5149 = vrot.slane %v4994, 1
        %v5150 = vsel %vm870, %v5147, %v5149
        %v5151 = vrot.slane %v4995, 1
        %v5152 = vrot.slane %v4996, 1
        %v5153 = vsel %vm870, %v5151, %v5152
        %v5154 = vrot.slane %v4997, 1
        %v5155 = vsel %vm870, %v5152, %v5154
        %v5156 = vrot.slane %v4998, 1
        %v5157 = vrot.slane %v4999, 1
        %v5158 = vsel %vm870, %v5156, %v5157
        %v5159 = vrot.slane %v5000, 1
        %v5160 = vsel %vm870, %v5157, %v5159
        %v5161 = vrot.slane %v5001, 1
        %v5162 = vrot.slane %v5002, 1
        %v5163 = vsel %vm870, %v5161, %v5162
        %v5164 = vrot.slane %v5003, 1
        %v5165 = vsel %vm870, %v5162, %v5164
        %v5166 = vrot.slane %v5004, 1
        %v5167 = vrot.slane %v5005, 1
        %v5168 = vsel %vm870, %v5166, %v5167
        %v5169 = vrot.slane %v5006, 1
        %v5170 = vsel %vm870, %v5167, %v5169
        %v5171 = vrot.slane %v5007, 1
        %v5172 = vrot.slane %v5008, 1
        %v5173 = vsel %vm870, %v5171, %v5172
        %v5174 = vrot.slane %v5009, 1
        %v5175 = vsel %vm870, %v5172, %v5174
        %v5176 = vrot.slane %v5010, 1
        %v5177 = vrot.slane %v5011, 1
        %v5178 = vsel %vm870, %v5176, %v5177
        %v5179 = vrot.slane %v5012, 1
        %v5180 = vsel %vm870, %v5177, %v5179
        %v5181 = vrot.slane %v5013, 1
        %v5182 = vrot.slane %v5014, 1
        %v5183 = vsel %vm870, %v5181, %v5182
        %v5184 = vrot.slane %v5015, 1
        %v5185 = vsel %vm870, %v5182, %v5184
        %v5186 = vrot.slane %v5016, 1
        %v5187 = vrot.slane %v5017, 1
        %v5188 = vsel %vm870, %v5186, %v5187
        %v5189 = vrot.slane %v5018, 1
        %v5190 = vsel %vm870, %v5187, %v5189
        %v5191 = vrot.slane %v5019, 1
        %v5192 = vrot.slane %v5020, 1
        %v5193 = vsel %vm870, %v5191, %v5192
        %v5194 = vrot.slane %v5021, 1
        %v5195 = vsel %vm870, %v5192, %v5194
        %v5196 = vrot.slane %v5022, 1
        %v5197 = vrot.slane %v5023, 1
        %v5198 = vsel %vm870, %v5196, %v5197
        %v5199 = vrot.slane %v5024, 1
        %v5200 = vsel %vm870, %v5197, %v5199
        %v5201 = vrot.slane %v5025, 1
        %v5202 = vrot.slane %v5026, 1
        %v5203 = vsel %vm870, %v5201, %v5202
        %v5204 = vrot.slane %v5027, 1
        %v5205 = vsel %vm870, %v5202, %v5204
        %v5206 = vrot.slane %v5028, 1
        %v5207 = vrot.slane %v5029, 1
        %v5208 = vsel %vm870, %v5206, %v5207
        %v5209 = vrot.slane %v5030, 1
        %v5210 = vsel %vm870, %v5207, %v5209
        %5211 = vrot.lane.b32.xlu0 %v5123, 64
        %v5212 = vpop.permute.xlu0 %5211
        %5213 = vrot.lane.b32.xlu0 %v5125, 64
        %v5214 = vpop.permute.xlu0 %5213
        %5215 = vrot.lane.b32.xlu0 %v5128, 64
        %v5216 = vpop.permute.xlu0 %5215
        %5217 = vrot.lane.b32.xlu0 %v5130, 64
        %v5218 = vpop.permute.xlu0 %5217
        %5219 = vrot.lane.b32.xlu0 %v5133, 64
        %v5220 = vpop.permute.xlu0 %5219
        %5221 = vrot.lane.b32.xlu0 %v5135, 64
        %v5222 = vpop.permute.xlu0 %5221
        %5223 = vrot.lane.b32.xlu0 %v5138, 64
        %v5224 = vpop.permute.xlu0 %5223
        %5225 = vrot.lane.b32.xlu0 %v5140, 64
        %v5226 = vpop.permute.xlu0 %5225
        %5227 = vrot.lane.b32.xlu0 %v5143, 64
        %v5228 = vpop.permute.xlu0 %5227
        %5229 = vrot.lane.b32.xlu0 %v5145, 64
        %v5230 = vpop.permute.xlu0 %5229
        %5231 = vrot.lane.b32.xlu0 %v5148, 64
        %v5232 = vpop.permute.xlu0 %5231
        %5233 = vrot.lane.b32.xlu0 %v5150, 64
        %v5234 = vpop.permute.xlu0 %5233
        %5235 = vrot.lane.b32.xlu0 %v5153, 64
        %v5236 = vpop.permute.xlu0 %5235
        %5237 = vrot.lane.b32.xlu0 %v5155, 64
        %v5238 = vpop.permute.xlu0 %5237
        %5239 = vrot.lane.b32.xlu0 %v5158, 64
        %v5240 = vpop.permute.xlu0 %5239
        %5241 = vrot.lane.b32.xlu0 %v5160, 64
        %v5242 = vpop.permute.xlu0 %5241
        %5243 = vrot.lane.b32.xlu0 %v5163, 64
        %v5244 = vpop.permute.xlu0 %5243
        %5245 = vrot.lane.b32.xlu0 %v5165, 64
        %v5246 = vpop.permute.xlu0 %5245
        %5247 = vrot.lane.b32.xlu0 %v5168, 64
        %v5248 = vpop.permute.xlu0 %5247
        %5249 = vrot.lane.b32.xlu0 %v5170, 64
        %v5250 = vpop.permute.xlu0 %5249
        %5251 = vrot.lane.b32.xlu0 %v5173, 64
        %v5252 = vpop.permute.xlu0 %5251
        %5253 = vrot.lane.b32.xlu0 %v5175, 64
        %v5254 = vpop.permute.xlu0 %5253
        %5255 = vrot.lane.b32.xlu0 %v5178, 64
        %v5256 = vpop.permute.xlu0 %5255
        %5257 = vrot.lane.b32.xlu0 %v5180, 64
        %v5258 = vpop.permute.xlu0 %5257
        %5259 = vrot.lane.b32.xlu0 %v5183, 64
        %v5260 = vpop.permute.xlu0 %5259
        %5261 = vrot.lane.b32.xlu0 %v5185, 64
        %v5262 = vpop.permute.xlu0 %5261
        %5263 = vrot.lane.b32.xlu0 %v5188, 64
        %v5264 = vpop.permute.xlu0 %5263
        %5265 = vrot.lane.b32.xlu0 %v5190, 64
        %v5266 = vpop.permute.xlu0 %5265
        %5267 = vrot.lane.b32.xlu0 %v5193, 64
        %v5268 = vpop.permute.xlu0 %5267
        %5269 = vrot.lane.b32.xlu0 %v5195, 64
        %v5270 = vpop.permute.xlu0 %5269
        %5271 = vrot.lane.b32.xlu0 %v5198, 64
        %v5272 = vpop.permute.xlu0 %5271
        %5273 = vrot.lane.b32.xlu0 %v5200, 64
        %v5274 = vpop.permute.xlu0 %5273
        %5275 = vrot.lane.b32.xlu0 %v5203, 64
        %v5276 = vpop.permute.xlu0 %5275
        %5277 = vrot.lane.b32.xlu0 %v5205, 64
        %v5278 = vpop.permute.xlu0 %5277
        %5279 = vrot.lane.b32.xlu0 %v5208, 64
        %v5280 = vpop.permute.xlu0 %5279
        %5281 = vrot.lane.b32.xlu0 %v5210, 64
        %v5282 = vpop.permute.xlu0 %5281
        %5319 = vst.msk [vmem:[#allocation5] sm:$0xff] %vm3340, %v5212
        %5320 = vst.msk [vmem:[#allocation5 + $0x10] sm:$0xff] %vm3340, %v5214
        %5321 = vst.msk [vmem:[#allocation5 + $0x20] sm:$0xff] %vm3340, %v5216
        %5322 = vst.msk [vmem:[#allocation5 + $0x30] sm:$0xff] %vm3340, %v5218
        %5323 = vst.msk [vmem:[#allocation5 + $0x40] sm:$0xff] %vm3340, %v5220
        %5324 = vst.msk [vmem:[#allocation5 + $0x50] sm:$0xff] %vm3340, %v5222
        %5325 = vst.msk [vmem:[#allocation5 + $0x60] sm:$0xff] %vm3340, %v5224
        %5326 = vst.msk [vmem:[#allocation5 + $0x70] sm:$0xff] %vm3340, %v5226
        %5327 = vst.msk [vmem:[#allocation5 + $0x80] sm:$0xff] %vm3340, %v5228
        %5328 = vst.msk [vmem:[#allocation5 + $0x90] sm:$0xff] %vm3340, %v5230
        %5329 = vst.msk [vmem:[#allocation5 + $0xa0] sm:$0xff] %vm3340, %v5232
        %5330 = vst.msk [vmem:[#allocation5 + $0xb0] sm:$0xff] %vm3340, %v5234
        %5331 = vst.msk [vmem:[#allocation5 + $0xc0] sm:$0xff] %vm3340, %v5236
        %5332 = vst.msk [vmem:[#allocation5 + $0xd0] sm:$0xff] %vm3340, %v5238
        %5333 = vst.msk [vmem:[#allocation5 + $0xe0] sm:$0xff] %vm3340, %v5240
        %5334 = vst.msk [vmem:[#allocation5 + $0xf0] sm:$0xff] %vm3340, %v5242
        %5335 = vst.msk [vmem:[#allocation5 + $0x100] sm:$0xff] %vm3340, %v5244
        %5336 = vst.msk [vmem:[#allocation5 + $0x110] sm:$0xff] %vm3340, %v5246
        %5337 = vst.msk [vmem:[#allocation5 + $0x120] sm:$0xff] %vm3340, %v5248
        %5338 = vst.msk [vmem:[#allocation5 + $0x130] sm:$0xff] %vm3340, %v5250
        %5339 = vst.msk [vmem:[#allocation5 + $0x140] sm:$0xff] %vm3340, %v5252
        %5340 = vst.msk [vmem:[#allocation5 + $0x150] sm:$0xff] %vm3340, %v5254
        %5341 = vst.msk [vmem:[#allocation5 + $0x160] sm:$0xff] %vm3340, %v5256
        %5342 = vst.msk [vmem:[#allocation5 + $0x170] sm:$0xff] %vm3340, %v5258
        %5343 = vst.msk [vmem:[#allocation5 + $0x180] sm:$0xff] %vm3340, %v5260
        %5344 = vst.msk [vmem:[#allocation5 + $0x190] sm:$0xff] %vm3340, %v5262
        %5345 = vst.msk [vmem:[#allocation5 + $0x1a0] sm:$0xff] %vm3340, %v5264
        %5346 = vst.msk [vmem:[#allocation5 + $0x1b0] sm:$0xff] %vm3340, %v5266
        %5347 = vst.msk [vmem:[#allocation5 + $0x1c0] sm:$0xff] %vm3340, %v5268
        %5348 = vst.msk [vmem:[#allocation5 + $0x1d0] sm:$0xff] %vm3340, %v5270
        %5349 = vst.msk [vmem:[#allocation5 + $0x1e0] sm:$0xff] %vm3340, %v5272
        %5350 = vst.msk [vmem:[#allocation5 + $0x1f0] sm:$0xff] %vm3340, %v5274
        %5351 = vst.msk [vmem:[#allocation5 + $0x200] sm:$0xff] %vm3340, %v5276
        %5352 = vst.msk [vmem:[#allocation5 + $0x210] sm:$0xff] %vm3340, %v5278
        %5353 = vst.msk [vmem:[#allocation5 + $0x220] sm:$0xff] %vm3340, %v5280
        %5354 = vst.msk [vmem:[#allocation5 + $0x230] sm:$0xff] %vm3340, %v5282
        %v5355 = vrot.slane %v4977, 2
        %v5356 = vrot.slane %v4978, 2
        %v5357 = vsel %vm1245, %v5355, %v5356
        %v5358 = vrot.slane %v4979, 2
        %v5359 = vsel %vm1245, %v5356, %v5358
        %v5360 = vrot.slane %v4980, 2
        %v5361 = vrot.slane %v4981, 2
        %v5362 = vsel %vm1245, %v5360, %v5361
        %v5363 = vrot.slane %v4982, 2
        %v5364 = vsel %vm1245, %v5361, %v5363
        %v5365 = vrot.slane %v4983, 2
        %v5366 = vrot.slane %v4984, 2
        %v5367 = vsel %vm1245, %v5365, %v5366
        %v5368 = vrot.slane %v4985, 2
        %v5369 = vsel %vm1245, %v5366, %v5368
        %v5370 = vrot.slane %v4986, 2
        %v5371 = vrot.slane %v4987, 2
        %v5372 = vsel %vm1245, %v5370, %v5371
        %v5373 = vrot.slane %v4988, 2
        %v5374 = vsel %vm1245, %v5371, %v5373
        %v5375 = vrot.slane %v4989, 2
        %v5376 = vrot.slane %v4990, 2
        %v5377 = vsel %vm1245, %v5375, %v5376
        %v5378 = vrot.slane %v4991, 2
        %v5379 = vsel %vm1245, %v5376, %v5378
        %v5380 = vrot.slane %v4992, 2
        %v5381 = vrot.slane %v4993, 2
        %v5382 = vsel %vm1245, %v5380, %v5381
        %v5383 = vrot.slane %v4994, 2
        %v5384 = vsel %vm1245, %v5381, %v5383
        %v5385 = vrot.slane %v4995, 2
        %v5386 = vrot.slane %v4996, 2
        %v5387 = vsel %vm1245, %v5385, %v5386
        %v5388 = vrot.slane %v4997, 2
        %v5389 = vsel %vm1245, %v5386, %v5388
        %v5390 = vrot.slane %v4998, 2
        %v5391 = vrot.slane %v4999, 2
        %v5392 = vsel %vm1245, %v5390, %v5391
        %v5393 = vrot.slane %v5000, 2
        %v5394 = vsel %vm1245, %v5391, %v5393
        %v5395 = vrot.slane %v5001, 2
        %v5396 = vrot.slane %v5002, 2
        %v5397 = vsel %vm1245, %v5395, %v5396
        %v5398 = vrot.slane %v5003, 2
        %v5399 = vsel %vm1245, %v5396, %v5398
        %v5400 = vrot.slane %v5004, 2
        %v5401 = vrot.slane %v5005, 2
        %v5402 = vsel %vm1245, %v5400, %v5401
        %v5403 = vrot.slane %v5006, 2
        %v5404 = vsel %vm1245, %v5401, %v5403
        %v5405 = vrot.slane %v5007, 2
        %v5406 = vrot.slane %v5008, 2
        %v5407 = vsel %vm1245, %v5405, %v5406
        %v5408 = vrot.slane %v5009, 2
        %v5409 = vsel %vm1245, %v5406, %v5408
        %v5410 = vrot.slane %v5010, 2
        %v5411 = vrot.slane %v5011, 2
        %v5412 = vsel %vm1245, %v5410, %v5411
        %v5413 = vrot.slane %v5012, 2
        %v5414 = vsel %vm1245, %v5411, %v5413
        %v5415 = vrot.slane %v5013, 2
        %v5416 = vrot.slane %v5014, 2
        %v5417 = vsel %vm1245, %v5415, %v5416
        %v5418 = vrot.slane %v5015, 2
        %v5419 = vsel %vm1245, %v5416, %v5418
        %v5420 = vrot.slane %v5016, 2
        %v5421 = vrot.slane %v5017, 2
        %v5422 = vsel %vm1245, %v5420, %v5421
        %v5423 = vrot.slane %v5018, 2
        %v5424 = vsel %vm1245, %v5421, %v5423
        %v5425 = vrot.slane %v5019, 2
        %v5426 = vrot.slane %v5020, 2
        %v5427 = vsel %vm1245, %v5425, %v5426
        %v5428 = vrot.slane %v5021, 2
        %v5429 = vsel %vm1245, %v5426, %v5428
        %v5430 = vrot.slane %v5022, 2
        %v5431 = vrot.slane %v5023, 2
        %v5432 = vsel %vm1245, %v5430, %v5431
        %v5433 = vrot.slane %v5024, 2
        %v5434 = vsel %vm1245, %v5431, %v5433
        %v5435 = vrot.slane %v5025, 2
        %v5436 = vrot.slane %v5026, 2
        %v5437 = vsel %vm1245, %v5435, %v5436
        %v5438 = vrot.slane %v5027, 2
        %v5439 = vsel %vm1245, %v5436, %v5438
        %v5440 = vrot.slane %v5028, 2
        %v5441 = vrot.slane %v5029, 2
        %v5442 = vsel %vm1245, %v5440, %v5441
        %v5443 = vrot.slane %v5030, 2
        %v5444 = vsel %vm1245, %v5441, %v5443
        %5481 = vst.msk [vmem:[#allocation5 + $0x8] sm:$0xff] %vm294, %v5357
        %5482 = vst.msk [vmem:[#allocation5 + $0x18] sm:$0xff] %vm294, %v5359
        %5483 = vst.msk [vmem:[#allocation5 + $0x28] sm:$0xff] %vm294, %v5362
        %5484 = vst.msk [vmem:[#allocation5 + $0x38] sm:$0xff] %vm294, %v5364
        %5485 = vst.msk [vmem:[#allocation5 + $0x48] sm:$0xff] %vm294, %v5367
        %5486 = vst.msk [vmem:[#allocation5 + $0x58] sm:$0xff] %vm294, %v5369
        %5487 = vst.msk [vmem:[#allocation5 + $0x68] sm:$0xff] %vm294, %v5372
        %5488 = vst.msk [vmem:[#allocation5 + $0x78] sm:$0xff] %vm294, %v5374
        %5489 = vst.msk [vmem:[#allocation5 + $0x88] sm:$0xff] %vm294, %v5377
        %5490 = vst.msk [vmem:[#allocation5 + $0x98] sm:$0xff] %vm294, %v5379
        %5491 = vst.msk [vmem:[#allocation5 + $0xa8] sm:$0xff] %vm294, %v5382
        %5492 = vst.msk [vmem:[#allocation5 + $0xb8] sm:$0xff] %vm294, %v5384
        %5493 = vst.msk [vmem:[#allocation5 + $0xc8] sm:$0xff] %vm294, %v5387
        %5494 = vst.msk [vmem:[#allocation5 + $0xd8] sm:$0xff] %vm294, %v5389
        %5495 = vst.msk [vmem:[#allocation5 + $0xe8] sm:$0xff] %vm294, %v5392
        %5496 = vst.msk [vmem:[#allocation5 + $0xf8] sm:$0xff] %vm294, %v5394
        %5497 = vst.msk [vmem:[#allocation5 + $0x108] sm:$0xff] %vm294, %v5397
        %5498 = vst.msk [vmem:[#allocation5 + $0x118] sm:$0xff] %vm294, %v5399
        %5499 = vst.msk [vmem:[#allocation5 + $0x128] sm:$0xff] %vm294, %v5402
        %5500 = vst.msk [vmem:[#allocation5 + $0x138] sm:$0xff] %vm294, %v5404
        %5501 = vst.msk [vmem:[#allocation5 + $0x148] sm:$0xff] %vm294, %v5407
        %5502 = vst.msk [vmem:[#allocation5 + $0x158] sm:$0xff] %vm294, %v5409
        %5503 = vst.msk [vmem:[#allocation5 + $0x168] sm:$0xff] %vm294, %v5412
        %5504 = vst.msk [vmem:[#allocation5 + $0x178] sm:$0xff] %vm294, %v5414
        %5505 = vst.msk [vmem:[#allocation5 + $0x188] sm:$0xff] %vm294, %v5417
        %5506 = vst.msk [vmem:[#allocation5 + $0x198] sm:$0xff] %vm294, %v5419
        %5507 = vst.msk [vmem:[#allocation5 + $0x1a8] sm:$0xff] %vm294, %v5422
        %5508 = vst.msk [vmem:[#allocation5 + $0x1b8] sm:$0xff] %vm294, %v5424
        %5509 = vst.msk [vmem:[#allocation5 + $0x1c8] sm:$0xff] %vm294, %v5427
        %5510 = vst.msk [vmem:[#allocation5 + $0x1d8] sm:$0xff] %vm294, %v5429
        %5511 = vst.msk [vmem:[#allocation5 + $0x1e8] sm:$0xff] %vm294, %v5432
        %5512 = vst.msk [vmem:[#allocation5 + $0x1f8] sm:$0xff] %vm294, %v5434
        %5513 = vst.msk [vmem:[#allocation5 + $0x208] sm:$0xff] %vm294, %v5437
        %5514 = vst.msk [vmem:[#allocation5 + $0x218] sm:$0xff] %vm294, %v5439
        %5515 = vst.msk [vmem:[#allocation5 + $0x228] sm:$0xff] %vm294, %v5442
        %5516 = vst.msk [vmem:[#allocation5 + $0x238] sm:$0xff] %vm294, %v5444
        %v5517 = vlaneseq
        %v5518 = vshrl.u32 %v5517, 7
        %v5519 = vsub.s32 2, %v5518
        %v5520 = vrot.slane %v501, %v5519
        %v5521 = vld [vmem:[#allocation5] sm:$0xff]
        %v5522 = vld [vmem:[#allocation5 + $0x8] sm:$0xff]
        %v5523 = vld [vmem:[#allocation5 + $0x10] sm:$0xff]
        %v5524 = vld [vmem:[#allocation5 + $0x18] sm:$0xff]
        %v5525 = vld [vmem:[#allocation5 + $0x20] sm:$0xff]
        %v5526 = vld [vmem:[#allocation5 + $0x28] sm:$0xff]
        %v5527 = vld [vmem:[#allocation5 + $0x30] sm:$0xff]
        %v5528 = vld [vmem:[#allocation5 + $0x38] sm:$0xff]
        %v5529 = vld [vmem:[#allocation5 + $0x40] sm:$0xff]
        %v5530 = vld [vmem:[#allocation5 + $0x48] sm:$0xff]
        %v5531 = vld [vmem:[#allocation5 + $0x50] sm:$0xff]
        %v5532 = vld [vmem:[#allocation5 + $0x58] sm:$0xff]
        %v5533 = vld [vmem:[#allocation5 + $0x60] sm:$0xff]
        %v5534 = vld [vmem:[#allocation5 + $0x68] sm:$0xff]
        %v5535 = vld [vmem:[#allocation5 + $0x70] sm:$0xff]
        %v5536 = vld [vmem:[#allocation5 + $0x78] sm:$0xff]
        %v5537 = vld [vmem:[#allocation5 + $0x80] sm:$0xff]
        %v5538 = vld [vmem:[#allocation5 + $0x88] sm:$0xff]
        %v5539 = vld [vmem:[#allocation5 + $0x90] sm:$0xff]
        %v5540 = vld [vmem:[#allocation5 + $0x98] sm:$0xff]
        %v5541 = vld [vmem:[#allocation5 + $0xa0] sm:$0xff]
        %v5542 = vld [vmem:[#allocation5 + $0xa8] sm:$0xff]
        %v5543 = vld [vmem:[#allocation5 + $0xb0] sm:$0xff]
        %v5544 = vld [vmem:[#allocation5 + $0xb8] sm:$0xff]
        %v5545 = vld [vmem:[#allocation5 + $0xc0] sm:$0xff]
        %v5546 = vld [vmem:[#allocation5 + $0xc8] sm:$0xff]
        %v5547 = vld [vmem:[#allocation5 + $0xd0] sm:$0xff]
        %v5548 = vld [vmem:[#allocation5 + $0xd8] sm:$0xff]
        %v5549 = vld [vmem:[#allocation5 + $0xe0] sm:$0xff]
        %v5550 = vld [vmem:[#allocation5 + $0xe8] sm:$0xff]
        %v5551 = vld [vmem:[#allocation5 + $0xf0] sm:$0xff]
        %v5552 = vld [vmem:[#allocation5 + $0xf8] sm:$0xff]
        %v5553 = vld [vmem:[#allocation5 + $0x100] sm:$0xff]
        %v5554 = vld [vmem:[#allocation5 + $0x108] sm:$0xff]
        %v5555 = vld [vmem:[#allocation5 + $0x110] sm:$0xff]
        %v5556 = vld [vmem:[#allocation5 + $0x118] sm:$0xff]
        %v5557 = vld [vmem:[#allocation5 + $0x120] sm:$0xff]
        %v5558 = vld [vmem:[#allocation5 + $0x128] sm:$0xff]
        %v5559 = vld [vmem:[#allocation5 + $0x130] sm:$0xff]
        %v5560 = vld [vmem:[#allocation5 + $0x138] sm:$0xff]
        %v5561 = vld [vmem:[#allocation5 + $0x140] sm:$0xff]
        %v5562 = vld [vmem:[#allocation5 + $0x148] sm:$0xff]
        %v5563 = vld [vmem:[#allocation5 + $0x150] sm:$0xff]
        %v5564 = vld [vmem:[#allocation5 + $0x158] sm:$0xff]
        %v5565 = vld [vmem:[#allocation5 + $0x160] sm:$0xff]
        %v5566 = vld [vmem:[#allocation5 + $0x168] sm:$0xff]
        %v5567 = vld [vmem:[#allocation5 + $0x170] sm:$0xff]
        %v5568 = vld [vmem:[#allocation5 + $0x178] sm:$0xff]
        %v5569 = vld [vmem:[#allocation5 + $0x180] sm:$0xff]
        %v5570 = vld [vmem:[#allocation5 + $0x188] sm:$0xff]
        %v5571 = vld [vmem:[#allocation5 + $0x190] sm:$0xff]
        %v5572 = vld [vmem:[#allocation5 + $0x198] sm:$0xff]
        %v5573 = vld [vmem:[#allocation5 + $0x1a0] sm:$0xff]
        %v5574 = vld [vmem:[#allocation5 + $0x1a8] sm:$0xff]
        %v5575 = vld [vmem:[#allocation5 + $0x1b0] sm:$0xff]
        %v5576 = vld [vmem:[#allocation5 + $0x1b8] sm:$0xff]
        %v5577 = vld [vmem:[#allocation5 + $0x1c0] sm:$0xff]
        %v5578 = vld [vmem:[#allocation5 + $0x1c8] sm:$0xff]
        %v5579 = vld [vmem:[#allocation5 + $0x1d0] sm:$0xff]
        %v5580 = vld [vmem:[#allocation5 + $0x1d8] sm:$0xff]
        %v5581 = vld [vmem:[#allocation5 + $0x1e0] sm:$0xff]
        %v5582 = vld [vmem:[#allocation5 + $0x1e8] sm:$0xff]
        %v5583 = vld [vmem:[#allocation5 + $0x1f0] sm:$0xff]
        %v5584 = vld [vmem:[#allocation5 + $0x1f8] sm:$0xff]
        %v5585 = vpack.c.bf16 %v5523, %v5521
        %v5586 = vpack.c.bf16 %v5524, %v5522
        %v5587 = vpack.c.bf16 %v5527, %v5525
        %v5588 = vpack.c.bf16 %v5528, %v5526
        %v5589 = vpack.c.bf16 %v5531, %v5529
        %v5590 = vpack.c.bf16 %v5532, %v5530
        %v5591 = vpack.c.bf16 %v5535, %v5533
        %v5592 = vpack.c.bf16 %v5536, %v5534
        %v5593 = vpack.c.bf16 %v5539, %v5537
        %v5594 = vpack.c.bf16 %v5540, %v5538
        %v5595 = vpack.c.bf16 %v5543, %v5541
        %v5596 = vpack.c.bf16 %v5544, %v5542
        %v5597 = vpack.c.bf16 %v5547, %v5545
        %v5598 = vpack.c.bf16 %v5548, %v5546
        %v5599 = vpack.c.bf16 %v5551, %v5549
        %v5600 = vpack.c.bf16 %v5552, %v5550
        %v5601 = vpack.c.bf16 %v5555, %v5553
        %v5602 = vpack.c.bf16 %v5556, %v5554
        %v5603 = vpack.c.bf16 %v5559, %v5557
        %v5604 = vpack.c.bf16 %v5560, %v5558
        %v5605 = vpack.c.bf16 %v5563, %v5561
        %v5606 = vpack.c.bf16 %v5564, %v5562
        %v5607 = vpack.c.bf16 %v5567, %v5565
        %v5608 = vpack.c.bf16 %v5568, %v5566
        %v5609 = vpack.c.bf16 %v5571, %v5569
        %v5610 = vpack.c.bf16 %v5572, %v5570
        %v5611 = vpack.c.bf16 %v5575, %v5573
        %v5612 = vpack.c.bf16 %v5576, %v5574
        %v5613 = vpack.c.bf16 %v5579, %v5577
        %v5614 = vpack.c.bf16 %v5580, %v5578
        %v5615 = vpack.c.bf16 %v5583, %v5581
        %v5616 = vpack.c.bf16 %v5584, %v5582
        %s5617 = scalar_lea.vmem %s2, 288
        %v5618 = vld [vmem:[%s5617] sm:$0xf]
        %v5619 = vld [vmem:[%s5617 + $0x4] sm:$0xf]
        %v5620 = vld [vmem:[%s5617 + $0x8] sm:$0xf]
        %v5621 = vld [vmem:[%s5617 + $0xc] sm:$0xf]
        %v5622 = vld [vmem:[%s5617 + $0x10] sm:$0xf]
        %v5623 = vld [vmem:[%s5617 + $0x14] sm:$0xf]
        %v5624 = vld [vmem:[%s5617 + $0x18] sm:$0xf]
        %v5625 = vld [vmem:[%s5617 + $0x1c] sm:$0xf]
        %v5626 = vld [vmem:[%s5617 + $0x20] sm:$0xf]
        %v5627 = vld [vmem:[%s5617 + $0x24] sm:$0xf]
        %v5628 = vld [vmem:[%s5617 + $0x28] sm:$0xf]
        %v5629 = vld [vmem:[%s5617 + $0x2c] sm:$0xf]
        %v5630 = vld [vmem:[%s5617 + $0x30] sm:$0xf]
        %v5631 = vld [vmem:[%s5617 + $0x34] sm:$0xf]
        %v5632 = vld [vmem:[%s5617 + $0x38] sm:$0xf]
        %v5633 = vld [vmem:[%s5617 + $0x3c] sm:$0xf]
        %v5634 = vld [vmem:[%s5617 + $0x40] sm:$0xf]
        %v5635 = vld [vmem:[%s5617 + $0x44] sm:$0xf]
        %v5636 = vld [vmem:[%s5617 + $0x48] sm:$0xf]
        %v5637 = vld [vmem:[%s5617 + $0x4c] sm:$0xf]
        %v5638 = vld [vmem:[%s5617 + $0x50] sm:$0xf]
        %v5639 = vld [vmem:[%s5617 + $0x54] sm:$0xf]
        %v5640 = vld [vmem:[%s5617 + $0x58] sm:$0xf]
        %v5641 = vld [vmem:[%s5617 + $0x5c] sm:$0xf]
        %v5666 = vunpack.c.l.b16 %v5618
        %v5667 = vunpack.c.l.b16 %v5619
        %v5668 = vunpack.c.l.b16 %v5620
        %v5669 = vunpack.c.l.b16 %v5621
        %v5670 = vunpack.c.l.b16 %v5622
        %v5671 = vunpack.c.l.b16 %v5623
        %v5672 = vunpack.c.l.b16 %v5624
        %v5673 = vunpack.c.l.b16 %v5625
        %v5674 = vunpack.c.l.b16 %v5626
        %v5675 = vunpack.c.l.b16 %v5627
        %v5676 = vunpack.c.l.b16 %v5628
        %v5677 = vunpack.c.l.b16 %v5629
        %v5678 = vunpack.c.l.b16 %v5630
        %v5679 = vunpack.c.l.b16 %v5631
        %v5680 = vunpack.c.l.b16 %v5632
        %v5681 = vunpack.c.l.b16 %v5633
        %v5682 = vunpack.c.l.b16 %v5634
        %v5683 = vunpack.c.l.b16 %v5635
        %v5684 = vunpack.c.l.b16 %v5636
        %v5685 = vunpack.c.l.b16 %v5637
        %v5686 = vunpack.c.l.b16 %v5638
        %v5687 = vunpack.c.l.b16 %v5639
        %v5688 = vunpack.c.l.b16 %v5640
        %v5689 = vunpack.c.l.b16 %v5641
        %v5690 = vpack.c.b16 %v5667, %v5666
        %v5691 = vpack.c.b16 %v5669, %v5668
        %v5692 = vpack.c.b16 %v5671, %v5670
        %v5693 = vpack.c.b16 %v5673, %v5672
        %v5694 = vpack.c.b16 %v5675, %v5674
        %v5695 = vpack.c.b16 %v5677, %v5676
        %v5696 = vpack.c.b16 %v5679, %v5678
        %v5697 = vpack.c.b16 %v5681, %v5680
        %v5698 = vpack.c.b16 %v5683, %v5682
        %v5699 = vpack.c.b16 %v5685, %v5684
        %v5700 = vpack.c.b16 %v5687, %v5686
        %v5701 = vpack.c.b16 %v5689, %v5688
        %v5715 = vsel %vm294, %v5586, 0
        %v5718 = vsel %vm294, %v5588, 0
        %v5721 = vsel %vm294, %v5590, 0
        %v5724 = vsel %vm294, %v5592, 0
        %v5727 = vsel %vm294, %v5594, 0
        %v5730 = vsel %vm294, %v5596, 0
        %v5733 = vsel %vm294, %v5598, 0
        %v5736 = vsel %vm294, %v5600, 0
        %v5739 = vsel %vm294, %v5602, 0
        %v5742 = vsel %vm294, %v5604, 0
        %v5745 = vsel %vm294, %v5606, 0
        %v5748 = vsel %vm294, %v5608, 0
        %v5751 = vsel %vm294, %v5610, 0
        %v5754 = vsel %vm294, %v5612, 0
        %v5757 = vsel %vm294, %v5614, 0
        %v5760 = vsel %vm294, %v5616, 0
        %5762 = vmatprep.subr.bf16.mxu0 0
        %5763 = vmatpush1.bf16.msra.mxu0 %v5690
        %5764 = vmatprep.subr.bf16.mxu0 0
        %5765 = vmatpush1.bf16.msra.mxu0 %v5691
        %5766 = vmatprep.subr.bf16.mxu0 0
        %5767 = vmatpush1.bf16.msra.mxu0 %v5692
        %5768 = vmatprep.subr.bf16.mxu0 0
        %5769 = vmatpush1.bf16.msra.mxu0 %v5693
        %5770 = vmatprep.subr.bf16.mxu0 0
        %5771 = vmatpush1.bf16.msra.mxu0 %v5694
        %5772 = vmatprep.subr.bf16.mxu0 0
        %5773 = vmatpush1.bf16.msra.mxu0 %v5695
        %5774 = vmatprep.subr.bf16.mxu0 0
        %5775 = vmatpush1.bf16.msra.mxu0 %v5696
        %5776 = vmatprep.subr.bf16.mxu0 0
        %5777 = vmatpush1.bf16.msra.mxu0 %v5697
        %5778 = vmatprep.subr.bf16.mxu0 0
        %5779 = vmatpush1.bf16.msra.mxu0 %v5698
        %5780 = vmatprep.subr.bf16.mxu0 0
        %5781 = vmatpush1.bf16.msra.mxu0 %v5699
        %5782 = vmatprep.subr.bf16.mxu0 0
        %5783 = vmatpush1.bf16.msra.mxu0 %v5700
        %5784 = vmatprep.subr.bf16.mxu0 0
        %5785 = vmatpush1.bf16.msra.mxu0 %v5701
        %5786 = vmatprep.subr.bf16.mxu0 0
        %5787 = vmatpush1.bf16.msra.mxu0 0
        %5788 = vmatprep.subr.bf16.mxu0 0
        %5789 = vmatpush1.bf16.msra.mxu0 0
        %5790 = vmatprep.subr.bf16.mxu0 0
        %5791 = vmatpush1.bf16.msra.mxu0 0
        %5792 = vmatprep.subr.bf16.mxu0 0
        %5793 = vmatpush1.bf16.msra.mxu0 0
        %5794 = vmatprep.mubr.bf16.mxu0 %v5715
        %5795 = vmatmul.mubr.bf16.gmra.mrb[0].mxu0 %v5585
        %v5796 = vpop.f32.mrb[0].mxu0
        %v5797 = vadd.f32 0.0, %v5796
        %v5798 = vpop.f32.mrb[0].mxu0
        %v5799 = vpop.f32.mrb[0].mxu0
        %v5800 = vadd.f32 0.0, %v5799
        %v5801 = vpop.f32.mrb[0].mxu0
        %5802 = vmatprep.mubr.bf16.mxu0 %v5718
        %5803 = vmatmul.mubr.bf16.gmra.mrb[0].mxu0 %v5587
        %v5804 = vpop.f32.mrb[0].mxu0
        %v5805 = vadd.f32 0.0, %v5804
        %v5806 = vpop.f32.mrb[0].mxu0
        %v5807 = vpop.f32.mrb[0].mxu0
        %v5808 = vadd.f32 0.0, %v5807
        %v5809 = vpop.f32.mrb[0].mxu0
        %5810 = vmatprep.mubr.bf16.mxu0 %v5721
        %5811 = vmatmul.mubr.bf16.gmra.mrb[0].mxu0 %v5589
        %v5812 = vpop.f32.mrb[0].mxu0
        %v5813 = vadd.f32 0.0, %v5812
        %v5814 = vpop.f32.mrb[0].mxu0
        %v5815 = vpop.f32.mrb[0].mxu0
        %v5816 = vadd.f32 0.0, %v5815
        %v5817 = vpop.f32.mrb[0].mxu0
        %5818 = vmatprep.mubr.bf16.mxu0 %v5724
        %5819 = vmatmul.mubr.bf16.gmra.mrb[0].mxu0 %v5591
        %v5820 = vpop.f32.mrb[0].mxu0
        %v5821 = vadd.f32 0.0, %v5820
        %v5822 = vpop.f32.mrb[0].mxu0
        %v5823 = vpop.f32.mrb[0].mxu0
        %v5824 = vadd.f32 0.0, %v5823
        %v5825 = vpop.f32.mrb[0].mxu0
        %5826 = vmatprep.mubr.bf16.mxu0 %v5727
        %5827 = vmatmul.mubr.bf16.gmra.mrb[0].mxu0 %v5593
        %v5828 = vpop.f32.mrb[0].mxu0
        %v5829 = vadd.f32 0.0, %v5828
        %v5830 = vpop.f32.mrb[0].mxu0
        %v5831 = vpop.f32.mrb[0].mxu0
        %v5832 = vadd.f32 0.0, %v5831
        %v5833 = vpop.f32.mrb[0].mxu0
        %5834 = vmatprep.mubr.bf16.mxu0 %v5730
        %5835 = vmatmul.mubr.bf16.gmra.mrb[0].mxu0 %v5595
        %v5836 = vpop.f32.mrb[0].mxu0
        %v5837 = vadd.f32 0.0, %v5836
        %v5838 = vpop.f32.mrb[0].mxu0
        %v5839 = vpop.f32.mrb[0].mxu0
        %v5840 = vadd.f32 0.0, %v5839
        %v5841 = vpop.f32.mrb[0].mxu0
        %5842 = vmatprep.mubr.bf16.mxu0 %v5733
        %5843 = vmatmul.mubr.bf16.gmra.mrb[0].mxu0 %v5597
        %v5844 = vpop.f32.mrb[0].mxu0
        %v5845 = vadd.f32 0.0, %v5844
        %v5846 = vpop.f32.mrb[0].mxu0
        %v5847 = vpop.f32.mrb[0].mxu0
        %v5848 = vadd.f32 0.0, %v5847
        %v5849 = vpop.f32.mrb[0].mxu0
        %5850 = vmatprep.mubr.bf16.mxu0 %v5736
        %5851 = vmatmul.mubr.bf16.gmra.mrb[0].mxu0 %v5599
        %v5852 = vpop.f32.mrb[0].mxu0
        %v5853 = vadd.f32 0.0, %v5852
        %v5854 = vpop.f32.mrb[0].mxu0
        %v5855 = vpop.f32.mrb[0].mxu0
        %v5856 = vadd.f32 0.0, %v5855
        %v5857 = vpop.f32.mrb[0].mxu0
        %5858 = vmatprep.mubr.bf16.mxu0 %v5739
        %5859 = vmatmul.mubr.bf16.gmra.mrb[0].mxu0 %v5601
        %v5860 = vpop.f32.mrb[0].mxu0
        %v5861 = vadd.f32 0.0, %v5860
        %v5862 = vpop.f32.mrb[0].mxu0
        %v5863 = vpop.f32.mrb[0].mxu0
        %v5864 = vadd.f32 0.0, %v5863
        %v5865 = vpop.f32.mrb[0].mxu0
        %5866 = vmatprep.mubr.bf16.mxu0 %v5742
        %5867 = vmatmul.mubr.bf16.gmra.mrb[0].mxu0 %v5603
        %v5868 = vpop.f32.mrb[0].mxu0
        %v5869 = vadd.f32 0.0, %v5868
        %v5870 = vpop.f32.mrb[0].mxu0
        %v5871 = vpop.f32.mrb[0].mxu0
        %v5872 = vadd.f32 0.0, %v5871
        %v5873 = vpop.f32.mrb[0].mxu0
        %5874 = vmatprep.mubr.bf16.mxu0 %v5745
        %5875 = vmatmul.mubr.bf16.gmra.mrb[0].mxu0 %v5605
        %v5876 = vpop.f32.mrb[0].mxu0
        %v5877 = vadd.f32 0.0, %v5876
        %v5878 = vpop.f32.mrb[0].mxu0
        %v5879 = vpop.f32.mrb[0].mxu0
        %v5880 = vadd.f32 0.0, %v5879
        %v5881 = vpop.f32.mrb[0].mxu0
        %5882 = vmatprep.mubr.bf16.mxu0 %v5748
        %5883 = vmatmul.mubr.bf16.gmra.mrb[0].mxu0 %v5607
        %v5884 = vpop.f32.mrb[0].mxu0
        %v5885 = vadd.f32 0.0, %v5884
        %v5886 = vpop.f32.mrb[0].mxu0
        %v5887 = vpop.f32.mrb[0].mxu0
        %v5888 = vadd.f32 0.0, %v5887
        %v5889 = vpop.f32.mrb[0].mxu0
        %5890 = vmatprep.mubr.bf16.mxu0 %v5751
        %5891 = vmatmul.mubr.bf16.gmra.mrb[0].mxu0 %v5609
        %v5892 = vpop.f32.mrb[0].mxu0
        %v5893 = vadd.f32 0.0, %v5892
        %v5894 = vpop.f32.mrb[0].mxu0
        %v5895 = vpop.f32.mrb[0].mxu0
        %v5896 = vadd.f32 0.0, %v5895
        %v5897 = vpop.f32.mrb[0].mxu0
        %5898 = vmatprep.mubr.bf16.mxu0 %v5754
        %5899 = vmatmul.mubr.bf16.gmra.mrb[0].mxu0 %v5611
        %v5900 = vpop.f32.mrb[0].mxu0
        %v5901 = vadd.f32 0.0, %v5900
        %v5902 = vpop.f32.mrb[0].mxu0
        %v5903 = vpop.f32.mrb[0].mxu0
        %v5904 = vadd.f32 0.0, %v5903
        %v5905 = vpop.f32.mrb[0].mxu0
        %5906 = vmatprep.mubr.bf16.mxu0 %v5757
        %5907 = vmatmul.mubr.bf16.gmra.mrb[0].mxu0 %v5613
        %v5908 = vpop.f32.mrb[0].mxu0
        %v5909 = vadd.f32 0.0, %v5908
        %v5910 = vpop.f32.mrb[0].mxu0
        %v5911 = vpop.f32.mrb[0].mxu0
        %v5912 = vadd.f32 0.0, %v5911
        %v5913 = vpop.f32.mrb[0].mxu0
        %5914 = vmatprep.mubr.bf16.mxu0 %v5760
        %5915 = vmatmul.mubr.bf16.gmra.mrb[0].mxu0 %v5615
        %v5916 = vpop.f32.mrb[0].mxu0
        %v5917 = vadd.f32 0.0, %v5916
        %v5918 = vpop.f32.mrb[0].mxu0
        %v5919 = vpop.f32.mrb[0].mxu0
        %v5920 = vadd.f32 0.0, %v5919
        %v5921 = vpop.f32.mrb[0].mxu0
        %5922 = vdwg.mxu0
        %v5923 = vadd.f32 %v5520, %v5797
        %v5924 = vadd.f32 %v5520, %v5800
        %v5925 = vadd.f32 %v5520, %v5805
        %v5926 = vadd.f32 %v5520, %v5808
        %v5927 = vadd.f32 %v5520, %v5813
        %v5928 = vadd.f32 %v5520, %v5816
        %v5929 = vadd.f32 %v5520, %v5821
        %v5930 = vadd.f32 %v5520, %v5824
        %v5931 = vadd.f32 %v5520, %v5829
        %v5932 = vadd.f32 %v5520, %v5832
        %v5933 = vadd.f32 %v5520, %v5837
        %v5934 = vadd.f32 %v5520, %v5840
        %v5935 = vadd.f32 %v5520, %v5845
        %v5936 = vadd.f32 %v5520, %v5848
        %v5937 = vadd.f32 %v5520, %v5853
        %v5938 = vadd.f32 %v5520, %v5856
        %v5939 = vadd.f32 %v5520, %v5861
        %v5940 = vadd.f32 %v5520, %v5864
        %v5941 = vadd.f32 %v5520, %v5869
        %v5942 = vadd.f32 %v5520, %v5872
        %v5943 = vadd.f32 %v5520, %v5877
        %v5944 = vadd.f32 %v5520, %v5880
        %v5945 = vadd.f32 %v5520, %v5885
        %v5946 = vadd.f32 %v5520, %v5888
        %v5947 = vadd.f32 %v5520, %v5893
        %v5948 = vadd.f32 %v5520, %v5896
        %v5949 = vadd.f32 %v5520, %v5901
        %v5950 = vadd.f32 %v5520, %v5904
        %v5951 = vadd.f32 %v5520, %v5909
        %v5952 = vadd.f32 %v5520, %v5912
        %v5953 = vadd.f32 %v5520, %v5917
        %v5954 = vadd.f32 %v5520, %v5920
        %v5955 = vld [vmem:[%s3976] sm:$0xff]
        %v5956 = vld [vmem:[%s3976 + $0x8] sm:$0xff]
        %v5957 = vld [vmem:[%s3976 + $0x10] sm:$0xff]
        %v5958 = vld [vmem:[%s3976 + $0x18] sm:$0xff]
        %v5959 = vld [vmem:[%s3976 + $0x20] sm:$0xff]
        %v5960 = vld [vmem:[%s3976 + $0x28] sm:$0xff]
        %v5961 = vld [vmem:[%s3976 + $0x30] sm:$0xff]
        %v5962 = vld [vmem:[%s3976 + $0x38] sm:$0xff]
        %v5963 = vld [vmem:[%s3976 + $0x40] sm:$0xff]
        %v5964 = vld [vmem:[%s3976 + $0x48] sm:$0xff]
        %v5965 = vld [vmem:[%s3976 + $0x50] sm:$0xff]
        %v5966 = vld [vmem:[%s3976 + $0x58] sm:$0xff]
        %v5967 = vld [vmem:[%s3976 + $0x60] sm:$0xff]
        %v5968 = vld [vmem:[%s3976 + $0x68] sm:$0xff]
        %v5969 = vld [vmem:[%s3976 + $0x70] sm:$0xff]
        %v5970 = vld [vmem:[%s3976 + $0x78] sm:$0xff]
        %v5971 = vld [vmem:[%s3976 + $0x80] sm:$0xff]
        %v5972 = vld [vmem:[%s3976 + $0x88] sm:$0xff]
        %v5973 = vld [vmem:[%s3976 + $0x90] sm:$0xff]
        %v5974 = vld [vmem:[%s3976 + $0x98] sm:$0xff]
        %v5975 = vld [vmem:[%s3976 + $0xa0] sm:$0xff]
        %v5976 = vld [vmem:[%s3976 + $0xa8] sm:$0xff]
        %v5977 = vld [vmem:[%s3976 + $0xb0] sm:$0xff]
        %v5978 = vld [vmem:[%s3976 + $0xb8] sm:$0xff]
        %v5979 = vld [vmem:[%s3976 + $0xc0] sm:$0xff]
        %v5980 = vld [vmem:[%s3976 + $0xc8] sm:$0xff]
        %v5981 = vld [vmem:[%s3976 + $0xd0] sm:$0xff]
        %v5982 = vld [vmem:[%s3976 + $0xd8] sm:$0xff]
        %v5983 = vld [vmem:[%s3976 + $0xe0] sm:$0xff]
        %v5984 = vld [vmem:[%s3976 + $0xe8] sm:$0xff]
        %v5985 = vld [vmem:[%s3976 + $0xf0] sm:$0xff]
        %v5986 = vld [vmem:[%s3976 + $0xf8] sm:$0xff]
        %v5987 = vld [vmem:[%s3976 + $0x100] sm:$0xff]
        %v5988 = vld [vmem:[%s3976 + $0x108] sm:$0xff]
        %v5989 = vld [vmem:[%s3976 + $0x110] sm:$0xff]
        %v5990 = vld [vmem:[%s3976 + $0x118] sm:$0xff]
        %v5991 = vld [vmem:[%s3976 + $0x120] sm:$0xff]
        %v5992 = vld [vmem:[%s3976 + $0x128] sm:$0xff]
        %v5993 = vld [vmem:[%s3976 + $0x130] sm:$0xff]
        %v5994 = vld [vmem:[%s3976 + $0x138] sm:$0xff]
        %v5995 = vld [vmem:[%s3976 + $0x140] sm:$0xff]
        %v5996 = vld [vmem:[%s3976 + $0x148] sm:$0xff]
        %v5997 = vld [vmem:[%s3976 + $0x150] sm:$0xff]
        %v5998 = vld [vmem:[%s3976 + $0x158] sm:$0xff]
        %v5999 = vld [vmem:[%s3976 + $0x160] sm:$0xff]
        %v6000 = vld [vmem:[%s3976 + $0x168] sm:$0xff]
        %v6001 = vld [vmem:[%s3976 + $0x170] sm:$0xff]
        %v6002 = vld [vmem:[%s3976 + $0x178] sm:$0xff]
        %v6003 = vld [vmem:[%s3976 + $0x180] sm:$0xff]
        %v6004 = vld [vmem:[%s3976 + $0x188] sm:$0xff]
        %v6005 = vld [vmem:[%s3976 + $0x190] sm:$0xff]
        %v6006 = vld [vmem:[%s3976 + $0x198] sm:$0xff]
        %v6007 = vld [vmem:[%s3976 + $0x1a0] sm:$0xff]
        %v6008 = vld [vmem:[%s3976 + $0x1a8] sm:$0xff]
        %v6009 = vld [vmem:[%s3976 + $0x1b0] sm:$0xff]
        %v6010 = vld [vmem:[%s3976 + $0x1b8] sm:$0xff]
        %v6011 = vld [vmem:[%s3976 + $0x1c0] sm:$0xff]
        %v6012 = vld [vmem:[%s3976 + $0x1c8] sm:$0xff]
        %v6013 = vld [vmem:[%s3976 + $0x1d0] sm:$0xff]
        %v6014 = vld [vmem:[%s3976 + $0x1d8] sm:$0xff]
        %v6015 = vld [vmem:[%s3976 + $0x1e0] sm:$0xff]
        %v6016 = vld [vmem:[%s3976 + $0x1e8] sm:$0xff]
        %v6017 = vld [vmem:[%s3976 + $0x1f0] sm:$0xff]
        %v6018 = vld [vmem:[%s3976 + $0x1f8] sm:$0xff]
        %v6019 = vpack.c.bf16 %v5957, %v5955
        %v6020 = vpack.c.bf16 %v5958, %v5956
        %v6021 = vpack.c.bf16 %v5961, %v5959
        %v6022 = vpack.c.bf16 %v5962, %v5960
        %v6023 = vpack.c.bf16 %v5965, %v5963
        %v6024 = vpack.c.bf16 %v5966, %v5964
        %v6025 = vpack.c.bf16 %v5969, %v5967
        %v6026 = vpack.c.bf16 %v5970, %v5968
        %v6027 = vpack.c.bf16 %v5973, %v5971
        %v6028 = vpack.c.bf16 %v5974, %v5972
        %v6029 = vpack.c.bf16 %v5977, %v5975
        %v6030 = vpack.c.bf16 %v5978, %v5976
        %v6031 = vpack.c.bf16 %v5981, %v5979
        %v6032 = vpack.c.bf16 %v5982, %v5980
        %v6033 = vpack.c.bf16 %v5985, %v5983
        %v6034 = vpack.c.bf16 %v5986, %v5984
        %v6035 = vpack.c.bf16 %v5989, %v5987
        %v6036 = vpack.c.bf16 %v5990, %v5988
        %v6037 = vpack.c.bf16 %v5993, %v5991
        %v6038 = vpack.c.bf16 %v5994, %v5992
        %v6039 = vpack.c.bf16 %v5997, %v5995
        %v6040 = vpack.c.bf16 %v5998, %v5996
        %v6041 = vpack.c.bf16 %v6001, %v5999
        %v6042 = vpack.c.bf16 %v6002, %v6000
        %v6043 = vpack.c.bf16 %v6005, %v6003
        %v6044 = vpack.c.bf16 %v6006, %v6004
        %v6045 = vpack.c.bf16 %v6009, %v6007
        %v6046 = vpack.c.bf16 %v6010, %v6008
        %v6047 = vpack.c.bf16 %v6013, %v6011
        %v6048 = vpack.c.bf16 %v6014, %v6012
        %v6049 = vpack.c.bf16 %v6017, %v6015
        %v6050 = vpack.c.bf16 %v6018, %v6016
        %s6051 = scalar_lea.vmem %s2, 384
        %v6052 = vld [vmem:[%s6051] sm:$0xf]
        %v6053 = vld [vmem:[%s6051 + $0x4] sm:$0xf]
        %v6054 = vld [vmem:[%s6051 + $0x8] sm:$0xf]
        %v6055 = vld [vmem:[%s6051 + $0xc] sm:$0xf]
        %v6056 = vld [vmem:[%s6051 + $0x10] sm:$0xf]
        %v6057 = vld [vmem:[%s6051 + $0x14] sm:$0xf]
        %v6058 = vld [vmem:[%s6051 + $0x18] sm:$0xf]
        %v6059 = vld [vmem:[%s6051 + $0x1c] sm:$0xf]
        %v6060 = vld [vmem:[%s6051 + $0x20] sm:$0xf]
        %v6061 = vld [vmem:[%s6051 + $0x24] sm:$0xf]
        %v6062 = vld [vmem:[%s6051 + $0x28] sm:$0xf]
        %v6063 = vld [vmem:[%s6051 + $0x2c] sm:$0xf]
        %v6064 = vld [vmem:[%s6051 + $0x30] sm:$0xf]
        %v6065 = vld [vmem:[%s6051 + $0x34] sm:$0xf]
        %v6066 = vld [vmem:[%s6051 + $0x38] sm:$0xf]
        %v6067 = vld [vmem:[%s6051 + $0x3c] sm:$0xf]
        %v6068 = vld [vmem:[%s6051 + $0x40] sm:$0xf]
        %v6069 = vld [vmem:[%s6051 + $0x44] sm:$0xf]
        %v6070 = vld [vmem:[%s6051 + $0x48] sm:$0xf]
        %v6071 = vld [vmem:[%s6051 + $0x4c] sm:$0xf]
        %v6072 = vld [vmem:[%s6051 + $0x50] sm:$0xf]
        %v6073 = vld [vmem:[%s6051 + $0x54] sm:$0xf]
        %v6074 = vld [vmem:[%s6051 + $0x58] sm:$0xf]
        %v6075 = vld [vmem:[%s6051 + $0x5c] sm:$0xf]
        %v6100 = vunpack.c.l.b16 %v6052
        %v6101 = vunpack.c.l.b16 %v6053
        %v6102 = vunpack.c.l.b16 %v6054
        %v6103 = vunpack.c.l.b16 %v6055
        %v6104 = vunpack.c.l.b16 %v6056
        %v6105 = vunpack.c.l.b16 %v6057
        %v6106 = vunpack.c.l.b16 %v6058
        %v6107 = vunpack.c.l.b16 %v6059
        %v6108 = vunpack.c.l.b16 %v6060
        %v6109 = vunpack.c.l.b16 %v6061
        %v6110 = vunpack.c.l.b16 %v6062
        %v6111 = vunpack.c.l.b16 %v6063
        %v6112 = vunpack.c.l.b16 %v6064
        %v6113 = vunpack.c.l.b16 %v6065
        %v6114 = vunpack.c.l.b16 %v6066
        %v6115 = vunpack.c.l.b16 %v6067
        %v6116 = vunpack.c.l.b16 %v6068
        %v6117 = vunpack.c.l.b16 %v6069
        %v6118 = vunpack.c.l.b16 %v6070
        %v6119 = vunpack.c.l.b16 %v6071
        %v6120 = vunpack.c.l.b16 %v6072
        %v6121 = vunpack.c.l.b16 %v6073
        %v6122 = vunpack.c.l.b16 %v6074
        %v6123 = vunpack.c.l.b16 %v6075
        %v6124 = vpack.c.b16 %v6101, %v6100
        %v6125 = vpack.c.b16 %v6103, %v6102
        %v6126 = vpack.c.b16 %v6105, %v6104
        %v6127 = vpack.c.b16 %v6107, %v6106
        %v6128 = vpack.c.b16 %v6109, %v6108
        %v6129 = vpack.c.b16 %v6111, %v6110
        %v6130 = vpack.c.b16 %v6113, %v6112
        %v6131 = vpack.c.b16 %v6115, %v6114
        %v6132 = vpack.c.b16 %v6117, %v6116
        %v6133 = vpack.c.b16 %v6119, %v6118
        %v6134 = vpack.c.b16 %v6121, %v6120
        %v6135 = vpack.c.b16 %v6123, %v6122
        %v6149 = vsel %vm294, %v6020, 0
        %v6152 = vsel %vm294, %v6022, 0
        %v6155 = vsel %vm294, %v6024, 0
        %v6158 = vsel %vm294, %v6026, 0
        %v6161 = vsel %vm294, %v6028, 0
        %v6164 = vsel %vm294, %v6030, 0
        %v6167 = vsel %vm294, %v6032, 0
        %v6170 = vsel %vm294, %v6034, 0
        %v6173 = vsel %vm294, %v6036, 0
        %v6176 = vsel %vm294, %v6038, 0
        %v6179 = vsel %vm294, %v6040, 0
        %v6182 = vsel %vm294, %v6042, 0
        %v6185 = vsel %vm294, %v6044, 0
        %v6188 = vsel %vm294, %v6046, 0
        %v6191 = vsel %vm294, %v6048, 0
        %v6194 = vsel %vm294, %v6050, 0
        %6196 = vmatprep.subr.bf16.mxu0 0
        %6197 = vmatpush1.bf16.msra.mxu0 %v6124
        %6198 = vmatprep.subr.bf16.mxu0 0
        %6199 = vmatpush1.bf16.msra.mxu0 %v6125
        %6200 = vmatprep.subr.bf16.mxu0 0
        %6201 = vmatpush1.bf16.msra.mxu0 %v6126
        %6202 = vmatprep.subr.bf16.mxu0 0
        %6203 = vmatpush1.bf16.msra.mxu0 %v6127
        %6204 = vmatprep.subr.bf16.mxu0 0
        %6205 = vmatpush1.bf16.msra.mxu0 %v6128
        %6206 = vmatprep.subr.bf16.mxu0 0
        %6207 = vmatpush1.bf16.msra.mxu0 %v6129
        %6208 = vmatprep.subr.bf16.mxu0 0
        %6209 = vmatpush1.bf16.msra.mxu0 %v6130
        %6210 = vmatprep.subr.bf16.mxu0 0
        %6211 = vmatpush1.bf16.msra.mxu0 %v6131
        %6212 = vmatprep.subr.bf16.mxu0 0
        %6213 = vmatpush1.bf16.msra.mxu0 %v6132
        %6214 = vmatprep.subr.bf16.mxu0 0
        %6215 = vmatpush1.bf16.msra.mxu0 %v6133
        %6216 = vmatprep.subr.bf16.mxu0 0
        %6217 = vmatpush1.bf16.msra.mxu0 %v6134
        %6218 = vmatprep.subr.bf16.mxu0 0
        %6219 = vmatpush1.bf16.msra.mxu0 %v6135
        %6220 = vmatprep.subr.bf16.mxu0 0
        %6221 = vmatpush1.bf16.msra.mxu0 0
        %6222 = vmatprep.subr.bf16.mxu0 0
        %6223 = vmatpush1.bf16.msra.mxu0 0
        %6224 = vmatprep.subr.bf16.mxu0 0
        %6225 = vmatpush1.bf16.msra.mxu0 0
        %6226 = vmatprep.subr.bf16.mxu0 0
        %6227 = vmatpush1.bf16.msra.mxu0 0
        %6228 = vmatprep.mubr.bf16.mxu0 %v6149
        %6229 = vmatmul.mubr.bf16.gmra.mrb[0].mxu0 %v6019
        %v6230 = vpop.f32.mrb[0].mxu0
        %v6231 = vadd.f32 0.0, %v6230
        %v6232 = vpop.f32.mrb[0].mxu0
        %v6233 = vpop.f32.mrb[0].mxu0
        %v6234 = vadd.f32 0.0, %v6233
        %v6235 = vpop.f32.mrb[0].mxu0
        %6236 = vmatprep.mubr.bf16.mxu0 %v6152
        %6237 = vmatmul.mubr.bf16.gmra.mrb[0].mxu0 %v6021
        %v6238 = vpop.f32.mrb[0].mxu0
        %v6239 = vadd.f32 0.0, %v6238
        %v6240 = vpop.f32.mrb[0].mxu0
        %v6241 = vpop.f32.mrb[0].mxu0
        %v6242 = vadd.f32 0.0, %v6241
        %v6243 = vpop.f32.mrb[0].mxu0
        %6244 = vmatprep.mubr.bf16.mxu0 %v6155
        %6245 = vmatmul.mubr.bf16.gmra.mrb[0].mxu0 %v6023
        %v6246 = vpop.f32.mrb[0].mxu0
        %v6247 = vadd.f32 0.0, %v6246
        %v6248 = vpop.f32.mrb[0].mxu0
        %v6249 = vpop.f32.mrb[0].mxu0
        %v6250 = vadd.f32 0.0, %v6249
        %v6251 = vpop.f32.mrb[0].mxu0
        %6252 = vmatprep.mubr.bf16.mxu0 %v6158
        %6253 = vmatmul.mubr.bf16.gmra.mrb[0].mxu0 %v6025
        %v6254 = vpop.f32.mrb[0].mxu0
        %v6255 = vadd.f32 0.0, %v6254
        %v6256 = vpop.f32.mrb[0].mxu0
        %v6257 = vpop.f32.mrb[0].mxu0
        %v6258 = vadd.f32 0.0, %v6257
        %v6259 = vpop.f32.mrb[0].mxu0
        %6260 = vmatprep.mubr.bf16.mxu0 %v6161
        %6261 = vmatmul.mubr.bf16.gmra.mrb[0].mxu0 %v6027
        %v6262 = vpop.f32.mrb[0].mxu0
        %v6263 = vadd.f32 0.0, %v6262
        %v6264 = vpop.f32.mrb[0].mxu0
        %v6265 = vpop.f32.mrb[0].mxu0
        %v6266 = vadd.f32 0.0, %v6265
        %v6267 = vpop.f32.mrb[0].mxu0
        %6268 = vmatprep.mubr.bf16.mxu0 %v6164
        %6269 = vmatmul.mubr.bf16.gmra.mrb[0].mxu0 %v6029
        %v6270 = vpop.f32.mrb[0].mxu0
        %v6271 = vadd.f32 0.0, %v6270
        %v6272 = vpop.f32.mrb[0].mxu0
        %v6273 = vpop.f32.mrb[0].mxu0
        %v6274 = vadd.f32 0.0, %v6273
        %v6275 = vpop.f32.mrb[0].mxu0
        %6276 = vmatprep.mubr.bf16.mxu0 %v6167
        %6277 = vmatmul.mubr.bf16.gmra.mrb[0].mxu0 %v6031
        %v6278 = vpop.f32.mrb[0].mxu0
        %v6279 = vadd.f32 0.0, %v6278
        %v6280 = vpop.f32.mrb[0].mxu0
        %v6281 = vpop.f32.mrb[0].mxu0
        %v6282 = vadd.f32 0.0, %v6281
        %v6283 = vpop.f32.mrb[0].mxu0
        %6284 = vmatprep.mubr.bf16.mxu0 %v6170
        %6285 = vmatmul.mubr.bf16.gmra.mrb[0].mxu0 %v6033
        %v6286 = vpop.f32.mrb[0].mxu0
        %v6287 = vadd.f32 0.0, %v6286
        %v6288 = vpop.f32.mrb[0].mxu0
        %v6289 = vpop.f32.mrb[0].mxu0
        %v6290 = vadd.f32 0.0, %v6289
        %v6291 = vpop.f32.mrb[0].mxu0
        %6292 = vmatprep.mubr.bf16.mxu0 %v6173
        %6293 = vmatmul.mubr.bf16.gmra.mrb[0].mxu0 %v6035
        %v6294 = vpop.f32.mrb[0].mxu0
        %v6295 = vadd.f32 0.0, %v6294
        %v6296 = vpop.f32.mrb[0].mxu0
        %v6297 = vpop.f32.mrb[0].mxu0
        %v6298 = vadd.f32 0.0, %v6297
        %v6299 = vpop.f32.mrb[0].mxu0
        %6300 = vmatprep.mubr.bf16.mxu0 %v6176
        %6301 = vmatmul.mubr.bf16.gmra.mrb[0].mxu0 %v6037
        %v6302 = vpop.f32.mrb[0].mxu0
        %v6303 = vadd.f32 0.0, %v6302
        %v6304 = vpop.f32.mrb[0].mxu0
        %v6305 = vpop.f32.mrb[0].mxu0
        %v6306 = vadd.f32 0.0, %v6305
        %v6307 = vpop.f32.mrb[0].mxu0
        %6308 = vmatprep.mubr.bf16.mxu0 %v6179
        %6309 = vmatmul.mubr.bf16.gmra.mrb[0].mxu0 %v6039
        %v6310 = vpop.f32.mrb[0].mxu0
        %v6311 = vadd.f32 0.0, %v6310
        %v6312 = vpop.f32.mrb[0].mxu0
        %v6313 = vpop.f32.mrb[0].mxu0
        %v6314 = vadd.f32 0.0, %v6313
        %v6315 = vpop.f32.mrb[0].mxu0
        %6316 = vmatprep.mubr.bf16.mxu0 %v6182
        %6317 = vmatmul.mubr.bf16.gmra.mrb[0].mxu0 %v6041
        %v6318 = vpop.f32.mrb[0].mxu0
        %v6319 = vadd.f32 0.0, %v6318
        %v6320 = vpop.f32.mrb[0].mxu0
        %v6321 = vpop.f32.mrb[0].mxu0
        %v6322 = vadd.f32 0.0, %v6321
        %v6323 = vpop.f32.mrb[0].mxu0
        %6324 = vmatprep.mubr.bf16.mxu0 %v6185
        %6325 = vmatmul.mubr.bf16.gmra.mrb[0].mxu0 %v6043
        %v6326 = vpop.f32.mrb[0].mxu0
        %v6327 = vadd.f32 0.0, %v6326
        %v6328 = vpop.f32.mrb[0].mxu0
        %v6329 = vpop.f32.mrb[0].mxu0
        %v6330 = vadd.f32 0.0, %v6329
        %v6331 = vpop.f32.mrb[0].mxu0
        %6332 = vmatprep.mubr.bf16.mxu0 %v6188
        %6333 = vmatmul.mubr.bf16.gmra.mrb[0].mxu0 %v6045
        %v6334 = vpop.f32.mrb[0].mxu0
        %v6335 = vadd.f32 0.0, %v6334
        %v6336 = vpop.f32.mrb[0].mxu0
        %v6337 = vpop.f32.mrb[0].mxu0
        %v6338 = vadd.f32 0.0, %v6337
        %v6339 = vpop.f32.mrb[0].mxu0
        %6340 = vmatprep.mubr.bf16.mxu0 %v6191
        %6341 = vmatmul.mubr.bf16.gmra.mrb[0].mxu0 %v6047
        %v6342 = vpop.f32.mrb[0].mxu0
        %v6343 = vadd.f32 0.0, %v6342
        %v6344 = vpop.f32.mrb[0].mxu0
        %v6345 = vpop.f32.mrb[0].mxu0
        %v6346 = vadd.f32 0.0, %v6345
        %v6347 = vpop.f32.mrb[0].mxu0
        %6348 = vmatprep.mubr.bf16.mxu0 %v6194
        %6349 = vmatmul.mubr.bf16.gmra.mrb[0].mxu0 %v6049
        %v6350 = vpop.f32.mrb[0].mxu0
        %v6351 = vadd.f32 0.0, %v6350
        %v6352 = vpop.f32.mrb[0].mxu0
        %v6353 = vpop.f32.mrb[0].mxu0
        %v6354 = vadd.f32 0.0, %v6353
        %v6355 = vpop.f32.mrb[0].mxu0
        %6356 = vdwg.mxu0
        %v6357 = vadd.f32 %v5923, %v6231
        %v6358 = vadd.f32 %v5924, %v6234
        %v6359 = vadd.f32 %v5925, %v6239
        %v6360 = vadd.f32 %v5926, %v6242
        %v6361 = vadd.f32 %v5927, %v6247
        %v6362 = vadd.f32 %v5928, %v6250
        %v6363 = vadd.f32 %v5929, %v6255
        %v6364 = vadd.f32 %v5930, %v6258
        %v6365 = vadd.f32 %v5931, %v6263
        %v6366 = vadd.f32 %v5932, %v6266
        %v6367 = vadd.f32 %v5933, %v6271
        %v6368 = vadd.f32 %v5934, %v6274
        %v6369 = vadd.f32 %v5935, %v6279
        %v6370 = vadd.f32 %v5936, %v6282
        %v6371 = vadd.f32 %v5937, %v6287
        %v6372 = vadd.f32 %v5938, %v6290
        %v6373 = vadd.f32 %v5939, %v6295
        %v6374 = vadd.f32 %v5940, %v6298
        %v6375 = vadd.f32 %v5941, %v6303
        %v6376 = vadd.f32 %v5942, %v6306
        %v6377 = vadd.f32 %v5943, %v6311
        %v6378 = vadd.f32 %v5944, %v6314
        %v6379 = vadd.f32 %v5945, %v6319
        %v6380 = vadd.f32 %v5946, %v6322
        %v6381 = vadd.f32 %v5947, %v6327
        %v6382 = vadd.f32 %v5948, %v6330
        %v6383 = vadd.f32 %v5949, %v6335
        %v6384 = vadd.f32 %v5950, %v6338
        %v6385 = vadd.f32 %v5951, %v6343
        %v6386 = vadd.f32 %v5952, %v6346
        %v6387 = vadd.f32 %v5953, %v6351
        %v6388 = vadd.f32 %v5954, %v6354
        %v6389 = vld [vmem:[%s4411] sm:$0xff]
        %v6390 = vld [vmem:[%s4411 + $0x8] sm:$0xff]
        %v6391 = vld [vmem:[%s4411 + $0x10] sm:$0xff]
        %v6392 = vld [vmem:[%s4411 + $0x18] sm:$0xff]
        %v6393 = vld [vmem:[%s4411 + $0x20] sm:$0xff]
        %v6394 = vld [vmem:[%s4411 + $0x28] sm:$0xff]
        %v6395 = vld [vmem:[%s4411 + $0x30] sm:$0xff]
        %v6396 = vld [vmem:[%s4411 + $0x38] sm:$0xff]
        %v6397 = vld [vmem:[%s4411 + $0x40] sm:$0xff]
        %v6398 = vld [vmem:[%s4411 + $0x48] sm:$0xff]
        %v6399 = vld [vmem:[%s4411 + $0x50] sm:$0xff]
        %v6400 = vld [vmem:[%s4411 + $0x58] sm:$0xff]
        %v6401 = vld [vmem:[%s4411 + $0x60] sm:$0xff]
        %v6402 = vld [vmem:[%s4411 + $0x68] sm:$0xff]
        %v6403 = vld [vmem:[%s4411 + $0x70] sm:$0xff]
        %v6404 = vld [vmem:[%s4411 + $0x78] sm:$0xff]
        %v6405 = vld [vmem:[%s4411 + $0x80] sm:$0xff]
        %v6406 = vld [vmem:[%s4411 + $0x88] sm:$0xff]
        %v6407 = vld [vmem:[%s4411 + $0x90] sm:$0xff]
        %v6408 = vld [vmem:[%s4411 + $0x98] sm:$0xff]
        %v6409 = vld [vmem:[%s4411 + $0xa0] sm:$0xff]
        %v6410 = vld [vmem:[%s4411 + $0xa8] sm:$0xff]
        %v6411 = vld [vmem:[%s4411 + $0xb0] sm:$0xff]
        %v6412 = vld [vmem:[%s4411 + $0xb8] sm:$0xff]
        %v6413 = vld [vmem:[%s4411 + $0xc0] sm:$0xff]
        %v6414 = vld [vmem:[%s4411 + $0xc8] sm:$0xff]
        %v6415 = vld [vmem:[%s4411 + $0xd0] sm:$0xff]
        %v6416 = vld [vmem:[%s4411 + $0xd8] sm:$0xff]
        %v6417 = vld [vmem:[%s4411 + $0xe0] sm:$0xff]
        %v6418 = vld [vmem:[%s4411 + $0xe8] sm:$0xff]
        %v6419 = vld [vmem:[%s4411 + $0xf0] sm:$0xff]
        %v6420 = vld [vmem:[%s4411 + $0xf8] sm:$0xff]
        %v6421 = vld [vmem:[%s4411 + $0x100] sm:$0xff]
        %v6422 = vld [vmem:[%s4411 + $0x108] sm:$0xff]
        %v6423 = vld [vmem:[%s4411 + $0x110] sm:$0xff]
        %v6424 = vld [vmem:[%s4411 + $0x118] sm:$0xff]
        %v6425 = vld [vmem:[%s4411 + $0x120] sm:$0xff]
        %v6426 = vld [vmem:[%s4411 + $0x128] sm:$0xff]
        %v6427 = vld [vmem:[%s4411 + $0x130] sm:$0xff]
        %v6428 = vld [vmem:[%s4411 + $0x138] sm:$0xff]
        %v6429 = vld [vmem:[%s4411 + $0x140] sm:$0xff]
        %v6430 = vld [vmem:[%s4411 + $0x148] sm:$0xff]
        %v6431 = vld [vmem:[%s4411 + $0x150] sm:$0xff]
        %v6432 = vld [vmem:[%s4411 + $0x158] sm:$0xff]
        %v6433 = vld [vmem:[%s4411 + $0x160] sm:$0xff]
        %v6434 = vld [vmem:[%s4411 + $0x168] sm:$0xff]
        %v6435 = vld [vmem:[%s4411 + $0x170] sm:$0xff]
        %v6436 = vld [vmem:[%s4411 + $0x178] sm:$0xff]
        %v6437 = vld [vmem:[%s4411 + $0x180] sm:$0xff]
        %v6438 = vld [vmem:[%s4411 + $0x188] sm:$0xff]
        %v6439 = vld [vmem:[%s4411 + $0x190] sm:$0xff]
        %v6440 = vld [vmem:[%s4411 + $0x198] sm:$0xff]
        %v6441 = vld [vmem:[%s4411 + $0x1a0] sm:$0xff]
        %v6442 = vld [vmem:[%s4411 + $0x1a8] sm:$0xff]
        %v6443 = vld [vmem:[%s4411 + $0x1b0] sm:$0xff]
        %v6444 = vld [vmem:[%s4411 + $0x1b8] sm:$0xff]
        %v6445 = vld [vmem:[%s4411 + $0x1c0] sm:$0xff]
        %v6446 = vld [vmem:[%s4411 + $0x1c8] sm:$0xff]
        %v6447 = vld [vmem:[%s4411 + $0x1d0] sm:$0xff]
        %v6448 = vld [vmem:[%s4411 + $0x1d8] sm:$0xff]
        %v6449 = vld [vmem:[%s4411 + $0x1e0] sm:$0xff]
        %v6450 = vld [vmem:[%s4411 + $0x1e8] sm:$0xff]
        %v6451 = vld [vmem:[%s4411 + $0x1f0] sm:$0xff]
        %v6452 = vld [vmem:[%s4411 + $0x1f8] sm:$0xff]
        %v6453 = vpack.c.bf16 %v6391, %v6389
        %v6454 = vpack.c.bf16 %v6392, %v6390
        %v6455 = vpack.c.bf16 %v6395, %v6393
        %v6456 = vpack.c.bf16 %v6396, %v6394
        %v6457 = vpack.c.bf16 %v6399, %v6397
        %v6458 = vpack.c.bf16 %v6400, %v6398
        %v6459 = vpack.c.bf16 %v6403, %v6401
        %v6460 = vpack.c.bf16 %v6404, %v6402
        %v6461 = vpack.c.bf16 %v6407, %v6405
        %v6462 = vpack.c.bf16 %v6408, %v6406
        %v6463 = vpack.c.bf16 %v6411, %v6409
        %v6464 = vpack.c.bf16 %v6412, %v6410
        %v6465 = vpack.c.bf16 %v6415, %v6413
        %v6466 = vpack.c.bf16 %v6416, %v6414
        %v6467 = vpack.c.bf16 %v6419, %v6417
        %v6468 = vpack.c.bf16 %v6420, %v6418
        %v6469 = vpack.c.bf16 %v6423, %v6421
        %v6470 = vpack.c.bf16 %v6424, %v6422
        %v6471 = vpack.c.bf16 %v6427, %v6425
        %v6472 = vpack.c.bf16 %v6428, %v6426
        %v6473 = vpack.c.bf16 %v6431, %v6429
        %v6474 = vpack.c.bf16 %v6432, %v6430
        %v6475 = vpack.c.bf16 %v6435, %v6433
        %v6476 = vpack.c.bf16 %v6436, %v6434
        %v6477 = vpack.c.bf16 %v6439, %v6437
        %v6478 = vpack.c.bf16 %v6440, %v6438
        %v6479 = vpack.c.bf16 %v6443, %v6441
        %v6480 = vpack.c.bf16 %v6444, %v6442
        %v6481 = vpack.c.bf16 %v6447, %v6445
        %v6482 = vpack.c.bf16 %v6448, %v6446
        %v6483 = vpack.c.bf16 %v6451, %v6449
        %v6484 = vpack.c.bf16 %v6452, %v6450
        %s6485 = scalar_lea.vmem %s2, 480
        %v6486 = vld [vmem:[%s6485] sm:$0xf]
        %v6487 = vld [vmem:[%s6485 + $0x4] sm:$0xf]
        %v6488 = vld [vmem:[%s6485 + $0x8] sm:$0xf]
        %v6489 = vld [vmem:[%s6485 + $0xc] sm:$0xf]
        %v6490 = vld [vmem:[%s6485 + $0x10] sm:$0xf]
        %v6491 = vld [vmem:[%s6485 + $0x14] sm:$0xf]
        %v6492 = vld [vmem:[%s6485 + $0x18] sm:$0xf]
        %v6493 = vld [vmem:[%s6485 + $0x1c] sm:$0xf]
        %v6494 = vld [vmem:[%s6485 + $0x20] sm:$0xf]
        %v6495 = vld [vmem:[%s6485 + $0x24] sm:$0xf]
        %v6496 = vld [vmem:[%s6485 + $0x28] sm:$0xf]
        %v6497 = vld [vmem:[%s6485 + $0x2c] sm:$0xf]
        %v6498 = vld [vmem:[%s6485 + $0x30] sm:$0xf]
        %v6499 = vld [vmem:[%s6485 + $0x34] sm:$0xf]
        %v6500 = vld [vmem:[%s6485 + $0x38] sm:$0xf]
        %v6501 = vld [vmem:[%s6485 + $0x3c] sm:$0xf]
        %v6502 = vld [vmem:[%s6485 + $0x40] sm:$0xf]
        %v6503 = vld [vmem:[%s6485 + $0x44] sm:$0xf]
        %v6504 = vld [vmem:[%s6485 + $0x48] sm:$0xf]
        %v6505 = vld [vmem:[%s6485 + $0x4c] sm:$0xf]
        %v6506 = vld [vmem:[%s6485 + $0x50] sm:$0xf]
        %v6507 = vld [vmem:[%s6485 + $0x54] sm:$0xf]
        %v6508 = vld [vmem:[%s6485 + $0x58] sm:$0xf]
        %v6509 = vld [vmem:[%s6485 + $0x5c] sm:$0xf]
        %v6534 = vunpack.c.l.b16 %v6486
        %v6535 = vunpack.c.l.b16 %v6487
        %v6536 = vunpack.c.l.b16 %v6488
        %v6537 = vunpack.c.l.b16 %v6489
        %v6538 = vunpack.c.l.b16 %v6490
        %v6539 = vunpack.c.l.b16 %v6491
        %v6540 = vunpack.c.l.b16 %v6492
        %v6541 = vunpack.c.l.b16 %v6493
        %v6542 = vunpack.c.l.b16 %v6494
        %v6543 = vunpack.c.l.b16 %v6495
        %v6544 = vunpack.c.l.b16 %v6496
        %v6545 = vunpack.c.l.b16 %v6497
        %v6546 = vunpack.c.l.b16 %v6498
        %v6547 = vunpack.c.l.b16 %v6499
        %v6548 = vunpack.c.l.b16 %v6500
        %v6549 = vunpack.c.l.b16 %v6501
        %v6550 = vunpack.c.l.b16 %v6502
        %v6551 = vunpack.c.l.b16 %v6503
        %v6552 = vunpack.c.l.b16 %v6504
        %v6553 = vunpack.c.l.b16 %v6505
        %v6554 = vunpack.c.l.b16 %v6506
        %v6555 = vunpack.c.l.b16 %v6507
        %v6556 = vunpack.c.l.b16 %v6508
        %v6557 = vunpack.c.l.b16 %v6509
        %v6558 = vpack.c.b16 %v6535, %v6534
        %v6559 = vpack.c.b16 %v6537, %v6536
        %v6560 = vpack.c.b16 %v6539, %v6538
        %v6561 = vpack.c.b16 %v6541, %v6540
        %v6562 = vpack.c.b16 %v6543, %v6542
        %v6563 = vpack.c.b16 %v6545, %v6544
        %v6564 = vpack.c.b16 %v6547, %v6546
        %v6565 = vpack.c.b16 %v6549, %v6548
        %v6566 = vpack.c.b16 %v6551, %v6550
        %v6567 = vpack.c.b16 %v6553, %v6552
        %v6568 = vpack.c.b16 %v6555, %v6554
        %v6569 = vpack.c.b16 %v6557, %v6556
        %v6583 = vsel %vm294, %v6454, 0
        %v6586 = vsel %vm294, %v6456, 0
        %v6589 = vsel %vm294, %v6458, 0
        %v6592 = vsel %vm294, %v6460, 0
        %v6595 = vsel %vm294, %v6462, 0
        %v6598 = vsel %vm294, %v6464, 0
        %v6601 = vsel %vm294, %v6466, 0
        %v6604 = vsel %vm294, %v6468, 0
        %v6607 = vsel %vm294, %v6470, 0
        %v6610 = vsel %vm294, %v6472, 0
        %v6613 = vsel %vm294, %v6474, 0
        %v6616 = vsel %vm294, %v6476, 0
        %v6619 = vsel %vm294, %v6478, 0
        %v6622 = vsel %vm294, %v6480, 0
        %v6625 = vsel %vm294, %v6482, 0
        %v6628 = vsel %vm294, %v6484, 0
        %6630 = vmatprep.subr.bf16.mxu0 0
        %6631 = vmatpush1.bf16.msra.mxu0 %v6558
        %6632 = vmatprep.subr.bf16.mxu0 0
        %6633 = vmatpush1.bf16.msra.mxu0 %v6559
        %6634 = vmatprep.subr.bf16.mxu0 0
        %6635 = vmatpush1.bf16.msra.mxu0 %v6560
        %6636 = vmatprep.subr.bf16.mxu0 0
        %6637 = vmatpush1.bf16.msra.mxu0 %v6561
        %6638 = vmatprep.subr.bf16.mxu0 0
        %6639 = vmatpush1.bf16.msra.mxu0 %v6562
        %6640 = vmatprep.subr.bf16.mxu0 0
        %6641 = vmatpush1.bf16.msra.mxu0 %v6563
        %6642 = vmatprep.subr.bf16.mxu0 0
        %6643 = vmatpush1.bf16.msra.mxu0 %v6564
        %6644 = vmatprep.subr.bf16.mxu0 0
        %6645 = vmatpush1.bf16.msra.mxu0 %v6565
        %6646 = vmatprep.subr.bf16.mxu0 0
        %6647 = vmatpush1.bf16.msra.mxu0 %v6566
        %6648 = vmatprep.subr.bf16.mxu0 0
        %6649 = vmatpush1.bf16.msra.mxu0 %v6567
        %6650 = vmatprep.subr.bf16.mxu0 0
        %6651 = vmatpush1.bf16.msra.mxu0 %v6568
        %6652 = vmatprep.subr.bf16.mxu0 0
        %6653 = vmatpush1.bf16.msra.mxu0 %v6569
        %6654 = vmatprep.subr.bf16.mxu0 0
        %6655 = vmatpush1.bf16.msra.mxu0 0
        %6656 = vmatprep.subr.bf16.mxu0 0
        %6657 = vmatpush1.bf16.msra.mxu0 0
        %6658 = vmatprep.subr.bf16.mxu0 0
        %6659 = vmatpush1.bf16.msra.mxu0 0
        %6660 = vmatprep.subr.bf16.mxu0 0
        %6661 = vmatpush1.bf16.msra.mxu0 0
        %6662 = vmatprep.mubr.bf16.mxu0 %v6583
        %6663 = vmatmul.mubr.bf16.gmra.mrb[0].mxu0 %v6453
        %v6664 = vpop.f32.mrb[0].mxu0
        %v6665 = vadd.f32 0.0, %v6664
        %v6666 = vpop.f32.mrb[0].mxu0
        %v6667 = vpop.f32.mrb[0].mxu0
        %v6668 = vadd.f32 0.0, %v6667
        %v6669 = vpop.f32.mrb[0].mxu0
        %6670 = vmatprep.mubr.bf16.mxu0 %v6586
        %6671 = vmatmul.mubr.bf16.gmra.mrb[0].mxu0 %v6455
        %v6672 = vpop.f32.mrb[0].mxu0
        %v6673 = vadd.f32 0.0, %v6672
        %v6674 = vpop.f32.mrb[0].mxu0
        %v6675 = vpop.f32.mrb[0].mxu0
        %v6676 = vadd.f32 0.0, %v6675
        %v6677 = vpop.f32.mrb[0].mxu0
        %6678 = vmatprep.mubr.bf16.mxu0 %v6589
        %6679 = vmatmul.mubr.bf16.gmra.mrb[0].mxu0 %v6457
        %v6680 = vpop.f32.mrb[0].mxu0
        %v6681 = vadd.f32 0.0, %v6680
        %v6682 = vpop.f32.mrb[0].mxu0
        %v6683 = vpop.f32.mrb[0].mxu0
        %v6684 = vadd.f32 0.0, %v6683
        %v6685 = vpop.f32.mrb[0].mxu0
        %6686 = vmatprep.mubr.bf16.mxu0 %v6592
        %6687 = vmatmul.mubr.bf16.gmra.mrb[0].mxu0 %v6459
        %v6688 = vpop.f32.mrb[0].mxu0
        %v6689 = vadd.f32 0.0, %v6688
        %v6690 = vpop.f32.mrb[0].mxu0
        %v6691 = vpop.f32.mrb[0].mxu0
        %v6692 = vadd.f32 0.0, %v6691
        %v6693 = vpop.f32.mrb[0].mxu0
        %6694 = vmatprep.mubr.bf16.mxu0 %v6595
        %6695 = vmatmul.mubr.bf16.gmra.mrb[0].mxu0 %v6461
        %v6696 = vpop.f32.mrb[0].mxu0
        %v6697 = vadd.f32 0.0, %v6696
        %v6698 = vpop.f32.mrb[0].mxu0
        %v6699 = vpop.f32.mrb[0].mxu0
        %v6700 = vadd.f32 0.0, %v6699
        %v6701 = vpop.f32.mrb[0].mxu0
        %6702 = vmatprep.mubr.bf16.mxu0 %v6598
        %6703 = vmatmul.mubr.bf16.gmra.mrb[0].mxu0 %v6463
        %v6704 = vpop.f32.mrb[0].mxu0
        %v6705 = vadd.f32 0.0, %v6704
        %v6706 = vpop.f32.mrb[0].mxu0
        %v6707 = vpop.f32.mrb[0].mxu0
        %v6708 = vadd.f32 0.0, %v6707
        %v6709 = vpop.f32.mrb[0].mxu0
        %6710 = vmatprep.mubr.bf16.mxu0 %v6601
        %6711 = vmatmul.mubr.bf16.gmra.mrb[0].mxu0 %v6465
        %v6712 = vpop.f32.mrb[0].mxu0
        %v6713 = vadd.f32 0.0, %v6712
        %v6714 = vpop.f32.mrb[0].mxu0
        %v6715 = vpop.f32.mrb[0].mxu0
        %v6716 = vadd.f32 0.0, %v6715
        %v6717 = vpop.f32.mrb[0].mxu0
        %6718 = vmatprep.mubr.bf16.mxu0 %v6604
        %6719 = vmatmul.mubr.bf16.gmra.mrb[0].mxu0 %v6467
        %v6720 = vpop.f32.mrb[0].mxu0
        %v6721 = vadd.f32 0.0, %v6720
        %v6722 = vpop.f32.mrb[0].mxu0
        %v6723 = vpop.f32.mrb[0].mxu0
        %v6724 = vadd.f32 0.0, %v6723
        %v6725 = vpop.f32.mrb[0].mxu0
        %6726 = vmatprep.mubr.bf16.mxu0 %v6607
        %6727 = vmatmul.mubr.bf16.gmra.mrb[0].mxu0 %v6469
        %v6728 = vpop.f32.mrb[0].mxu0
        %v6729 = vadd.f32 0.0, %v6728
        %v6730 = vpop.f32.mrb[0].mxu0
        %v6731 = vpop.f32.mrb[0].mxu0
        %v6732 = vadd.f32 0.0, %v6731
        %v6733 = vpop.f32.mrb[0].mxu0
        %6734 = vmatprep.mubr.bf16.mxu0 %v6610
        %6735 = vmatmul.mubr.bf16.gmra.mrb[0].mxu0 %v6471
        %v6736 = vpop.f32.mrb[0].mxu0
        %v6737 = vadd.f32 0.0, %v6736
        %v6738 = vpop.f32.mrb[0].mxu0
        %v6739 = vpop.f32.mrb[0].mxu0
        %v6740 = vadd.f32 0.0, %v6739
        %v6741 = vpop.f32.mrb[0].mxu0
        %6742 = vmatprep.mubr.bf16.mxu0 %v6613
        %6743 = vmatmul.mubr.bf16.gmra.mrb[0].mxu0 %v6473
        %v6744 = vpop.f32.mrb[0].mxu0
        %v6745 = vadd.f32 0.0, %v6744
        %v6746 = vpop.f32.mrb[0].mxu0
        %v6747 = vpop.f32.mrb[0].mxu0
        %v6748 = vadd.f32 0.0, %v6747
        %v6749 = vpop.f32.mrb[0].mxu0
        %6750 = vmatprep.mubr.bf16.mxu0 %v6616
        %6751 = vmatmul.mubr.bf16.gmra.mrb[0].mxu0 %v6475
        %v6752 = vpop.f32.mrb[0].mxu0
        %v6753 = vadd.f32 0.0, %v6752
        %v6754 = vpop.f32.mrb[0].mxu0
        %v6755 = vpop.f32.mrb[0].mxu0
        %v6756 = vadd.f32 0.0, %v6755
        %v6757 = vpop.f32.mrb[0].mxu0
        %6758 = vmatprep.mubr.bf16.mxu0 %v6619
        %6759 = vmatmul.mubr.bf16.gmra.mrb[0].mxu0 %v6477
        %v6760 = vpop.f32.mrb[0].mxu0
        %v6761 = vadd.f32 0.0, %v6760
        %v6762 = vpop.f32.mrb[0].mxu0
        %v6763 = vpop.f32.mrb[0].mxu0
        %v6764 = vadd.f32 0.0, %v6763
        %v6765 = vpop.f32.mrb[0].mxu0
        %6766 = vmatprep.mubr.bf16.mxu0 %v6622
        %6767 = vmatmul.mubr.bf16.gmra.mrb[0].mxu0 %v6479
        %v6768 = vpop.f32.mrb[0].mxu0
        %v6769 = vadd.f32 0.0, %v6768
        %v6770 = vpop.f32.mrb[0].mxu0
        %v6771 = vpop.f32.mrb[0].mxu0
        %v6772 = vadd.f32 0.0, %v6771
        %v6773 = vpop.f32.mrb[0].mxu0
        %6774 = vmatprep.mubr.bf16.mxu0 %v6625
        %6775 = vmatmul.mubr.bf16.gmra.mrb[0].mxu0 %v6481
        %v6776 = vpop.f32.mrb[0].mxu0
        %v6777 = vadd.f32 0.0, %v6776
        %v6778 = vpop.f32.mrb[0].mxu0
        %v6779 = vpop.f32.mrb[0].mxu0
        %v6780 = vadd.f32 0.0, %v6779
        %v6781 = vpop.f32.mrb[0].mxu0
        %6782 = vmatprep.mubr.bf16.mxu0 %v6628
        %6783 = vmatmul.mubr.bf16.gmra.mrb[0].mxu0 %v6483
        %v6784 = vpop.f32.mrb[0].mxu0
        %v6785 = vadd.f32 0.0, %v6784
        %v6786 = vpop.f32.mrb[0].mxu0
        %v6787 = vpop.f32.mrb[0].mxu0
        %v6788 = vadd.f32 0.0, %v6787
        %v6789 = vpop.f32.mrb[0].mxu0
        %6790 = vdwg.mxu0
        %v6791 = vadd.f32 %v6357, %v6665
        %v6792 = vadd.f32 %v6358, %v6668
        %v6793 = vadd.f32 %v6359, %v6673
        %v6794 = vadd.f32 %v6360, %v6676
        %v6795 = vadd.f32 %v6361, %v6681
        %v6796 = vadd.f32 %v6362, %v6684
        %v6797 = vadd.f32 %v6363, %v6689
        %v6798 = vadd.f32 %v6364, %v6692
        %v6799 = vadd.f32 %v6365, %v6697
        %v6800 = vadd.f32 %v6366, %v6700
        %v6801 = vadd.f32 %v6367, %v6705
        %v6802 = vadd.f32 %v6368, %v6708
        %v6803 = vadd.f32 %v6369, %v6713
        %v6804 = vadd.f32 %v6370, %v6716
        %v6805 = vadd.f32 %v6371, %v6721
        %v6806 = vadd.f32 %v6372, %v6724
        %v6807 = vadd.f32 %v6373, %v6729
        %v6808 = vadd.f32 %v6374, %v6732
        %v6809 = vadd.f32 %v6375, %v6737
        %v6810 = vadd.f32 %v6376, %v6740
        %v6811 = vadd.f32 %v6377, %v6745
        %v6812 = vadd.f32 %v6378, %v6748
        %v6813 = vadd.f32 %v6379, %v6753
        %v6814 = vadd.f32 %v6380, %v6756
        %v6815 = vadd.f32 %v6381, %v6761
        %v6816 = vadd.f32 %v6382, %v6764
        %v6817 = vadd.f32 %v6383, %v6769
        %v6818 = vadd.f32 %v6384, %v6772
        %v6819 = vadd.f32 %v6385, %v6777
        %v6820 = vadd.f32 %v6386, %v6780
        %v6821 = vadd.f32 %v6387, %v6785
        %v6822 = vadd.f32 %v6388, %v6788
        %vm6823 = vcmp.gt.f32.partialorder %v6791, 0.0
        %vm6824 = vcmp.gt.f32.partialorder %v6792, 0.0
        %vm6825 = vcmp.gt.f32.partialorder %v6793, 0.0
        %vm6826 = vcmp.gt.f32.partialorder %v6794, 0.0
        %vm6827 = vcmp.gt.f32.partialorder %v6795, 0.0
        %vm6828 = vcmp.gt.f32.partialorder %v6796, 0.0
        %vm6829 = vcmp.gt.f32.partialorder %v6797, 0.0
        %vm6830 = vcmp.gt.f32.partialorder %v6798, 0.0
        %vm6831 = vcmp.gt.f32.partialorder %v6799, 0.0
        %vm6832 = vcmp.gt.f32.partialorder %v6800, 0.0
        %vm6833 = vcmp.gt.f32.partialorder %v6801, 0.0
        %vm6834 = vcmp.gt.f32.partialorder %v6802, 0.0
        %vm6835 = vcmp.gt.f32.partialorder %v6803, 0.0
        %vm6836 = vcmp.gt.f32.partialorder %v6804, 0.0
        %vm6837 = vcmp.gt.f32.partialorder %v6805, 0.0
        %vm6838 = vcmp.gt.f32.partialorder %v6806, 0.0
        %vm6839 = vcmp.gt.f32.partialorder %v6807, 0.0
        %vm6840 = vcmp.gt.f32.partialorder %v6808, 0.0
        %vm6841 = vcmp.gt.f32.partialorder %v6809, 0.0
        %vm6842 = vcmp.gt.f32.partialorder %v6810, 0.0
        %vm6843 = vcmp.gt.f32.partialorder %v6811, 0.0
        %vm6844 = vcmp.gt.f32.partialorder %v6812, 0.0
        %vm6845 = vcmp.gt.f32.partialorder %v6813, 0.0
        %vm6846 = vcmp.gt.f32.partialorder %v6814, 0.0
        %vm6847 = vcmp.gt.f32.partialorder %v6815, 0.0
        %vm6848 = vcmp.gt.f32.partialorder %v6816, 0.0
        %vm6849 = vcmp.gt.f32.partialorder %v6817, 0.0
        %vm6850 = vcmp.gt.f32.partialorder %v6818, 0.0
        %vm6851 = vcmp.gt.f32.partialorder %v6819, 0.0
        %vm6852 = vcmp.gt.f32.partialorder %v6820, 0.0
        %vm6853 = vcmp.gt.f32.partialorder %v6821, 0.0
        %vm6854 = vcmp.gt.f32.partialorder %v6822, 0.0
        %v6855 = vstv %s4976
        %v6856 = vmul.f32 %v6855, %v6791
        %v6857 = vmul.f32 %v6855, %v6792
        %v6858 = vmul.f32 %v6855, %v6793
        %v6859 = vmul.f32 %v6855, %v6794
        %v6860 = vmul.f32 %v6855, %v6795
        %v6861 = vmul.f32 %v6855, %v6796
        %v6862 = vmul.f32 %v6855, %v6797
        %v6863 = vmul.f32 %v6855, %v6798
        %v6864 = vmul.f32 %v6855, %v6799
        %v6865 = vmul.f32 %v6855, %v6800
        %v6866 = vmul.f32 %v6855, %v6801
        %v6867 = vmul.f32 %v6855, %v6802
        %v6868 = vmul.f32 %v6855, %v6803
        %v6869 = vmul.f32 %v6855, %v6804
        %v6870 = vmul.f32 %v6855, %v6805
        %v6871 = vmul.f32 %v6855, %v6806
        %v6872 = vmul.f32 %v6855, %v6807
        %v6873 = vmul.f32 %v6855, %v6808
        %v6874 = vmul.f32 %v6855, %v6809
        %v6875 = vmul.f32 %v6855, %v6810
        %v6876 = vmul.f32 %v6855, %v6811
        %v6877 = vmul.f32 %v6855, %v6812
        %v6878 = vmul.f32 %v6855, %v6813
        %v6879 = vmul.f32 %v6855, %v6814
        %v6880 = vmul.f32 %v6855, %v6815
        %v6881 = vmul.f32 %v6855, %v6816
        %v6882 = vmul.f32 %v6855, %v6817
        %v6883 = vmul.f32 %v6855, %v6818
        %v6884 = vmul.f32 %v6855, %v6819
        %v6885 = vmul.f32 %v6855, %v6820
        %v6886 = vmul.f32 %v6855, %v6821
        %v6887 = vmul.f32 %v6855, %v6822
        %v6888 = vsel %vm6823, %v6791, %v6856
        %v6889 = vsel %vm6824, %v6792, %v6857
        %v6890 = vsel %vm6825, %v6793, %v6858
        %v6891 = vsel %vm6826, %v6794, %v6859
        %v6892 = vsel %vm6827, %v6795, %v6860
        %v6893 = vsel %vm6828, %v6796, %v6861
        %v6894 = vsel %vm6829, %v6797, %v6862
        %v6895 = vsel %vm6830, %v6798, %v6863
        %v6896 = vsel %vm6831, %v6799, %v6864
        %v6897 = vsel %vm6832, %v6800, %v6865
        %v6898 = vsel %vm6833, %v6801, %v6866
        %v6899 = vsel %vm6834, %v6802, %v6867
        %v6900 = vsel %vm6835, %v6803, %v6868
        %v6901 = vsel %vm6836, %v6804, %v6869
        %v6902 = vsel %vm6837, %v6805, %v6870
        %v6903 = vsel %vm6838, %v6806, %v6871
        %v6904 = vsel %vm6839, %v6807, %v6872
        %v6905 = vsel %vm6840, %v6808, %v6873
        %v6906 = vsel %vm6841, %v6809, %v6874
        %v6907 = vsel %vm6842, %v6810, %v6875
        %v6908 = vsel %vm6843, %v6811, %v6876
        %v6909 = vsel %vm6844, %v6812, %v6877
        %v6910 = vsel %vm6845, %v6813, %v6878
        %v6911 = vsel %vm6846, %v6814, %v6879
        %v6912 = vsel %vm6847, %v6815, %v6880
        %v6913 = vsel %vm6848, %v6816, %v6881
        %v6914 = vsel %vm6849, %v6817, %v6882
        %v6915 = vsel %vm6850, %v6818, %v6883
        %v6916 = vsel %vm6851, %v6819, %v6884
        %v6917 = vsel %vm6852, %v6820, %v6885
        %v6918 = vsel %vm6853, %v6821, %v6886
        %v6919 = vsel %vm6854, %v6822, %v6887
        %v6920 = vld [vmem:[%s2964 + $0x1] sm:$0xff]
        %v6921 = vld [vmem:[%s2964 + $0x9] sm:$0xff]
        %v6922 = vld [vmem:[%s2964 + $0x19] sm:$0xff]
        %v6923 = vld [vmem:[%s2964 + $0x21] sm:$0xff]
        %v6924 = vld [vmem:[%s2964 + $0x31] sm:$0xff]
        %v6925 = vld [vmem:[%s2964 + $0x39] sm:$0xff]
        %v6926 = vld [vmem:[%s2964 + $0x49] sm:$0xff]
        %v6927 = vld [vmem:[%s2964 + $0x51] sm:$0xff]
        %v6928 = vld [vmem:[%s2964 + $0x61] sm:$0xff]
        %v6929 = vld [vmem:[%s2964 + $0x69] sm:$0xff]
        %v6930 = vld [vmem:[%s2964 + $0x79] sm:$0xff]
        %v6931 = vld [vmem:[%s2964 + $0x81] sm:$0xff]
        %v6932 = vld [vmem:[%s2964 + $0x91] sm:$0xff]
        %v6933 = vld [vmem:[%s2964 + $0x99] sm:$0xff]
        %v6934 = vld [vmem:[%s2964 + $0xa9] sm:$0xff]
        %v6935 = vld [vmem:[%s2964 + $0xb1] sm:$0xff]
        %v6936 = vld [vmem:[%s2964 + $0xc1] sm:$0xff]
        %v6937 = vld [vmem:[%s2964 + $0xc9] sm:$0xff]
        %v6938 = vld [vmem:[%s2964 + $0xd9] sm:$0xff]
        %v6939 = vld [vmem:[%s2964 + $0xe1] sm:$0xff]
        %v6940 = vld [vmem:[%s2964 + $0xf1] sm:$0xff]
        %v6941 = vld [vmem:[%s2964 + $0xf9] sm:$0xff]
        %v6942 = vld [vmem:[%s2964 + $0x109] sm:$0xff]
        %v6943 = vld [vmem:[%s2964 + $0x111] sm:$0xff]
        %v6944 = vld [vmem:[%s2964 + $0x121] sm:$0xff]
        %v6945 = vld [vmem:[%s2964 + $0x129] sm:$0xff]
        %v6946 = vld [vmem:[%s2964 + $0x139] sm:$0xff]
        %v6947 = vld [vmem:[%s2964 + $0x141] sm:$0xff]
        %v6948 = vld [vmem:[%s2964 + $0x151] sm:$0xff]
        %v6949 = vld [vmem:[%s2964 + $0x159] sm:$0xff]
        %v6950 = vld [vmem:[%s2964 + $0x169] sm:$0xff]
        %v6951 = vld [vmem:[%s2964 + $0x171] sm:$0xff]
        %v6952 = vadd.f32 %v6920, %v6888
        %v6953 = vadd.f32 %v6921, %v6889
        %v6954 = vadd.f32 %v6922, %v6890
        %v6955 = vadd.f32 %v6923, %v6891
        %v6956 = vadd.f32 %v6924, %v6892
        %v6957 = vadd.f32 %v6925, %v6893
        %v6958 = vadd.f32 %v6926, %v6894
        %v6959 = vadd.f32 %v6927, %v6895
        %v6960 = vadd.f32 %v6928, %v6896
        %v6961 = vadd.f32 %v6929, %v6897
        %v6962 = vadd.f32 %v6930, %v6898
        %v6963 = vadd.f32 %v6931, %v6899
        %v6964 = vadd.f32 %v6932, %v6900
        %v6965 = vadd.f32 %v6933, %v6901
        %v6966 = vadd.f32 %v6934, %v6902
        %v6967 = vadd.f32 %v6935, %v6903
        %v6968 = vadd.f32 %v6936, %v6904
        %v6969 = vadd.f32 %v6937, %v6905
        %v6970 = vadd.f32 %v6938, %v6906
        %v6971 = vadd.f32 %v6939, %v6907
        %v6972 = vadd.f32 %v6940, %v6908
        %v6973 = vadd.f32 %v6941, %v6909
        %v6974 = vadd.f32 %v6942, %v6910
        %v6975 = vadd.f32 %v6943, %v6911
        %v6976 = vadd.f32 %v6944, %v6912
        %v6977 = vadd.f32 %v6945, %v6913
        %v6978 = vadd.f32 %v6946, %v6914
        %v6979 = vadd.f32 %v6947, %v6915
        %v6980 = vadd.f32 %v6948, %v6916
        %v6981 = vadd.f32 %v6949, %v6917
        %v6982 = vadd.f32 %v6950, %v6918
        %v6983 = vadd.f32 %v6951, %v6919
        %6984 = vst.msk [vmem:[%s4943 + $0x1] sm:$0xff] %vm294, %v6952
        %6985 = vst.msk [vmem:[%s4943 + $0x9] sm:$0xff] %vm294, %v6953
        %6986 = vst.msk [vmem:[%s4943 + $0x19] sm:$0xff] %vm294, %v6954
        %6987 = vst.msk [vmem:[%s4943 + $0x21] sm:$0xff] %vm294, %v6955
        %6988 = vst.msk [vmem:[%s4943 + $0x31] sm:$0xff] %vm294, %v6956
        %6989 = vst.msk [vmem:[%s4943 + $0x39] sm:$0xff] %vm294, %v6957
        %6990 = vst.msk [vmem:[%s4943 + $0x49] sm:$0xff] %vm294, %v6958
        %6991 = vst.msk [vmem:[%s4943 + $0x51] sm:$0xff] %vm294, %v6959
        %6992 = vst.msk [vmem:[%s4943 + $0x61] sm:$0xff] %vm294, %v6960
        %6993 = vst.msk [vmem:[%s4943 + $0x69] sm:$0xff] %vm294, %v6961
        %6994 = vst.msk [vmem:[%s4943 + $0x79] sm:$0xff] %vm294, %v6962
        %6995 = vst.msk [vmem:[%s4943 + $0x81] sm:$0xff] %vm294, %v6963
        %6996 = vst.msk [vmem:[%s4943 + $0x91] sm:$0xff] %vm294, %v6964
        %6997 = vst.msk [vmem:[%s4943 + $0x99] sm:$0xff] %vm294, %v6965
        %6998 = vst.msk [vmem:[%s4943 + $0xa9] sm:$0xff] %vm294, %v6966
        %6999 = vst.msk [vmem:[%s4943 + $0xb1] sm:$0xff] %vm294, %v6967
        %7000 = vst.msk [vmem:[%s4943 + $0xc1] sm:$0xff] %vm294, %v6968
        %7001 = vst.msk [vmem:[%s4943 + $0xc9] sm:$0xff] %vm294, %v6969
        %7002 = vst.msk [vmem:[%s4943 + $0xd9] sm:$0xff] %vm294, %v6970
        %7003 = vst.msk [vmem:[%s4943 + $0xe1] sm:$0xff] %vm294, %v6971
        %7004 = vst.msk [vmem:[%s4943 + $0xf1] sm:$0xff] %vm294, %v6972
        %7005 = vst.msk [vmem:[%s4943 + $0xf9] sm:$0xff] %vm294, %v6973
        %7006 = vst.msk [vmem:[%s4943 + $0x109] sm:$0xff] %vm294, %v6974
        %7007 = vst.msk [vmem:[%s4943 + $0x111] sm:$0xff] %vm294, %v6975
        %7008 = vst.msk [vmem:[%s4943 + $0x121] sm:$0xff] %vm294, %v6976
        %7009 = vst.msk [vmem:[%s4943 + $0x129] sm:$0xff] %vm294, %v6977
        %7010 = vst.msk [vmem:[%s4943 + $0x139] sm:$0xff] %vm294, %v6978
        %7011 = vst.msk [vmem:[%s4943 + $0x141] sm:$0xff] %vm294, %v6979
        %7012 = vst.msk [vmem:[%s4943 + $0x151] sm:$0xff] %vm294, %v6980
        %7013 = vst.msk [vmem:[%s4943 + $0x159] sm:$0xff] %vm294, %v6981
        %7014 = vst.msk [vmem:[%s4943 + $0x169] sm:$0xff] %vm294, %v6982
        %7015 = vst.msk [vmem:[%s4943 + $0x171] sm:$0xff] %vm294, %v6983
        %s7016 = sld [smem:[#allocation6 + $0x3]]
        %v7017 = vld [vmem:[#allocation4] sm:$0xff]
        %v7018 = vld [vmem:[#allocation4 + $0x8] sm:$0xff]
        %v7019 = vld [vmem:[#allocation4 + $0x10] sm:$0x3]
        %v7020 = vld [vmem:[#allocation4 + $0x18] sm:$0xff]
        %v7021 = vld [vmem:[#allocation4 + $0x20] sm:$0xff]
        %v7022 = vld [vmem:[#allocation4 + $0x28] sm:$0x3]
        %v7023 = vld [vmem:[#allocation4 + $0x30] sm:$0xff]
        %v7024 = vld [vmem:[#allocation4 + $0x38] sm:$0xff]
        %v7025 = vld [vmem:[#allocation4 + $0x40] sm:$0x3]
        %v7026 = vld [vmem:[#allocation4 + $0x48] sm:$0xff]
        %v7027 = vld [vmem:[#allocation4 + $0x50] sm:$0xff]
        %v7028 = vld [vmem:[#allocation4 + $0x58] sm:$0x3]
        %v7029 = vld [vmem:[#allocation4 + $0x60] sm:$0xff]
        %v7030 = vld [vmem:[#allocation4 + $0x68] sm:$0xff]
        %v7031 = vld [vmem:[#allocation4 + $0x70] sm:$0x3]
        %v7032 = vld [vmem:[#allocation4 + $0x78] sm:$0xff]
        %v7033 = vld [vmem:[#allocation4 + $0x80] sm:$0xff]
        %v7034 = vld [vmem:[#allocation4 + $0x88] sm:$0x3]
        %v7035 = vld [vmem:[#allocation4 + $0x90] sm:$0xff]
        %v7036 = vld [vmem:[#allocation4 + $0x98] sm:$0xff]
        %v7037 = vld [vmem:[#allocation4 + $0xa0] sm:$0x3]
        %v7038 = vld [vmem:[#allocation4 + $0xa8] sm:$0xff]
        %v7039 = vld [vmem:[#allocation4 + $0xb0] sm:$0xff]
        %v7040 = vld [vmem:[#allocation4 + $0xb8] sm:$0x3]
        %v7041 = vld [vmem:[#allocation4 + $0xc0] sm:$0xff]
        %v7042 = vld [vmem:[#allocation4 + $0xc8] sm:$0xff]
        %v7043 = vld [vmem:[#allocation4 + $0xd0] sm:$0x3]
        %v7044 = vld [vmem:[#allocation4 + $0xd8] sm:$0xff]
        %v7045 = vld [vmem:[#allocation4 + $0xe0] sm:$0xff]
        %v7046 = vld [vmem:[#allocation4 + $0xe8] sm:$0x3]
        %v7047 = vld [vmem:[#allocation4 + $0xf0] sm:$0xff]
        %v7048 = vld [vmem:[#allocation4 + $0xf8] sm:$0xff]
        %v7049 = vld [vmem:[#allocation4 + $0x100] sm:$0x3]
        %v7050 = vld [vmem:[#allocation4 + $0x108] sm:$0xff]
        %v7051 = vld [vmem:[#allocation4 + $0x110] sm:$0xff]
        %v7052 = vld [vmem:[#allocation4 + $0x118] sm:$0x3]
        %v7053 = vld [vmem:[#allocation4 + $0x120] sm:$0xff]
        %v7054 = vld [vmem:[#allocation4 + $0x128] sm:$0xff]
        %v7055 = vld [vmem:[#allocation4 + $0x130] sm:$0x3]
        %v7056 = vld [vmem:[#allocation4 + $0x138] sm:$0xff]
        %v7057 = vld [vmem:[#allocation4 + $0x140] sm:$0xff]
        %v7058 = vld [vmem:[#allocation4 + $0x148] sm:$0x3]
        %v7059 = vld [vmem:[#allocation4 + $0x150] sm:$0xff]
        %v7060 = vld [vmem:[#allocation4 + $0x158] sm:$0xff]
        %v7061 = vld [vmem:[#allocation4 + $0x160] sm:$0x3]
        %v7062 = vld [vmem:[#allocation4 + $0x168] sm:$0xff]
        %v7063 = vld [vmem:[#allocation4 + $0x170] sm:$0xff]
        %v7064 = vld [vmem:[#allocation4 + $0x178] sm:$0x3]
        %v7065 = vld [vmem:[#allocation4 + $0x180] sm:$0xff]
        %v7066 = vld [vmem:[#allocation4 + $0x188] sm:$0xff]
        %v7067 = vld [vmem:[#allocation4 + $0x190] sm:$0x3]
        %v7068 = vld [vmem:[#allocation4 + $0x198] sm:$0xff]
        %v7069 = vld [vmem:[#allocation4 + $0x1a0] sm:$0xff]
        %v7070 = vld [vmem:[#allocation4 + $0x1a8] sm:$0x3]
        %7071 = vst.msk [vmem:[#allocation5] sm:$0xff] %vm294, %v7017
        %7072 = vst.msk [vmem:[#allocation5 + $0x10] sm:$0xff] %vm294, %v7018
        %7073 = vst.msk [vmem:[#allocation5 + $0x20] sm:$0xff] %vm294, %v7020
        %7074 = vst.msk [vmem:[#allocation5 + $0x30] sm:$0xff] %vm294, %v7021
        %7075 = vst.msk [vmem:[#allocation5 + $0x40] sm:$0xff] %vm294, %v7023
        %7076 = vst.msk [vmem:[#allocation5 + $0x50] sm:$0xff] %vm294, %v7024
        %7077 = vst.msk [vmem:[#allocation5 + $0x60] sm:$0xff] %vm294, %v7026
        %7078 = vst.msk [vmem:[#allocation5 + $0x70] sm:$0xff] %vm294, %v7027
        %7079 = vst.msk [vmem:[#allocation5 + $0x80] sm:$0xff] %vm294, %v7029
        %7080 = vst.msk [vmem:[#allocation5 + $0x90] sm:$0xff] %vm294, %v7030
        %7081 = vst.msk [vmem:[#allocation5 + $0xa0] sm:$0xff] %vm294, %v7032
        %7082 = vst.msk [vmem:[#allocation5 + $0xb0] sm:$0xff] %vm294, %v7033
        %7083 = vst.msk [vmem:[#allocation5 + $0xc0] sm:$0xff] %vm294, %v7035
        %7084 = vst.msk [vmem:[#allocation5 + $0xd0] sm:$0xff] %vm294, %v7036
        %7085 = vst.msk [vmem:[#allocation5 + $0xe0] sm:$0xff] %vm294, %v7038
        %7086 = vst.msk [vmem:[#allocation5 + $0xf0] sm:$0xff] %vm294, %v7039
        %7087 = vst.msk [vmem:[#allocation5 + $0x100] sm:$0xff] %vm294, %v7041
        %7088 = vst.msk [vmem:[#allocation5 + $0x110] sm:$0xff] %vm294, %v7042
        %7089 = vst.msk [vmem:[#allocation5 + $0x120] sm:$0xff] %vm294, %v7044
        %7090 = vst.msk [vmem:[#allocation5 + $0x130] sm:$0xff] %vm294, %v7045
        %7091 = vst.msk [vmem:[#allocation5 + $0x140] sm:$0xff] %vm294, %v7047
        %7092 = vst.msk [vmem:[#allocation5 + $0x150] sm:$0xff] %vm294, %v7048
        %7093 = vst.msk [vmem:[#allocation5 + $0x160] sm:$0xff] %vm294, %v7050
        %7094 = vst.msk [vmem:[#allocation5 + $0x170] sm:$0xff] %vm294, %v7051
        %7095 = vst.msk [vmem:[#allocation5 + $0x180] sm:$0xff] %vm294, %v7053
        %7096 = vst.msk [vmem:[#allocation5 + $0x190] sm:$0xff] %vm294, %v7054
        %7097 = vst.msk [vmem:[#allocation5 + $0x1a0] sm:$0xff] %vm294, %v7056
        %7098 = vst.msk [vmem:[#allocation5 + $0x1b0] sm:$0xff] %vm294, %v7057
        %7099 = vst.msk [vmem:[#allocation5 + $0x1c0] sm:$0xff] %vm294, %v7059
        %7100 = vst.msk [vmem:[#allocation5 + $0x1d0] sm:$0xff] %vm294, %v7060
        %7101 = vst.msk [vmem:[#allocation5 + $0x1e0] sm:$0xff] %vm294, %v7062
        %7102 = vst.msk [vmem:[#allocation5 + $0x1f0] sm:$0xff] %vm294, %v7063
        %7103 = vst.msk [vmem:[#allocation5 + $0x200] sm:$0xff] %vm294, %v7065
        %7104 = vst.msk [vmem:[#allocation5 + $0x210] sm:$0xff] %vm294, %v7066
        %7105 = vst.msk [vmem:[#allocation5 + $0x220] sm:$0xff] %vm294, %v7068
        %7106 = vst.msk [vmem:[#allocation5 + $0x230] sm:$0xff] %vm294, %v7069
        %v7161 = vrot.slane %v7017, 1
        %v7162 = vrot.slane %v7018, 1
        %v7163 = vsel %vm870, %v7161, %v7162
        %v7164 = vrot.slane %v7019, 1
        %v7165 = vsel %vm870, %v7162, %v7164
        %v7166 = vrot.slane %v7020, 1
        %v7167 = vrot.slane %v7021, 1
        %v7168 = vsel %vm870, %v7166, %v7167
        %v7169 = vrot.slane %v7022, 1
        %v7170 = vsel %vm870, %v7167, %v7169
        %v7171 = vrot.slane %v7023, 1
        %v7172 = vrot.slane %v7024, 1
        %v7173 = vsel %vm870, %v7171, %v7172
        %v7174 = vrot.slane %v7025, 1
        %v7175 = vsel %vm870, %v7172, %v7174
        %v7176 = vrot.slane %v7026, 1
        %v7177 = vrot.slane %v7027, 1
        %v7178 = vsel %vm870, %v7176, %v7177
        %v7179 = vrot.slane %v7028, 1
        %v7180 = vsel %vm870, %v7177, %v7179
        %v7181 = vrot.slane %v7029, 1
        %v7182 = vrot.slane %v7030, 1
        %v7183 = vsel %vm870, %v7181, %v7182
        %v7184 = vrot.slane %v7031, 1
        %v7185 = vsel %vm870, %v7182, %v7184
        %v7186 = vrot.slane %v7032, 1
        %v7187 = vrot.slane %v7033, 1
        %v7188 = vsel %vm870, %v7186, %v7187
        %v7189 = vrot.slane %v7034, 1
        %v7190 = vsel %vm870, %v7187, %v7189
        %v7191 = vrot.slane %v7035, 1
        %v7192 = vrot.slane %v7036, 1
        %v7193 = vsel %vm870, %v7191, %v7192
        %v7194 = vrot.slane %v7037, 1
        %v7195 = vsel %vm870, %v7192, %v7194
        %v7196 = vrot.slane %v7038, 1
        %v7197 = vrot.slane %v7039, 1
        %v7198 = vsel %vm870, %v7196, %v7197
        %v7199 = vrot.slane %v7040, 1
        %v7200 = vsel %vm870, %v7197, %v7199
        %v7201 = vrot.slane %v7041, 1
        %v7202 = vrot.slane %v7042, 1
        %v7203 = vsel %vm870, %v7201, %v7202
        %v7204 = vrot.slane %v7043, 1
        %v7205 = vsel %vm870, %v7202, %v7204
        %v7206 = vrot.slane %v7044, 1
        %v7207 = vrot.slane %v7045, 1
        %v7208 = vsel %vm870, %v7206, %v7207
        %v7209 = vrot.slane %v7046, 1
        %v7210 = vsel %vm870, %v7207, %v7209
        %v7211 = vrot.slane %v7047, 1
        %v7212 = vrot.slane %v7048, 1
        %v7213 = vsel %vm870, %v7211, %v7212
        %v7214 = vrot.slane %v7049, 1
        %v7215 = vsel %vm870, %v7212, %v7214
        %v7216 = vrot.slane %v7050, 1
        %v7217 = vrot.slane %v7051, 1
        %v7218 = vsel %vm870, %v7216, %v7217
        %v7219 = vrot.slane %v7052, 1
        %v7220 = vsel %vm870, %v7217, %v7219
        %v7221 = vrot.slane %v7053, 1
        %v7222 = vrot.slane %v7054, 1
        %v7223 = vsel %vm870, %v7221, %v7222
        %v7224 = vrot.slane %v7055, 1
        %v7225 = vsel %vm870, %v7222, %v7224
        %v7226 = vrot.slane %v7056, 1
        %v7227 = vrot.slane %v7057, 1
        %v7228 = vsel %vm870, %v7226, %v7227
        %v7229 = vrot.slane %v7058, 1
        %v7230 = vsel %vm870, %v7227, %v7229
        %v7231 = vrot.slane %v7059, 1
        %v7232 = vrot.slane %v7060, 1
        %v7233 = vsel %vm870, %v7231, %v7232
        %v7234 = vrot.slane %v7061, 1
        %v7235 = vsel %vm870, %v7232, %v7234
        %v7236 = vrot.slane %v7062, 1
        %v7237 = vrot.slane %v7063, 1
        %v7238 = vsel %vm870, %v7236, %v7237
        %v7239 = vrot.slane %v7064, 1
        %v7240 = vsel %vm870, %v7237, %v7239
        %v7241 = vrot.slane %v7065, 1
        %v7242 = vrot.slane %v7066, 1
        %v7243 = vsel %vm870, %v7241, %v7242
        %v7244 = vrot.slane %v7067, 1
        %v7245 = vsel %vm870, %v7242, %v7244
        %v7246 = vrot.slane %v7068, 1
        %v7247 = vrot.slane %v7069, 1
        %v7248 = vsel %vm870, %v7246, %v7247
        %v7249 = vrot.slane %v7070, 1
        %v7250 = vsel %vm870, %v7247, %v7249
        %7251 = vrot.lane.b32.xlu0 %v7163, 64
        %v7252 = vpop.permute.xlu0 %7251
        %7253 = vrot.lane.b32.xlu0 %v7165, 64
        %v7254 = vpop.permute.xlu0 %7253
        %7255 = vrot.lane.b32.xlu0 %v7168, 64
        %v7256 = vpop.permute.xlu0 %7255
        %7257 = vrot.lane.b32.xlu0 %v7170, 64
        %v7258 = vpop.permute.xlu0 %7257
        %7259 = vrot.lane.b32.xlu0 %v7173, 64
        %v7260 = vpop.permute.xlu0 %7259
        %7261 = vrot.lane.b32.xlu0 %v7175, 64
        %v7262 = vpop.permute.xlu0 %7261
        %7263 = vrot.lane.b32.xlu0 %v7178, 64
        %v7264 = vpop.permute.xlu0 %7263
        %7265 = vrot.lane.b32.xlu0 %v7180, 64
        %v7266 = vpop.permute.xlu0 %7265
        %7267 = vrot.lane.b32.xlu0 %v7183, 64
        %v7268 = vpop.permute.xlu0 %7267
        %7269 = vrot.lane.b32.xlu0 %v7185, 64
        %v7270 = vpop.permute.xlu0 %7269
        %7271 = vrot.lane.b32.xlu0 %v7188, 64
        %v7272 = vpop.permute.xlu0 %7271
        %7273 = vrot.lane.b32.xlu0 %v7190, 64
        %v7274 = vpop.permute.xlu0 %7273
        %7275 = vrot.lane.b32.xlu0 %v7193, 64
        %v7276 = vpop.permute.xlu0 %7275
        %7277 = vrot.lane.b32.xlu0 %v7195, 64
        %v7278 = vpop.permute.xlu0 %7277
        %7279 = vrot.lane.b32.xlu0 %v7198, 64
        %v7280 = vpop.permute.xlu0 %7279
        %7281 = vrot.lane.b32.xlu0 %v7200, 64
        %v7282 = vpop.permute.xlu0 %7281
        %7283 = vrot.lane.b32.xlu0 %v7203, 64
        %v7284 = vpop.permute.xlu0 %7283
        %7285 = vrot.lane.b32.xlu0 %v7205, 64
        %v7286 = vpop.permute.xlu0 %7285
        %7287 = vrot.lane.b32.xlu0 %v7208, 64
        %v7288 = vpop.permute.xlu0 %7287
        %7289 = vrot.lane.b32.xlu0 %v7210, 64
        %v7290 = vpop.permute.xlu0 %7289
        %7291 = vrot.lane.b32.xlu0 %v7213, 64
        %v7292 = vpop.permute.xlu0 %7291
        %7293 = vrot.lane.b32.xlu0 %v7215, 64
        %v7294 = vpop.permute.xlu0 %7293
        %7295 = vrot.lane.b32.xlu0 %v7218, 64
        %v7296 = vpop.permute.xlu0 %7295
        %7297 = vrot.lane.b32.xlu0 %v7220, 64
        %v7298 = vpop.permute.xlu0 %7297
        %7299 = vrot.lane.b32.xlu0 %v7223, 64
        %v7300 = vpop.permute.xlu0 %7299
        %7301 = vrot.lane.b32.xlu0 %v7225, 64
        %v7302 = vpop.permute.xlu0 %7301
        %7303 = vrot.lane.b32.xlu0 %v7228, 64
        %v7304 = vpop.permute.xlu0 %7303
        %7305 = vrot.lane.b32.xlu0 %v7230, 64
        %v7306 = vpop.permute.xlu0 %7305
        %7307 = vrot.lane.b32.xlu0 %v7233, 64
        %v7308 = vpop.permute.xlu0 %7307
        %7309 = vrot.lane.b32.xlu0 %v7235, 64
        %v7310 = vpop.permute.xlu0 %7309
        %7311 = vrot.lane.b32.xlu0 %v7238, 64
        %v7312 = vpop.permute.xlu0 %7311
        %7313 = vrot.lane.b32.xlu0 %v7240, 64
        %v7314 = vpop.permute.xlu0 %7313
        %7315 = vrot.lane.b32.xlu0 %v7243, 64
        %v7316 = vpop.permute.xlu0 %7315
        %7317 = vrot.lane.b32.xlu0 %v7245, 64
        %v7318 = vpop.permute.xlu0 %7317
        %7319 = vrot.lane.b32.xlu0 %v7248, 64
        %v7320 = vpop.permute.xlu0 %7319
        %7321 = vrot.lane.b32.xlu0 %v7250, 64
        %v7322 = vpop.permute.xlu0 %7321
        %7359 = vst.msk [vmem:[#allocation5] sm:$0xff] %vm3340, %v7252
        %7360 = vst.msk [vmem:[#allocation5 + $0x10] sm:$0xff] %vm3340, %v7254
        %7361 = vst.msk [vmem:[#allocation5 + $0x20] sm:$0xff] %vm3340, %v7256
        %7362 = vst.msk [vmem:[#allocation5 + $0x30] sm:$0xff] %vm3340, %v7258
        %7363 = vst.msk [vmem:[#allocation5 + $0x40] sm:$0xff] %vm3340, %v7260
        %7364 = vst.msk [vmem:[#allocation5 + $0x50] sm:$0xff] %vm3340, %v7262
        %7365 = vst.msk [vmem:[#allocation5 + $0x60] sm:$0xff] %vm3340, %v7264
        %7366 = vst.msk [vmem:[#allocation5 + $0x70] sm:$0xff] %vm3340, %v7266
        %7367 = vst.msk [vmem:[#allocation5 + $0x80] sm:$0xff] %vm3340, %v7268
        %7368 = vst.msk [vmem:[#allocation5 + $0x90] sm:$0xff] %vm3340, %v7270
        %7369 = vst.msk [vmem:[#allocation5 + $0xa0] sm:$0xff] %vm3340, %v7272
        %7370 = vst.msk [vmem:[#allocation5 + $0xb0] sm:$0xff] %vm3340, %v7274
        %7371 = vst.msk [vmem:[#allocation5 + $0xc0] sm:$0xff] %vm3340, %v7276
        %7372 = vst.msk [vmem:[#allocation5 + $0xd0] sm:$0xff] %vm3340, %v7278
        %7373 = vst.msk [vmem:[#allocation5 + $0xe0] sm:$0xff] %vm3340, %v7280
        %7374 = vst.msk [vmem:[#allocation5 + $0xf0] sm:$0xff] %vm3340, %v7282
        %7375 = vst.msk [vmem:[#allocation5 + $0x100] sm:$0xff] %vm3340, %v7284
        %7376 = vst.msk [vmem:[#allocation5 + $0x110] sm:$0xff] %vm3340, %v7286
        %7377 = vst.msk [vmem:[#allocation5 + $0x120] sm:$0xff] %vm3340, %v7288
        %7378 = vst.msk [vmem:[#allocation5 + $0x130] sm:$0xff] %vm3340, %v7290
        %7379 = vst.msk [vmem:[#allocation5 + $0x140] sm:$0xff] %vm3340, %v7292
        %7380 = vst.msk [vmem:[#allocation5 + $0x150] sm:$0xff] %vm3340, %v7294
        %7381 = vst.msk [vmem:[#allocation5 + $0x160] sm:$0xff] %vm3340, %v7296
        %7382 = vst.msk [vmem:[#allocation5 + $0x170] sm:$0xff] %vm3340, %v7298
        %7383 = vst.msk [vmem:[#allocation5 + $0x180] sm:$0xff] %vm3340, %v7300
        %7384 = vst.msk [vmem:[#allocation5 + $0x190] sm:$0xff] %vm3340, %v7302
        %7385 = vst.msk [vmem:[#allocation5 + $0x1a0] sm:$0xff] %vm3340, %v7304
        %7386 = vst.msk [vmem:[#allocation5 + $0x1b0] sm:$0xff] %vm3340, %v7306
        %7387 = vst.msk [vmem:[#allocation5 + $0x1c0] sm:$0xff] %vm3340, %v7308
        %7388 = vst.msk [vmem:[#allocation5 + $0x1d0] sm:$0xff] %vm3340, %v7310
        %7389 = vst.msk [vmem:[#allocation5 + $0x1e0] sm:$0xff] %vm3340, %v7312
        %7390 = vst.msk [vmem:[#allocation5 + $0x1f0] sm:$0xff] %vm3340, %v7314
        %7391 = vst.msk [vmem:[#allocation5 + $0x200] sm:$0xff] %vm3340, %v7316
        %7392 = vst.msk [vmem:[#allocation5 + $0x210] sm:$0xff] %vm3340, %v7318
        %7393 = vst.msk [vmem:[#allocation5 + $0x220] sm:$0xff] %vm3340, %v7320
        %7394 = vst.msk [vmem:[#allocation5 + $0x230] sm:$0xff] %vm3340, %v7322
        %v7395 = vrot.slane %v7017, 2
        %v7396 = vrot.slane %v7018, 2
        %v7397 = vsel %vm1245, %v7395, %v7396
        %v7398 = vrot.slane %v7019, 2
        %v7399 = vsel %vm1245, %v7396, %v7398
        %v7400 = vrot.slane %v7020, 2
        %v7401 = vrot.slane %v7021, 2
        %v7402 = vsel %vm1245, %v7400, %v7401
        %v7403 = vrot.slane %v7022, 2
        %v7404 = vsel %vm1245, %v7401, %v7403
        %v7405 = vrot.slane %v7023, 2
        %v7406 = vrot.slane %v7024, 2
        %v7407 = vsel %vm1245, %v7405, %v7406
        %v7408 = vrot.slane %v7025, 2
        %v7409 = vsel %vm1245, %v7406, %v7408
        %v7410 = vrot.slane %v7026, 2
        %v7411 = vrot.slane %v7027, 2
        %v7412 = vsel %vm1245, %v7410, %v7411
        %v7413 = vrot.slane %v7028, 2
        %v7414 = vsel %vm1245, %v7411, %v7413
        %v7415 = vrot.slane %v7029, 2
        %v7416 = vrot.slane %v7030, 2
        %v7417 = vsel %vm1245, %v7415, %v7416
        %v7418 = vrot.slane %v7031, 2
        %v7419 = vsel %vm1245, %v7416, %v7418
        %v7420 = vrot.slane %v7032, 2
        %v7421 = vrot.slane %v7033, 2
        %v7422 = vsel %vm1245, %v7420, %v7421
        %v7423 = vrot.slane %v7034, 2
        %v7424 = vsel %vm1245, %v7421, %v7423
        %v7425 = vrot.slane %v7035, 2
        %v7426 = vrot.slane %v7036, 2
        %v7427 = vsel %vm1245, %v7425, %v7426
        %v7428 = vrot.slane %v7037, 2
        %v7429 = vsel %vm1245, %v7426, %v7428
        %v7430 = vrot.slane %v7038, 2
        %v7431 = vrot.slane %v7039, 2
        %v7432 = vsel %vm1245, %v7430, %v7431
        %v7433 = vrot.slane %v7040, 2
        %v7434 = vsel %vm1245, %v7431, %v7433
        %v7435 = vrot.slane %v7041, 2
        %v7436 = vrot.slane %v7042, 2
        %v7437 = vsel %vm1245, %v7435, %v7436
        %v7438 = vrot.slane %v7043, 2
        %v7439 = vsel %vm1245, %v7436, %v7438
        %v7440 = vrot.slane %v7044, 2
        %v7441 = vrot.slane %v7045, 2
        %v7442 = vsel %vm1245, %v7440, %v7441
        %v7443 = vrot.slane %v7046, 2
        %v7444 = vsel %vm1245, %v7441, %v7443
        %v7445 = vrot.slane %v7047, 2
        %v7446 = vrot.slane %v7048, 2
        %v7447 = vsel %vm1245, %v7445, %v7446
        %v7448 = vrot.slane %v7049, 2
        %v7449 = vsel %vm1245, %v7446, %v7448
        %v7450 = vrot.slane %v7050, 2
        %v7451 = vrot.slane %v7051, 2
        %v7452 = vsel %vm1245, %v7450, %v7451
        %v7453 = vrot.slane %v7052, 2
        %v7454 = vsel %vm1245, %v7451, %v7453
        %v7455 = vrot.slane %v7053, 2
        %v7456 = vrot.slane %v7054, 2
        %v7457 = vsel %vm1245, %v7455, %v7456
        %v7458 = vrot.slane %v7055, 2
        %v7459 = vsel %vm1245, %v7456, %v7458
        %v7460 = vrot.slane %v7056, 2
        %v7461 = vrot.slane %v7057, 2
        %v7462 = vsel %vm1245, %v7460, %v7461
        %v7463 = vrot.slane %v7058, 2
        %v7464 = vsel %vm1245, %v7461, %v7463
        %v7465 = vrot.slane %v7059, 2
        %v7466 = vrot.slane %v7060, 2
        %v7467 = vsel %vm1245, %v7465, %v7466
        %v7468 = vrot.slane %v7061, 2
        %v7469 = vsel %vm1245, %v7466, %v7468
        %v7470 = vrot.slane %v7062, 2
        %v7471 = vrot.slane %v7063, 2
        %v7472 = vsel %vm1245, %v7470, %v7471
        %v7473 = vrot.slane %v7064, 2
        %v7474 = vsel %vm1245, %v7471, %v7473
        %v7475 = vrot.slane %v7065, 2
        %v7476 = vrot.slane %v7066, 2
        %v7477 = vsel %vm1245, %v7475, %v7476
        %v7478 = vrot.slane %v7067, 2
        %v7479 = vsel %vm1245, %v7476, %v7478
        %v7480 = vrot.slane %v7068, 2
        %v7481 = vrot.slane %v7069, 2
        %v7482 = vsel %vm1245, %v7480, %v7481
        %v7483 = vrot.slane %v7070, 2
        %v7484 = vsel %vm1245, %v7481, %v7483
        %7521 = vst.msk [vmem:[#allocation5 + $0x8] sm:$0xff] %vm294, %v7397
        %7522 = vst.msk [vmem:[#allocation5 + $0x18] sm:$0xff] %vm294, %v7399
        %7523 = vst.msk [vmem:[#allocation5 + $0x28] sm:$0xff] %vm294, %v7402
        %7524 = vst.msk [vmem:[#allocation5 + $0x38] sm:$0xff] %vm294, %v7404
        %7525 = vst.msk [vmem:[#allocation5 + $0x48] sm:$0xff] %vm294, %v7407
        %7526 = vst.msk [vmem:[#allocation5 + $0x58] sm:$0xff] %vm294, %v7409
        %7527 = vst.msk [vmem:[#allocation5 + $0x68] sm:$0xff] %vm294, %v7412
        %7528 = vst.msk [vmem:[#allocation5 + $0x78] sm:$0xff] %vm294, %v7414
        %7529 = vst.msk [vmem:[#allocation5 + $0x88] sm:$0xff] %vm294, %v7417
        %7530 = vst.msk [vmem:[#allocation5 + $0x98] sm:$0xff] %vm294, %v7419
        %7531 = vst.msk [vmem:[#allocation5 + $0xa8] sm:$0xff] %vm294, %v7422
        %7532 = vst.msk [vmem:[#allocation5 + $0xb8] sm:$0xff] %vm294, %v7424
        %7533 = vst.msk [vmem:[#allocation5 + $0xc8] sm:$0xff] %vm294, %v7427
        %7534 = vst.msk [vmem:[#allocation5 + $0xd8] sm:$0xff] %vm294, %v7429
        %7535 = vst.msk [vmem:[#allocation5 + $0xe8] sm:$0xff] %vm294, %v7432
        %7536 = vst.msk [vmem:[#allocation5 + $0xf8] sm:$0xff] %vm294, %v7434
        %7537 = vst.msk [vmem:[#allocation5 + $0x108] sm:$0xff] %vm294, %v7437
        %7538 = vst.msk [vmem:[#allocation5 + $0x118] sm:$0xff] %vm294, %v7439
        %7539 = vst.msk [vmem:[#allocation5 + $0x128] sm:$0xff] %vm294, %v7442
        %7540 = vst.msk [vmem:[#allocation5 + $0x138] sm:$0xff] %vm294, %v7444
        %7541 = vst.msk [vmem:[#allocation5 + $0x148] sm:$0xff] %vm294, %v7447
        %7542 = vst.msk [vmem:[#allocation5 + $0x158] sm:$0xff] %vm294, %v7449
        %7543 = vst.msk [vmem:[#allocation5 + $0x168] sm:$0xff] %vm294, %v7452
        %7544 = vst.msk [vmem:[#allocation5 + $0x178] sm:$0xff] %vm294, %v7454
        %7545 = vst.msk [vmem:[#allocation5 + $0x188] sm:$0xff] %vm294, %v7457
        %7546 = vst.msk [vmem:[#allocation5 + $0x198] sm:$0xff] %vm294, %v7459
        %7547 = vst.msk [vmem:[#allocation5 + $0x1a8] sm:$0xff] %vm294, %v7462
        %7548 = vst.msk [vmem:[#allocation5 + $0x1b8] sm:$0xff] %vm294, %v7464
        %7549 = vst.msk [vmem:[#allocation5 + $0x1c8] sm:$0xff] %vm294, %v7467
        %7550 = vst.msk [vmem:[#allocation5 + $0x1d8] sm:$0xff] %vm294, %v7469
        %7551 = vst.msk [vmem:[#allocation5 + $0x1e8] sm:$0xff] %vm294, %v7472
        %7552 = vst.msk [vmem:[#allocation5 + $0x1f8] sm:$0xff] %vm294, %v7474
        %7553 = vst.msk [vmem:[#allocation5 + $0x208] sm:$0xff] %vm294, %v7477
        %7554 = vst.msk [vmem:[#allocation5 + $0x218] sm:$0xff] %vm294, %v7479
        %7555 = vst.msk [vmem:[#allocation5 + $0x228] sm:$0xff] %vm294, %v7482
        %7556 = vst.msk [vmem:[#allocation5 + $0x238] sm:$0xff] %vm294, %v7484
        %v7557 = vlaneseq
        %v7558 = vshrl.u32 %v7557, 7
        %v7559 = vsub.s32 3, %v7558
        %v7560 = vrot.slane %v501, %v7559
        %v7561 = vld [vmem:[#allocation5] sm:$0xff]
        %v7562 = vld [vmem:[#allocation5 + $0x8] sm:$0xff]
        %v7563 = vld [vmem:[#allocation5 + $0x10] sm:$0xff]
        %v7564 = vld [vmem:[#allocation5 + $0x18] sm:$0xff]
        %v7565 = vld [vmem:[#allocation5 + $0x20] sm:$0xff]
        %v7566 = vld [vmem:[#allocation5 + $0x28] sm:$0xff]
        %v7567 = vld [vmem:[#allocation5 + $0x30] sm:$0xff]
        %v7568 = vld [vmem:[#allocation5 + $0x38] sm:$0xff]
        %v7569 = vld [vmem:[#allocation5 + $0x40] sm:$0xff]
        %v7570 = vld [vmem:[#allocation5 + $0x48] sm:$0xff]
        %v7571 = vld [vmem:[#allocation5 + $0x50] sm:$0xff]
        %v7572 = vld [vmem:[#allocation5 + $0x58] sm:$0xff]
        %v7573 = vld [vmem:[#allocation5 + $0x60] sm:$0xff]
        %v7574 = vld [vmem:[#allocation5 + $0x68] sm:$0xff]
        %v7575 = vld [vmem:[#allocation5 + $0x70] sm:$0xff]
        %v7576 = vld [vmem:[#allocation5 + $0x78] sm:$0xff]
        %v7577 = vld [vmem:[#allocation5 + $0x80] sm:$0xff]
        %v7578 = vld [vmem:[#allocation5 + $0x88] sm:$0xff]
        %v7579 = vld [vmem:[#allocation5 + $0x90] sm:$0xff]
        %v7580 = vld [vmem:[#allocation5 + $0x98] sm:$0xff]
        %v7581 = vld [vmem:[#allocation5 + $0xa0] sm:$0xff]
        %v7582 = vld [vmem:[#allocation5 + $0xa8] sm:$0xff]
        %v7583 = vld [vmem:[#allocation5 + $0xb0] sm:$0xff]
        %v7584 = vld [vmem:[#allocation5 + $0xb8] sm:$0xff]
        %v7585 = vld [vmem:[#allocation5 + $0xc0] sm:$0xff]
        %v7586 = vld [vmem:[#allocation5 + $0xc8] sm:$0xff]
        %v7587 = vld [vmem:[#allocation5 + $0xd0] sm:$0xff]
        %v7588 = vld [vmem:[#allocation5 + $0xd8] sm:$0xff]
        %v7589 = vld [vmem:[#allocation5 + $0xe0] sm:$0xff]
        %v7590 = vld [vmem:[#allocation5 + $0xe8] sm:$0xff]
        %v7591 = vld [vmem:[#allocation5 + $0xf0] sm:$0xff]
        %v7592 = vld [vmem:[#allocation5 + $0xf8] sm:$0xff]
        %v7593 = vld [vmem:[#allocation5 + $0x100] sm:$0xff]
        %v7594 = vld [vmem:[#allocation5 + $0x108] sm:$0xff]
        %v7595 = vld [vmem:[#allocation5 + $0x110] sm:$0xff]
        %v7596 = vld [vmem:[#allocation5 + $0x118] sm:$0xff]
        %v7597 = vld [vmem:[#allocation5 + $0x120] sm:$0xff]
        %v7598 = vld [vmem:[#allocation5 + $0x128] sm:$0xff]
        %v7599 = vld [vmem:[#allocation5 + $0x130] sm:$0xff]
        %v7600 = vld [vmem:[#allocation5 + $0x138] sm:$0xff]
        %v7601 = vld [vmem:[#allocation5 + $0x140] sm:$0xff]
        %v7602 = vld [vmem:[#allocation5 + $0x148] sm:$0xff]
        %v7603 = vld [vmem:[#allocation5 + $0x150] sm:$0xff]
        %v7604 = vld [vmem:[#allocation5 + $0x158] sm:$0xff]
        %v7605 = vld [vmem:[#allocation5 + $0x160] sm:$0xff]
        %v7606 = vld [vmem:[#allocation5 + $0x168] sm:$0xff]
        %v7607 = vld [vmem:[#allocation5 + $0x170] sm:$0xff]
        %v7608 = vld [vmem:[#allocation5 + $0x178] sm:$0xff]
        %v7609 = vld [vmem:[#allocation5 + $0x180] sm:$0xff]
        %v7610 = vld [vmem:[#allocation5 + $0x188] sm:$0xff]
        %v7611 = vld [vmem:[#allocation5 + $0x190] sm:$0xff]
        %v7612 = vld [vmem:[#allocation5 + $0x198] sm:$0xff]
        %v7613 = vld [vmem:[#allocation5 + $0x1a0] sm:$0xff]
        %v7614 = vld [vmem:[#allocation5 + $0x1a8] sm:$0xff]
        %v7615 = vld [vmem:[#allocation5 + $0x1b0] sm:$0xff]
        %v7616 = vld [vmem:[#allocation5 + $0x1b8] sm:$0xff]
        %v7617 = vld [vmem:[#allocation5 + $0x1c0] sm:$0xff]
        %v7618 = vld [vmem:[#allocation5 + $0x1c8] sm:$0xff]
        %v7619 = vld [vmem:[#allocation5 + $0x1d0] sm:$0xff]
        %v7620 = vld [vmem:[#allocation5 + $0x1d8] sm:$0xff]
        %v7621 = vld [vmem:[#allocation5 + $0x1e0] sm:$0xff]
        %v7622 = vld [vmem:[#allocation5 + $0x1e8] sm:$0xff]
        %v7623 = vld [vmem:[#allocation5 + $0x1f0] sm:$0xff]
        %v7624 = vld [vmem:[#allocation5 + $0x1f8] sm:$0xff]
        %v7625 = vpack.c.bf16 %v7563, %v7561
        %v7626 = vpack.c.bf16 %v7564, %v7562
        %v7627 = vpack.c.bf16 %v7567, %v7565
        %v7628 = vpack.c.bf16 %v7568, %v7566
        %v7629 = vpack.c.bf16 %v7571, %v7569
        %v7630 = vpack.c.bf16 %v7572, %v7570
        %v7631 = vpack.c.bf16 %v7575, %v7573
        %v7632 = vpack.c.bf16 %v7576, %v7574
        %v7633 = vpack.c.bf16 %v7579, %v7577
        %v7634 = vpack.c.bf16 %v7580, %v7578
        %v7635 = vpack.c.bf16 %v7583, %v7581
        %v7636 = vpack.c.bf16 %v7584, %v7582
        %v7637 = vpack.c.bf16 %v7587, %v7585
        %v7638 = vpack.c.bf16 %v7588, %v7586
        %v7639 = vpack.c.bf16 %v7591, %v7589
        %v7640 = vpack.c.bf16 %v7592, %v7590
        %v7641 = vpack.c.bf16 %v7595, %v7593
        %v7642 = vpack.c.bf16 %v7596, %v7594
        %v7643 = vpack.c.bf16 %v7599, %v7597
        %v7644 = vpack.c.bf16 %v7600, %v7598
        %v7645 = vpack.c.bf16 %v7603, %v7601
        %v7646 = vpack.c.bf16 %v7604, %v7602
        %v7647 = vpack.c.bf16 %v7607, %v7605
        %v7648 = vpack.c.bf16 %v7608, %v7606
        %v7649 = vpack.c.bf16 %v7611, %v7609
        %v7650 = vpack.c.bf16 %v7612, %v7610
        %v7651 = vpack.c.bf16 %v7615, %v7613
        %v7652 = vpack.c.bf16 %v7616, %v7614
        %v7653 = vpack.c.bf16 %v7619, %v7617
        %v7654 = vpack.c.bf16 %v7620, %v7618
        %v7655 = vpack.c.bf16 %v7623, %v7621
        %v7656 = vpack.c.bf16 %v7624, %v7622
        %s7657 = scalar_lea.vmem %s2, 576
        %v7658 = vld [vmem:[%s7657] sm:$0xf]
        %v7659 = vld [vmem:[%s7657 + $0x4] sm:$0xf]
        %v7660 = vld [vmem:[%s7657 + $0x8] sm:$0xf]
        %v7661 = vld [vmem:[%s7657 + $0xc] sm:$0xf]
        %v7662 = vld [vmem:[%s7657 + $0x10] sm:$0xf]
        %v7663 = vld [vmem:[%s7657 + $0x14] sm:$0xf]
        %v7664 = vld [vmem:[%s7657 + $0x18] sm:$0xf]
        %v7665 = vld [vmem:[%s7657 + $0x1c] sm:$0xf]
        %v7666 = vld [vmem:[%s7657 + $0x20] sm:$0xf]
        %v7667 = vld [vmem:[%s7657 + $0x24] sm:$0xf]
        %v7668 = vld [vmem:[%s7657 + $0x28] sm:$0xf]
        %v7669 = vld [vmem:[%s7657 + $0x2c] sm:$0xf]
        %v7670 = vld [vmem:[%s7657 + $0x30] sm:$0xf]
        %v7671 = vld [vmem:[%s7657 + $0x34] sm:$0xf]
        %v7672 = vld [vmem:[%s7657 + $0x38] sm:$0xf]
        %v7673 = vld [vmem:[%s7657 + $0x3c] sm:$0xf]
        %v7674 = vld [vmem:[%s7657 + $0x40] sm:$0xf]
        %v7675 = vld [vmem:[%s7657 + $0x44] sm:$0xf]
        %v7676 = vld [vmem:[%s7657 + $0x48] sm:$0xf]
        %v7677 = vld [vmem:[%s7657 + $0x4c] sm:$0xf]
        %v7678 = vld [vmem:[%s7657 + $0x50] sm:$0xf]
        %v7679 = vld [vmem:[%s7657 + $0x54] sm:$0xf]
        %v7680 = vld [vmem:[%s7657 + $0x58] sm:$0xf]
        %v7681 = vld [vmem:[%s7657 + $0x5c] sm:$0xf]
        %v7706 = vunpack.c.l.b16 %v7658
        %v7707 = vunpack.c.l.b16 %v7659
        %v7708 = vunpack.c.l.b16 %v7660
        %v7709 = vunpack.c.l.b16 %v7661
        %v7710 = vunpack.c.l.b16 %v7662
        %v7711 = vunpack.c.l.b16 %v7663
        %v7712 = vunpack.c.l.b16 %v7664
        %v7713 = vunpack.c.l.b16 %v7665
        %v7714 = vunpack.c.l.b16 %v7666
        %v7715 = vunpack.c.l.b16 %v7667
        %v7716 = vunpack.c.l.b16 %v7668
        %v7717 = vunpack.c.l.b16 %v7669
        %v7718 = vunpack.c.l.b16 %v7670
        %v7719 = vunpack.c.l.b16 %v7671
        %v7720 = vunpack.c.l.b16 %v7672
        %v7721 = vunpack.c.l.b16 %v7673
        %v7722 = vunpack.c.l.b16 %v7674
        %v7723 = vunpack.c.l.b16 %v7675
        %v7724 = vunpack.c.l.b16 %v7676
        %v7725 = vunpack.c.l.b16 %v7677
        %v7726 = vunpack.c.l.b16 %v7678
        %v7727 = vunpack.c.l.b16 %v7679
        %v7728 = vunpack.c.l.b16 %v7680
        %v7729 = vunpack.c.l.b16 %v7681
        %v7730 = vpack.c.b16 %v7707, %v7706
        %v7731 = vpack.c.b16 %v7709, %v7708
        %v7732 = vpack.c.b16 %v7711, %v7710
        %v7733 = vpack.c.b16 %v7713, %v7712
        %v7734 = vpack.c.b16 %v7715, %v7714
        %v7735 = vpack.c.b16 %v7717, %v7716
        %v7736 = vpack.c.b16 %v7719, %v7718
        %v7737 = vpack.c.b16 %v7721, %v7720
        %v7738 = vpack.c.b16 %v7723, %v7722
        %v7739 = vpack.c.b16 %v7725, %v7724
        %v7740 = vpack.c.b16 %v7727, %v7726
        %v7741 = vpack.c.b16 %v7729, %v7728
        %v7755 = vsel %vm294, %v7626, 0
        %v7758 = vsel %vm294, %v7628, 0
        %v7761 = vsel %vm294, %v7630, 0
        %v7764 = vsel %vm294, %v7632, 0
        %v7767 = vsel %vm294, %v7634, 0
        %v7770 = vsel %vm294, %v7636, 0
        %v7773 = vsel %vm294, %v7638, 0
        %v7776 = vsel %vm294, %v7640, 0
        %v7779 = vsel %vm294, %v7642, 0
        %v7782 = vsel %vm294, %v7644, 0
        %v7785 = vsel %vm294, %v7646, 0
        %v7788 = vsel %vm294, %v7648, 0
        %v7791 = vsel %vm294, %v7650, 0
        %v7794 = vsel %vm294, %v7652, 0
        %v7797 = vsel %vm294, %v7654, 0
        %v7800 = vsel %vm294, %v7656, 0
        %7802 = vmatprep.subr.bf16.mxu0 0
        %7803 = vmatpush1.bf16.msra.mxu0 %v7730
        %7804 = vmatprep.subr.bf16.mxu0 0
        %7805 = vmatpush1.bf16.msra.mxu0 %v7731
        %7806 = vmatprep.subr.bf16.mxu0 0
        %7807 = vmatpush1.bf16.msra.mxu0 %v7732
        %7808 = vmatprep.subr.bf16.mxu0 0
        %7809 = vmatpush1.bf16.msra.mxu0 %v7733
        %7810 = vmatprep.subr.bf16.mxu0 0
        %7811 = vmatpush1.bf16.msra.mxu0 %v7734
        %7812 = vmatprep.subr.bf16.mxu0 0
        %7813 = vmatpush1.bf16.msra.mxu0 %v7735
        %7814 = vmatprep.subr.bf16.mxu0 0
        %7815 = vmatpush1.bf16.msra.mxu0 %v7736
        %7816 = vmatprep.subr.bf16.mxu0 0
        %7817 = vmatpush1.bf16.msra.mxu0 %v7737
        %7818 = vmatprep.subr.bf16.mxu0 0
        %7819 = vmatpush1.bf16.msra.mxu0 %v7738
        %7820 = vmatprep.subr.bf16.mxu0 0
        %7821 = vmatpush1.bf16.msra.mxu0 %v7739
        %7822 = vmatprep.subr.bf16.mxu0 0
        %7823 = vmatpush1.bf16.msra.mxu0 %v7740
        %7824 = vmatprep.subr.bf16.mxu0 0
        %7825 = vmatpush1.bf16.msra.mxu0 %v7741
        %7826 = vmatprep.subr.bf16.mxu0 0
        %7827 = vmatpush1.bf16.msra.mxu0 0
        %7828 = vmatprep.subr.bf16.mxu0 0
        %7829 = vmatpush1.bf16.msra.mxu0 0
        %7830 = vmatprep.subr.bf16.mxu0 0
        %7831 = vmatpush1.bf16.msra.mxu0 0
        %7832 = vmatprep.subr.bf16.mxu0 0
        %7833 = vmatpush1.bf16.msra.mxu0 0
        %7834 = vmatprep.mubr.bf16.mxu0 %v7755
        %7835 = vmatmul.mubr.bf16.gmra.mrb[0].mxu0 %v7625
        %v7836 = vpop.f32.mrb[0].mxu0
        %v7837 = vadd.f32 0.0, %v7836
        %v7838 = vpop.f32.mrb[0].mxu0
        %v7839 = vpop.f32.mrb[0].mxu0
        %v7840 = vadd.f32 0.0, %v7839
        %v7841 = vpop.f32.mrb[0].mxu0
        %7842 = vmatprep.mubr.bf16.mxu0 %v7758
        %7843 = vmatmul.mubr.bf16.gmra.mrb[0].mxu0 %v7627
        %v7844 = vpop.f32.mrb[0].mxu0
        %v7845 = vadd.f32 0.0, %v7844
        %v7846 = vpop.f32.mrb[0].mxu0
        %v7847 = vpop.f32.mrb[0].mxu0
        %v7848 = vadd.f32 0.0, %v7847
        %v7849 = vpop.f32.mrb[0].mxu0
        %7850 = vmatprep.mubr.bf16.mxu0 %v7761
        %7851 = vmatmul.mubr.bf16.gmra.mrb[0].mxu0 %v7629
        %v7852 = vpop.f32.mrb[0].mxu0
        %v7853 = vadd.f32 0.0, %v7852
        %v7854 = vpop.f32.mrb[0].mxu0
        %v7855 = vpop.f32.mrb[0].mxu0
        %v7856 = vadd.f32 0.0, %v7855
        %v7857 = vpop.f32.mrb[0].mxu0
        %7858 = vmatprep.mubr.bf16.mxu0 %v7764
        %7859 = vmatmul.mubr.bf16.gmra.mrb[0].mxu0 %v7631
        %v7860 = vpop.f32.mrb[0].mxu0
        %v7861 = vadd.f32 0.0, %v7860
        %v7862 = vpop.f32.mrb[0].mxu0
        %v7863 = vpop.f32.mrb[0].mxu0
        %v7864 = vadd.f32 0.0, %v7863
        %v7865 = vpop.f32.mrb[0].mxu0
        %7866 = vmatprep.mubr.bf16.mxu0 %v7767
        %7867 = vmatmul.mubr.bf16.gmra.mrb[0].mxu0 %v7633
        %v7868 = vpop.f32.mrb[0].mxu0
        %v7869 = vadd.f32 0.0, %v7868
        %v7870 = vpop.f32.mrb[0].mxu0
        %v7871 = vpop.f32.mrb[0].mxu0
        %v7872 = vadd.f32 0.0, %v7871
        %v7873 = vpop.f32.mrb[0].mxu0
        %7874 = vmatprep.mubr.bf16.mxu0 %v7770
        %7875 = vmatmul.mubr.bf16.gmra.mrb[0].mxu0 %v7635
        %v7876 = vpop.f32.mrb[0].mxu0
        %v7877 = vadd.f32 0.0, %v7876
        %v7878 = vpop.f32.mrb[0].mxu0
        %v7879 = vpop.f32.mrb[0].mxu0
        %v7880 = vadd.f32 0.0, %v7879
        %v7881 = vpop.f32.mrb[0].mxu0
        %7882 = vmatprep.mubr.bf16.mxu0 %v7773
        %7883 = vmatmul.mubr.bf16.gmra.mrb[0].mxu0 %v7637
        %v7884 = vpop.f32.mrb[0].mxu0
        %v7885 = vadd.f32 0.0, %v7884
        %v7886 = vpop.f32.mrb[0].mxu0
        %v7887 = vpop.f32.mrb[0].mxu0
        %v7888 = vadd.f32 0.0, %v7887
        %v7889 = vpop.f32.mrb[0].mxu0
        %7890 = vmatprep.mubr.bf16.mxu0 %v7776
        %7891 = vmatmul.mubr.bf16.gmra.mrb[0].mxu0 %v7639
        %v7892 = vpop.f32.mrb[0].mxu0
        %v7893 = vadd.f32 0.0, %v7892
        %v7894 = vpop.f32.mrb[0].mxu0
        %v7895 = vpop.f32.mrb[0].mxu0
        %v7896 = vadd.f32 0.0, %v7895
        %v7897 = vpop.f32.mrb[0].mxu0
        %7898 = vmatprep.mubr.bf16.mxu0 %v7779
        %7899 = vmatmul.mubr.bf16.gmra.mrb[0].mxu0 %v7641
        %v7900 = vpop.f32.mrb[0].mxu0
        %v7901 = vadd.f32 0.0, %v7900
        %v7902 = vpop.f32.mrb[0].mxu0
        %v7903 = vpop.f32.mrb[0].mxu0
        %v7904 = vadd.f32 0.0, %v7903
        %v7905 = vpop.f32.mrb[0].mxu0
        %7906 = vmatprep.mubr.bf16.mxu0 %v7782
        %7907 = vmatmul.mubr.bf16.gmra.mrb[0].mxu0 %v7643
        %v7908 = vpop.f32.mrb[0].mxu0
        %v7909 = vadd.f32 0.0, %v7908
        %v7910 = vpop.f32.mrb[0].mxu0
        %v7911 = vpop.f32.mrb[0].mxu0
        %v7912 = vadd.f32 0.0, %v7911
        %v7913 = vpop.f32.mrb[0].mxu0
        %7914 = vmatprep.mubr.bf16.mxu0 %v7785
        %7915 = vmatmul.mubr.bf16.gmra.mrb[0].mxu0 %v7645
        %v7916 = vpop.f32.mrb[0].mxu0
        %v7917 = vadd.f32 0.0, %v7916
        %v7918 = vpop.f32.mrb[0].mxu0
        %v7919 = vpop.f32.mrb[0].mxu0
        %v7920 = vadd.f32 0.0, %v7919
        %v7921 = vpop.f32.mrb[0].mxu0
        %7922 = vmatprep.mubr.bf16.mxu0 %v7788
        %7923 = vmatmul.mubr.bf16.gmra.mrb[0].mxu0 %v7647
        %v7924 = vpop.f32.mrb[0].mxu0
        %v7925 = vadd.f32 0.0, %v7924
        %v7926 = vpop.f32.mrb[0].mxu0
        %v7927 = vpop.f32.mrb[0].mxu0
        %v7928 = vadd.f32 0.0, %v7927
        %v7929 = vpop.f32.mrb[0].mxu0
        %7930 = vmatprep.mubr.bf16.mxu0 %v7791
        %7931 = vmatmul.mubr.bf16.gmra.mrb[0].mxu0 %v7649
        %v7932 = vpop.f32.mrb[0].mxu0
        %v7933 = vadd.f32 0.0, %v7932
        %v7934 = vpop.f32.mrb[0].mxu0
        %v7935 = vpop.f32.mrb[0].mxu0
        %v7936 = vadd.f32 0.0, %v7935
        %v7937 = vpop.f32.mrb[0].mxu0
        %7938 = vmatprep.mubr.bf16.mxu0 %v7794
        %7939 = vmatmul.mubr.bf16.gmra.mrb[0].mxu0 %v7651
        %v7940 = vpop.f32.mrb[0].mxu0
        %v7941 = vadd.f32 0.0, %v7940
        %v7942 = vpop.f32.mrb[0].mxu0
        %v7943 = vpop.f32.mrb[0].mxu0
        %v7944 = vadd.f32 0.0, %v7943
        %v7945 = vpop.f32.mrb[0].mxu0
        %7946 = vmatprep.mubr.bf16.mxu0 %v7797
        %7947 = vmatmul.mubr.bf16.gmra.mrb[0].mxu0 %v7653
        %v7948 = vpop.f32.mrb[0].mxu0
        %v7949 = vadd.f32 0.0, %v7948
        %v7950 = vpop.f32.mrb[0].mxu0
        %v7951 = vpop.f32.mrb[0].mxu0
        %v7952 = vadd.f32 0.0, %v7951
        %v7953 = vpop.f32.mrb[0].mxu0
        %7954 = vmatprep.mubr.bf16.mxu0 %v7800
        %7955 = vmatmul.mubr.bf16.gmra.mrb[0].mxu0 %v7655
        %v7956 = vpop.f32.mrb[0].mxu0
        %v7957 = vadd.f32 0.0, %v7956
        %v7958 = vpop.f32.mrb[0].mxu0
        %v7959 = vpop.f32.mrb[0].mxu0
        %v7960 = vadd.f32 0.0, %v7959
        %v7961 = vpop.f32.mrb[0].mxu0
        %7962 = vdwg.mxu0
        %v7963 = vadd.f32 %v7560, %v7837
        %v7964 = vadd.f32 %v7560, %v7840
        %v7965 = vadd.f32 %v7560, %v7845
        %v7966 = vadd.f32 %v7560, %v7848
        %v7967 = vadd.f32 %v7560, %v7853
        %v7968 = vadd.f32 %v7560, %v7856
        %v7969 = vadd.f32 %v7560, %v7861
        %v7970 = vadd.f32 %v7560, %v7864
        %v7971 = vadd.f32 %v7560, %v7869
        %v7972 = vadd.f32 %v7560, %v7872
        %v7973 = vadd.f32 %v7560, %v7877
        %v7974 = vadd.f32 %v7560, %v7880
        %v7975 = vadd.f32 %v7560, %v7885
        %v7976 = vadd.f32 %v7560, %v7888
        %v7977 = vadd.f32 %v7560, %v7893
        %v7978 = vadd.f32 %v7560, %v7896
        %v7979 = vadd.f32 %v7560, %v7901
        %v7980 = vadd.f32 %v7560, %v7904
        %v7981 = vadd.f32 %v7560, %v7909
        %v7982 = vadd.f32 %v7560, %v7912
        %v7983 = vadd.f32 %v7560, %v7917
        %v7984 = vadd.f32 %v7560, %v7920
        %v7985 = vadd.f32 %v7560, %v7925
        %v7986 = vadd.f32 %v7560, %v7928
        %v7987 = vadd.f32 %v7560, %v7933
        %v7988 = vadd.f32 %v7560, %v7936
        %v7989 = vadd.f32 %v7560, %v7941
        %v7990 = vadd.f32 %v7560, %v7944
        %v7991 = vadd.f32 %v7560, %v7949
        %v7992 = vadd.f32 %v7560, %v7952
        %v7993 = vadd.f32 %v7560, %v7957
        %v7994 = vadd.f32 %v7560, %v7960
        %v7995 = vld [vmem:[%s3976] sm:$0xff]
        %v7996 = vld [vmem:[%s3976 + $0x8] sm:$0xff]
        %v7997 = vld [vmem:[%s3976 + $0x10] sm:$0xff]
        %v7998 = vld [vmem:[%s3976 + $0x18] sm:$0xff]
        %v7999 = vld [vmem:[%s3976 + $0x20] sm:$0xff]
        %v8000 = vld [vmem:[%s3976 + $0x28] sm:$0xff]
        %v8001 = vld [vmem:[%s3976 + $0x30] sm:$0xff]
        %v8002 = vld [vmem:[%s3976 + $0x38] sm:$0xff]
        %v8003 = vld [vmem:[%s3976 + $0x40] sm:$0xff]
        %v8004 = vld [vmem:[%s3976 + $0x48] sm:$0xff]
        %v8005 = vld [vmem:[%s3976 + $0x50] sm:$0xff]
        %v8006 = vld [vmem:[%s3976 + $0x58] sm:$0xff]
        %v8007 = vld [vmem:[%s3976 + $0x60] sm:$0xff]
        %v8008 = vld [vmem:[%s3976 + $0x68] sm:$0xff]
        %v8009 = vld [vmem:[%s3976 + $0x70] sm:$0xff]
        %v8010 = vld [vmem:[%s3976 + $0x78] sm:$0xff]
        %v8011 = vld [vmem:[%s3976 + $0x80] sm:$0xff]
        %v8012 = vld [vmem:[%s3976 + $0x88] sm:$0xff]
        %v8013 = vld [vmem:[%s3976 + $0x90] sm:$0xff]
        %v8014 = vld [vmem:[%s3976 + $0x98] sm:$0xff]
        %v8015 = vld [vmem:[%s3976 + $0xa0] sm:$0xff]
        %v8016 = vld [vmem:[%s3976 + $0xa8] sm:$0xff]
        %v8017 = vld [vmem:[%s3976 + $0xb0] sm:$0xff]
        %v8018 = vld [vmem:[%s3976 + $0xb8] sm:$0xff]
        %v8019 = vld [vmem:[%s3976 + $0xc0] sm:$0xff]
        %v8020 = vld [vmem:[%s3976 + $0xc8] sm:$0xff]
        %v8021 = vld [vmem:[%s3976 + $0xd0] sm:$0xff]
        %v8022 = vld [vmem:[%s3976 + $0xd8] sm:$0xff]
        %v8023 = vld [vmem:[%s3976 + $0xe0] sm:$0xff]
        %v8024 = vld [vmem:[%s3976 + $0xe8] sm:$0xff]
        %v8025 = vld [vmem:[%s3976 + $0xf0] sm:$0xff]
        %v8026 = vld [vmem:[%s3976 + $0xf8] sm:$0xff]
        %v8027 = vld [vmem:[%s3976 + $0x100] sm:$0xff]
        %v8028 = vld [vmem:[%s3976 + $0x108] sm:$0xff]
        %v8029 = vld [vmem:[%s3976 + $0x110] sm:$0xff]
        %v8030 = vld [vmem:[%s3976 + $0x118] sm:$0xff]
        %v8031 = vld [vmem:[%s3976 + $0x120] sm:$0xff]
        %v8032 = vld [vmem:[%s3976 + $0x128] sm:$0xff]
        %v8033 = vld [vmem:[%s3976 + $0x130] sm:$0xff]
        %v8034 = vld [vmem:[%s3976 + $0x138] sm:$0xff]
        %v8035 = vld [vmem:[%s3976 + $0x140] sm:$0xff]
        %v8036 = vld [vmem:[%s3976 + $0x148] sm:$0xff]
        %v8037 = vld [vmem:[%s3976 + $0x150] sm:$0xff]
        %v8038 = vld [vmem:[%s3976 + $0x158] sm:$0xff]
        %v8039 = vld [vmem:[%s3976 + $0x160] sm:$0xff]
        %v8040 = vld [vmem:[%s3976 + $0x168] sm:$0xff]
        %v8041 = vld [vmem:[%s3976 + $0x170] sm:$0xff]
        %v8042 = vld [vmem:[%s3976 + $0x178] sm:$0xff]
        %v8043 = vld [vmem:[%s3976 + $0x180] sm:$0xff]
        %v8044 = vld [vmem:[%s3976 + $0x188] sm:$0xff]
        %v8045 = vld [vmem:[%s3976 + $0x190] sm:$0xff]
        %v8046 = vld [vmem:[%s3976 + $0x198] sm:$0xff]
        %v8047 = vld [vmem:[%s3976 + $0x1a0] sm:$0xff]
        %v8048 = vld [vmem:[%s3976 + $0x1a8] sm:$0xff]
        %v8049 = vld [vmem:[%s3976 + $0x1b0] sm:$0xff]
        %v8050 = vld [vmem:[%s3976 + $0x1b8] sm:$0xff]
        %v8051 = vld [vmem:[%s3976 + $0x1c0] sm:$0xff]
        %v8052 = vld [vmem:[%s3976 + $0x1c8] sm:$0xff]
        %v8053 = vld [vmem:[%s3976 + $0x1d0] sm:$0xff]
        %v8054 = vld [vmem:[%s3976 + $0x1d8] sm:$0xff]
        %v8055 = vld [vmem:[%s3976 + $0x1e0] sm:$0xff]
        %v8056 = vld [vmem:[%s3976 + $0x1e8] sm:$0xff]
        %v8057 = vld [vmem:[%s3976 + $0x1f0] sm:$0xff]
        %v8058 = vld [vmem:[%s3976 + $0x1f8] sm:$0xff]
        %v8059 = vpack.c.bf16 %v7997, %v7995
        %v8060 = vpack.c.bf16 %v7998, %v7996
        %v8061 = vpack.c.bf16 %v8001, %v7999
        %v8062 = vpack.c.bf16 %v8002, %v8000
        %v8063 = vpack.c.bf16 %v8005, %v8003
        %v8064 = vpack.c.bf16 %v8006, %v8004
        %v8065 = vpack.c.bf16 %v8009, %v8007
        %v8066 = vpack.c.bf16 %v8010, %v8008
        %v8067 = vpack.c.bf16 %v8013, %v8011
        %v8068 = vpack.c.bf16 %v8014, %v8012
        %v8069 = vpack.c.bf16 %v8017, %v8015
        %v8070 = vpack.c.bf16 %v8018, %v8016
        %v8071 = vpack.c.bf16 %v8021, %v8019
        %v8072 = vpack.c.bf16 %v8022, %v8020
        %v8073 = vpack.c.bf16 %v8025, %v8023
        %v8074 = vpack.c.bf16 %v8026, %v8024
        %v8075 = vpack.c.bf16 %v8029, %v8027
        %v8076 = vpack.c.bf16 %v8030, %v8028
        %v8077 = vpack.c.bf16 %v8033, %v8031
        %v8078 = vpack.c.bf16 %v8034, %v8032
        %v8079 = vpack.c.bf16 %v8037, %v8035
        %v8080 = vpack.c.bf16 %v8038, %v8036
        %v8081 = vpack.c.bf16 %v8041, %v8039
        %v8082 = vpack.c.bf16 %v8042, %v8040
        %v8083 = vpack.c.bf16 %v8045, %v8043
        %v8084 = vpack.c.bf16 %v8046, %v8044
        %v8085 = vpack.c.bf16 %v8049, %v8047
        %v8086 = vpack.c.bf16 %v8050, %v8048
        %v8087 = vpack.c.bf16 %v8053, %v8051
        %v8088 = vpack.c.bf16 %v8054, %v8052
        %v8089 = vpack.c.bf16 %v8057, %v8055
        %v8090 = vpack.c.bf16 %v8058, %v8056
        %s8091 = scalar_lea.vmem %s2, 672
        %v8092 = vld [vmem:[%s8091] sm:$0xf]
        %v8093 = vld [vmem:[%s8091 + $0x4] sm:$0xf]
        %v8094 = vld [vmem:[%s8091 + $0x8] sm:$0xf]
        %v8095 = vld [vmem:[%s8091 + $0xc] sm:$0xf]
        %v8096 = vld [vmem:[%s8091 + $0x10] sm:$0xf]
        %v8097 = vld [vmem:[%s8091 + $0x14] sm:$0xf]
        %v8098 = vld [vmem:[%s8091 + $0x18] sm:$0xf]
        %v8099 = vld [vmem:[%s8091 + $0x1c] sm:$0xf]
        %v8100 = vld [vmem:[%s8091 + $0x20] sm:$0xf]
        %v8101 = vld [vmem:[%s8091 + $0x24] sm:$0xf]
        %v8102 = vld [vmem:[%s8091 + $0x28] sm:$0xf]
        %v8103 = vld [vmem:[%s8091 + $0x2c] sm:$0xf]
        %v8104 = vld [vmem:[%s8091 + $0x30] sm:$0xf]
        %v8105 = vld [vmem:[%s8091 + $0x34] sm:$0xf]
        %v8106 = vld [vmem:[%s8091 + $0x38] sm:$0xf]
        %v8107 = vld [vmem:[%s8091 + $0x3c] sm:$0xf]
        %v8108 = vld [vmem:[%s8091 + $0x40] sm:$0xf]
        %v8109 = vld [vmem:[%s8091 + $0x44] sm:$0xf]
        %v8110 = vld [vmem:[%s8091 + $0x48] sm:$0xf]
        %v8111 = vld [vmem:[%s8091 + $0x4c] sm:$0xf]
        %v8112 = vld [vmem:[%s8091 + $0x50] sm:$0xf]
        %v8113 = vld [vmem:[%s8091 + $0x54] sm:$0xf]
        %v8114 = vld [vmem:[%s8091 + $0x58] sm:$0xf]
        %v8115 = vld [vmem:[%s8091 + $0x5c] sm:$0xf]
        %v8140 = vunpack.c.l.b16 %v8092
        %v8141 = vunpack.c.l.b16 %v8093
        %v8142 = vunpack.c.l.b16 %v8094
        %v8143 = vunpack.c.l.b16 %v8095
        %v8144 = vunpack.c.l.b16 %v8096
        %v8145 = vunpack.c.l.b16 %v8097
        %v8146 = vunpack.c.l.b16 %v8098
        %v8147 = vunpack.c.l.b16 %v8099
        %v8148 = vunpack.c.l.b16 %v8100
        %v8149 = vunpack.c.l.b16 %v8101
        %v8150 = vunpack.c.l.b16 %v8102
        %v8151 = vunpack.c.l.b16 %v8103
        %v8152 = vunpack.c.l.b16 %v8104
        %v8153 = vunpack.c.l.b16 %v8105
        %v8154 = vunpack.c.l.b16 %v8106
        %v8155 = vunpack.c.l.b16 %v8107
        %v8156 = vunpack.c.l.b16 %v8108
        %v8157 = vunpack.c.l.b16 %v8109
        %v8158 = vunpack.c.l.b16 %v8110
        %v8159 = vunpack.c.l.b16 %v8111
        %v8160 = vunpack.c.l.b16 %v8112
        %v8161 = vunpack.c.l.b16 %v8113
        %v8162 = vunpack.c.l.b16 %v8114
        %v8163 = vunpack.c.l.b16 %v8115
        %v8164 = vpack.c.b16 %v8141, %v8140
        %v8165 = vpack.c.b16 %v8143, %v8142
        %v8166 = vpack.c.b16 %v8145, %v8144
        %v8167 = vpack.c.b16 %v8147, %v8146
        %v8168 = vpack.c.b16 %v8149, %v8148
        %v8169 = vpack.c.b16 %v8151, %v8150
        %v8170 = vpack.c.b16 %v8153, %v8152
        %v8171 = vpack.c.b16 %v8155, %v8154
        %v8172 = vpack.c.b16 %v8157, %v8156
        %v8173 = vpack.c.b16 %v8159, %v8158
        %v8174 = vpack.c.b16 %v8161, %v8160
        %v8175 = vpack.c.b16 %v8163, %v8162
        %v8189 = vsel %vm294, %v8060, 0
        %v8192 = vsel %vm294, %v8062, 0
        %v8195 = vsel %vm294, %v8064, 0
        %v8198 = vsel %vm294, %v8066, 0
        %v8201 = vsel %vm294, %v8068, 0
        %v8204 = vsel %vm294, %v8070, 0
        %v8207 = vsel %vm294, %v8072, 0
        %v8210 = vsel %vm294, %v8074, 0
        %v8213 = vsel %vm294, %v8076, 0
        %v8216 = vsel %vm294, %v8078, 0
        %v8219 = vsel %vm294, %v8080, 0
        %v8222 = vsel %vm294, %v8082, 0
        %v8225 = vsel %vm294, %v8084, 0
        %v8228 = vsel %vm294, %v8086, 0
        %v8231 = vsel %vm294, %v8088, 0
        %v8234 = vsel %vm294, %v8090, 0
        %8236 = vmatprep.subr.bf16.mxu0 0
        %8237 = vmatpush1.bf16.msra.mxu0 %v8164
        %8238 = vmatprep.subr.bf16.mxu0 0
        %8239 = vmatpush1.bf16.msra.mxu0 %v8165
        %8240 = vmatprep.subr.bf16.mxu0 0
        %8241 = vmatpush1.bf16.msra.mxu0 %v8166
        %8242 = vmatprep.subr.bf16.mxu0 0
        %8243 = vmatpush1.bf16.msra.mxu0 %v8167
        %8244 = vmatprep.subr.bf16.mxu0 0
        %8245 = vmatpush1.bf16.msra.mxu0 %v8168
        %8246 = vmatprep.subr.bf16.mxu0 0
        %8247 = vmatpush1.bf16.msra.mxu0 %v8169
        %8248 = vmatprep.subr.bf16.mxu0 0
        %8249 = vmatpush1.bf16.msra.mxu0 %v8170
        %8250 = vmatprep.subr.bf16.mxu0 0
        %8251 = vmatpush1.bf16.msra.mxu0 %v8171
        %8252 = vmatprep.subr.bf16.mxu0 0
        %8253 = vmatpush1.bf16.msra.mxu0 %v8172
        %8254 = vmatprep.subr.bf16.mxu0 0
        %8255 = vmatpush1.bf16.msra.mxu0 %v8173
        %8256 = vmatprep.subr.bf16.mxu0 0
        %8257 = vmatpush1.bf16.msra.mxu0 %v8174
        %8258 = vmatprep.subr.bf16.mxu0 0
        %8259 = vmatpush1.bf16.msra.mxu0 %v8175
        %8260 = vmatprep.subr.bf16.mxu0 0
        %8261 = vmatpush1.bf16.msra.mxu0 0
        %8262 = vmatprep.subr.bf16.mxu0 0
        %8263 = vmatpush1.bf16.msra.mxu0 0
        %8264 = vmatprep.subr.bf16.mxu0 0
        %8265 = vmatpush1.bf16.msra.mxu0 0
        %8266 = vmatprep.subr.bf16.mxu0 0
        %8267 = vmatpush1.bf16.msra.mxu0 0
        %8268 = vmatprep.mubr.bf16.mxu0 %v8189
        %8269 = vmatmul.mubr.bf16.gmra.mrb[0].mxu0 %v8059
        %v8270 = vpop.f32.mrb[0].mxu0
        %v8271 = vadd.f32 0.0, %v8270
        %v8272 = vpop.f32.mrb[0].mxu0
        %v8273 = vpop.f32.mrb[0].mxu0
        %v8274 = vadd.f32 0.0, %v8273
        %v8275 = vpop.f32.mrb[0].mxu0
        %8276 = vmatprep.mubr.bf16.mxu0 %v8192
        %8277 = vmatmul.mubr.bf16.gmra.mrb[0].mxu0 %v8061
        %v8278 = vpop.f32.mrb[0].mxu0
        %v8279 = vadd.f32 0.0, %v8278
        %v8280 = vpop.f32.mrb[0].mxu0
        %v8281 = vpop.f32.mrb[0].mxu0
        %v8282 = vadd.f32 0.0, %v8281
        %v8283 = vpop.f32.mrb[0].mxu0
        %8284 = vmatprep.mubr.bf16.mxu0 %v8195
        %8285 = vmatmul.mubr.bf16.gmra.mrb[0].mxu0 %v8063
        %v8286 = vpop.f32.mrb[0].mxu0
        %v8287 = vadd.f32 0.0, %v8286
        %v8288 = vpop.f32.mrb[0].mxu0
        %v8289 = vpop.f32.mrb[0].mxu0
        %v8290 = vadd.f32 0.0, %v8289
        %v8291 = vpop.f32.mrb[0].mxu0
        %8292 = vmatprep.mubr.bf16.mxu0 %v8198
        %8293 = vmatmul.mubr.bf16.gmra.mrb[0].mxu0 %v8065
        %v8294 = vpop.f32.mrb[0].mxu0
        %v8295 = vadd.f32 0.0, %v8294
        %v8296 = vpop.f32.mrb[0].mxu0
        %v8297 = vpop.f32.mrb[0].mxu0
        %v8298 = vadd.f32 0.0, %v8297
        %v8299 = vpop.f32.mrb[0].mxu0
        %8300 = vmatprep.mubr.bf16.mxu0 %v8201
        %8301 = vmatmul.mubr.bf16.gmra.mrb[0].mxu0 %v8067
        %v8302 = vpop.f32.mrb[0].mxu0
        %v8303 = vadd.f32 0.0, %v8302
        %v8304 = vpop.f32.mrb[0].mxu0
        %v8305 = vpop.f32.mrb[0].mxu0
        %v8306 = vadd.f32 0.0, %v8305
        %v8307 = vpop.f32.mrb[0].mxu0
        %8308 = vmatprep.mubr.bf16.mxu0 %v8204
        %8309 = vmatmul.mubr.bf16.gmra.mrb[0].mxu0 %v8069
        %v8310 = vpop.f32.mrb[0].mxu0
        %v8311 = vadd.f32 0.0, %v8310
        %v8312 = vpop.f32.mrb[0].mxu0
        %v8313 = vpop.f32.mrb[0].mxu0
        %v8314 = vadd.f32 0.0, %v8313
        %v8315 = vpop.f32.mrb[0].mxu0
        %8316 = vmatprep.mubr.bf16.mxu0 %v8207
        %8317 = vmatmul.mubr.bf16.gmra.mrb[0].mxu0 %v8071
        %v8318 = vpop.f32.mrb[0].mxu0
        %v8319 = vadd.f32 0.0, %v8318
        %v8320 = vpop.f32.mrb[0].mxu0
        %v8321 = vpop.f32.mrb[0].mxu0
        %v8322 = vadd.f32 0.0, %v8321
        %v8323 = vpop.f32.mrb[0].mxu0
        %8324 = vmatprep.mubr.bf16.mxu0 %v8210
        %8325 = vmatmul.mubr.bf16.gmra.mrb[0].mxu0 %v8073
        %v8326 = vpop.f32.mrb[0].mxu0
        %v8327 = vadd.f32 0.0, %v8326
        %v8328 = vpop.f32.mrb[0].mxu0
        %v8329 = vpop.f32.mrb[0].mxu0
        %v8330 = vadd.f32 0.0, %v8329
        %v8331 = vpop.f32.mrb[0].mxu0
        %8332 = vmatprep.mubr.bf16.mxu0 %v8213
        %8333 = vmatmul.mubr.bf16.gmra.mrb[0].mxu0 %v8075
        %v8334 = vpop.f32.mrb[0].mxu0
        %v8335 = vadd.f32 0.0, %v8334
        %v8336 = vpop.f32.mrb[0].mxu0
        %v8337 = vpop.f32.mrb[0].mxu0
        %v8338 = vadd.f32 0.0, %v8337
        %v8339 = vpop.f32.mrb[0].mxu0
        %8340 = vmatprep.mubr.bf16.mxu0 %v8216
        %8341 = vmatmul.mubr.bf16.gmra.mrb[0].mxu0 %v8077
        %v8342 = vpop.f32.mrb[0].mxu0
        %v8343 = vadd.f32 0.0, %v8342
        %v8344 = vpop.f32.mrb[0].mxu0
        %v8345 = vpop.f32.mrb[0].mxu0
        %v8346 = vadd.f32 0.0, %v8345
        %v8347 = vpop.f32.mrb[0].mxu0
        %8348 = vmatprep.mubr.bf16.mxu0 %v8219
        %8349 = vmatmul.mubr.bf16.gmra.mrb[0].mxu0 %v8079
        %v8350 = vpop.f32.mrb[0].mxu0
        %v8351 = vadd.f32 0.0, %v8350
        %v8352 = vpop.f32.mrb[0].mxu0
        %v8353 = vpop.f32.mrb[0].mxu0
        %v8354 = vadd.f32 0.0, %v8353
        %v8355 = vpop.f32.mrb[0].mxu0
        %8356 = vmatprep.mubr.bf16.mxu0 %v8222
        %8357 = vmatmul.mubr.bf16.gmra.mrb[0].mxu0 %v8081
        %v8358 = vpop.f32.mrb[0].mxu0
        %v8359 = vadd.f32 0.0, %v8358
        %v8360 = vpop.f32.mrb[0].mxu0
        %v8361 = vpop.f32.mrb[0].mxu0
        %v8362 = vadd.f32 0.0, %v8361
        %v8363 = vpop.f32.mrb[0].mxu0
        %8364 = vmatprep.mubr.bf16.mxu0 %v8225
        %8365 = vmatmul.mubr.bf16.gmra.mrb[0].mxu0 %v8083
        %v8366 = vpop.f32.mrb[0].mxu0
        %v8367 = vadd.f32 0.0, %v8366
        %v8368 = vpop.f32.mrb[0].mxu0
        %v8369 = vpop.f32.mrb[0].mxu0
        %v8370 = vadd.f32 0.0, %v8369
        %v8371 = vpop.f32.mrb[0].mxu0
        %8372 = vmatprep.mubr.bf16.mxu0 %v8228
        %8373 = vmatmul.mubr.bf16.gmra.mrb[0].mxu0 %v8085
        %v8374 = vpop.f32.mrb[0].mxu0
        %v8375 = vadd.f32 0.0, %v8374
        %v8376 = vpop.f32.mrb[0].mxu0
        %v8377 = vpop.f32.mrb[0].mxu0
        %v8378 = vadd.f32 0.0, %v8377
        %v8379 = vpop.f32.mrb[0].mxu0
        %8380 = vmatprep.mubr.bf16.mxu0 %v8231
        %8381 = vmatmul.mubr.bf16.gmra.mrb[0].mxu0 %v8087
        %v8382 = vpop.f32.mrb[0].mxu0
        %v8383 = vadd.f32 0.0, %v8382
        %v8384 = vpop.f32.mrb[0].mxu0
        %v8385 = vpop.f32.mrb[0].mxu0
        %v8386 = vadd.f32 0.0, %v8385
        %v8387 = vpop.f32.mrb[0].mxu0
        %8388 = vmatprep.mubr.bf16.mxu0 %v8234
        %8389 = vmatmul.mubr.bf16.gmra.mrb[0].mxu0 %v8089
        %v8390 = vpop.f32.mrb[0].mxu0
        %v8391 = vadd.f32 0.0, %v8390
        %v8392 = vpop.f32.mrb[0].mxu0
        %v8393 = vpop.f32.mrb[0].mxu0
        %v8394 = vadd.f32 0.0, %v8393
        %v8395 = vpop.f32.mrb[0].mxu0
        %8396 = vdwg.mxu0
        %v8397 = vadd.f32 %v7963, %v8271
        %v8398 = vadd.f32 %v7964, %v8274
        %v8399 = vadd.f32 %v7965, %v8279
        %v8400 = vadd.f32 %v7966, %v8282
        %v8401 = vadd.f32 %v7967, %v8287
        %v8402 = vadd.f32 %v7968, %v8290
        %v8403 = vadd.f32 %v7969, %v8295
        %v8404 = vadd.f32 %v7970, %v8298
        %v8405 = vadd.f32 %v7971, %v8303
        %v8406 = vadd.f32 %v7972, %v8306
        %v8407 = vadd.f32 %v7973, %v8311
        %v8408 = vadd.f32 %v7974, %v8314
        %v8409 = vadd.f32 %v7975, %v8319
        %v8410 = vadd.f32 %v7976, %v8322
        %v8411 = vadd.f32 %v7977, %v8327
        %v8412 = vadd.f32 %v7978, %v8330
        %v8413 = vadd.f32 %v7979, %v8335
        %v8414 = vadd.f32 %v7980, %v8338
        %v8415 = vadd.f32 %v7981, %v8343
        %v8416 = vadd.f32 %v7982, %v8346
        %v8417 = vadd.f32 %v7983, %v8351
        %v8418 = vadd.f32 %v7984, %v8354
        %v8419 = vadd.f32 %v7985, %v8359
        %v8420 = vadd.f32 %v7986, %v8362
        %v8421 = vadd.f32 %v7987, %v8367
        %v8422 = vadd.f32 %v7988, %v8370
        %v8423 = vadd.f32 %v7989, %v8375
        %v8424 = vadd.f32 %v7990, %v8378
        %v8425 = vadd.f32 %v7991, %v8383
        %v8426 = vadd.f32 %v7992, %v8386
        %v8427 = vadd.f32 %v7993, %v8391
        %v8428 = vadd.f32 %v7994, %v8394
        %v8429 = vld [vmem:[%s4411] sm:$0xff]
        %v8430 = vld [vmem:[%s4411 + $0x8] sm:$0xff]
        %v8431 = vld [vmem:[%s4411 + $0x10] sm:$0xff]
        %v8432 = vld [vmem:[%s4411 + $0x18] sm:$0xff]
        %v8433 = vld [vmem:[%s4411 + $0x20] sm:$0xff]
        %v8434 = vld [vmem:[%s4411 + $0x28] sm:$0xff]
        %v8435 = vld [vmem:[%s4411 + $0x30] sm:$0xff]
        %v8436 = vld [vmem:[%s4411 + $0x38] sm:$0xff]
        %v8437 = vld [vmem:[%s4411 + $0x40] sm:$0xff]
        %v8438 = vld [vmem:[%s4411 + $0x48] sm:$0xff]
        %v8439 = vld [vmem:[%s4411 + $0x50] sm:$0xff]
        %v8440 = vld [vmem:[%s4411 + $0x58] sm:$0xff]
        %v8441 = vld [vmem:[%s4411 + $0x60] sm:$0xff]
        %v8442 = vld [vmem:[%s4411 + $0x68] sm:$0xff]
        %v8443 = vld [vmem:[%s4411 + $0x70] sm:$0xff]
        %v8444 = vld [vmem:[%s4411 + $0x78] sm:$0xff]
        %v8445 = vld [vmem:[%s4411 + $0x80] sm:$0xff]
        %v8446 = vld [vmem:[%s4411 + $0x88] sm:$0xff]
        %v8447 = vld [vmem:[%s4411 + $0x90] sm:$0xff]
        %v8448 = vld [vmem:[%s4411 + $0x98] sm:$0xff]
        %v8449 = vld [vmem:[%s4411 + $0xa0] sm:$0xff]
        %v8450 = vld [vmem:[%s4411 + $0xa8] sm:$0xff]
        %v8451 = vld [vmem:[%s4411 + $0xb0] sm:$0xff]
        %v8452 = vld [vmem:[%s4411 + $0xb8] sm:$0xff]
        %v8453 = vld [vmem:[%s4411 + $0xc0] sm:$0xff]
        %v8454 = vld [vmem:[%s4411 + $0xc8] sm:$0xff]
        %v8455 = vld [vmem:[%s4411 + $0xd0] sm:$0xff]
        %v8456 = vld [vmem:[%s4411 + $0xd8] sm:$0xff]
        %v8457 = vld [vmem:[%s4411 + $0xe0] sm:$0xff]
        %v8458 = vld [vmem:[%s4411 + $0xe8] sm:$0xff]
        %v8459 = vld [vmem:[%s4411 + $0xf0] sm:$0xff]
        %v8460 = vld [vmem:[%s4411 + $0xf8] sm:$0xff]
        %v8461 = vld [vmem:[%s4411 + $0x100] sm:$0xff]
        %v8462 = vld [vmem:[%s4411 + $0x108] sm:$0xff]
        %v8463 = vld [vmem:[%s4411 + $0x110] sm:$0xff]
        %v8464 = vld [vmem:[%s4411 + $0x118] sm:$0xff]
        %v8465 = vld [vmem:[%s4411 + $0x120] sm:$0xff]
        %v8466 = vld [vmem:[%s4411 + $0x128] sm:$0xff]
        %v8467 = vld [vmem:[%s4411 + $0x130] sm:$0xff]
        %v8468 = vld [vmem:[%s4411 + $0x138] sm:$0xff]
        %v8469 = vld [vmem:[%s4411 + $0x140] sm:$0xff]
        %v8470 = vld [vmem:[%s4411 + $0x148] sm:$0xff]
        %v8471 = vld [vmem:[%s4411 + $0x150] sm:$0xff]
        %v8472 = vld [vmem:[%s4411 + $0x158] sm:$0xff]
        %v8473 = vld [vmem:[%s4411 + $0x160] sm:$0xff]
        %v8474 = vld [vmem:[%s4411 + $0x168] sm:$0xff]
        %v8475 = vld [vmem:[%s4411 + $0x170] sm:$0xff]
        %v8476 = vld [vmem:[%s4411 + $0x178] sm:$0xff]
        %v8477 = vld [vmem:[%s4411 + $0x180] sm:$0xff]
        %v8478 = vld [vmem:[%s4411 + $0x188] sm:$0xff]
        %v8479 = vld [vmem:[%s4411 + $0x190] sm:$0xff]
        %v8480 = vld [vmem:[%s4411 + $0x198] sm:$0xff]
        %v8481 = vld [vmem:[%s4411 + $0x1a0] sm:$0xff]
        %v8482 = vld [vmem:[%s4411 + $0x1a8] sm:$0xff]
        %v8483 = vld [vmem:[%s4411 + $0x1b0] sm:$0xff]
        %v8484 = vld [vmem:[%s4411 + $0x1b8] sm:$0xff]
        %v8485 = vld [vmem:[%s4411 + $0x1c0] sm:$0xff]
        %v8486 = vld [vmem:[%s4411 + $0x1c8] sm:$0xff]
        %v8487 = vld [vmem:[%s4411 + $0x1d0] sm:$0xff]
        %v8488 = vld [vmem:[%s4411 + $0x1d8] sm:$0xff]
        %v8489 = vld [vmem:[%s4411 + $0x1e0] sm:$0xff]
        %v8490 = vld [vmem:[%s4411 + $0x1e8] sm:$0xff]
        %v8491 = vld [vmem:[%s4411 + $0x1f0] sm:$0xff]
        %v8492 = vld [vmem:[%s4411 + $0x1f8] sm:$0xff]
        %v8493 = vpack.c.bf16 %v8431, %v8429
        %v8494 = vpack.c.bf16 %v8432, %v8430
        %v8495 = vpack.c.bf16 %v8435, %v8433
        %v8496 = vpack.c.bf16 %v8436, %v8434
        %v8497 = vpack.c.bf16 %v8439, %v8437
        %v8498 = vpack.c.bf16 %v8440, %v8438
        %v8499 = vpack.c.bf16 %v8443, %v8441
        %v8500 = vpack.c.bf16 %v8444, %v8442
        %v8501 = vpack.c.bf16 %v8447, %v8445
        %v8502 = vpack.c.bf16 %v8448, %v8446
        %v8503 = vpack.c.bf16 %v8451, %v8449
        %v8504 = vpack.c.bf16 %v8452, %v8450
        %v8505 = vpack.c.bf16 %v8455, %v8453
        %v8506 = vpack.c.bf16 %v8456, %v8454
        %v8507 = vpack.c.bf16 %v8459, %v8457
        %v8508 = vpack.c.bf16 %v8460, %v8458
        %v8509 = vpack.c.bf16 %v8463, %v8461
        %v8510 = vpack.c.bf16 %v8464, %v8462
        %v8511 = vpack.c.bf16 %v8467, %v8465
        %v8512 = vpack.c.bf16 %v8468, %v8466
        %v8513 = vpack.c.bf16 %v8471, %v8469
        %v8514 = vpack.c.bf16 %v8472, %v8470
        %v8515 = vpack.c.bf16 %v8475, %v8473
        %v8516 = vpack.c.bf16 %v8476, %v8474
        %v8517 = vpack.c.bf16 %v8479, %v8477
        %v8518 = vpack.c.bf16 %v8480, %v8478
        %v8519 = vpack.c.bf16 %v8483, %v8481
        %v8520 = vpack.c.bf16 %v8484, %v8482
        %v8521 = vpack.c.bf16 %v8487, %v8485
        %v8522 = vpack.c.bf16 %v8488, %v8486
        %v8523 = vpack.c.bf16 %v8491, %v8489
        %v8524 = vpack.c.bf16 %v8492, %v8490
        %s8525 = scalar_lea.vmem %s2, 768
        %v8526 = vld [vmem:[%s8525] sm:$0xf]
        %v8527 = vld [vmem:[%s8525 + $0x4] sm:$0xf]
        %v8528 = vld [vmem:[%s8525 + $0x8] sm:$0xf]
        %v8529 = vld [vmem:[%s8525 + $0xc] sm:$0xf]
        %v8530 = vld [vmem:[%s8525 + $0x10] sm:$0xf]
        %v8531 = vld [vmem:[%s8525 + $0x14] sm:$0xf]
        %v8532 = vld [vmem:[%s8525 + $0x18] sm:$0xf]
        %v8533 = vld [vmem:[%s8525 + $0x1c] sm:$0xf]
        %v8534 = vld [vmem:[%s8525 + $0x20] sm:$0xf]
        %v8535 = vld [vmem:[%s8525 + $0x24] sm:$0xf]
        %v8536 = vld [vmem:[%s8525 + $0x28] sm:$0xf]
        %v8537 = vld [vmem:[%s8525 + $0x2c] sm:$0xf]
        %v8538 = vld [vmem:[%s8525 + $0x30] sm:$0xf]
        %v8539 = vld [vmem:[%s8525 + $0x34] sm:$0xf]
        %v8540 = vld [vmem:[%s8525 + $0x38] sm:$0xf]
        %v8541 = vld [vmem:[%s8525 + $0x3c] sm:$0xf]
        %v8542 = vld [vmem:[%s8525 + $0x40] sm:$0xf]
        %v8543 = vld [vmem:[%s8525 + $0x44] sm:$0xf]
        %v8544 = vld [vmem:[%s8525 + $0x48] sm:$0xf]
        %v8545 = vld [vmem:[%s8525 + $0x4c] sm:$0xf]
        %v8546 = vld [vmem:[%s8525 + $0x50] sm:$0xf]
        %v8547 = vld [vmem:[%s8525 + $0x54] sm:$0xf]
        %v8548 = vld [vmem:[%s8525 + $0x58] sm:$0xf]
        %v8549 = vld [vmem:[%s8525 + $0x5c] sm:$0xf]
        %v8574 = vunpack.c.l.b16 %v8526
        %v8575 = vunpack.c.l.b16 %v8527
        %v8576 = vunpack.c.l.b16 %v8528
        %v8577 = vunpack.c.l.b16 %v8529
        %v8578 = vunpack.c.l.b16 %v8530
        %v8579 = vunpack.c.l.b16 %v8531
        %v8580 = vunpack.c.l.b16 %v8532
        %v8581 = vunpack.c.l.b16 %v8533
        %v8582 = vunpack.c.l.b16 %v8534
        %v8583 = vunpack.c.l.b16 %v8535
        %v8584 = vunpack.c.l.b16 %v8536
        %v8585 = vunpack.c.l.b16 %v8537
        %v8586 = vunpack.c.l.b16 %v8538
        %v8587 = vunpack.c.l.b16 %v8539
        %v8588 = vunpack.c.l.b16 %v8540
        %v8589 = vunpack.c.l.b16 %v8541
        %v8590 = vunpack.c.l.b16 %v8542
        %v8591 = vunpack.c.l.b16 %v8543
        %v8592 = vunpack.c.l.b16 %v8544
        %v8593 = vunpack.c.l.b16 %v8545
        %v8594 = vunpack.c.l.b16 %v8546
        %v8595 = vunpack.c.l.b16 %v8547
        %v8596 = vunpack.c.l.b16 %v8548
        %v8597 = vunpack.c.l.b16 %v8549
        %v8598 = vpack.c.b16 %v8575, %v8574
        %v8599 = vpack.c.b16 %v8577, %v8576
        %v8600 = vpack.c.b16 %v8579, %v8578
        %v8601 = vpack.c.b16 %v8581, %v8580
        %v8602 = vpack.c.b16 %v8583, %v8582
        %v8603 = vpack.c.b16 %v8585, %v8584
        %v8604 = vpack.c.b16 %v8587, %v8586
        %v8605 = vpack.c.b16 %v8589, %v8588
        %v8606 = vpack.c.b16 %v8591, %v8590
        %v8607 = vpack.c.b16 %v8593, %v8592
        %v8608 = vpack.c.b16 %v8595, %v8594
        %v8609 = vpack.c.b16 %v8597, %v8596
        %v8623 = vsel %vm294, %v8494, 0
        %v8626 = vsel %vm294, %v8496, 0
        %v8629 = vsel %vm294, %v8498, 0
        %v8632 = vsel %vm294, %v8500, 0
        %v8635 = vsel %vm294, %v8502, 0
        %v8638 = vsel %vm294, %v8504, 0
        %v8641 = vsel %vm294, %v8506, 0
        %v8644 = vsel %vm294, %v8508, 0
        %v8647 = vsel %vm294, %v8510, 0
        %v8650 = vsel %vm294, %v8512, 0
        %v8653 = vsel %vm294, %v8514, 0
        %v8656 = vsel %vm294, %v8516, 0
        %v8659 = vsel %vm294, %v8518, 0
        %v8662 = vsel %vm294, %v8520, 0
        %v8665 = vsel %vm294, %v8522, 0
        %v8668 = vsel %vm294, %v8524, 0
        %8670 = vmatprep.subr.bf16.mxu0 0
        %8671 = vmatpush1.bf16.msra.mxu0 %v8598
        %8672 = vmatprep.subr.bf16.mxu0 0
        %8673 = vmatpush1.bf16.msra.mxu0 %v8599
        %8674 = vmatprep.subr.bf16.mxu0 0
        %8675 = vmatpush1.bf16.msra.mxu0 %v8600
        %8676 = vmatprep.subr.bf16.mxu0 0
        %8677 = vmatpush1.bf16.msra.mxu0 %v8601
        %8678 = vmatprep.subr.bf16.mxu0 0
        %8679 = vmatpush1.bf16.msra.mxu0 %v8602
        %8680 = vmatprep.subr.bf16.mxu0 0
        %8681 = vmatpush1.bf16.msra.mxu0 %v8603
        %8682 = vmatprep.subr.bf16.mxu0 0
        %8683 = vmatpush1.bf16.msra.mxu0 %v8604
        %8684 = vmatprep.subr.bf16.mxu0 0
        %8685 = vmatpush1.bf16.msra.mxu0 %v8605
        %8686 = vmatprep.subr.bf16.mxu0 0
        %8687 = vmatpush1.bf16.msra.mxu0 %v8606
        %8688 = vmatprep.subr.bf16.mxu0 0
        %8689 = vmatpush1.bf16.msra.mxu0 %v8607
        %8690 = vmatprep.subr.bf16.mxu0 0
        %8691 = vmatpush1.bf16.msra.mxu0 %v8608
        %8692 = vmatprep.subr.bf16.mxu0 0
        %8693 = vmatpush1.bf16.msra.mxu0 %v8609
        %8694 = vmatprep.subr.bf16.mxu0 0
        %8695 = vmatpush1.bf16.msra.mxu0 0
        %8696 = vmatprep.subr.bf16.mxu0 0
        %8697 = vmatpush1.bf16.msra.mxu0 0
        %8698 = vmatprep.subr.bf16.mxu0 0
        %8699 = vmatpush1.bf16.msra.mxu0 0
        %8700 = vmatprep.subr.bf16.mxu0 0
        %8701 = vmatpush1.bf16.msra.mxu0 0
        %8702 = vmatprep.mubr.bf16.mxu0 %v8623
        %8703 = vmatmul.mubr.bf16.gmra.mrb[0].mxu0 %v8493
        %v8704 = vpop.f32.mrb[0].mxu0
        %v8705 = vadd.f32 0.0, %v8704
        %v8706 = vpop.f32.mrb[0].mxu0
        %v8707 = vpop.f32.mrb[0].mxu0
        %v8708 = vadd.f32 0.0, %v8707
        %v8709 = vpop.f32.mrb[0].mxu0
        %8710 = vmatprep.mubr.bf16.mxu0 %v8626
        %8711 = vmatmul.mubr.bf16.gmra.mrb[0].mxu0 %v8495
        %v8712 = vpop.f32.mrb[0].mxu0
        %v8713 = vadd.f32 0.0, %v8712
        %v8714 = vpop.f32.mrb[0].mxu0
        %v8715 = vpop.f32.mrb[0].mxu0
        %v8716 = vadd.f32 0.0, %v8715
        %v8717 = vpop.f32.mrb[0].mxu0
        %8718 = vmatprep.mubr.bf16.mxu0 %v8629
        %8719 = vmatmul.mubr.bf16.gmra.mrb[0].mxu0 %v8497
        %v8720 = vpop.f32.mrb[0].mxu0
        %v8721 = vadd.f32 0.0, %v8720
        %v8722 = vpop.f32.mrb[0].mxu0
        %v8723 = vpop.f32.mrb[0].mxu0
        %v8724 = vadd.f32 0.0, %v8723
        %v8725 = vpop.f32.mrb[0].mxu0
        %8726 = vmatprep.mubr.bf16.mxu0 %v8632
        %8727 = vmatmul.mubr.bf16.gmra.mrb[0].mxu0 %v8499
        %v8728 = vpop.f32.mrb[0].mxu0
        %v8729 = vadd.f32 0.0, %v8728
        %v8730 = vpop.f32.mrb[0].mxu0
        %v8731 = vpop.f32.mrb[0].mxu0
        %v8732 = vadd.f32 0.0, %v8731
        %v8733 = vpop.f32.mrb[0].mxu0
        %8734 = vmatprep.mubr.bf16.mxu0 %v8635
        %8735 = vmatmul.mubr.bf16.gmra.mrb[0].mxu0 %v8501
        %v8736 = vpop.f32.mrb[0].mxu0
        %v8737 = vadd.f32 0.0, %v8736
        %v8738 = vpop.f32.mrb[0].mxu0
        %v8739 = vpop.f32.mrb[0].mxu0
        %v8740 = vadd.f32 0.0, %v8739
        %v8741 = vpop.f32.mrb[0].mxu0
        %8742 = vmatprep.mubr.bf16.mxu0 %v8638
        %8743 = vmatmul.mubr.bf16.gmra.mrb[0].mxu0 %v8503
        %v8744 = vpop.f32.mrb[0].mxu0
        %v8745 = vadd.f32 0.0, %v8744
        %v8746 = vpop.f32.mrb[0].mxu0
        %v8747 = vpop.f32.mrb[0].mxu0
        %v8748 = vadd.f32 0.0, %v8747
        %v8749 = vpop.f32.mrb[0].mxu0
        %8750 = vmatprep.mubr.bf16.mxu0 %v8641
        %8751 = vmatmul.mubr.bf16.gmra.mrb[0].mxu0 %v8505
        %v8752 = vpop.f32.mrb[0].mxu0
        %v8753 = vadd.f32 0.0, %v8752
        %v8754 = vpop.f32.mrb[0].mxu0
        %v8755 = vpop.f32.mrb[0].mxu0
        %v8756 = vadd.f32 0.0, %v8755
        %v8757 = vpop.f32.mrb[0].mxu0
        %8758 = vmatprep.mubr.bf16.mxu0 %v8644
        %8759 = vmatmul.mubr.bf16.gmra.mrb[0].mxu0 %v8507
        %v8760 = vpop.f32.mrb[0].mxu0
        %v8761 = vadd.f32 0.0, %v8760
        %v8762 = vpop.f32.mrb[0].mxu0
        %v8763 = vpop.f32.mrb[0].mxu0
        %v8764 = vadd.f32 0.0, %v8763
        %v8765 = vpop.f32.mrb[0].mxu0
        %8766 = vmatprep.mubr.bf16.mxu0 %v8647
        %8767 = vmatmul.mubr.bf16.gmra.mrb[0].mxu0 %v8509
        %v8768 = vpop.f32.mrb[0].mxu0
        %v8769 = vadd.f32 0.0, %v8768
        %v8770 = vpop.f32.mrb[0].mxu0
        %v8771 = vpop.f32.mrb[0].mxu0
        %v8772 = vadd.f32 0.0, %v8771
        %v8773 = vpop.f32.mrb[0].mxu0
        %8774 = vmatprep.mubr.bf16.mxu0 %v8650
        %8775 = vmatmul.mubr.bf16.gmra.mrb[0].mxu0 %v8511
        %v8776 = vpop.f32.mrb[0].mxu0
        %v8777 = vadd.f32 0.0, %v8776
        %v8778 = vpop.f32.mrb[0].mxu0
        %v8779 = vpop.f32.mrb[0].mxu0
        %v8780 = vadd.f32 0.0, %v8779
        %v8781 = vpop.f32.mrb[0].mxu0
        %8782 = vmatprep.mubr.bf16.mxu0 %v8653
        %8783 = vmatmul.mubr.bf16.gmra.mrb[0].mxu0 %v8513
        %v8784 = vpop.f32.mrb[0].mxu0
        %v8785 = vadd.f32 0.0, %v8784
        %v8786 = vpop.f32.mrb[0].mxu0
        %v8787 = vpop.f32.mrb[0].mxu0
        %v8788 = vadd.f32 0.0, %v8787
        %v8789 = vpop.f32.mrb[0].mxu0
        %8790 = vmatprep.mubr.bf16.mxu0 %v8656
        %8791 = vmatmul.mubr.bf16.gmra.mrb[0].mxu0 %v8515
        %v8792 = vpop.f32.mrb[0].mxu0
        %v8793 = vadd.f32 0.0, %v8792
        %v8794 = vpop.f32.mrb[0].mxu0
        %v8795 = vpop.f32.mrb[0].mxu0
        %v8796 = vadd.f32 0.0, %v8795
        %v8797 = vpop.f32.mrb[0].mxu0
        %8798 = vmatprep.mubr.bf16.mxu0 %v8659
        %8799 = vmatmul.mubr.bf16.gmra.mrb[0].mxu0 %v8517
        %v8800 = vpop.f32.mrb[0].mxu0
        %v8801 = vadd.f32 0.0, %v8800
        %v8802 = vpop.f32.mrb[0].mxu0
        %v8803 = vpop.f32.mrb[0].mxu0
        %v8804 = vadd.f32 0.0, %v8803
        %v8805 = vpop.f32.mrb[0].mxu0
        %8806 = vmatprep.mubr.bf16.mxu0 %v8662
        %8807 = vmatmul.mubr.bf16.gmra.mrb[0].mxu0 %v8519
        %v8808 = vpop.f32.mrb[0].mxu0
        %v8809 = vadd.f32 0.0, %v8808
        %v8810 = vpop.f32.mrb[0].mxu0
        %v8811 = vpop.f32.mrb[0].mxu0
        %v8812 = vadd.f32 0.0, %v8811
        %v8813 = vpop.f32.mrb[0].mxu0
        %8814 = vmatprep.mubr.bf16.mxu0 %v8665
        %8815 = vmatmul.mubr.bf16.gmra.mrb[0].mxu0 %v8521
        %v8816 = vpop.f32.mrb[0].mxu0
        %v8817 = vadd.f32 0.0, %v8816
        %v8818 = vpop.f32.mrb[0].mxu0
        %v8819 = vpop.f32.mrb[0].mxu0
        %v8820 = vadd.f32 0.0, %v8819
        %v8821 = vpop.f32.mrb[0].mxu0
        %8822 = vmatprep.mubr.bf16.mxu0 %v8668
        %8823 = vmatmul.mubr.bf16.gmra.mrb[0].mxu0 %v8523
        %v8824 = vpop.f32.mrb[0].mxu0
        %v8825 = vadd.f32 0.0, %v8824
        %v8826 = vpop.f32.mrb[0].mxu0
        %v8827 = vpop.f32.mrb[0].mxu0
        %v8828 = vadd.f32 0.0, %v8827
        %v8829 = vpop.f32.mrb[0].mxu0
        %8830 = vdwg.mxu0
        %v8831 = vadd.f32 %v8397, %v8705
        %v8832 = vadd.f32 %v8398, %v8708
        %v8833 = vadd.f32 %v8399, %v8713
        %v8834 = vadd.f32 %v8400, %v8716
        %v8835 = vadd.f32 %v8401, %v8721
        %v8836 = vadd.f32 %v8402, %v8724
        %v8837 = vadd.f32 %v8403, %v8729
        %v8838 = vadd.f32 %v8404, %v8732
        %v8839 = vadd.f32 %v8405, %v8737
        %v8840 = vadd.f32 %v8406, %v8740
        %v8841 = vadd.f32 %v8407, %v8745
        %v8842 = vadd.f32 %v8408, %v8748
        %v8843 = vadd.f32 %v8409, %v8753
        %v8844 = vadd.f32 %v8410, %v8756
        %v8845 = vadd.f32 %v8411, %v8761
        %v8846 = vadd.f32 %v8412, %v8764
        %v8847 = vadd.f32 %v8413, %v8769
        %v8848 = vadd.f32 %v8414, %v8772
        %v8849 = vadd.f32 %v8415, %v8777
        %v8850 = vadd.f32 %v8416, %v8780
        %v8851 = vadd.f32 %v8417, %v8785
        %v8852 = vadd.f32 %v8418, %v8788
        %v8853 = vadd.f32 %v8419, %v8793
        %v8854 = vadd.f32 %v8420, %v8796
        %v8855 = vadd.f32 %v8421, %v8801
        %v8856 = vadd.f32 %v8422, %v8804
        %v8857 = vadd.f32 %v8423, %v8809
        %v8858 = vadd.f32 %v8424, %v8812
        %v8859 = vadd.f32 %v8425, %v8817
        %v8860 = vadd.f32 %v8426, %v8820
        %v8861 = vadd.f32 %v8427, %v8825
        %v8862 = vadd.f32 %v8428, %v8828
        %vm8863 = vcmp.gt.f32.partialorder %v8831, 0.0
        %vm8864 = vcmp.gt.f32.partialorder %v8832, 0.0
        %vm8865 = vcmp.gt.f32.partialorder %v8833, 0.0
        %vm8866 = vcmp.gt.f32.partialorder %v8834, 0.0
        %vm8867 = vcmp.gt.f32.partialorder %v8835, 0.0
        %vm8868 = vcmp.gt.f32.partialorder %v8836, 0.0
        %vm8869 = vcmp.gt.f32.partialorder %v8837, 0.0
        %vm8870 = vcmp.gt.f32.partialorder %v8838, 0.0
        %vm8871 = vcmp.gt.f32.partialorder %v8839, 0.0
        %vm8872 = vcmp.gt.f32.partialorder %v8840, 0.0
        %vm8873 = vcmp.gt.f32.partialorder %v8841, 0.0
        %vm8874 = vcmp.gt.f32.partialorder %v8842, 0.0
        %vm8875 = vcmp.gt.f32.partialorder %v8843, 0.0
        %vm8876 = vcmp.gt.f32.partialorder %v8844, 0.0
        %vm8877 = vcmp.gt.f32.partialorder %v8845, 0.0
        %vm8878 = vcmp.gt.f32.partialorder %v8846, 0.0
        %vm8879 = vcmp.gt.f32.partialorder %v8847, 0.0
        %vm8880 = vcmp.gt.f32.partialorder %v8848, 0.0
        %vm8881 = vcmp.gt.f32.partialorder %v8849, 0.0
        %vm8882 = vcmp.gt.f32.partialorder %v8850, 0.0
        %vm8883 = vcmp.gt.f32.partialorder %v8851, 0.0
        %vm8884 = vcmp.gt.f32.partialorder %v8852, 0.0
        %vm8885 = vcmp.gt.f32.partialorder %v8853, 0.0
        %vm8886 = vcmp.gt.f32.partialorder %v8854, 0.0
        %vm8887 = vcmp.gt.f32.partialorder %v8855, 0.0
        %vm8888 = vcmp.gt.f32.partialorder %v8856, 0.0
        %vm8889 = vcmp.gt.f32.partialorder %v8857, 0.0
        %vm8890 = vcmp.gt.f32.partialorder %v8858, 0.0
        %vm8891 = vcmp.gt.f32.partialorder %v8859, 0.0
        %vm8892 = vcmp.gt.f32.partialorder %v8860, 0.0
        %vm8893 = vcmp.gt.f32.partialorder %v8861, 0.0
        %vm8894 = vcmp.gt.f32.partialorder %v8862, 0.0
        %v8895 = vstv %s7016
        %v8896 = vmul.f32 %v8895, %v8831
        %v8897 = vmul.f32 %v8895, %v8832
        %v8898 = vmul.f32 %v8895, %v8833
        %v8899 = vmul.f32 %v8895, %v8834
        %v8900 = vmul.f32 %v8895, %v8835
        %v8901 = vmul.f32 %v8895, %v8836
        %v8902 = vmul.f32 %v8895, %v8837
        %v8903 = vmul.f32 %v8895, %v8838
        %v8904 = vmul.f32 %v8895, %v8839
        %v8905 = vmul.f32 %v8895, %v8840
        %v8906 = vmul.f32 %v8895, %v8841
        %v8907 = vmul.f32 %v8895, %v8842
        %v8908 = vmul.f32 %v8895, %v8843
        %v8909 = vmul.f32 %v8895, %v8844
        %v8910 = vmul.f32 %v8895, %v8845
        %v8911 = vmul.f32 %v8895, %v8846
        %v8912 = vmul.f32 %v8895, %v8847
        %v8913 = vmul.f32 %v8895, %v8848
        %v8914 = vmul.f32 %v8895, %v8849
        %v8915 = vmul.f32 %v8895, %v8850
        %v8916 = vmul.f32 %v8895, %v8851
        %v8917 = vmul.f32 %v8895, %v8852
        %v8918 = vmul.f32 %v8895, %v8853
        %v8919 = vmul.f32 %v8895, %v8854
        %v8920 = vmul.f32 %v8895, %v8855
        %v8921 = vmul.f32 %v8895, %v8856
        %v8922 = vmul.f32 %v8895, %v8857
        %v8923 = vmul.f32 %v8895, %v8858
        %v8924 = vmul.f32 %v8895, %v8859
        %v8925 = vmul.f32 %v8895, %v8860
        %v8926 = vmul.f32 %v8895, %v8861
        %v8927 = vmul.f32 %v8895, %v8862
        %v8928 = vsel %vm8863, %v8831, %v8896
        %v8929 = vsel %vm8864, %v8832, %v8897
        %v8930 = vsel %vm8865, %v8833, %v8898
        %v8931 = vsel %vm8866, %v8834, %v8899
        %v8932 = vsel %vm8867, %v8835, %v8900
        %v8933 = vsel %vm8868, %v8836, %v8901
        %v8934 = vsel %vm8869, %v8837, %v8902
        %v8935 = vsel %vm8870, %v8838, %v8903
        %v8936 = vsel %vm8871, %v8839, %v8904
        %v8937 = vsel %vm8872, %v8840, %v8905
        %v8938 = vsel %vm8873, %v8841, %v8906
        %v8939 = vsel %vm8874, %v8842, %v8907
        %v8940 = vsel %vm8875, %v8843, %v8908
        %v8941 = vsel %vm8876, %v8844, %v8909
        %v8942 = vsel %vm8877, %v8845, %v8910
        %v8943 = vsel %vm8878, %v8846, %v8911
        %v8944 = vsel %vm8879, %v8847, %v8912
        %v8945 = vsel %vm8880, %v8848, %v8913
        %v8946 = vsel %vm8881, %v8849, %v8914
        %v8947 = vsel %vm8882, %v8850, %v8915
        %v8948 = vsel %vm8883, %v8851, %v8916
        %v8949 = vsel %vm8884, %v8852, %v8917
        %v8950 = vsel %vm8885, %v8853, %v8918
        %v8951 = vsel %vm8886, %v8854, %v8919
        %v8952 = vsel %vm8887, %v8855, %v8920
        %v8953 = vsel %vm8888, %v8856, %v8921
        %v8954 = vsel %vm8889, %v8857, %v8922
        %v8955 = vsel %vm8890, %v8858, %v8923
        %v8956 = vsel %vm8891, %v8859, %v8924
        %v8957 = vsel %vm8892, %v8860, %v8925
        %v8958 = vsel %vm8893, %v8861, %v8926
        %v8959 = vsel %vm8894, %v8862, %v8927
        %8960 = vst.msk [vmem:[%s231] sm:$0xff] %vm294, %v8928
        %8961 = vst.msk [vmem:[%s231 + $0x8] sm:$0xff] %vm294, %v8929
        %8962 = vst.msk [vmem:[%s231 + $0x10] sm:$0xff] %vm294, %v8930
        %8963 = vst.msk [vmem:[%s231 + $0x18] sm:$0xff] %vm294, %v8931
        %8964 = vst.msk [vmem:[%s231 + $0x20] sm:$0xff] %vm294, %v8932
        %8965 = vst.msk [vmem:[%s231 + $0x28] sm:$0xff] %vm294, %v8933
        %8966 = vst.msk [vmem:[%s231 + $0x30] sm:$0xff] %vm294, %v8934
        %8967 = vst.msk [vmem:[%s231 + $0x38] sm:$0xff] %vm294, %v8935
        %8968 = vst.msk [vmem:[%s231 + $0x40] sm:$0xff] %vm294, %v8936
        %8969 = vst.msk [vmem:[%s231 + $0x48] sm:$0xff] %vm294, %v8937
        %8970 = vst.msk [vmem:[%s231 + $0x50] sm:$0xff] %vm294, %v8938
        %8971 = vst.msk [vmem:[%s231 + $0x58] sm:$0xff] %vm294, %v8939
        %8972 = vst.msk [vmem:[%s231 + $0x60] sm:$0xff] %vm294, %v8940
        %8973 = vst.msk [vmem:[%s231 + $0x68] sm:$0xff] %vm294, %v8941
        %8974 = vst.msk [vmem:[%s231 + $0x70] sm:$0xff] %vm294, %v8942
        %8975 = vst.msk [vmem:[%s231 + $0x78] sm:$0xff] %vm294, %v8943
        %8976 = vst.msk [vmem:[%s231 + $0x80] sm:$0xff] %vm294, %v8944
        %8977 = vst.msk [vmem:[%s231 + $0x88] sm:$0xff] %vm294, %v8945
        %8978 = vst.msk [vmem:[%s231 + $0x90] sm:$0xff] %vm294, %v8946
        %8979 = vst.msk [vmem:[%s231 + $0x98] sm:$0xff] %vm294, %v8947
        %8980 = vst.msk [vmem:[%s231 + $0xa0] sm:$0xff] %vm294, %v8948
        %8981 = vst.msk [vmem:[%s231 + $0xa8] sm:$0xff] %vm294, %v8949
        %8982 = vst.msk [vmem:[%s231 + $0xb0] sm:$0xff] %vm294, %v8950
        %8983 = vst.msk [vmem:[%s231 + $0xb8] sm:$0xff] %vm294, %v8951
        %8984 = vst.msk [vmem:[%s231 + $0xc0] sm:$0xff] %vm294, %v8952
        %8985 = vst.msk [vmem:[%s231 + $0xc8] sm:$0xff] %vm294, %v8953
        %8986 = vst.msk [vmem:[%s231 + $0xd0] sm:$0xff] %vm294, %v8954
        %8987 = vst.msk [vmem:[%s231 + $0xd8] sm:$0xff] %vm294, %v8955
        %8988 = vst.msk [vmem:[%s231 + $0xe0] sm:$0xff] %vm294, %v8956
        %8989 = vst.msk [vmem:[%s231 + $0xe8] sm:$0xff] %vm294, %v8957
        %8990 = vst.msk [vmem:[%s231 + $0xf0] sm:$0xff] %vm294, %v8958
        %8991 = vst.msk [vmem:[%s231 + $0xf8] sm:$0xff] %vm294, %v8959
        %s8992 = sand.u32 %s138, 1
        %s8993 = scalar_lea.sflag [#allocation7], %s8992
        %s8994 = sand.u32 %s138, 1
        %s8995 = smul.addr %s8994, 256
        %s8996 = scalar_lea.vmem [#allocation9], %s8995
        // Predicated region
        $region45: #{tpu_custom_call.1} parent=39 // pred_check
          %p8997 = pneg %p148
        $region46: #{tpu_custom_call.1} parent=39 // pred_check_branch
          %8999 = sbr.rel (%p8997) target = $region48
        $region47: #{tpu_custom_call.1} parent=39 // pred_region
          %s9001 = ssub.s32 4096, 4096
          %9002 = vsyncadd %s8993, %s9001
          %s9003 = smul.addr %s20, 32
          %s9004 = smul.addr %s9003, 128
          %s9005 = scalar_lea.hbm %s5, %s9004
          %s9006 = sshll.u32 %s8996, 4
          %s9007 = int_to_ptr.vmem [resolvable:$true] %s9006
          %9012 = dma.vmem_to_hbm [thread:$0]  %s9007, 4096, %s9005, %s8993, 128, 128, 8
        $region48: #{tpu_custom_call.1} parent=39 // pred_fallthru
          _
      $region40: #{tpu_custom_call.1} parent=5 // pred_fallthru
        _
      %p9013 = scmp.le.s32.totalorder 2, %s15
      // Predicated region
      $region49: #{tpu_custom_call.1} parent=5 // pred_check
        %p9014 = pneg %p9013
      $region50: #{tpu_custom_call.1} parent=5 // pred_check_branch
        %9016 = sbr.rel (%p9014) target = $region52
      $region51: #{tpu_custom_call.1} parent=5 // pred_region
        %s9017 = ssub.s32 %s15, 2
        // Predicated region
        $region53: #{tpu_custom_call.1} parent=51 // pred_check
          %p9018 = pneg %p154
        $region54: #{tpu_custom_call.1} parent=51 // pred_check_branch
          %9020 = sbr.rel (%p9018) target = $region56
        $region55: #{tpu_custom_call.1} parent=51 // pred_region
          %s9021 = sand.u32 %s139, 1
          %s9022 = scalar_lea.sflag [#allocation7], %s9021
          %s9023 = sand.u32 %s139, 1
          %s9024 = smul.addr %s9023, 256
          %s9025 = scalar_lea.vmem [#allocation9], %s9024
          %9026 = dma.done %s9022, 4096
        $region56: #{tpu_custom_call.1} parent=51 // pred_fallthru
          _
      $region52: #{tpu_custom_call.1} parent=5 // pred_fallthru
        _
    $region6: #{tpu_custom_call.1} parent=1 // loop_footer
      %s19 = sadd.s32 1, %s15
    $region7: #{tpu_custom_call.1} parent=1 // loop_footer_branch
      %14 = sbr.rel target = $region3
    $region8: #{tpu_custom_call.1} parent=1 // loop_exit
      _
    %9027 = vsyncpa [#allocation7], 1
    %s9028 = scalar_lea.sflag [#allocation7], 1
    %9029 = vsyncpa %s9028, 1
    %9030 = vsyncpa [#allocation8], 1
    %s9031 = scalar_lea.sflag [#allocation8], 1
    %9032 = vsyncpa %s9031, 1

</llo_original>
